<compile_context>
chip_gen: v7x
topology: tpu7x:2x2x1
jax: 0.10.0
libtpu: 0.0.40
codegen_flags: <defaults>
</compile_context>

<pallas_src>
import functools
import math

import jax
import jax.numpy as jnp
from jax import lax
from jax.experimental import pallas as pl
from jax.experimental.pallas import tpu as pltpu


_BN_EPS = 1e-5
DILATIONS = (1, 2, 4, 8, 16, 32, 64,
             2, 4, 8, 16, 32, 64,
             2, 4, 8, 16, 32, 64)
POOLS = (None, 4, 4, 5, 5, 5, 2)


def _round_up(x, m):
    return ((x + m - 1) // m) * m


def _cdiv(a, b):
    return -(-a // b)


def _pick_tile(m, cap=1024):
    """Row-tile: >=16 (bf16 sublane packing), <=cap, >=2 tiles when practical."""
    if m <= 32:
        return _round_up(m, 16)
    return min(cap, _round_up((m + 1) // 2, 16))


def _vmem_limit_bytes():
    try:
        cap = int(pltpu.get_tpu_info().vmem_capacity_bytes)
    except Exception:
        cap = 64 * 1024 * 1024
    # v5e/v6e (128 MiB) -> 64 MiB limit, v7x (64 MiB) -> 48 MiB limit.
    return int(min(max(cap - 16 * 1024 * 1024, cap // 2), 64 * 1024 * 1024))


_VMEM_LIMIT = _vmem_limit_bytes()


# ----------------------------------------------------------------------------
# Kernel 1: fused 1D conv (k taps) + folded BN + optional ReLU + optional residual
# ----------------------------------------------------------------------------
def _conv1d_kernel(xa_ref, xb_ref, w_ref, s_ref, t_ref, *rest, k, relu, has_resid):
    if has_resid:
        r_ref, o_ref = rest
    else:
        (o_ref,) = rest
    tl = o_ref.shape[1]
    # Window = this tile + right halo (taken from the next block of the same array).
    win = jnp.concatenate([xa_ref[0], xb_ref[0]], axis=0)          # (2*tl, Cin) bf16
    acc = jnp.dot(win[0:tl], w_ref[0], preferred_element_type=jnp.float32)
    for t in range(1, k):
        acc = acc + jnp.dot(win[t:t + tl], w_ref[t],
                            preferred_element_type=jnp.float32)
    acc = acc * s_ref[...] + t_ref[...]
    if relu:
        acc = jnp.maximum(acc, 0.0)
    if has_resid:
        acc = acc + r_ref[0].astype(jnp.float32)
    o_ref[0] = acc.astype(o_ref.dtype)


def conv1d_pallas(x, cp, relu, residual=None):
    """x: [B, L, Cin] bf16 -> [B, L, Cout] bf16 ('same' conv + BN (+ReLU) (+residual))."""
    B, L, cin = x.shape
    w = cp['w']                               # (k, cin, cout) bf16
    k, _, cout = w.shape
    pad = k // 2
    tile = _pick_tile(L)
    tiles = _cdiv(L, tile)
    lp_out = tiles * tile
    lp_in = (tiles + 1) * tile                # extra block so the halo read never OOBs
    xp = jnp.pad(x, ((0, 0), (pad, lp_in - L - pad), (0, 0)))

    args = [xp, xp, w, cp['scale'], cp['shift']]
    in_specs = [
        pl.BlockSpec((1, tile, cin), lambda b, i: (b, i, 0)),       # tile
        pl.BlockSpec((1, tile, cin), lambda b, i: (b, i + 1, 0)),   # halo (next block)
        pl.BlockSpec((k, cin, cout), lambda b, i: (0, 0, 0)),       # weights (resident)
        pl.BlockSpec((1, cout), lambda b, i: (0, 0)),               # folded BN scale
        pl.BlockSpec((1, cout), lambda b, i: (0, 0)),               # folded BN shift+bias
    ]
    has_resid = residual is not None
    if has_resid:
        rp = residual if lp_out == L else jnp.pad(
            residual, ((0, 0), (0, lp_out - L), (0, 0)))
        args.append(rp)
        in_specs.append(pl.BlockSpec((1, tile, cout), lambda b, i: (b, i, 0)))

    out = pl.pallas_call(
        functools.partial(_conv1d_kernel, k=k, relu=relu, has_resid=has_resid),
        out_shape=jax.ShapeDtypeStruct((B, lp_out, cout), jnp.bfloat16),
        grid_spec=pltpu.PrefetchScalarGridSpec(
            num_scalar_prefetch=0,
            grid=(B, tiles),
            in_specs=in_specs,
            out_specs=pl.BlockSpec((1, tile, cout), lambda b, i: (b, i, 0)),
        ),
        compiler_params=pltpu.CompilerParams(
            dimension_semantics=("parallel", "parallel"),
            vmem_limit_bytes=_VMEM_LIMIT),
        cost_estimate=pl.CostEstimate(
            flops=int(2 * B * lp_out * cin * cout * k),
            transcendentals=0,
            bytes_accessed=int(2 * B * (2 * lp_in * cin + lp_out * cout)
                               + 2 * k * cin * cout),
        ),
    )(*args)
    return out if lp_out == L else out[:, :L, :]


# ----------------------------------------------------------------------------
# Kernel 2: fused dilated 3x3 Conv2d PAIR (Cin->32->Cout) + BN (+ReLU) (+residual)
# The 32-channel intermediate never touches HBM (VMEM scratch, zero-padded).
# ----------------------------------------------------------------------------
def _conv2d_pair_kernel(x_ref, w1_ref, s1_ref, t1_ref, w2_ref, s2_ref, t2_ref,
                        *rest, d, relu1, relu2, has_resid):
    if has_resid:
        r_ref, o_ref, y1p_ref = rest
    else:
        o_ref, y1p_ref = rest
    _, H, W, cout = o_ref.shape
    cin = x_ref.shape[3]
    cmid = w1_ref.shape[2]

    # --- conv1: Cin -> 32 over the H x W map (input already zero-padded by d) ---
    acc1 = None
    for ih in range(3):
        for iw in range(3):
            a = x_ref[0, ih * d:ih * d + H, iw * d:iw * d + W, :]
            p = jnp.dot(a.reshape(H * W, cin), w1_ref[ih * 3 + iw],
                        preferred_element_type=jnp.float32)
            acc1 = p if acc1 is None else acc1 + p
    acc1 = acc1 * s1_ref[...] + t1_ref[...]
    if relu1:
        acc1 = jnp.maximum(acc1, 0.0)

    # Zero-padded (by d) 32-channel intermediate, VMEM only.
    y1p_ref[...] = jnp.zeros_like(y1p_ref)
    y1p_ref[d:d + H, d:d + W, :] = acc1.astype(jnp.bfloat16).reshape(H, W, cmid)

    # --- conv2: 32 -> Cout ---
    acc2 = None
    for ih in range(3):
        for iw in range(3):
            a = y1p_ref[ih * d:ih * d + H, iw * d:iw * d + W, :]
            p = jnp.dot(a.reshape(H * W, cmid), w2_ref[ih * 3 + iw],
                        preferred_element_type=jnp.float32)
            acc2 = p if acc2 is None else acc2 + p
    acc2 = acc2 * s2_ref[...] + t2_ref[...]
    if relu2:
        acc2 = jnp.maximum(acc2, 0.0)
    if has_resid:
        acc2 = acc2 + r_ref[0].reshape(H * W, cout).astype(jnp.float32)
    o_ref[0] = acc2.reshape(H, W, cout).astype(o_ref.dtype)


def conv2d_pair_pallas(x, cp1, cp2, d, relu1, relu2, residual=None):
    """x: [B, H, W, Cin] bf16 -> [B, H, W, Cout] bf16; two fused dilated 3x3 convs."""
    B, H, W, cin = x.shape
    cmid = cp1['w'].shape[2]
    cout = cp2['w'].shape[2]
    xp = jnp.pad(x, ((0, 0), (d, d), (d, d), (0, 0)))
    Hp, Wp = H + 2 * d, W + 2 * d

    args = [xp, cp1['w'], cp1['scale'], cp1['shift'],
            cp2['w'], cp2['scale'], cp2['shift']]
    in_specs = [
        pl.BlockSpec((1, Hp, Wp, cin), lambda b: (b, 0, 0, 0)),
        pl.BlockSpec((9, cin, cmid), lambda b: (0, 0, 0)),
        pl.BlockSpec((1, cmid), lambda b: (0, 0)),
        pl.BlockSpec((1, cmid), lambda b: (0, 0)),
        pl.BlockSpec((9, cmid, cout), lambda b: (0, 0, 0)),
        pl.BlockSpec((1, cout), lambda b: (0, 0)),
        pl.BlockSpec((1, cout), lambda b: (0, 0)),
    ]
    has_resid = residual is not None
    if has_resid:
        args.append(residual)
        in_specs.append(pl.BlockSpec((1, H, W, cout), lambda b: (b, 0, 0, 0)))

    out = pl.pallas_call(
        functools.partial(_conv2d_pair_kernel, d=d, relu1=relu1, relu2=relu2,
                          has_resid=has_resid),
        out_shape=jax.ShapeDtypeStruct((B, H, W, cout), jnp.bfloat16),
        grid_spec=pltpu.PrefetchScalarGridSpec(
            num_scalar_prefetch=0,
            grid=(B,),
            in_specs=in_specs,
            out_specs=pl.BlockSpec((1, H, W, cout), lambda b: (b, 0, 0, 0)),
            scratch_shapes=[pltpu.VMEM((Hp, Wp, cmid), jnp.bfloat16)],
        ),
        compiler_params=pltpu.CompilerParams(
            dimension_semantics=("parallel",),
            vmem_limit_bytes=_VMEM_LIMIT),
        cost_estimate=pl.CostEstimate(
            flops=int(2 * B * 9 * H * W * (cin * cmid + cmid * cout)),
            transcendentals=0,
            bytes_accessed=int(2 * B * (Hp * Wp * cin + 2 * H * W * cout)),
        ),
    )(*args)
    return out


# ----------------------------------------------------------------------------
# Kernel 3: fused final 1x1 conv pair (64 -> 5 -> 1), BN + ReLU in between.
# ----------------------------------------------------------------------------
def _final_kernel(x_ref, w1_ref, s1_ref, t1_ref, w2_ref, b2_ref, o_ref):
    h = jnp.dot(x_ref[...], w1_ref[...], preferred_element_type=jnp.float32)
    h = jnp.maximum(h * s1_ref[...] + t1_ref[...], 0.0)
    y = jnp.dot(h.astype(jnp.bfloat16), w2_ref[...],
                preferred_element_type=jnp.float32)
    o_ref[...] = y + b2_ref[...]


def final_pair_pallas(x, fp1, fp2):
    """x: [B, H, W, 64] bf16 -> [B, H, W, 1] f32."""
    B, H, W, cin = x.shape
    cmid = fp1['w'].shape[2]
    M = B * H * W
    tile = _pick_tile(M)
    tiles = _cdiv(M, tile)
    Mp = tiles * tile
    xm = x.reshape(M, cin)
    if Mp != M:
        xm = jnp.pad(xm, ((0, Mp - M), (0, 0)))
    w1 = fp1['w'][0]                               # (cin, 5)  bf16
    w2 = fp2['w'][0]                               # (5, 1)    bf16
    out = pl.pallas_call(
        _final_kernel,
        out_shape=jax.ShapeDtypeStruct((Mp, 1), jnp.float32),
        grid_spec=pltpu.PrefetchScalarGridSpec(
            num_scalar_prefetch=0,
            grid=(tiles,),
            in_specs=[
                pl.BlockSpec((tile, cin), lambda i: (i, 0)),
                pl.BlockSpec((cin, cmid), lambda i: (0, 0)),
                pl.BlockSpec((1, cmid), lambda i: (0, 0)),
                pl.BlockSpec((1, cmid), lambda i: (0, 0)),
                pl.BlockSpec((cmid, 1), lambda i: (0, 0)),
                pl.BlockSpec((1, 1), lambda i: (0, 0)),
            ],
            out_specs=pl.BlockSpec((tile, 1), lambda i: (i, 0)),
        ),
        compiler_params=pltpu.CompilerParams(
            dimension_semantics=("parallel",),
            vmem_limit_bytes=_VMEM_LIMIT),
    )(xm, w1, fp1['scale'], fp1['shift'], w2, fp2['shift'])
    out = out[:M] if Mp != M else out
    return out.reshape(B, H, W, 1)


# ----------------------------------------------------------------------------
# Parameter prep (weights re-laid-out + BN folded once, outside the traced fwd)
# ----------------------------------------------------------------------------
def fold_bn(p):
    if 'gamma' in p:
        s = p['gamma'] * lax.rsqrt(p['var'] + _BN_EPS)
        return s, p['beta'] + (p['b'] - p['mean']) * s
    return jnp.ones_like(p['b']), p['b']


def _prep1d(p):
    s, t = fold_bn(p)
    w = jnp.transpose(p['w'], (2, 1, 0)).astype(jnp.bfloat16)          # (k, cin, cout)
    return {'w': w,
            'scale': s.reshape(1, -1).astype(jnp.float32),
            'shift': t.reshape(1, -1).astype(jnp.float32)}


def _prep2d(p):
    s, t = fold_bn(p)
    co, ci, kh, kw = p['w'].shape
    w = jnp.transpose(p['w'], (2, 3, 1, 0)).reshape(kh * kw, ci, co)
    return {'w': w.astype(jnp.bfloat16),
            'scale': s.reshape(1, -1).astype(jnp.float32),
            'shift': t.reshape(1, -1).astype(jnp.float32)}


def prepare_params(P):
    PP = {}
    for name, val in P.items():
        if name in ('lconvtwos', 'convtwos'):
            PP[name] = [[_prep2d(p) for p in pair] for pair in val]
        elif name == 'final':
            PP[name] = [_prep2d(p) for p in val]
        else:
            PP[name] = [_prep1d(p) for p in val]
    return PP


# ----------------------------------------------------------------------------
# Forward passes
# ----------------------------------------------------------------------------
def maxpool1d(x, k):
    B, L, C = x.shape
    Lk = (L // k) * k
    if Lk != L:
        x = x[:, :Lk, :]
    return jnp.max(x.reshape(B, Lk // k, k, C), axis=2)


def forward_pallas(x_ncl, PP):
    x = jnp.transpose(x_ncl, (0, 2, 1)).astype(jnp.bfloat16)

    def lblock(h, pp, pool):
        if pool is not None:
            h = maxpool1d(h, pool)
        h = conv1d_pallas(h, pp[0], relu=False)
        return conv1d_pallas(h, pp[1], relu=False)

    def cblock(h, pp, residual):
        h = conv1d_pallas(h, pp[0], relu=True)
        return conv1d_pallas(h, pp[1], relu=True, residual=residual)

    lout = lblock(x, PP['lconv1'], POOLS[0])
    h = cblock(lout, PP['conv1'], lout)                       # out1 + lout1 (fused)
    for s in range(2, 8):
        lout = lblock(h, PP[f'lconv{s}'], POOLS[s - 1])
        h = cblock(lout, PP[f'conv{s}'], lout if s < 7 else None)
    out7 = h                                                   # [B, L7, 128]

    cur = out7[:, :, None, :] + out7[:, None, :, :]            # [B, L7, L7, 128]
    for i, d in enumerate(DILATIONS):
        l0, l1 = PP['lconvtwos'][i]
        cur = conv2d_pair_pallas(cur, l0, l1, d, False, False,
                                 residual=None if i == 0 else cur)
        c0, c1 = PP['convtwos'][i]
        cur = conv2d_pair_pallas(cur, c0, c1, d, True, True, residual=cur)

    y = final_pair_pallas(cur, PP['final'][0], PP['final'][1])
    y = 0.5 * y + 0.5 * jnp.transpose(y, (0, 2, 1, 3))
    return jnp.transpose(y, (0, 3, 1, 2))                      # NCHW


# --- pure-XLA reference (same bf16 storage / f32 accumulation policy) --------
def conv1d_ref(x, p, relu, residual=None):
    w = p['w'].astype(jnp.bfloat16)
    k = w.shape[2]
    pad = k // 2
    scale, shift = fold_bn(p)
    y = lax.conv_general_dilated(
        x[:, None, :, :].astype(jnp.bfloat16), jnp.transpose(w, (2, 1, 0))[None],
        window_strides=(1, 1), padding=((0, 0), (pad, pad)),
        dimension_numbers=('NHWC', 'HWIO', 'NHWC'),
        preferred_element_type=jnp.float32)[:, 0]
    y = y * scale.reshape(1, 1, -1) + shift.reshape(1, 1, -1)
    if relu:
        y = jnp.maximum(y, 0.0)
    if residual is not None:
        y = y + residual.astype(jnp.float32)
    return y.astype(jnp.bfloat16)


def conv2d_ref(x, p, d, relu, residual=None):
    w = p['w'].astype(jnp.bfloat16)
    pad = d * (w.shape[2] // 2)
    scale, shift = fold_bn(p)
    y = lax.conv_general_dilated(
        x.astype(jnp.bfloat16), jnp.transpose(w, (2, 3, 1, 0)),
        window_strides=(1, 1), padding=((pad, pad), (pad, pad)),
        rhs_dilation=(d, d), dimension_numbers=('NHWC', 'HWIO', 'NHWC'),
        preferred_element_type=jnp.float32)
    y = y * scale.reshape(1, 1, 1, -1) + shift.reshape(1, 1, 1, -1)
    if relu:
        y = jnp.maximum(y, 0.0)
    if residual is not None:
        y = y + residual.astype(jnp.float32)
    return y.astype(jnp.bfloat16)


def final_ref(x, p1, p2):
    B, H, W, cin = x.shape
    s1, t1 = fold_bn(p1)
    w1 = p1['w'].reshape(p1['w'].shape[0], p1['w'].shape[1]).T.astype(jnp.bfloat16)
    h = jnp.dot(x.reshape(-1, cin).astype(jnp.bfloat16), w1,
                preferred_element_type=jnp.float32)
    h = jnp.maximum(h * s1.reshape(1, -1) + t1.reshape(1, -1), 0.0)
    w2 = p2['w'].reshape(p2['w'].shape[0], p2['w'].shape[1]).T.astype(jnp.bfloat16)
    y = jnp.dot(h.astype(jnp.bfloat16), w2,
                preferred_element_type=jnp.float32) + p2['b'].reshape(1, 1)
    return y.reshape(B, H, W, 1)


def forward_ref(x_ncl, P):
    x = jnp.transpose(x_ncl, (0, 2, 1)).astype(jnp.bfloat16)

    def lblock(h, pp, pool):
        if pool is not None:
            h = maxpool1d(h, pool)
        return conv1d_ref(conv1d_ref(h, pp[0], False), pp[1], False)

    def cblock(h, pp, residual):
        return conv1d_ref(conv1d_ref(h, pp[0], True), pp[1], True, residual)

    lout = lblock(x, P['lconv1'], POOLS[0])
    h = cblock(lout, P['conv1'], lout)
    for s in range(2, 8):
        lout = lblock(h, P[f'lconv{s}'], POOLS[s - 1])
        h = cblock(lout, P[f'conv{s}'], lout if s < 7 else None)
    out7 = h
    cur = out7[:, :, None, :] + out7[:, None, :, :]
    for i, d in enumerate(DILATIONS):
        p0, p1 = P['lconvtwos'][i]
        y = conv2d_ref(cur, p0, d, False)
        cur = conv2d_ref(y, p1, d, False, None if i == 0 else cur)
        q0, q1 = P['convtwos'][i]
        y = conv2d_ref(cur, q0, d, True)
        cur = conv2d_ref(y, q1, d, True, cur)
    y = final_ref(cur, P['final'][0], P['final'][1])
    y = 0.5 * y + 0.5 * jnp.transpose(y, (0, 2, 1, 3))
    return jnp.transpose(y, (0, 3, 1, 2))


# ----------------------------------------------------------------------------
# Deterministic parameter construction
# ----------------------------------------------------------------------------
def _init_conv(key, shape, fan_in, bn, c_out):
    ks = jax.random.split(key, 6)
    bound = math.sqrt(3.0 / fan_in)
    p = {
        'w': jax.random.uniform(ks[0], shape, jnp.float32, -bound, bound),
        'b': jax.random.uniform(ks[1], (c_out,), jnp.float32, -bound, bound),
    }
    if bn:
        p['gamma'] = jax.random.uniform(ks[2], (c_out,), jnp.float32, 0.8, 1.2)
        p['beta'] = jax.random.uniform(ks[3], (c_out,), jnp.float32, -0.1, 0.1)
        p['mean'] = jax.random.uniform(ks[4], (c_out,), jnp.float32, -0.1, 0.1)
        p['var'] = jax.random.uniform(ks[5], (c_out,), jnp.float32, 0.8, 1.2)
    return p


def init_conv1d(key, c_in, c_out, k=9, bn=True):
    return _init_conv(key, (c_out, c_in, k), c_in * k, bn, c_out)


def init_conv2d(key, c_in, c_out, k=3, bn=True):
    return _init_conv(key, (c_out, c_in, k, k), c_in * k * k, bn, c_out)


def init_params(key):
    keys = iter(jax.random.split(key, 128))
    nk = lambda: next(keys)
    P = {
        'lconv1': [init_conv1d(nk(), 4, 64), init_conv1d(nk(), 64, 64)],
        'conv1': [init_conv1d(nk(), 64, 64), init_conv1d(nk(), 64, 64)],
        'lconv2': [init_conv1d(nk(), 64, 96), init_conv1d(nk(), 96, 96)],
        'conv2': [init_conv1d(nk(), 96, 96), init_conv1d(nk(), 96, 96)],
        'lconv3': [init_conv1d(nk(), 96, 128), init_conv1d(nk(), 128, 128)],
        'conv3': [init_conv1d(nk(), 128, 128), init_conv1d(nk(), 128, 128)],
    }
    for s in range(4, 8):
        P[f'lconv{s}'] = [init_conv1d(nk(), 128, 128), init_conv1d(nk(), 128, 128)]
        P[f'conv{s}'] = [init_conv1d(nk(), 128, 128), init_conv1d(nk(), 128, 128)]
    P['lconvtwos'] = []
    P['convtwos'] = []
    for i in range(19):
        cin = 128 if i == 0 else 64
        P['lconvtwos'].append([init_conv2d(nk(), cin, 32), init_conv2d(nk(), 32, 64)])
        P['convtwos'].append([init_conv2d(nk(), 64, 32), init_conv2d(nk(), 32, 64)])
    P['final'] = [init_conv2d(nk(), 64, 5, k=1),
                  init_conv2d(nk(), 5, 1, k=1, bn=False)]
    return P


# ----------------------------------------------------------------------------
if __name__ == "__main__":
    # Smallest input consistent with the model's 4*4*5*5*5*2 = 4000x downsampling.
    B, L = 1, 8000
    key = jax.random.PRNGKey(0)
    kx, kp = jax.random.split(key)
    x = jax.random.normal(kx, (B, 4, L), dtype=jnp.float32)
    params = init_params(kp)
    pparams = prepare_params(params)

    # Gold check: one Pallas bf16 conv1d layer vs. an f32/HIGHEST lax.conv reference.
    x_cl = jnp.transpose(x, (0, 2, 1))
    y_k = conv1d_pallas(x_cl.astype(jnp.bfloat16), pparams['lconv1'][0],
                        relu=False).astype(jnp.float32)
    p0 = params['lconv1'][0]
    s0, t0 = fold_bn(p0)
    y_g = lax.conv_general_dilated(
        x_cl[:, None, :, :], jnp.transpose(p0['w'], (2, 1, 0))[None],
        window_strides=(1, 1), padding=((0, 0), (4, 4)),
        dimension_numbers=('NHWC', 'HWIO', 'NHWC'),
        precision=lax.Precision.HIGHEST)[:, 0]
    y_g = y_g * s0.reshape(1, 1, -1) + t0.reshape(1, 1, -1)
    gold_err = float(jnp.max(jnp.abs(y_k - y_g)) / (jnp.max(jnp.abs(y_g)) + 1e-8))
    assert gold_err < 3e-2, f"conv1d layer vs f32 gold mismatch: rel_err={gold_err}"

    fwd_pallas = jax.jit(forward_pallas)
    fwd_ref = jax.jit(forward_ref)

    out = jax.block_until_ready(fwd_pallas(x, pparams))
    ref = jax.block_until_ready(fwd_ref(x, params))

    assert out.shape == (B, 1, L // 4000, L // 4000), out.shape
    rel_err = float(jnp.max(jnp.abs(out - ref)) / (jnp.max(jnp.abs(ref)) + 1e-8))
    assert rel_err < 2e-2, f"Pallas forward mismatch vs XLA reference: {rel_err}"
    # Final map must be symmetric in its last two axes.
    assert bool(jnp.allclose(out, jnp.transpose(out, (0, 1, 3, 2)), atol=1e-6))

    print("KERNEL_OK")
</pallas_src>

<mosaic_0001>
module attributes {stable_mosaic.version = 11 : i64} {
  func.func @_conv1d_kernel(%arg0: i32, %arg1: i32, %arg2: memref<1x1024x4xbf16, #tpu.memory_space<vmem>>, %arg3: memref<1x1024x4xbf16, #tpu.memory_space<vmem>>, %arg4: memref<9x4x64xbf16, #tpu.memory_space<vmem>>, %arg5: memref<1x64xf32, #tpu.memory_space<vmem>>, %arg6: memref<1x64xf32, #tpu.memory_space<vmem>>, %arg7: memref<1x1024x64xbf16, #tpu.memory_space<vmem>>) attributes {dimension_semantics = [#tpu.dimension_semantics<parallel>, #tpu.dimension_semantics<parallel>], iteration_bounds = array<i64: 1, 8>, scalar_prefetch = 0 : i64, scratch_operands = 0 : i64, tpu.core_type = #tpu.core_type<tc>, window_params = [{transform_indices = @transform_0, window_bounds = array<i64: 1, 1024, 4>}, {transform_indices = @transform_1, window_bounds = array<i64: 1, 1024, 4>}, {pipeline_mode = #tpu.pipeline_mode<synchronous>, transform_indices = @transform_2, window_bounds = array<i64: 9, 4, 64>}, {pipeline_mode = #tpu.pipeline_mode<synchronous>, transform_indices = @transform_3, window_bounds = array<i64: 1, 64>}, {pipeline_mode = #tpu.pipeline_mode<synchronous>, transform_indices = @transform_4, window_bounds = array<i64: 1, 64>}, {transform_indices = @transform_5, window_bounds = array<i64: 1, 1024, 64>}]} {
    %c0 = arith.constant 0 : index
    %c0_0 = arith.constant 0 : index
    %c0_1 = arith.constant 0 : index
    %0 = vector.load %arg2[%c0, %c0_0, %c0_1] : memref<1x1024x4xbf16, #tpu.memory_space<vmem>>, vector<1x1024x4xbf16>
    %1 = vector.shape_cast %0 : vector<1x1024x4xbf16> to vector<1024x4xbf16>
    %c0_2 = arith.constant 0 : index
    %c0_3 = arith.constant 0 : index
    %c0_4 = arith.constant 0 : index
    %2 = vector.load %arg3[%c0_2, %c0_3, %c0_4] : memref<1x1024x4xbf16, #tpu.memory_space<vmem>>, vector<1x1024x4xbf16>
    %3 = vector.shape_cast %2 : vector<1x1024x4xbf16> to vector<1024x4xbf16>
    %4 = tpu.concatenate %1, %3 in 0 : vector<1024x4xbf16>, vector<1024x4xbf16> -> vector<2048x4xbf16>
    %5 = vector.extract_strided_slice %4 {offsets = [0, 0], sizes = [1024, 4], strides = [1, 1]} : vector<2048x4xbf16> to vector<1024x4xbf16>
    %c0_5 = arith.constant 0 : index
    %c0_6 = arith.constant 0 : index
    %c0_7 = arith.constant 0 : index
    %6 = vector.load %arg4[%c0_5, %c0_6, %c0_7] : memref<9x4x64xbf16, #tpu.memory_space<vmem>>, vector<1x4x64xbf16>
    %7 = vector.shape_cast %6 : vector<1x4x64xbf16> to vector<4x64xbf16>
    %cst = arith.constant dense<0.000000e+00> : vector<1024x64xf32>
    %8 = tpu.matmul %5, %7, %cst {dimension_numbers = #tpu.dot_dimension_numbers<[1], [0], [0], [1], [0, 0, 1, 1], [], []>} : vector<1024x4xbf16>, vector<4x64xbf16>, vector<1024x64xf32> -> vector<1024x64xf32>
    %9 = vector.extract_strided_slice %4 {offsets = [1, 0], sizes = [1024, 4], strides = [1, 1]} : vector<2048x4xbf16> to vector<1024x4xbf16>
    %c1 = arith.constant 1 : index
    %c0_8 = arith.constant 0 : index
    %c0_9 = arith.constant 0 : index
    %10 = vector.load %arg4[%c1, %c0_8, %c0_9] : memref<9x4x64xbf16, #tpu.memory_space<vmem>>, vector<1x4x64xbf16>
    %11 = vector.shape_cast %10 : vector<1x4x64xbf16> to vector<4x64xbf16>
    %cst_10 = arith.constant dense<0.000000e+00> : vector<1024x64xf32>
    %12 = tpu.matmul %9, %11, %cst_10 {dimension_numbers = #tpu.dot_dimension_numbers<[1], [0], [0], [1], [0, 0, 1, 1], [], []>} : vector<1024x4xbf16>, vector<4x64xbf16>, vector<1024x64xf32> -> vector<1024x64xf32>
    %13 = arith.addf %8, %12 : vector<1024x64xf32>
    %14 = vector.extract_strided_slice %4 {offsets = [2, 0], sizes = [1024, 4], strides = [1, 1]} : vector<2048x4xbf16> to vector<1024x4xbf16>
    %c2 = arith.constant 2 : index
    %c0_11 = arith.constant 0 : index
    %c0_12 = arith.constant 0 : index
    %15 = vector.load %arg4[%c2, %c0_11, %c0_12] : memref<9x4x64xbf16, #tpu.memory_space<vmem>>, vector<1x4x64xbf16>
    %16 = vector.shape_cast %15 : vector<1x4x64xbf16> to vector<4x64xbf16>
    %cst_13 = arith.constant dense<0.000000e+00> : vector<1024x64xf32>
    %17 = tpu.matmul %14, %16, %cst_13 {dimension_numbers = #tpu.dot_dimension_numbers<[1], [0], [0], [1], [0, 0, 1, 1], [], []>} : vector<1024x4xbf16>, vector<4x64xbf16>, vector<1024x64xf32> -> vector<1024x64xf32>
    %18 = arith.addf %13, %17 : vector<1024x64xf32>
    %19 = vector.extract_strided_slice %4 {offsets = [3, 0], sizes = [1024, 4], strides = [1, 1]} : vector<2048x4xbf16> to vector<1024x4xbf16>
    %c3 = arith.constant 3 : index
    %c0_14 = arith.constant 0 : index
    %c0_15 = arith.constant 0 : index
    %20 = vector.load %arg4[%c3, %c0_14, %c0_15] : memref<9x4x64xbf16, #tpu.memory_space<vmem>>, vector<1x4x64xbf16>
    %21 = vector.shape_cast %20 : vector<1x4x64xbf16> to vector<4x64xbf16>
    %cst_16 = arith.constant dense<0.000000e+00> : vector<1024x64xf32>
    %22 = tpu.matmul %19, %21, %cst_16 {dimension_numbers = #tpu.dot_dimension_numbers<[1], [0], [0], [1], [0, 0, 1, 1], [], []>} : vector<1024x4xbf16>, vector<4x64xbf16>, vector<1024x64xf32> -> vector<1024x64xf32>
    %23 = arith.addf %18, %22 : vector<1024x64xf32>
    %24 = vector.extract_strided_slice %4 {offsets = [4, 0], sizes = [1024, 4], strides = [1, 1]} : vector<2048x4xbf16> to vector<1024x4xbf16>
    %c4 = arith.constant 4 : index
    %c0_17 = arith.constant 0 : index
    %c0_18 = arith.constant 0 : index
    %25 = vector.load %arg4[%c4, %c0_17, %c0_18] : memref<9x4x64xbf16, #tpu.memory_space<vmem>>, vector<1x4x64xbf16>
    %26 = vector.shape_cast %25 : vector<1x4x64xbf16> to vector<4x64xbf16>
    %cst_19 = arith.constant dense<0.000000e+00> : vector<1024x64xf32>
    %27 = tpu.matmul %24, %26, %cst_19 {dimension_numbers = #tpu.dot_dimension_numbers<[1], [0], [0], [1], [0, 0, 1, 1], [], []>} : vector<1024x4xbf16>, vector<4x64xbf16>, vector<1024x64xf32> -> vector<1024x64xf32>
    %28 = arith.addf %23, %27 : vector<1024x64xf32>
    %29 = vector.extract_strided_slice %4 {offsets = [5, 0], sizes = [1024, 4], strides = [1, 1]} : vector<2048x4xbf16> to vector<1024x4xbf16>
    %c5 = arith.constant 5 : index
    %c0_20 = arith.constant 0 : index
    %c0_21 = arith.constant 0 : index
    %30 = vector.load %arg4[%c5, %c0_20, %c0_21] : memref<9x4x64xbf16, #tpu.memory_space<vmem>>, vector<1x4x64xbf16>
    %31 = vector.shape_cast %30 : vector<1x4x64xbf16> to vector<4x64xbf16>
    %cst_22 = arith.constant dense<0.000000e+00> : vector<1024x64xf32>
    %32 = tpu.matmul %29, %31, %cst_22 {dimension_numbers = #tpu.dot_dimension_numbers<[1], [0], [0], [1], [0, 0, 1, 1], [], []>} : vector<1024x4xbf16>, vector<4x64xbf16>, vector<1024x64xf32> -> vector<1024x64xf32>
    %33 = arith.addf %28, %32 : vector<1024x64xf32>
    %34 = vector.extract_strided_slice %4 {offsets = [6, 0], sizes = [1024, 4], strides = [1, 1]} : vector<2048x4xbf16> to vector<1024x4xbf16>
    %c6 = arith.constant 6 : index
    %c0_23 = arith.constant 0 : index
    %c0_24 = arith.constant 0 : index
    %35 = vector.load %arg4[%c6, %c0_23, %c0_24] : memref<9x4x64xbf16, #tpu.memory_space<vmem>>, vector<1x4x64xbf16>
    %36 = vector.shape_cast %35 : vector<1x4x64xbf16> to vector<4x64xbf16>
    %cst_25 = arith.constant dense<0.000000e+00> : vector<1024x64xf32>
    %37 = tpu.matmul %34, %36, %cst_25 {dimension_numbers = #tpu.dot_dimension_numbers<[1], [0], [0], [1], [0, 0, 1, 1], [], []>} : vector<1024x4xbf16>, vector<4x64xbf16>, vector<1024x64xf32> -> vector<1024x64xf32>
    %38 = arith.addf %33, %37 : vector<1024x64xf32>
    %39 = vector.extract_strided_slice %4 {offsets = [7, 0], sizes = [1024, 4], strides = [1, 1]} : vector<2048x4xbf16> to vector<1024x4xbf16>
    %c7 = arith.constant 7 : index
    %c0_26 = arith.constant 0 : index
    %c0_27 = arith.constant 0 : index
    %40 = vector.load %arg4[%c7, %c0_26, %c0_27] : memref<9x4x64xbf16, #tpu.memory_space<vmem>>, vector<1x4x64xbf16>
    %41 = vector.shape_cast %40 : vector<1x4x64xbf16> to vector<4x64xbf16>
    %cst_28 = arith.constant dense<0.000000e+00> : vector<1024x64xf32>
    %42 = tpu.matmul %39, %41, %cst_28 {dimension_numbers = #tpu.dot_dimension_numbers<[1], [0], [0], [1], [0, 0, 1, 1], [], []>} : vector<1024x4xbf16>, vector<4x64xbf16>, vector<1024x64xf32> -> vector<1024x64xf32>
    %43 = arith.addf %38, %42 : vector<1024x64xf32>
    %44 = vector.extract_strided_slice %4 {offsets = [8, 0], sizes = [1024, 4], strides = [1, 1]} : vector<2048x4xbf16> to vector<1024x4xbf16>
    %c8 = arith.constant 8 : index
    %c0_29 = arith.constant 0 : index
    %c0_30 = arith.constant 0 : index
    %45 = vector.load %arg4[%c8, %c0_29, %c0_30] : memref<9x4x64xbf16, #tpu.memory_space<vmem>>, vector<1x4x64xbf16>
    %46 = vector.shape_cast %45 : vector<1x4x64xbf16> to vector<4x64xbf16>
    %cst_31 = arith.constant dense<0.000000e+00> : vector<1024x64xf32>
    %47 = tpu.matmul %44, %46, %cst_31 {dimension_numbers = #tpu.dot_dimension_numbers<[1], [0], [0], [1], [0, 0, 1, 1], [], []>} : vector<1024x4xbf16>, vector<4x64xbf16>, vector<1024x64xf32> -> vector<1024x64xf32>
    %48 = arith.addf %43, %47 : vector<1024x64xf32>
    %c0_32 = arith.constant 0 : index
    %c0_33 = arith.constant 0 : index
    %49 = vector.load %arg5[%c0_32, %c0_33] : memref<1x64xf32, #tpu.memory_space<vmem>>, vector<1x64xf32>
    %50 = vector.broadcast %49 : vector<1x64xf32> to vector<1024x64xf32>
    %51 = arith.mulf %48, %50 : vector<1024x64xf32>
    %c0_34 = arith.constant 0 : index
    %c0_35 = arith.constant 0 : index
    %52 = vector.load %arg6[%c0_34, %c0_35] : memref<1x64xf32, #tpu.memory_space<vmem>>, vector<1x64xf32>
    %53 = vector.broadcast %52 : vector<1x64xf32> to vector<1024x64xf32>
    %54 = arith.addf %51, %53 : vector<1024x64xf32>
    %55 = arith.truncf %54 : vector<1024x64xf32> to vector<1024x64xbf16>
    %c0_36 = arith.constant 0 : index
    %c0_37 = arith.constant 0 : index
    %c0_38 = arith.constant 0 : index
    %56 = vector.load %arg7[%c0_36, %c0_37, %c0_38] : memref<1x1024x64xbf16, #tpu.memory_space<vmem>>, vector<1x1024x64xbf16>
    %57 = vector.shape_cast %56 : vector<1x1024x64xbf16> to vector<1024x64xbf16>
    %58 = vector.shape_cast %55 : vector<1024x64xbf16> to vector<1x1024x64xbf16>
    tpu.vector_store %arg7[%c0_36, %c0_37, %c0_38], %58 {strides = array<i32>} : memref<1x1024x64xbf16, #tpu.memory_space<vmem>>, vector<1x1024x64xbf16>,
    return
  }
  func.func @transform_0(%arg0: i32, %arg1: i32) -> (i32, i32, i32) {
    %c0_i32 = arith.constant 0 : i32
    %c0_i32_0 = arith.constant 0 : i32
    return %arg0, %arg1, %c0_i32 : i32, i32, i32
  }
  func.func @transform_1(%arg0: i32, %arg1: i32) -> (i32, i32, i32) {
    %c1_i32 = arith.constant 1 : i32
    %0 = arith.addi %arg1, %c1_i32 : i32
    %c0_i32 = arith.constant 0 : i32
    %c0_i32_0 = arith.constant 0 : i32
    return %arg0, %0, %c0_i32 : i32, i32, i32
  }
  func.func @transform_2(%arg0: i32, %arg1: i32) -> (i32, i32, i32) {
    %c0_i32 = arith.constant 0 : i32
    %c0_i32_0 = arith.constant 0 : i32
    %c0_i32_1 = arith.constant 0 : i32
    %c0_i32_2 = arith.constant 0 : i32
    return %c0_i32, %c0_i32_0, %c0_i32_1 : i32, i32, i32
  }
  func.func @transform_3(%arg0: i32, %arg1: i32) -> (i32, i32) {
    %c0_i32 = arith.constant 0 : i32
    %c0_i32_0 = arith.constant 0 : i32
    %c0_i32_1 = arith.constant 0 : i32
    return %c0_i32, %c0_i32_0 : i32, i32
  }
  func.func @transform_4(%arg0: i32, %arg1: i32) -> (i32, i32) {
    %c0_i32 = arith.constant 0 : i32
    %c0_i32_0 = arith.constant 0 : i32
    %c0_i32_1 = arith.constant 0 : i32
    return %c0_i32, %c0_i32_0 : i32, i32
  }
  func.func @transform_5(%arg0: i32, %arg1: i32) -> (i32, i32, i32) {
    %c0_i32 = arith.constant 0 : i32
    %c0_i32_0 = arith.constant 0 : i32
    return %arg0, %arg1, %c0_i32 : i32, i32, i32
  }
}

</mosaic_0001>

<llo_original>
// kernel: tpu_custom_call.1
$region0: #{tpu_custom_call.1}
  #allocation0 [shape = 'u32[]', space=smem, size = 0x4, offset = 0x4, fixed_abs, tag = 'smem constant byte address 0x4 - core index']
  #allocation1 [shape = 'u32[144,128]{1,0:T(1,128)}', space=vmem, size = 0x12000, scoped, tag = 'internal scratch']
  %s0 = inlined_call_operand.vmem [shape: bf16[1,9216,4], index: 0, kind: input, shape index: {}]
  %s1 = inlined_call_operand.vmem [shape: bf16[1,9216,4], index: 1, kind: input, shape index: {}]
  %s2 = inlined_call_operand.vmem [shape: bf16[9,4,64], index: 2, kind: input, shape index: {}]
  %s3 = inlined_call_operand.vmem [shape: f32[1,64], index: 3, kind: input, shape index: {}]
  %s4 = inlined_call_operand.vmem [shape: f32[1,64], index: 4, kind: input, shape index: {}]
  %s5 = inlined_call_operand.vmem [shape: bf16[1,8192,64], index: 5, kind: output, shape index: {}]
  %s6 = sld [smem:[#allocation0]]
  $region53: #{tpu_custom_call.1} parent=0
    _
  %s8 = ssub.s32 1, %s6
  %s9 = scalar_select 0, %s8, %s6
  loop: start=0, step=1, limit=10
  $region2: #{tpu_custom_call.1} parent=0 // loop_pre_header
    _
  $region3: #{tpu_custom_call.1} parent=0 // loop_header
    %s11 = sphi 0, %s15
    %p12 = scmp.ge.s32.totalorder %s11, 10
    %s18 = sphi 0, %s30
    %s19 = sphi 0, %s26
    %s20 = sphi 0, %s18
    %s21 = sphi 0, %s19
    %s22 = sphi 0, %s20
    %s23 = sphi 0, %s21
    %s35 = sphi 0, %s37
    %s38 = sphi 0, %s35
    %s39 = sphi 0, %s38
    %s55 = sphi 0, %s39
    %s65 = sphi 0, %s67
    %s68 = sphi 0, %s65
    %s69 = sphi 0, %s68
    %s85 = sphi 0, %s69
    %s89 = sphi 0, %s89
    %s91 = sphi 0, %s89
    %s92 = sphi 0, %s91
    %s106 = sphi 0, %s92
    %s110 = sphi 0, %s110
    %s112 = sphi 0, %s110
    %s113 = sphi 0, %s112
    %s127 = sphi 0, %s113
    %s131 = sphi 0, %s131
    %s133 = sphi 0, %s131
    %s134 = sphi 0, %s133
    %s148 = sphi 0, %s134
    %s156 = sphi 0, %s158
    %s159 = sphi 0, %s156
    %s160 = sphi 0, %s159
    %s176 = sphi 0, %s160
  $region4: #{tpu_custom_call.1} parent=0 // loop_header_branch
    %14 = sbr.rel (%p12) target = $region8
  $region5: #{tpu_custom_call.1} parent=0 // loop_body
    %s16 = ssub.s32 %s11, 1
    %s17 = ssub.s32 %s11, 2
    %s24 = sadd.s32 1, %s19
    %p25 = scmp.ge.s32.totalorder %s24, 8
    %s26 = scalar_select %p25, 0, %s24
    %s27 = sadd.s32 1, %s18
    %s28 = scalar_select %p25, %s27, %s18
    %p29 = scmp.ge.s32.totalorder %s28, 1
    %s30 = scalar_select %p29, 0, %s28
    %s31 = ssub.s32 %s18, %s30
    %s32 = ssub.s32 %s19, %s26
    %s33 = sor.u32 %s31, %s32
    %p34 = scmp.eq.s32.totalorder %s33, 0
    %s36 = sadd.s32 %s35, 1
    %s37 = scalar_select %p34, %s35, %s36
    %p40 = pneg %p34
    %p41 = scmp.eq.s32.totalorder %s11, 7
    %p42 = por %p40, %p41
    %p43 = scmp.ne.s32.totalorder %s35, %s38
    %p44 = scmp.eq.s32.totalorder %s11, 0
    %p45 = por %p43, %p44
    %p46 = scmp.ne.s32.totalorder %s35, %s38
    %p47 = scmp.eq.s32.totalorder %s16, 7
    %p48 = por %p46, %p47
    %p49 = scmp.ne.s32.totalorder %s38, %s39
    %p50 = scmp.eq.s32.totalorder %s16, 0
    %p51 = por %p49, %p50
    %p52 = scmp.ne.s32.totalorder %s38, %s39
    %p53 = scmp.eq.s32.totalorder %s17, 7
    %p54 = por %p52, %p53
    %p56 = scmp.ne.s32.totalorder %s39, %s55
    %p57 = scmp.eq.s32.totalorder %s17, 0
    %p58 = por %p56, %p57
    %s59 = sadd.s32 %s19, 1
    %s60 = sadd.s32 %s26, 1
    %s61 = ssub.s32 %s18, %s30
    %s62 = ssub.s32 %s59, %s60
    %s63 = sor.u32 %s61, %s62
    %p64 = scmp.eq.s32.totalorder %s63, 0
    %s66 = sadd.s32 %s65, 1
    %s67 = scalar_select %p64, %s65, %s66
    %p70 = pneg %p64
    %p71 = scmp.eq.s32.totalorder %s11, 7
    %p72 = por %p70, %p71
    %p73 = scmp.ne.s32.totalorder %s65, %s68
    %p74 = scmp.eq.s32.totalorder %s11, 0
    %p75 = por %p73, %p74
    %p76 = scmp.ne.s32.totalorder %s65, %s68
    %p77 = scmp.eq.s32.totalorder %s16, 7
    %p78 = por %p76, %p77
    %p79 = scmp.ne.s32.totalorder %s68, %s69
    %p80 = scmp.eq.s32.totalorder %s16, 0
    %p81 = por %p79, %p80
    %p82 = scmp.ne.s32.totalorder %s68, %s69
    %p83 = scmp.eq.s32.totalorder %s17, 7
    %p84 = por %p82, %p83
    %p86 = scmp.ne.s32.totalorder %s69, %s85
    %p87 = scmp.eq.s32.totalorder %s17, 0
    %p88 = por %p86, %p87
    %s90 = sadd.s32 %s89, 1
    %p93 = scmp.eq.s32.totalorder %s11, 7
    %p94 = scmp.ne.s32.totalorder %s89, %s91
    %p95 = scmp.eq.s32.totalorder %s11, 0
    %p96 = por %p94, %p95
    %p97 = scmp.ne.s32.totalorder %s89, %s91
    %p98 = scmp.eq.s32.totalorder %s16, 7
    %p99 = por %p97, %p98
    %p100 = scmp.ne.s32.totalorder %s91, %s92
    %p101 = scmp.eq.s32.totalorder %s16, 0
    %p102 = por %p100, %p101
    %p103 = scmp.ne.s32.totalorder %s91, %s92
    %p104 = scmp.eq.s32.totalorder %s17, 7
    %p105 = por %p103, %p104
    %p107 = scmp.ne.s32.totalorder %s92, %s106
    %p108 = scmp.eq.s32.totalorder %s17, 0
    %p109 = por %p107, %p108
    %s111 = sadd.s32 %s110, 1
    %p114 = scmp.eq.s32.totalorder %s11, 7
    %p115 = scmp.ne.s32.totalorder %s110, %s112
    %p116 = scmp.eq.s32.totalorder %s11, 0
    %p117 = por %p115, %p116
    %p118 = scmp.ne.s32.totalorder %s110, %s112
    %p119 = scmp.eq.s32.totalorder %s16, 7
    %p120 = por %p118, %p119
    %p121 = scmp.ne.s32.totalorder %s112, %s113
    %p122 = scmp.eq.s32.totalorder %s16, 0
    %p123 = por %p121, %p122
    %p124 = scmp.ne.s32.totalorder %s112, %s113
    %p125 = scmp.eq.s32.totalorder %s17, 7
    %p126 = por %p124, %p125
    %p128 = scmp.ne.s32.totalorder %s113, %s127
    %p129 = scmp.eq.s32.totalorder %s17, 0
    %p130 = por %p128, %p129
    %s132 = sadd.s32 %s131, 1
    %p135 = scmp.eq.s32.totalorder %s11, 7
    %p136 = scmp.ne.s32.totalorder %s131, %s133
    %p137 = scmp.eq.s32.totalorder %s11, 0
    %p138 = por %p136, %p137
    %p139 = scmp.ne.s32.totalorder %s131, %s133
    %p140 = scmp.eq.s32.totalorder %s16, 7
    %p141 = por %p139, %p140
    %p142 = scmp.ne.s32.totalorder %s133, %s134
    %p143 = scmp.eq.s32.totalorder %s16, 0
    %p144 = por %p142, %p143
    %p145 = scmp.ne.s32.totalorder %s133, %s134
    %p146 = scmp.eq.s32.totalorder %s17, 7
    %p147 = por %p145, %p146
    %p149 = scmp.ne.s32.totalorder %s134, %s148
    %p150 = scmp.eq.s32.totalorder %s17, 0
    %p151 = por %p149, %p150
    %s152 = ssub.s32 %s18, %s30
    %s153 = ssub.s32 %s19, %s26
    %s154 = sor.u32 %s152, %s153
    %p155 = scmp.eq.s32.totalorder %s154, 0
    %s157 = sadd.s32 %s156, 1
    %s158 = scalar_select %p155, %s156, %s157
    %p161 = pneg %p155
    %p162 = scmp.eq.s32.totalorder %s11, 7
    %p163 = por %p161, %p162
    %p164 = scmp.ne.s32.totalorder %s156, %s159
    %p165 = scmp.eq.s32.totalorder %s11, 0
    %p166 = por %p164, %p165
    %p167 = scmp.ne.s32.totalorder %s156, %s159
    %p168 = scmp.eq.s32.totalorder %s16, 7
    %p169 = por %p167, %p168
    %p170 = scmp.ne.s32.totalorder %s159, %s160
    %p171 = scmp.eq.s32.totalorder %s16, 0
    %p172 = por %p170, %p171
    %p173 = scmp.ne.s32.totalorder %s159, %s160
    %p174 = scmp.eq.s32.totalorder %s17, 7
    %p175 = por %p173, %p174
    %p177 = scmp.ne.s32.totalorder %s160, %s176
    %p178 = scmp.eq.s32.totalorder %s17, 0
    %p179 = por %p177, %p178
    %p180 = scmp.le.s32.totalorder 1, %s11
    %p181 = scmp.lt.s32.totalorder %s11, 9
    %p182 = pnand %p180, %p181
    %p183 = pneg %p182
    // Predicated region
    $region9: #{tpu_custom_call.1} parent=5 // pred_check
      _
    $region10: #{tpu_custom_call.1} parent=5 // pred_check_branch
      %185 = sbr.rel (%p182) target = $region12
    $region11: #{tpu_custom_call.1} parent=5 // pred_region
      %s186 = ssub.s32 %s11, 1
      // Predicated region
      $region13: #{tpu_custom_call.1} parent=11 // pred_check
        %p187 = pneg %p102
      $region14: #{tpu_custom_call.1} parent=11 // pred_check_branch
        %189 = sbr.rel (%p187) target = $region16
      $region15: #{tpu_custom_call.1} parent=11 // pred_region
        _
      $region16: #{tpu_custom_call.1} parent=11 // pred_fallthru
        _
      // Predicated region
      $region17: #{tpu_custom_call.1} parent=11 // pred_check
        %p190 = pneg %p123
      $region18: #{tpu_custom_call.1} parent=11 // pred_check_branch
        %192 = sbr.rel (%p190) target = $region20
      $region19: #{tpu_custom_call.1} parent=11 // pred_region
        _
      $region20: #{tpu_custom_call.1} parent=11 // pred_fallthru
        _
      // Predicated region
      $region21: #{tpu_custom_call.1} parent=11 // pred_check
        %p193 = pneg %p144
      $region22: #{tpu_custom_call.1} parent=11 // pred_check_branch
        %195 = sbr.rel (%p193) target = $region24
      $region23: #{tpu_custom_call.1} parent=11 // pred_region
        _
      $region24: #{tpu_custom_call.1} parent=11 // pred_fallthru
        _
    $region12: #{tpu_custom_call.1} parent=5 // pred_fallthru
      _
    %p196 = scmp.lt.s32.totalorder %s11, 8
    // Predicated region
    $region25: #{tpu_custom_call.1} parent=5 // pred_check
      %p197 = pneg %p196
    $region26: #{tpu_custom_call.1} parent=5 // pred_check_branch
      %199 = sbr.rel (%p197) target = $region28
    $region27: #{tpu_custom_call.1} parent=5 // pred_region
      // Predicated region
      $region29: #{tpu_custom_call.1} parent=27 // pred_check
        %p200 = pneg %p45
      $region30: #{tpu_custom_call.1} parent=27 // pred_check_branch
        %202 = sbr.rel (%p200) target = $region32
      $region31: #{tpu_custom_call.1} parent=27 // pred_region
        %s203 = smul.u32 128, %s19
        %p204 = scmp.lt.s32.totalorder %s18, 0
        %s205 = scalar_select %p204, %s18, 0
        %p206 = scmp.lt.s32.totalorder %s203, 1151
        %s207 = scalar_select %p206, %s203, 1151
        %s208 = smul.addr %s205, 1152
        %s209 = sadd.s32 %s207, %s208
        %s210 = smul.addr %s209, 4
        %s211 = scalar_lea.vmem %s0, %s210
        %s212 = smul.u32 128, %s19
      $region32: #{tpu_custom_call.1} parent=27 // pred_fallthru
        _
      // Predicated region
      $region33: #{tpu_custom_call.1} parent=27 // pred_check
        %p213 = pneg %p75
      $region34: #{tpu_custom_call.1} parent=27 // pred_check_branch
        %215 = sbr.rel (%p213) target = $region36
      $region35: #{tpu_custom_call.1} parent=27 // pred_region
        %s216 = sadd.s32 %s19, 1
        %s217 = smul.u32 128, %s216
        %p218 = scmp.lt.s32.totalorder %s18, 0
        %s219 = scalar_select %p218, %s18, 0
        %p220 = scmp.lt.s32.totalorder %s217, 1151
        %s221 = scalar_select %p220, %s217, 1151
        %s222 = smul.addr %s219, 1152
        %s223 = sadd.s32 %s221, %s222
        %s224 = smul.addr %s223, 4
        %s225 = scalar_lea.vmem %s1, %s224
        %s226 = sadd.s32 %s19, 1
        %s227 = smul.u32 128, %s226
      $region36: #{tpu_custom_call.1} parent=27 // pred_fallthru
        _
    $region28: #{tpu_custom_call.1} parent=5 // pred_fallthru
      _
    %p228 = scmp.le.s32.totalorder 1, %s11
    %p229 = scmp.lt.s32.totalorder %s11, 9
    %p230 = pnand %p228, %p229
    %p231 = pneg %p230
    // Predicated region
    $region37: #{tpu_custom_call.1} parent=5 // pred_check
      _
    $region38: #{tpu_custom_call.1} parent=5 // pred_check_branch
      %233 = sbr.rel (%p230) target = $region40
    $region39: #{tpu_custom_call.1} parent=5 // pred_region
      %s234 = ssub.s32 %s11, 1
      %s235 = smul.u32 128, %s21
      %p236 = scmp.lt.s32.totalorder %s20, 0
      %s237 = scalar_select %p236, %s20, 0
      %p238 = scmp.lt.s32.totalorder %s235, 1151
      %s239 = scalar_select %p238, %s235, 1151
      %s240 = smul.addr %s237, 1152
      %s241 = sadd.s32 %s239, %s240
      %s242 = smul.addr %s241, 4
      %s243 = scalar_lea.vmem %s0, %s242
      %p244 = pneg %p51
      %p245 = pneg %p48
      %s246 = sadd.s32 %s21, 1
      %s247 = smul.u32 128, %s246
      %p248 = scmp.lt.s32.totalorder %s20, 0
      %s249 = scalar_select %p248, %s20, 0
      %p250 = scmp.lt.s32.totalorder %s247, 1151
      %s251 = scalar_select %p250, %s247, 1151
      %s252 = smul.addr %s249, 1152
      %s253 = sadd.s32 %s251, %s252
      %s254 = smul.addr %s253, 4
      %s255 = scalar_lea.vmem %s1, %s254
      %p256 = pneg %p81
      %p257 = pneg %p78
      %p258 = pneg %p102
      %p259 = pneg %p99
      %p260 = pneg %p123
      %p261 = pneg %p120
      %p262 = pneg %p144
      %p263 = pneg %p141
      %p264 = pneg %p172
      %p265 = pneg %p169
      %s266 = smul.u32 128, %s21
      %p267 = scmp.lt.s32.totalorder %s20, 0
      %s268 = scalar_select %p267, %s20, 0
      %p269 = scmp.lt.s32.totalorder %s266, 1023
      %s270 = scalar_select %p269, %s266, 1023
      %s271 = smul.addr %s268, 1024
      %s272 = sadd.s32 %s270, %s271
      %s273 = smul.addr %s272, 4
      %s274 = scalar_lea.vmem %s5, %s273
      %s275 = smul.u32 128, %s21
      %p276 = scmp.lt.s32.totalorder %s20, 0
      %s277 = scalar_select %p276, %s20, 0
      %p278 = scmp.lt.s32.totalorder %s275, 1151
      %s279 = scalar_select %p278, %s275, 1151
      %s280 = smul.addr %s277, 1152
      %s281 = sadd.s32 %s279, %s280
      %s282 = smul.addr %s281, 4
      %s283 = scalar_lea.vmem %s0, %s282
      %s284 = smul.u32 128, %s21
      %s285 = sadd.s32 %s21, 1
      %s286 = smul.u32 128, %s285
      %p287 = scmp.lt.s32.totalorder %s20, 0
      %s288 = scalar_select %p287, %s20, 0
      %p289 = scmp.lt.s32.totalorder %s286, 1151
      %s290 = scalar_select %p289, %s286, 1151
      %s291 = smul.addr %s288, 1152
      %s292 = sadd.s32 %s290, %s291
      %s293 = smul.addr %s292, 4
      %s294 = scalar_lea.vmem %s1, %s293
      %s295 = sadd.s32 %s21, 1
      %s296 = smul.u32 128, %s295
      %s297 = smul.u32 128, %s21
      %p298 = scmp.lt.s32.totalorder %s20, 0
      %s299 = scalar_select %p298, %s20, 0
      %p300 = scmp.lt.s32.totalorder %s297, 1023
      %s301 = scalar_select %p300, %s297, 1023
      %s302 = smul.addr %s299, 1024
      %s303 = sadd.s32 %s301, %s302
      %s304 = smul.addr %s303, 4
      %s305 = scalar_lea.vmem %s5, %s304
      %s306 = smul.u32 128, %s21
      %v308 = vld [vmem:[%s283] sm:$0xf]
      %v309 = vld [vmem:[%s283 + $0x4] sm:$0xf]
      %v310 = vld [vmem:[%s283 + $0x8] sm:$0xf]
      %v311 = vld [vmem:[%s283 + $0xc] sm:$0xf]
      %v312 = vld [vmem:[%s283 + $0x10] sm:$0xf]
      %v313 = vld [vmem:[%s283 + $0x14] sm:$0xf]
      %v314 = vld [vmem:[%s283 + $0x18] sm:$0xf]
      %v315 = vld [vmem:[%s283 + $0x1c] sm:$0xf]
      %v316 = vld [vmem:[%s283 + $0x20] sm:$0xf]
      %v317 = vld [vmem:[%s283 + $0x24] sm:$0xf]
      %v318 = vld [vmem:[%s283 + $0x28] sm:$0xf]
      %v319 = vld [vmem:[%s283 + $0x2c] sm:$0xf]
      %v320 = vld [vmem:[%s283 + $0x30] sm:$0xf]
      %v321 = vld [vmem:[%s283 + $0x34] sm:$0xf]
      %v322 = vld [vmem:[%s283 + $0x38] sm:$0xf]
      %v323 = vld [vmem:[%s283 + $0x3c] sm:$0xf]
      %v324 = vld [vmem:[%s283 + $0x40] sm:$0xf]
      %v325 = vld [vmem:[%s283 + $0x44] sm:$0xf]
      %v326 = vld [vmem:[%s283 + $0x48] sm:$0xf]
      %v327 = vld [vmem:[%s283 + $0x4c] sm:$0xf]
      %v328 = vld [vmem:[%s283 + $0x50] sm:$0xf]
      %v329 = vld [vmem:[%s283 + $0x54] sm:$0xf]
      %v330 = vld [vmem:[%s283 + $0x58] sm:$0xf]
      %v331 = vld [vmem:[%s283 + $0x5c] sm:$0xf]
      %v332 = vld [vmem:[%s283 + $0x60] sm:$0xf]
      %v333 = vld [vmem:[%s283 + $0x64] sm:$0xf]
      %v334 = vld [vmem:[%s283 + $0x68] sm:$0xf]
      %v335 = vld [vmem:[%s283 + $0x6c] sm:$0xf]
      %v336 = vld [vmem:[%s283 + $0x70] sm:$0xf]
      %v337 = vld [vmem:[%s283 + $0x74] sm:$0xf]
      %v338 = vld [vmem:[%s283 + $0x78] sm:$0xf]
      %v339 = vld [vmem:[%s283 + $0x7c] sm:$0xf]
      %v340 = vld [vmem:[%s283 + $0x80] sm:$0xf]
      %v341 = vld [vmem:[%s283 + $0x84] sm:$0xf]
      %v342 = vld [vmem:[%s283 + $0x88] sm:$0xf]
      %v343 = vld [vmem:[%s283 + $0x8c] sm:$0xf]
      %v344 = vld [vmem:[%s283 + $0x90] sm:$0xf]
      %v345 = vld [vmem:[%s283 + $0x94] sm:$0xf]
      %v346 = vld [vmem:[%s283 + $0x98] sm:$0xf]
      %v347 = vld [vmem:[%s283 + $0x9c] sm:$0xf]
      %v348 = vld [vmem:[%s283 + $0xa0] sm:$0xf]
      %v349 = vld [vmem:[%s283 + $0xa4] sm:$0xf]
      %v350 = vld [vmem:[%s283 + $0xa8] sm:$0xf]
      %v351 = vld [vmem:[%s283 + $0xac] sm:$0xf]
      %v352 = vld [vmem:[%s283 + $0xb0] sm:$0xf]
      %v353 = vld [vmem:[%s283 + $0xb4] sm:$0xf]
      %v354 = vld [vmem:[%s283 + $0xb8] sm:$0xf]
      %v355 = vld [vmem:[%s283 + $0xbc] sm:$0xf]
      %v356 = vld [vmem:[%s283 + $0xc0] sm:$0xf]
      %v357 = vld [vmem:[%s283 + $0xc4] sm:$0xf]
      %v358 = vld [vmem:[%s283 + $0xc8] sm:$0xf]
      %v359 = vld [vmem:[%s283 + $0xcc] sm:$0xf]
      %v360 = vld [vmem:[%s283 + $0xd0] sm:$0xf]
      %v361 = vld [vmem:[%s283 + $0xd4] sm:$0xf]
      %v362 = vld [vmem:[%s283 + $0xd8] sm:$0xf]
      %v363 = vld [vmem:[%s283 + $0xdc] sm:$0xf]
      %v364 = vld [vmem:[%s283 + $0xe0] sm:$0xf]
      %v365 = vld [vmem:[%s283 + $0xe4] sm:$0xf]
      %v366 = vld [vmem:[%s283 + $0xe8] sm:$0xf]
      %v367 = vld [vmem:[%s283 + $0xec] sm:$0xf]
      %v368 = vld [vmem:[%s283 + $0xf0] sm:$0xf]
      %v369 = vld [vmem:[%s283 + $0xf4] sm:$0xf]
      %v370 = vld [vmem:[%s283 + $0xf8] sm:$0xf]
      %v371 = vld [vmem:[%s283 + $0xfc] sm:$0xf]
      %v372 = vld [vmem:[%s283 + $0x100] sm:$0xf]
      %v373 = vld [vmem:[%s283 + $0x104] sm:$0xf]
      %v374 = vld [vmem:[%s283 + $0x108] sm:$0xf]
      %v375 = vld [vmem:[%s283 + $0x10c] sm:$0xf]
      %v376 = vld [vmem:[%s283 + $0x110] sm:$0xf]
      %v377 = vld [vmem:[%s283 + $0x114] sm:$0xf]
      %v378 = vld [vmem:[%s283 + $0x118] sm:$0xf]
      %v379 = vld [vmem:[%s283 + $0x11c] sm:$0xf]
      %v380 = vld [vmem:[%s283 + $0x120] sm:$0xf]
      %v381 = vld [vmem:[%s283 + $0x124] sm:$0xf]
      %v382 = vld [vmem:[%s283 + $0x128] sm:$0xf]
      %v383 = vld [vmem:[%s283 + $0x12c] sm:$0xf]
      %v384 = vld [vmem:[%s283 + $0x130] sm:$0xf]
      %v385 = vld [vmem:[%s283 + $0x134] sm:$0xf]
      %v386 = vld [vmem:[%s283 + $0x138] sm:$0xf]
      %v387 = vld [vmem:[%s283 + $0x13c] sm:$0xf]
      %v388 = vld [vmem:[%s283 + $0x140] sm:$0xf]
      %v389 = vld [vmem:[%s283 + $0x144] sm:$0xf]
      %v390 = vld [vmem:[%s283 + $0x148] sm:$0xf]
      %v391 = vld [vmem:[%s283 + $0x14c] sm:$0xf]
      %v392 = vld [vmem:[%s283 + $0x150] sm:$0xf]
      %v393 = vld [vmem:[%s283 + $0x154] sm:$0xf]
      %v394 = vld [vmem:[%s283 + $0x158] sm:$0xf]
      %v395 = vld [vmem:[%s283 + $0x15c] sm:$0xf]
      %v396 = vld [vmem:[%s283 + $0x160] sm:$0xf]
      %v397 = vld [vmem:[%s283 + $0x164] sm:$0xf]
      %v398 = vld [vmem:[%s283 + $0x168] sm:$0xf]
      %v399 = vld [vmem:[%s283 + $0x16c] sm:$0xf]
      %v400 = vld [vmem:[%s283 + $0x170] sm:$0xf]
      %v401 = vld [vmem:[%s283 + $0x174] sm:$0xf]
      %v402 = vld [vmem:[%s283 + $0x178] sm:$0xf]
      %v403 = vld [vmem:[%s283 + $0x17c] sm:$0xf]
      %v404 = vld [vmem:[%s283 + $0x180] sm:$0xf]
      %v405 = vld [vmem:[%s283 + $0x184] sm:$0xf]
      %v406 = vld [vmem:[%s283 + $0x188] sm:$0xf]
      %v407 = vld [vmem:[%s283 + $0x18c] sm:$0xf]
      %v408 = vld [vmem:[%s283 + $0x190] sm:$0xf]
      %v409 = vld [vmem:[%s283 + $0x194] sm:$0xf]
      %v410 = vld [vmem:[%s283 + $0x198] sm:$0xf]
      %v411 = vld [vmem:[%s283 + $0x19c] sm:$0xf]
      %v412 = vld [vmem:[%s283 + $0x1a0] sm:$0xf]
      %v413 = vld [vmem:[%s283 + $0x1a4] sm:$0xf]
      %v414 = vld [vmem:[%s283 + $0x1a8] sm:$0xf]
      %v415 = vld [vmem:[%s283 + $0x1ac] sm:$0xf]
      %v416 = vld [vmem:[%s283 + $0x1b0] sm:$0xf]
      %v417 = vld [vmem:[%s283 + $0x1b4] sm:$0xf]
      %v418 = vld [vmem:[%s283 + $0x1b8] sm:$0xf]
      %v419 = vld [vmem:[%s283 + $0x1bc] sm:$0xf]
      %v420 = vld [vmem:[%s283 + $0x1c0] sm:$0xf]
      %v421 = vld [vmem:[%s283 + $0x1c4] sm:$0xf]
      %v422 = vld [vmem:[%s283 + $0x1c8] sm:$0xf]
      %v423 = vld [vmem:[%s283 + $0x1cc] sm:$0xf]
      %v424 = vld [vmem:[%s283 + $0x1d0] sm:$0xf]
      %v425 = vld [vmem:[%s283 + $0x1d4] sm:$0xf]
      %v426 = vld [vmem:[%s283 + $0x1d8] sm:$0xf]
      %v427 = vld [vmem:[%s283 + $0x1dc] sm:$0xf]
      %v428 = vld [vmem:[%s283 + $0x1e0] sm:$0xf]
      %v429 = vld [vmem:[%s283 + $0x1e4] sm:$0xf]
      %v430 = vld [vmem:[%s283 + $0x1e8] sm:$0xf]
      %v431 = vld [vmem:[%s283 + $0x1ec] sm:$0xf]
      %v432 = vld [vmem:[%s283 + $0x1f0] sm:$0xf]
      %v433 = vld [vmem:[%s283 + $0x1f4] sm:$0xf]
      %v434 = vld [vmem:[%s283 + $0x1f8] sm:$0xf]
      %v435 = vld [vmem:[%s283 + $0x1fc] sm:$0xf]
      %v436 = vld [vmem:[%s294] sm:$0xf]
      %v437 = vld [vmem:[%s294 + $0x4] sm:$0xf]
      %v566 = vunpack.c.l.b16 %v308
      %v567 = vunpack.c.l.b16 %v309
      %v568 = vunpack.c.l.b16 %v310
      %v569 = vunpack.c.l.b16 %v311
      %v570 = vunpack.c.l.b16 %v312
      %v571 = vunpack.c.l.b16 %v313
      %v572 = vunpack.c.l.b16 %v314
      %v573 = vunpack.c.l.b16 %v315
      %v574 = vunpack.c.l.b16 %v316
      %v575 = vunpack.c.l.b16 %v317
      %v576 = vunpack.c.l.b16 %v318
      %v577 = vunpack.c.l.b16 %v319
      %v578 = vunpack.c.l.b16 %v320
      %v579 = vunpack.c.l.b16 %v321
      %v580 = vunpack.c.l.b16 %v322
      %v581 = vunpack.c.l.b16 %v323
      %v582 = vunpack.c.l.b16 %v324
      %v583 = vunpack.c.l.b16 %v325
      %v584 = vunpack.c.l.b16 %v326
      %v585 = vunpack.c.l.b16 %v327
      %v586 = vunpack.c.l.b16 %v328
      %v587 = vunpack.c.l.b16 %v329
      %v588 = vunpack.c.l.b16 %v330
      %v589 = vunpack.c.l.b16 %v331
      %v590 = vunpack.c.l.b16 %v332
      %v591 = vunpack.c.l.b16 %v333
      %v592 = vunpack.c.l.b16 %v334
      %v593 = vunpack.c.l.b16 %v335
      %v594 = vunpack.c.l.b16 %v336
      %v595 = vunpack.c.l.b16 %v337
      %v596 = vunpack.c.l.b16 %v338
      %v597 = vunpack.c.l.b16 %v339
      %v598 = vunpack.c.l.b16 %v340
      %v599 = vunpack.c.l.b16 %v341
      %v600 = vunpack.c.l.b16 %v342
      %v601 = vunpack.c.l.b16 %v343
      %v602 = vunpack.c.l.b16 %v344
      %v603 = vunpack.c.l.b16 %v345
      %v604 = vunpack.c.l.b16 %v346
      %v605 = vunpack.c.l.b16 %v347
      %v606 = vunpack.c.l.b16 %v348
      %v607 = vunpack.c.l.b16 %v349
      %v608 = vunpack.c.l.b16 %v350
      %v609 = vunpack.c.l.b16 %v351
      %v610 = vunpack.c.l.b16 %v352
      %v611 = vunpack.c.l.b16 %v353
      %v612 = vunpack.c.l.b16 %v354
      %v613 = vunpack.c.l.b16 %v355
      %v614 = vunpack.c.l.b16 %v356
      %v615 = vunpack.c.l.b16 %v357
      %v616 = vunpack.c.l.b16 %v358
      %v617 = vunpack.c.l.b16 %v359
      %v618 = vunpack.c.l.b16 %v360
      %v619 = vunpack.c.l.b16 %v361
      %v620 = vunpack.c.l.b16 %v362
      %v621 = vunpack.c.l.b16 %v363
      %v622 = vunpack.c.l.b16 %v364
      %v623 = vunpack.c.l.b16 %v365
      %v624 = vunpack.c.l.b16 %v366
      %v625 = vunpack.c.l.b16 %v367
      %v626 = vunpack.c.l.b16 %v368
      %v627 = vunpack.c.l.b16 %v369
      %v628 = vunpack.c.l.b16 %v370
      %v629 = vunpack.c.l.b16 %v371
      %v630 = vunpack.c.l.b16 %v372
      %v631 = vunpack.c.l.b16 %v373
      %v632 = vunpack.c.l.b16 %v374
      %v633 = vunpack.c.l.b16 %v375
      %v634 = vunpack.c.l.b16 %v376
      %v635 = vunpack.c.l.b16 %v377
      %v636 = vunpack.c.l.b16 %v378
      %v637 = vunpack.c.l.b16 %v379
      %v638 = vunpack.c.l.b16 %v380
      %v639 = vunpack.c.l.b16 %v381
      %v640 = vunpack.c.l.b16 %v382
      %v641 = vunpack.c.l.b16 %v383
      %v642 = vunpack.c.l.b16 %v384
      %v643 = vunpack.c.l.b16 %v385
      %v644 = vunpack.c.l.b16 %v386
      %v645 = vunpack.c.l.b16 %v387
      %v646 = vunpack.c.l.b16 %v388
      %v647 = vunpack.c.l.b16 %v389
      %v648 = vunpack.c.l.b16 %v390
      %v649 = vunpack.c.l.b16 %v391
      %v650 = vunpack.c.l.b16 %v392
      %v651 = vunpack.c.l.b16 %v393
      %v652 = vunpack.c.l.b16 %v394
      %v653 = vunpack.c.l.b16 %v395
      %v654 = vunpack.c.l.b16 %v396
      %v655 = vunpack.c.l.b16 %v397
      %v656 = vunpack.c.l.b16 %v398
      %v657 = vunpack.c.l.b16 %v399
      %v658 = vunpack.c.l.b16 %v400
      %v659 = vunpack.c.l.b16 %v401
      %v660 = vunpack.c.l.b16 %v402
      %v661 = vunpack.c.l.b16 %v403
      %v662 = vunpack.c.l.b16 %v404
      %v663 = vunpack.c.l.b16 %v405
      %v664 = vunpack.c.l.b16 %v406
      %v665 = vunpack.c.l.b16 %v407
      %v666 = vunpack.c.l.b16 %v408
      %v667 = vunpack.c.l.b16 %v409
      %v668 = vunpack.c.l.b16 %v410
      %v669 = vunpack.c.l.b16 %v411
      %v670 = vunpack.c.l.b16 %v412
      %v671 = vunpack.c.l.b16 %v413
      %v672 = vunpack.c.l.b16 %v414
      %v673 = vunpack.c.l.b16 %v415
      %v674 = vunpack.c.l.b16 %v416
      %v675 = vunpack.c.l.b16 %v417
      %v676 = vunpack.c.l.b16 %v418
      %v677 = vunpack.c.l.b16 %v419
      %v678 = vunpack.c.l.b16 %v420
      %v679 = vunpack.c.l.b16 %v421
      %v680 = vunpack.c.l.b16 %v422
      %v681 = vunpack.c.l.b16 %v423
      %v682 = vunpack.c.l.b16 %v424
      %v683 = vunpack.c.l.b16 %v425
      %v684 = vunpack.c.l.b16 %v426
      %v685 = vunpack.c.l.b16 %v427
      %v686 = vunpack.c.l.b16 %v428
      %v687 = vunpack.c.l.b16 %v429
      %v688 = vunpack.c.l.b16 %v430
      %v689 = vunpack.c.l.b16 %v431
      %v690 = vunpack.c.l.b16 %v432
      %v691 = vunpack.c.l.b16 %v433
      %v692 = vunpack.c.l.b16 %v434
      %v693 = vunpack.c.l.b16 %v435
      %v694 = vpack.c.b16 %v567, %v566
      %v695 = vpack.c.b16 %v569, %v568
      %v696 = vpack.c.b16 %v571, %v570
      %v697 = vpack.c.b16 %v573, %v572
      %v698 = vpack.c.b16 %v575, %v574
      %v699 = vpack.c.b16 %v577, %v576
      %v700 = vpack.c.b16 %v579, %v578
      %v701 = vpack.c.b16 %v581, %v580
      %v702 = vpack.c.b16 %v583, %v582
      %v703 = vpack.c.b16 %v585, %v584
      %v704 = vpack.c.b16 %v587, %v586
      %v705 = vpack.c.b16 %v589, %v588
      %v706 = vpack.c.b16 %v591, %v590
      %v707 = vpack.c.b16 %v593, %v592
      %v708 = vpack.c.b16 %v595, %v594
      %v709 = vpack.c.b16 %v597, %v596
      %v710 = vpack.c.b16 %v599, %v598
      %v711 = vpack.c.b16 %v601, %v600
      %v712 = vpack.c.b16 %v603, %v602
      %v713 = vpack.c.b16 %v605, %v604
      %v714 = vpack.c.b16 %v607, %v606
      %v715 = vpack.c.b16 %v609, %v608
      %v716 = vpack.c.b16 %v611, %v610
      %v717 = vpack.c.b16 %v613, %v612
      %v718 = vpack.c.b16 %v615, %v614
      %v719 = vpack.c.b16 %v617, %v616
      %v720 = vpack.c.b16 %v619, %v618
      %v721 = vpack.c.b16 %v621, %v620
      %v722 = vpack.c.b16 %v623, %v622
      %v723 = vpack.c.b16 %v625, %v624
      %v724 = vpack.c.b16 %v627, %v626
      %v725 = vpack.c.b16 %v629, %v628
      %v726 = vpack.c.b16 %v631, %v630
      %v727 = vpack.c.b16 %v633, %v632
      %v728 = vpack.c.b16 %v635, %v634
      %v729 = vpack.c.b16 %v637, %v636
      %v730 = vpack.c.b16 %v639, %v638
      %v731 = vpack.c.b16 %v641, %v640
      %v732 = vpack.c.b16 %v643, %v642
      %v733 = vpack.c.b16 %v645, %v644
      %v734 = vpack.c.b16 %v647, %v646
      %v735 = vpack.c.b16 %v649, %v648
      %v736 = vpack.c.b16 %v651, %v650
      %v737 = vpack.c.b16 %v653, %v652
      %v738 = vpack.c.b16 %v655, %v654
      %v739 = vpack.c.b16 %v657, %v656
      %v740 = vpack.c.b16 %v659, %v658
      %v741 = vpack.c.b16 %v661, %v660
      %v742 = vpack.c.b16 %v663, %v662
      %v743 = vpack.c.b16 %v665, %v664
      %v744 = vpack.c.b16 %v667, %v666
      %v745 = vpack.c.b16 %v669, %v668
      %v746 = vpack.c.b16 %v671, %v670
      %v747 = vpack.c.b16 %v673, %v672
      %v748 = vpack.c.b16 %v675, %v674
      %v749 = vpack.c.b16 %v677, %v676
      %v750 = vpack.c.b16 %v679, %v678
      %v751 = vpack.c.b16 %v681, %v680
      %v752 = vpack.c.b16 %v683, %v682
      %v753 = vpack.c.b16 %v685, %v684
      %v754 = vpack.c.b16 %v687, %v686
      %v755 = vpack.c.b16 %v689, %v688
      %v756 = vpack.c.b16 %v691, %v690
      %v757 = vpack.c.b16 %v693, %v692
      %v760 = vunpack.c.l.b16 %v436
      %v761 = vunpack.c.l.b16 %v437
      %v762 = vpack.c.b16 %v761, %v760
      %v763 = vld [vmem:[%s2] sm:$0x3]
      %s764 = scalar_lea.vmem %s2, 2
      %v765 = vld [vmem:[%s764] sm:$0x3]
      %vm766 = vsmask.f32 7424
      %v768 = vshrl.u32 %v694, 16
      %v770 = vshll.u32 %v694, 16
      %v772 = vrot.slane %v770, 1
      %v773 = vor.u32 %v768, %v772
      %v775 = vshll.u32 %v695, 16
      %v777 = vrot.slane %v775, 1
      %v778 = vsel %vm766, %v773, %v777
      %v779 = vshrl.u32 %v695, 16
      %v781 = vor.u32 %v779, %v777
      %v783 = vshll.u32 %v696, 16
      %v785 = vrot.slane %v783, 1
      %v786 = vsel %vm766, %v781, %v785
      %v787 = vshrl.u32 %v696, 16
      %v789 = vor.u32 %v787, %v785
      %v791 = vshll.u32 %v697, 16
      %v793 = vrot.slane %v791, 1
      %v794 = vsel %vm766, %v789, %v793
      %v795 = vshrl.u32 %v697, 16
      %v797 = vor.u32 %v795, %v793
      %v799 = vshll.u32 %v698, 16
      %v801 = vrot.slane %v799, 1
      %v802 = vsel %vm766, %v797, %v801
      %v803 = vshrl.u32 %v698, 16
      %v805 = vor.u32 %v803, %v801
      %v807 = vshll.u32 %v699, 16
      %v809 = vrot.slane %v807, 1
      %v810 = vsel %vm766, %v805, %v809
      %v811 = vshrl.u32 %v699, 16
      %v813 = vor.u32 %v811, %v809
      %v815 = vshll.u32 %v700, 16
      %v817 = vrot.slane %v815, 1
      %v818 = vsel %vm766, %v813, %v817
      %v819 = vshrl.u32 %v700, 16
      %v821 = vor.u32 %v819, %v817
      %v823 = vshll.u32 %v701, 16
      %v825 = vrot.slane %v823, 1
      %v826 = vsel %vm766, %v821, %v825
      %v827 = vshrl.u32 %v701, 16
      %v829 = vor.u32 %v827, %v825
      %v831 = vshll.u32 %v702, 16
      %v833 = vrot.slane %v831, 1
      %v834 = vsel %vm766, %v829, %v833
      %v835 = vshrl.u32 %v702, 16
      %v837 = vor.u32 %v835, %v833
      %v839 = vshll.u32 %v703, 16
      %v841 = vrot.slane %v839, 1
      %v842 = vsel %vm766, %v837, %v841
      %v843 = vshrl.u32 %v703, 16
      %v845 = vor.u32 %v843, %v841
      %v847 = vshll.u32 %v704, 16
      %v849 = vrot.slane %v847, 1
      %v850 = vsel %vm766, %v845, %v849
      %v851 = vshrl.u32 %v704, 16
      %v853 = vor.u32 %v851, %v849
      %v855 = vshll.u32 %v705, 16
      %v857 = vrot.slane %v855, 1
      %v858 = vsel %vm766, %v853, %v857
      %v859 = vshrl.u32 %v705, 16
      %v861 = vor.u32 %v859, %v857
      %v863 = vshll.u32 %v706, 16
      %v865 = vrot.slane %v863, 1
      %v866 = vsel %vm766, %v861, %v865
      %v867 = vshrl.u32 %v706, 16
      %v869 = vor.u32 %v867, %v865
      %v871 = vshll.u32 %v707, 16
      %v873 = vrot.slane %v871, 1
      %v874 = vsel %vm766, %v869, %v873
      %v875 = vshrl.u32 %v707, 16
      %v877 = vor.u32 %v875, %v873
      %v879 = vshll.u32 %v708, 16
      %v881 = vrot.slane %v879, 1
      %v882 = vsel %vm766, %v877, %v881
      %v883 = vshrl.u32 %v708, 16
      %v885 = vor.u32 %v883, %v881
      %v887 = vshll.u32 %v709, 16
      %v889 = vrot.slane %v887, 1
      %v890 = vsel %vm766, %v885, %v889
      %v891 = vshrl.u32 %v709, 16
      %v893 = vor.u32 %v891, %v889
      %v895 = vshll.u32 %v710, 16
      %v897 = vrot.slane %v895, 1
      %v898 = vsel %vm766, %v893, %v897
      %v899 = vshrl.u32 %v710, 16
      %v901 = vor.u32 %v899, %v897
      %v903 = vshll.u32 %v711, 16
      %v905 = vrot.slane %v903, 1
      %v906 = vsel %vm766, %v901, %v905
      %v907 = vshrl.u32 %v711, 16
      %v909 = vor.u32 %v907, %v905
      %v911 = vshll.u32 %v712, 16
      %v913 = vrot.slane %v911, 1
      %v914 = vsel %vm766, %v909, %v913
      %v915 = vshrl.u32 %v712, 16
      %v917 = vor.u32 %v915, %v913
      %v919 = vshll.u32 %v713, 16
      %v921 = vrot.slane %v919, 1
      %v922 = vsel %vm766, %v917, %v921
      %v923 = vshrl.u32 %v713, 16
      %v925 = vor.u32 %v923, %v921
      %v927 = vshll.u32 %v714, 16
      %v929 = vrot.slane %v927, 1
      %v930 = vsel %vm766, %v925, %v929
      %v931 = vshrl.u32 %v714, 16
      %v933 = vor.u32 %v931, %v929
      %v935 = vshll.u32 %v715, 16
      %v937 = vrot.slane %v935, 1
      %v938 = vsel %vm766, %v933, %v937
      %v939 = vshrl.u32 %v715, 16
      %v941 = vor.u32 %v939, %v937
      %v943 = vshll.u32 %v716, 16
      %v945 = vrot.slane %v943, 1
      %v946 = vsel %vm766, %v941, %v945
      %v947 = vshrl.u32 %v716, 16
      %v949 = vor.u32 %v947, %v945
      %v951 = vshll.u32 %v717, 16
      %v953 = vrot.slane %v951, 1
      %v954 = vsel %vm766, %v949, %v953
      %v955 = vshrl.u32 %v717, 16
      %v957 = vor.u32 %v955, %v953
      %v959 = vshll.u32 %v718, 16
      %v961 = vrot.slane %v959, 1
      %v962 = vsel %vm766, %v957, %v961
      %v963 = vshrl.u32 %v718, 16
      %v965 = vor.u32 %v963, %v961
      %v967 = vshll.u32 %v719, 16
      %v969 = vrot.slane %v967, 1
      %v970 = vsel %vm766, %v965, %v969
      %v971 = vshrl.u32 %v719, 16
      %v973 = vor.u32 %v971, %v969
      %v975 = vshll.u32 %v720, 16
      %v977 = vrot.slane %v975, 1
      %v978 = vsel %vm766, %v973, %v977
      %v979 = vshrl.u32 %v720, 16
      %v981 = vor.u32 %v979, %v977
      %v983 = vshll.u32 %v721, 16
      %v985 = vrot.slane %v983, 1
      %v986 = vsel %vm766, %v981, %v985
      %v987 = vshrl.u32 %v721, 16
      %v989 = vor.u32 %v987, %v985
      %v991 = vshll.u32 %v722, 16
      %v993 = vrot.slane %v991, 1
      %v994 = vsel %vm766, %v989, %v993
      %v995 = vshrl.u32 %v722, 16
      %v997 = vor.u32 %v995, %v993
      %v999 = vshll.u32 %v723, 16
      %v1001 = vrot.slane %v999, 1
      %v1002 = vsel %vm766, %v997, %v1001
      %v1003 = vshrl.u32 %v723, 16
      %v1005 = vor.u32 %v1003, %v1001
      %v1007 = vshll.u32 %v724, 16
      %v1009 = vrot.slane %v1007, 1
      %v1010 = vsel %vm766, %v1005, %v1009
      %v1011 = vshrl.u32 %v724, 16
      %v1013 = vor.u32 %v1011, %v1009
      %v1015 = vshll.u32 %v725, 16
      %v1017 = vrot.slane %v1015, 1
      %v1018 = vsel %vm766, %v1013, %v1017
      %v1019 = vshrl.u32 %v725, 16
      %v1021 = vor.u32 %v1019, %v1017
      %v1023 = vshll.u32 %v726, 16
      %v1025 = vrot.slane %v1023, 1
      %v1026 = vsel %vm766, %v1021, %v1025
      %v1027 = vshrl.u32 %v726, 16
      %v1029 = vor.u32 %v1027, %v1025
      %v1031 = vshll.u32 %v727, 16
      %v1033 = vrot.slane %v1031, 1
      %v1034 = vsel %vm766, %v1029, %v1033
      %v1035 = vshrl.u32 %v727, 16
      %v1037 = vor.u32 %v1035, %v1033
      %v1039 = vshll.u32 %v728, 16
      %v1041 = vrot.slane %v1039, 1
      %v1042 = vsel %vm766, %v1037, %v1041
      %v1043 = vshrl.u32 %v728, 16
      %v1045 = vor.u32 %v1043, %v1041
      %v1047 = vshll.u32 %v729, 16
      %v1049 = vrot.slane %v1047, 1
      %v1050 = vsel %vm766, %v1045, %v1049
      %v1051 = vshrl.u32 %v729, 16
      %v1053 = vor.u32 %v1051, %v1049
      %v1055 = vshll.u32 %v730, 16
      %v1057 = vrot.slane %v1055, 1
      %v1058 = vsel %vm766, %v1053, %v1057
      %v1059 = vshrl.u32 %v730, 16
      %v1061 = vor.u32 %v1059, %v1057
      %v1063 = vshll.u32 %v731, 16
      %v1065 = vrot.slane %v1063, 1
      %v1066 = vsel %vm766, %v1061, %v1065
      %v1067 = vshrl.u32 %v731, 16
      %v1069 = vor.u32 %v1067, %v1065
      %v1071 = vshll.u32 %v732, 16
      %v1073 = vrot.slane %v1071, 1
      %v1074 = vsel %vm766, %v1069, %v1073
      %v1075 = vshrl.u32 %v732, 16
      %v1077 = vor.u32 %v1075, %v1073
      %v1079 = vshll.u32 %v733, 16
      %v1081 = vrot.slane %v1079, 1
      %v1082 = vsel %vm766, %v1077, %v1081
      %v1083 = vshrl.u32 %v733, 16
      %v1085 = vor.u32 %v1083, %v1081
      %v1087 = vshll.u32 %v734, 16
      %v1089 = vrot.slane %v1087, 1
      %v1090 = vsel %vm766, %v1085, %v1089
      %v1091 = vshrl.u32 %v734, 16
      %v1093 = vor.u32 %v1091, %v1089
      %v1095 = vshll.u32 %v735, 16
      %v1097 = vrot.slane %v1095, 1
      %v1098 = vsel %vm766, %v1093, %v1097
      %v1099 = vshrl.u32 %v735, 16
      %v1101 = vor.u32 %v1099, %v1097
      %v1103 = vshll.u32 %v736, 16
      %v1105 = vrot.slane %v1103, 1
      %v1106 = vsel %vm766, %v1101, %v1105
      %v1107 = vshrl.u32 %v736, 16
      %v1109 = vor.u32 %v1107, %v1105
      %v1111 = vshll.u32 %v737, 16
      %v1113 = vrot.slane %v1111, 1
      %v1114 = vsel %vm766, %v1109, %v1113
      %v1115 = vshrl.u32 %v737, 16
      %v1117 = vor.u32 %v1115, %v1113
      %v1119 = vshll.u32 %v738, 16
      %v1121 = vrot.slane %v1119, 1
      %v1122 = vsel %vm766, %v1117, %v1121
      %v1123 = vshrl.u32 %v738, 16
      %v1125 = vor.u32 %v1123, %v1121
      %v1127 = vshll.u32 %v739, 16
      %v1129 = vrot.slane %v1127, 1
      %v1130 = vsel %vm766, %v1125, %v1129
      %v1131 = vshrl.u32 %v739, 16
      %v1133 = vor.u32 %v1131, %v1129
      %v1135 = vshll.u32 %v740, 16
      %v1137 = vrot.slane %v1135, 1
      %v1138 = vsel %vm766, %v1133, %v1137
      %v1139 = vshrl.u32 %v740, 16
      %v1141 = vor.u32 %v1139, %v1137
      %v1143 = vshll.u32 %v741, 16
      %v1145 = vrot.slane %v1143, 1
      %v1146 = vsel %vm766, %v1141, %v1145
      %v1147 = vshrl.u32 %v741, 16
      %v1149 = vor.u32 %v1147, %v1145
      %v1151 = vshll.u32 %v742, 16
      %v1153 = vrot.slane %v1151, 1
      %v1154 = vsel %vm766, %v1149, %v1153
      %v1155 = vshrl.u32 %v742, 16
      %v1157 = vor.u32 %v1155, %v1153
      %v1159 = vshll.u32 %v743, 16
      %v1161 = vrot.slane %v1159, 1
      %v1162 = vsel %vm766, %v1157, %v1161
      %v1163 = vshrl.u32 %v743, 16
      %v1165 = vor.u32 %v1163, %v1161
      %v1167 = vshll.u32 %v744, 16
      %v1169 = vrot.slane %v1167, 1
      %v1170 = vsel %vm766, %v1165, %v1169
      %v1171 = vshrl.u32 %v744, 16
      %v1173 = vor.u32 %v1171, %v1169
      %v1175 = vshll.u32 %v745, 16
      %v1177 = vrot.slane %v1175, 1
      %v1178 = vsel %vm766, %v1173, %v1177
      %v1179 = vshrl.u32 %v745, 16
      %v1181 = vor.u32 %v1179, %v1177
      %v1183 = vshll.u32 %v746, 16
      %v1185 = vrot.slane %v1183, 1
      %v1186 = vsel %vm766, %v1181, %v1185
      %v1187 = vshrl.u32 %v746, 16
      %v1189 = vor.u32 %v1187, %v1185
      %v1191 = vshll.u32 %v747, 16
      %v1193 = vrot.slane %v1191, 1
      %v1194 = vsel %vm766, %v1189, %v1193
      %v1195 = vshrl.u32 %v747, 16
      %v1197 = vor.u32 %v1195, %v1193
      %v1199 = vshll.u32 %v748, 16
      %v1201 = vrot.slane %v1199, 1
      %v1202 = vsel %vm766, %v1197, %v1201
      %v1203 = vshrl.u32 %v748, 16
      %v1205 = vor.u32 %v1203, %v1201
      %v1207 = vshll.u32 %v749, 16
      %v1209 = vrot.slane %v1207, 1
      %v1210 = vsel %vm766, %v1205, %v1209
      %v1211 = vshrl.u32 %v749, 16
      %v1213 = vor.u32 %v1211, %v1209
      %v1215 = vshll.u32 %v750, 16
      %v1217 = vrot.slane %v1215, 1
      %v1218 = vsel %vm766, %v1213, %v1217
      %v1219 = vshrl.u32 %v750, 16
      %v1221 = vor.u32 %v1219, %v1217
      %v1223 = vshll.u32 %v751, 16
      %v1225 = vrot.slane %v1223, 1
      %v1226 = vsel %vm766, %v1221, %v1225
      %v1227 = vshrl.u32 %v751, 16
      %v1229 = vor.u32 %v1227, %v1225
      %v1231 = vshll.u32 %v752, 16
      %v1233 = vrot.slane %v1231, 1
      %v1234 = vsel %vm766, %v1229, %v1233
      %v1235 = vshrl.u32 %v752, 16
      %v1237 = vor.u32 %v1235, %v1233
      %v1239 = vshll.u32 %v753, 16
      %v1241 = vrot.slane %v1239, 1
      %v1242 = vsel %vm766, %v1237, %v1241
      %v1243 = vshrl.u32 %v753, 16
      %v1245 = vor.u32 %v1243, %v1241
      %v1247 = vshll.u32 %v754, 16
      %v1249 = vrot.slane %v1247, 1
      %v1250 = vsel %vm766, %v1245, %v1249
      %v1251 = vshrl.u32 %v754, 16
      %v1253 = vor.u32 %v1251, %v1249
      %v1255 = vshll.u32 %v755, 16
      %v1257 = vrot.slane %v1255, 1
      %v1258 = vsel %vm766, %v1253, %v1257
      %v1259 = vshrl.u32 %v755, 16
      %v1261 = vor.u32 %v1259, %v1257
      %v1263 = vshll.u32 %v756, 16
      %v1265 = vrot.slane %v1263, 1
      %v1266 = vsel %vm766, %v1261, %v1265
      %v1267 = vshrl.u32 %v756, 16
      %v1269 = vor.u32 %v1267, %v1265
      %v1271 = vshll.u32 %v757, 16
      %v1273 = vrot.slane %v1271, 1
      %v1274 = vsel %vm766, %v1269, %v1273
      %v1275 = vshrl.u32 %v757, 16
      %v1277 = vor.u32 %v1275, %v1273
      %v1279 = vshll.u32 %v762, 16
      %v1281 = vrot.slane %v1279, 1
      %v1282 = vsel %vm766, %v1277, %v1281
      %vm1283 = vcmask 31744
      %v1285 = vsel %vm1283, %v778, 0
      %v1288 = vsel %vm1283, %v786, 0
      %v1291 = vsel %vm1283, %v794, 0
      %v1294 = vsel %vm1283, %v802, 0
      %v1297 = vsel %vm1283, %v810, 0
      %v1300 = vsel %vm1283, %v818, 0
      %v1303 = vsel %vm1283, %v826, 0
      %v1306 = vsel %vm1283, %v834, 0
      %v1309 = vsel %vm1283, %v842, 0
      %v1312 = vsel %vm1283, %v850, 0
      %v1315 = vsel %vm1283, %v858, 0
      %v1318 = vsel %vm1283, %v866, 0
      %v1321 = vsel %vm1283, %v874, 0
      %v1324 = vsel %vm1283, %v882, 0
      %v1327 = vsel %vm1283, %v890, 0
      %v1330 = vsel %vm1283, %v898, 0
      %v1333 = vsel %vm1283, %v906, 0
      %v1336 = vsel %vm1283, %v914, 0
      %v1339 = vsel %vm1283, %v922, 0
      %v1342 = vsel %vm1283, %v930, 0
      %v1345 = vsel %vm1283, %v938, 0
      %v1348 = vsel %vm1283, %v946, 0
      %v1351 = vsel %vm1283, %v954, 0
      %v1354 = vsel %vm1283, %v962, 0
      %v1357 = vsel %vm1283, %v970, 0
      %v1360 = vsel %vm1283, %v978, 0
      %v1363 = vsel %vm1283, %v986, 0
      %v1366 = vsel %vm1283, %v994, 0
      %v1369 = vsel %vm1283, %v1002, 0
      %v1372 = vsel %vm1283, %v1010, 0
      %v1375 = vsel %vm1283, %v1018, 0
      %v1378 = vsel %vm1283, %v1026, 0
      %v1381 = vsel %vm1283, %v1034, 0
      %v1384 = vsel %vm1283, %v1042, 0
      %v1387 = vsel %vm1283, %v1050, 0
      %v1390 = vsel %vm1283, %v1058, 0
      %v1393 = vsel %vm1283, %v1066, 0
      %v1396 = vsel %vm1283, %v1074, 0
      %v1399 = vsel %vm1283, %v1082, 0
      %v1402 = vsel %vm1283, %v1090, 0
      %v1405 = vsel %vm1283, %v1098, 0
      %v1408 = vsel %vm1283, %v1106, 0
      %v1411 = vsel %vm1283, %v1114, 0
      %v1414 = vsel %vm1283, %v1122, 0
      %v1417 = vsel %vm1283, %v1130, 0
      %v1420 = vsel %vm1283, %v1138, 0
      %v1423 = vsel %vm1283, %v1146, 0
      %v1426 = vsel %vm1283, %v1154, 0
      %v1429 = vsel %vm1283, %v1162, 0
      %v1432 = vsel %vm1283, %v1170, 0
      %v1435 = vsel %vm1283, %v1178, 0
      %v1438 = vsel %vm1283, %v1186, 0
      %v1441 = vsel %vm1283, %v1194, 0
      %v1444 = vsel %vm1283, %v1202, 0
      %v1447 = vsel %vm1283, %v1210, 0
      %v1450 = vsel %vm1283, %v1218, 0
      %v1453 = vsel %vm1283, %v1226, 0
      %v1456 = vsel %vm1283, %v1234, 0
      %v1459 = vsel %vm1283, %v1242, 0
      %v1462 = vsel %vm1283, %v1250, 0
      %v1465 = vsel %vm1283, %v1258, 0
      %v1468 = vsel %vm1283, %v1266, 0
      %v1471 = vsel %vm1283, %v1274, 0
      %v1474 = vsel %vm1283, %v1282, 0
      %vm1476 = vcmask 1041408
      %v1478 = vsel %vm1476, %v765, 0
      %1480 = vmatprep.subr.bf16.mxu0 0
      %1481 = vmatpush1.bf16.msra.mxu0 %v1478
      %1482 = vmatprep.subr.bf16.mxu0 0
      %1483 = vmatpush1.bf16.msra.mxu0 0
      %1484 = vmatprep.subr.bf16.mxu0 0
      %1485 = vmatpush1.bf16.msra.mxu0 0
      %1486 = vmatprep.subr.bf16.mxu0 0
      %1487 = vmatpush1.bf16.msra.mxu0 0
      %1488 = vmatprep.subr.bf16.mxu0 0
      %1489 = vmatpush1.bf16.msra.mxu0 0
      %1490 = vmatprep.subr.bf16.mxu0 0
      %1491 = vmatpush1.bf16.msra.mxu0 0
      %1492 = vmatprep.subr.bf16.mxu0 0
      %1493 = vmatpush1.bf16.msra.mxu0 0
      %1494 = vmatprep.subr.bf16.mxu0 0
      %1495 = vmatpush1.bf16.msra.mxu0 0
      %1496 = vmatprep.subr.bf16.mxu0 0
      %1497 = vmatpush1.bf16.msra.mxu0 0
      %1498 = vmatprep.subr.bf16.mxu0 0
      %1499 = vmatpush1.bf16.msra.mxu0 0
      %1500 = vmatprep.subr.bf16.mxu0 0
      %1501 = vmatpush1.bf16.msra.mxu0 0
      %1502 = vmatprep.subr.bf16.mxu0 0
      %1503 = vmatpush1.bf16.msra.mxu0 0
      %1504 = vmatprep.subr.bf16.mxu0 0
      %1505 = vmatpush1.bf16.msra.mxu0 0
      %1506 = vmatprep.subr.bf16.mxu0 0
      %1507 = vmatpush1.bf16.msra.mxu0 0
      %1508 = vmatprep.subr.bf16.mxu0 0
      %1509 = vmatpush1.bf16.msra.mxu0 0
      %1510 = vmatprep.subr.bf16.mxu0 0
      %1511 = vmatpush1.bf16.msra.mxu0 0
      %1512 = vmatprep.mubr.bf16.mxu0 0
      %1513 = vmatmul.mubr.bf16.gmra.mrb[0].mxu0 %v1285
      %v1514 = vpop.f32.mrb[0].mxu0
      %v1515 = vadd.f32 0.0, %v1514
      %v1516 = vpop.f32.mrb[0].mxu0
      %v1517 = vpop.f32.mrb[0].mxu0
      %v1518 = vadd.f32 0.0, %v1517
      %v1519 = vpop.f32.mrb[0].mxu0
      %1520 = vmatprep.mubr.bf16.mxu0 0
      %1521 = vmatmul.mubr.bf16.gmra.mrb[0].mxu0 %v1288
      %v1522 = vpop.f32.mrb[0].mxu0
      %v1523 = vadd.f32 0.0, %v1522
      %v1524 = vpop.f32.mrb[0].mxu0
      %v1525 = vpop.f32.mrb[0].mxu0
      %v1526 = vadd.f32 0.0, %v1525
      %v1527 = vpop.f32.mrb[0].mxu0
      %1528 = vmatprep.mubr.bf16.mxu0 0
      %1529 = vmatmul.mubr.bf16.gmra.mrb[0].mxu0 %v1291
      %v1530 = vpop.f32.mrb[0].mxu0
      %v1531 = vadd.f32 0.0, %v1530
      %v1532 = vpop.f32.mrb[0].mxu0
      %v1533 = vpop.f32.mrb[0].mxu0
      %v1534 = vadd.f32 0.0, %v1533
      %v1535 = vpop.f32.mrb[0].mxu0
      %1536 = vmatprep.mubr.bf16.mxu0 0
      %1537 = vmatmul.mubr.bf16.gmra.mrb[0].mxu0 %v1294
      %v1538 = vpop.f32.mrb[0].mxu0
      %v1539 = vadd.f32 0.0, %v1538
      %v1540 = vpop.f32.mrb[0].mxu0
      %v1541 = vpop.f32.mrb[0].mxu0
      %v1542 = vadd.f32 0.0, %v1541
      %v1543 = vpop.f32.mrb[0].mxu0
      %1544 = vmatprep.mubr.bf16.mxu0 0
      %1545 = vmatmul.mubr.bf16.gmra.mrb[0].mxu0 %v1297
      %v1546 = vpop.f32.mrb[0].mxu0
      %v1547 = vadd.f32 0.0, %v1546
      %v1548 = vpop.f32.mrb[0].mxu0
      %v1549 = vpop.f32.mrb[0].mxu0
      %v1550 = vadd.f32 0.0, %v1549
      %v1551 = vpop.f32.mrb[0].mxu0
      %1552 = vmatprep.mubr.bf16.mxu0 0
      %1553 = vmatmul.mubr.bf16.gmra.mrb[0].mxu0 %v1300
      %v1554 = vpop.f32.mrb[0].mxu0
      %v1555 = vadd.f32 0.0, %v1554
      %v1556 = vpop.f32.mrb[0].mxu0
      %v1557 = vpop.f32.mrb[0].mxu0
      %v1558 = vadd.f32 0.0, %v1557
      %v1559 = vpop.f32.mrb[0].mxu0
      %1560 = vmatprep.mubr.bf16.mxu0 0
      %1561 = vmatmul.mubr.bf16.gmra.mrb[0].mxu0 %v1303
      %v1562 = vpop.f32.mrb[0].mxu0
      %v1563 = vadd.f32 0.0, %v1562
      %v1564 = vpop.f32.mrb[0].mxu0
      %v1565 = vpop.f32.mrb[0].mxu0
      %v1566 = vadd.f32 0.0, %v1565
      %v1567 = vpop.f32.mrb[0].mxu0
      %1568 = vmatprep.mubr.bf16.mxu0 0
      %1569 = vmatmul.mubr.bf16.gmra.mrb[0].mxu0 %v1306
      %v1570 = vpop.f32.mrb[0].mxu0
      %v1571 = vadd.f32 0.0, %v1570
      %v1572 = vpop.f32.mrb[0].mxu0
      %v1573 = vpop.f32.mrb[0].mxu0
      %v1574 = vadd.f32 0.0, %v1573
      %v1575 = vpop.f32.mrb[0].mxu0
      %1576 = vmatprep.mubr.bf16.mxu0 0
      %1577 = vmatmul.mubr.bf16.gmra.mrb[0].mxu0 %v1309
      %v1578 = vpop.f32.mrb[0].mxu0
      %v1579 = vadd.f32 0.0, %v1578
      %v1580 = vpop.f32.mrb[0].mxu0
      %v1581 = vpop.f32.mrb[0].mxu0
      %v1582 = vadd.f32 0.0, %v1581
      %v1583 = vpop.f32.mrb[0].mxu0
      %1584 = vmatprep.mubr.bf16.mxu0 0
      %1585 = vmatmul.mubr.bf16.gmra.mrb[0].mxu0 %v1312
      %v1586 = vpop.f32.mrb[0].mxu0
      %v1587 = vadd.f32 0.0, %v1586
      %v1588 = vpop.f32.mrb[0].mxu0
      %v1589 = vpop.f32.mrb[0].mxu0
      %v1590 = vadd.f32 0.0, %v1589
      %v1591 = vpop.f32.mrb[0].mxu0
      %1592 = vmatprep.mubr.bf16.mxu0 0
      %1593 = vmatmul.mubr.bf16.gmra.mrb[0].mxu0 %v1315
      %v1594 = vpop.f32.mrb[0].mxu0
      %v1595 = vadd.f32 0.0, %v1594
      %v1596 = vpop.f32.mrb[0].mxu0
      %v1597 = vpop.f32.mrb[0].mxu0
      %v1598 = vadd.f32 0.0, %v1597
      %v1599 = vpop.f32.mrb[0].mxu0
      %1600 = vmatprep.mubr.bf16.mxu0 0
      %1601 = vmatmul.mubr.bf16.gmra.mrb[0].mxu0 %v1318
      %v1602 = vpop.f32.mrb[0].mxu0
      %v1603 = vadd.f32 0.0, %v1602
      %v1604 = vpop.f32.mrb[0].mxu0
      %v1605 = vpop.f32.mrb[0].mxu0
      %v1606 = vadd.f32 0.0, %v1605
      %v1607 = vpop.f32.mrb[0].mxu0
      %1608 = vmatprep.mubr.bf16.mxu0 0
      %1609 = vmatmul.mubr.bf16.gmra.mrb[0].mxu0 %v1321
      %v1610 = vpop.f32.mrb[0].mxu0
      %v1611 = vadd.f32 0.0, %v1610
      %v1612 = vpop.f32.mrb[0].mxu0
      %v1613 = vpop.f32.mrb[0].mxu0
      %v1614 = vadd.f32 0.0, %v1613
      %v1615 = vpop.f32.mrb[0].mxu0
      %1616 = vmatprep.mubr.bf16.mxu0 0
      %1617 = vmatmul.mubr.bf16.gmra.mrb[0].mxu0 %v1324
      %v1618 = vpop.f32.mrb[0].mxu0
      %v1619 = vadd.f32 0.0, %v1618
      %v1620 = vpop.f32.mrb[0].mxu0
      %v1621 = vpop.f32.mrb[0].mxu0
      %v1622 = vadd.f32 0.0, %v1621
      %v1623 = vpop.f32.mrb[0].mxu0
      %1624 = vmatprep.mubr.bf16.mxu0 0
      %1625 = vmatmul.mubr.bf16.gmra.mrb[0].mxu0 %v1327
      %v1626 = vpop.f32.mrb[0].mxu0
      %v1627 = vadd.f32 0.0, %v1626
      %v1628 = vpop.f32.mrb[0].mxu0
      %v1629 = vpop.f32.mrb[0].mxu0
      %v1630 = vadd.f32 0.0, %v1629
      %v1631 = vpop.f32.mrb[0].mxu0
      %1632 = vmatprep.mubr.bf16.mxu0 0
      %1633 = vmatmul.mubr.bf16.gmra.mrb[0].mxu0 %v1330
      %v1634 = vpop.f32.mrb[0].mxu0
      %v1635 = vadd.f32 0.0, %v1634
      %v1636 = vpop.f32.mrb[0].mxu0
      %v1637 = vpop.f32.mrb[0].mxu0
      %v1638 = vadd.f32 0.0, %v1637
      %v1639 = vpop.f32.mrb[0].mxu0
      %1640 = vmatprep.mubr.bf16.mxu0 0
      %1641 = vmatmul.mubr.bf16.gmra.mrb[0].mxu0 %v1333
      %v1642 = vpop.f32.mrb[0].mxu0
      %v1643 = vadd.f32 0.0, %v1642
      %v1644 = vpop.f32.mrb[0].mxu0
      %v1645 = vpop.f32.mrb[0].mxu0
      %v1646 = vadd.f32 0.0, %v1645
      %v1647 = vpop.f32.mrb[0].mxu0
      %1648 = vmatprep.mubr.bf16.mxu0 0
      %1649 = vmatmul.mubr.bf16.gmra.mrb[0].mxu0 %v1336
      %v1650 = vpop.f32.mrb[0].mxu0
      %v1651 = vadd.f32 0.0, %v1650
      %v1652 = vpop.f32.mrb[0].mxu0
      %v1653 = vpop.f32.mrb[0].mxu0
      %v1654 = vadd.f32 0.0, %v1653
      %v1655 = vpop.f32.mrb[0].mxu0
      %1656 = vmatprep.mubr.bf16.mxu0 0
      %1657 = vmatmul.mubr.bf16.gmra.mrb[0].mxu0 %v1339
      %v1658 = vpop.f32.mrb[0].mxu0
      %v1659 = vadd.f32 0.0, %v1658
      %v1660 = vpop.f32.mrb[0].mxu0
      %v1661 = vpop.f32.mrb[0].mxu0
      %v1662 = vadd.f32 0.0, %v1661
      %v1663 = vpop.f32.mrb[0].mxu0
      %1664 = vmatprep.mubr.bf16.mxu0 0
      %1665 = vmatmul.mubr.bf16.gmra.mrb[0].mxu0 %v1342
      %v1666 = vpop.f32.mrb[0].mxu0
      %v1667 = vadd.f32 0.0, %v1666
      %v1668 = vpop.f32.mrb[0].mxu0
      %v1669 = vpop.f32.mrb[0].mxu0
      %v1670 = vadd.f32 0.0, %v1669
      %v1671 = vpop.f32.mrb[0].mxu0
      %1672 = vmatprep.mubr.bf16.mxu0 0
      %1673 = vmatmul.mubr.bf16.gmra.mrb[0].mxu0 %v1345
      %v1674 = vpop.f32.mrb[0].mxu0
      %v1675 = vadd.f32 0.0, %v1674
      %v1676 = vpop.f32.mrb[0].mxu0
      %v1677 = vpop.f32.mrb[0].mxu0
      %v1678 = vadd.f32 0.0, %v1677
      %v1679 = vpop.f32.mrb[0].mxu0
      %1680 = vmatprep.mubr.bf16.mxu0 0
      %1681 = vmatmul.mubr.bf16.gmra.mrb[0].mxu0 %v1348
      %v1682 = vpop.f32.mrb[0].mxu0
      %v1683 = vadd.f32 0.0, %v1682
      %v1684 = vpop.f32.mrb[0].mxu0
      %v1685 = vpop.f32.mrb[0].mxu0
      %v1686 = vadd.f32 0.0, %v1685
      %v1687 = vpop.f32.mrb[0].mxu0
      %1688 = vmatprep.mubr.bf16.mxu0 0
      %1689 = vmatmul.mubr.bf16.gmra.mrb[0].mxu0 %v1351
      %v1690 = vpop.f32.mrb[0].mxu0
      %v1691 = vadd.f32 0.0, %v1690
      %v1692 = vpop.f32.mrb[0].mxu0
      %v1693 = vpop.f32.mrb[0].mxu0
      %v1694 = vadd.f32 0.0, %v1693
      %v1695 = vpop.f32.mrb[0].mxu0
      %1696 = vmatprep.mubr.bf16.mxu0 0
      %1697 = vmatmul.mubr.bf16.gmra.mrb[0].mxu0 %v1354
      %v1698 = vpop.f32.mrb[0].mxu0
      %v1699 = vadd.f32 0.0, %v1698
      %v1700 = vpop.f32.mrb[0].mxu0
      %v1701 = vpop.f32.mrb[0].mxu0
      %v1702 = vadd.f32 0.0, %v1701
      %v1703 = vpop.f32.mrb[0].mxu0
      %1704 = vmatprep.mubr.bf16.mxu0 0
      %1705 = vmatmul.mubr.bf16.gmra.mrb[0].mxu0 %v1357
      %v1706 = vpop.f32.mrb[0].mxu0
      %v1707 = vadd.f32 0.0, %v1706
      %v1708 = vpop.f32.mrb[0].mxu0
      %v1709 = vpop.f32.mrb[0].mxu0
      %v1710 = vadd.f32 0.0, %v1709
      %v1711 = vpop.f32.mrb[0].mxu0
      %1712 = vmatprep.mubr.bf16.mxu0 0
      %1713 = vmatmul.mubr.bf16.gmra.mrb[0].mxu0 %v1360
      %v1714 = vpop.f32.mrb[0].mxu0
      %v1715 = vadd.f32 0.0, %v1714
      %v1716 = vpop.f32.mrb[0].mxu0
      %v1717 = vpop.f32.mrb[0].mxu0
      %v1718 = vadd.f32 0.0, %v1717
      %v1719 = vpop.f32.mrb[0].mxu0
      %1720 = vmatprep.mubr.bf16.mxu0 0
      %1721 = vmatmul.mubr.bf16.gmra.mrb[0].mxu0 %v1363
      %v1722 = vpop.f32.mrb[0].mxu0
      %v1723 = vadd.f32 0.0, %v1722
      %v1724 = vpop.f32.mrb[0].mxu0
      %v1725 = vpop.f32.mrb[0].mxu0
      %v1726 = vadd.f32 0.0, %v1725
      %v1727 = vpop.f32.mrb[0].mxu0
      %1728 = vmatprep.mubr.bf16.mxu0 0
      %1729 = vmatmul.mubr.bf16.gmra.mrb[0].mxu0 %v1366
      %v1730 = vpop.f32.mrb[0].mxu0
      %v1731 = vadd.f32 0.0, %v1730
      %v1732 = vpop.f32.mrb[0].mxu0
      %v1733 = vpop.f32.mrb[0].mxu0
      %v1734 = vadd.f32 0.0, %v1733
      %v1735 = vpop.f32.mrb[0].mxu0
      %1736 = vmatprep.mubr.bf16.mxu0 0
      %1737 = vmatmul.mubr.bf16.gmra.mrb[0].mxu0 %v1369
      %v1738 = vpop.f32.mrb[0].mxu0
      %v1739 = vadd.f32 0.0, %v1738
      %v1740 = vpop.f32.mrb[0].mxu0
      %v1741 = vpop.f32.mrb[0].mxu0
      %v1742 = vadd.f32 0.0, %v1741
      %v1743 = vpop.f32.mrb[0].mxu0
      %1744 = vmatprep.mubr.bf16.mxu0 0
      %1745 = vmatmul.mubr.bf16.gmra.mrb[0].mxu0 %v1372
      %v1746 = vpop.f32.mrb[0].mxu0
      %v1747 = vadd.f32 0.0, %v1746
      %v1748 = vpop.f32.mrb[0].mxu0
      %v1749 = vpop.f32.mrb[0].mxu0
      %v1750 = vadd.f32 0.0, %v1749
      %v1751 = vpop.f32.mrb[0].mxu0
      %1752 = vmatprep.mubr.bf16.mxu0 0
      %1753 = vmatmul.mubr.bf16.gmra.mrb[0].mxu0 %v1375
      %v1754 = vpop.f32.mrb[0].mxu0
      %v1755 = vadd.f32 0.0, %v1754
      %v1756 = vpop.f32.mrb[0].mxu0
      %v1757 = vpop.f32.mrb[0].mxu0
      %v1758 = vadd.f32 0.0, %v1757
      %v1759 = vpop.f32.mrb[0].mxu0
      %1760 = vmatprep.mubr.bf16.mxu0 0
      %1761 = vmatmul.mubr.bf16.gmra.mrb[0].mxu0 %v1378
      %v1762 = vpop.f32.mrb[0].mxu0
      %v1763 = vadd.f32 0.0, %v1762
      %v1764 = vpop.f32.mrb[0].mxu0
      %v1765 = vpop.f32.mrb[0].mxu0
      %v1766 = vadd.f32 0.0, %v1765
      %v1767 = vpop.f32.mrb[0].mxu0
      %1768 = vmatprep.mubr.bf16.mxu0 0
      %1769 = vmatmul.mubr.bf16.gmra.mrb[0].mxu0 %v1381
      %v1770 = vpop.f32.mrb[0].mxu0
      %v1771 = vadd.f32 0.0, %v1770
      %v1772 = vpop.f32.mrb[0].mxu0
      %v1773 = vpop.f32.mrb[0].mxu0
      %v1774 = vadd.f32 0.0, %v1773
      %v1775 = vpop.f32.mrb[0].mxu0
      %1776 = vmatprep.mubr.bf16.mxu0 0
      %1777 = vmatmul.mubr.bf16.gmra.mrb[0].mxu0 %v1384
      %v1778 = vpop.f32.mrb[0].mxu0
      %v1779 = vadd.f32 0.0, %v1778
      %v1780 = vpop.f32.mrb[0].mxu0
      %v1781 = vpop.f32.mrb[0].mxu0
      %v1782 = vadd.f32 0.0, %v1781
      %v1783 = vpop.f32.mrb[0].mxu0
      %1784 = vmatprep.mubr.bf16.mxu0 0
      %1785 = vmatmul.mubr.bf16.gmra.mrb[0].mxu0 %v1387
      %v1786 = vpop.f32.mrb[0].mxu0
      %v1787 = vadd.f32 0.0, %v1786
      %v1788 = vpop.f32.mrb[0].mxu0
      %v1789 = vpop.f32.mrb[0].mxu0
      %v1790 = vadd.f32 0.0, %v1789
      %v1791 = vpop.f32.mrb[0].mxu0
      %1792 = vmatprep.mubr.bf16.mxu0 0
      %1793 = vmatmul.mubr.bf16.gmra.mrb[0].mxu0 %v1390
      %v1794 = vpop.f32.mrb[0].mxu0
      %v1795 = vadd.f32 0.0, %v1794
      %v1796 = vpop.f32.mrb[0].mxu0
      %v1797 = vpop.f32.mrb[0].mxu0
      %v1798 = vadd.f32 0.0, %v1797
      %v1799 = vpop.f32.mrb[0].mxu0
      %1800 = vmatprep.mubr.bf16.mxu0 0
      %1801 = vmatmul.mubr.bf16.gmra.mrb[0].mxu0 %v1393
      %v1802 = vpop.f32.mrb[0].mxu0
      %v1803 = vadd.f32 0.0, %v1802
      %v1804 = vpop.f32.mrb[0].mxu0
      %v1805 = vpop.f32.mrb[0].mxu0
      %v1806 = vadd.f32 0.0, %v1805
      %v1807 = vpop.f32.mrb[0].mxu0
      %1808 = vmatprep.mubr.bf16.mxu0 0
      %1809 = vmatmul.mubr.bf16.gmra.mrb[0].mxu0 %v1396
      %v1810 = vpop.f32.mrb[0].mxu0
      %v1811 = vadd.f32 0.0, %v1810
      %v1812 = vpop.f32.mrb[0].mxu0
      %v1813 = vpop.f32.mrb[0].mxu0
      %v1814 = vadd.f32 0.0, %v1813
      %v1815 = vpop.f32.mrb[0].mxu0
      %1816 = vmatprep.mubr.bf16.mxu0 0
      %1817 = vmatmul.mubr.bf16.gmra.mrb[0].mxu0 %v1399
      %v1818 = vpop.f32.mrb[0].mxu0
      %v1819 = vadd.f32 0.0, %v1818
      %v1820 = vpop.f32.mrb[0].mxu0
      %v1821 = vpop.f32.mrb[0].mxu0
      %v1822 = vadd.f32 0.0, %v1821
      %v1823 = vpop.f32.mrb[0].mxu0
      %1824 = vmatprep.mubr.bf16.mxu0 0
      %1825 = vmatmul.mubr.bf16.gmra.mrb[0].mxu0 %v1402
      %v1826 = vpop.f32.mrb[0].mxu0
      %v1827 = vadd.f32 0.0, %v1826
      %v1828 = vpop.f32.mrb[0].mxu0
      %v1829 = vpop.f32.mrb[0].mxu0
      %v1830 = vadd.f32 0.0, %v1829
      %v1831 = vpop.f32.mrb[0].mxu0
      %1832 = vmatprep.mubr.bf16.mxu0 0
      %1833 = vmatmul.mubr.bf16.gmra.mrb[0].mxu0 %v1405
      %v1834 = vpop.f32.mrb[0].mxu0
      %v1835 = vadd.f32 0.0, %v1834
      %v1836 = vpop.f32.mrb[0].mxu0
      %v1837 = vpop.f32.mrb[0].mxu0
      %v1838 = vadd.f32 0.0, %v1837
      %v1839 = vpop.f32.mrb[0].mxu0
      %1840 = vmatprep.mubr.bf16.mxu0 0
      %1841 = vmatmul.mubr.bf16.gmra.mrb[0].mxu0 %v1408
      %v1842 = vpop.f32.mrb[0].mxu0
      %v1843 = vadd.f32 0.0, %v1842
      %v1844 = vpop.f32.mrb[0].mxu0
      %v1845 = vpop.f32.mrb[0].mxu0
      %v1846 = vadd.f32 0.0, %v1845
      %v1847 = vpop.f32.mrb[0].mxu0
      %1848 = vmatprep.mubr.bf16.mxu0 0
      %1849 = vmatmul.mubr.bf16.gmra.mrb[0].mxu0 %v1411
      %v1850 = vpop.f32.mrb[0].mxu0
      %v1851 = vadd.f32 0.0, %v1850
      %v1852 = vpop.f32.mrb[0].mxu0
      %v1853 = vpop.f32.mrb[0].mxu0
      %v1854 = vadd.f32 0.0, %v1853
      %v1855 = vpop.f32.mrb[0].mxu0
      %1856 = vmatprep.mubr.bf16.mxu0 0
      %1857 = vmatmul.mubr.bf16.gmra.mrb[0].mxu0 %v1414
      %v1858 = vpop.f32.mrb[0].mxu0
      %v1859 = vadd.f32 0.0, %v1858
      %v1860 = vpop.f32.mrb[0].mxu0
      %v1861 = vpop.f32.mrb[0].mxu0
      %v1862 = vadd.f32 0.0, %v1861
      %v1863 = vpop.f32.mrb[0].mxu0
      %1864 = vmatprep.mubr.bf16.mxu0 0
      %1865 = vmatmul.mubr.bf16.gmra.mrb[0].mxu0 %v1417
      %v1866 = vpop.f32.mrb[0].mxu0
      %v1867 = vadd.f32 0.0, %v1866
      %v1868 = vpop.f32.mrb[0].mxu0
      %v1869 = vpop.f32.mrb[0].mxu0
      %v1870 = vadd.f32 0.0, %v1869
      %v1871 = vpop.f32.mrb[0].mxu0
      %1872 = vmatprep.mubr.bf16.mxu0 0
      %1873 = vmatmul.mubr.bf16.gmra.mrb[0].mxu0 %v1420
      %v1874 = vpop.f32.mrb[0].mxu0
      %v1875 = vadd.f32 0.0, %v1874
      %v1876 = vpop.f32.mrb[0].mxu0
      %v1877 = vpop.f32.mrb[0].mxu0
      %v1878 = vadd.f32 0.0, %v1877
      %v1879 = vpop.f32.mrb[0].mxu0
      %1880 = vmatprep.mubr.bf16.mxu0 0
      %1881 = vmatmul.mubr.bf16.gmra.mrb[0].mxu0 %v1423
      %v1882 = vpop.f32.mrb[0].mxu0
      %v1883 = vadd.f32 0.0, %v1882
      %v1884 = vpop.f32.mrb[0].mxu0
      %v1885 = vpop.f32.mrb[0].mxu0
      %v1886 = vadd.f32 0.0, %v1885
      %v1887 = vpop.f32.mrb[0].mxu0
      %1888 = vmatprep.mubr.bf16.mxu0 0
      %1889 = vmatmul.mubr.bf16.gmra.mrb[0].mxu0 %v1426
      %v1890 = vpop.f32.mrb[0].mxu0
      %v1891 = vadd.f32 0.0, %v1890
      %v1892 = vpop.f32.mrb[0].mxu0
      %v1893 = vpop.f32.mrb[0].mxu0
      %v1894 = vadd.f32 0.0, %v1893
      %v1895 = vpop.f32.mrb[0].mxu0
      %1896 = vmatprep.mubr.bf16.mxu0 0
      %1897 = vmatmul.mubr.bf16.gmra.mrb[0].mxu0 %v1429
      %v1898 = vpop.f32.mrb[0].mxu0
      %v1899 = vadd.f32 0.0, %v1898
      %v1900 = vpop.f32.mrb[0].mxu0
      %v1901 = vpop.f32.mrb[0].mxu0
      %v1902 = vadd.f32 0.0, %v1901
      %v1903 = vpop.f32.mrb[0].mxu0
      %1904 = vmatprep.mubr.bf16.mxu0 0
      %1905 = vmatmul.mubr.bf16.gmra.mrb[0].mxu0 %v1432
      %v1906 = vpop.f32.mrb[0].mxu0
      %v1907 = vadd.f32 0.0, %v1906
      %v1908 = vpop.f32.mrb[0].mxu0
      %v1909 = vpop.f32.mrb[0].mxu0
      %v1910 = vadd.f32 0.0, %v1909
      %v1911 = vpop.f32.mrb[0].mxu0
      %1912 = vmatprep.mubr.bf16.mxu0 0
      %1913 = vmatmul.mubr.bf16.gmra.mrb[0].mxu0 %v1435
      %v1914 = vpop.f32.mrb[0].mxu0
      %v1915 = vadd.f32 0.0, %v1914
      %v1916 = vpop.f32.mrb[0].mxu0
      %v1917 = vpop.f32.mrb[0].mxu0
      %v1918 = vadd.f32 0.0, %v1917
      %v1919 = vpop.f32.mrb[0].mxu0
      %1920 = vmatprep.mubr.bf16.mxu0 0
      %1921 = vmatmul.mubr.bf16.gmra.mrb[0].mxu0 %v1438
      %v1922 = vpop.f32.mrb[0].mxu0
      %v1923 = vadd.f32 0.0, %v1922
      %v1924 = vpop.f32.mrb[0].mxu0
      %v1925 = vpop.f32.mrb[0].mxu0
      %v1926 = vadd.f32 0.0, %v1925
      %v1927 = vpop.f32.mrb[0].mxu0
      %1928 = vmatprep.mubr.bf16.mxu0 0
      %1929 = vmatmul.mubr.bf16.gmra.mrb[0].mxu0 %v1441
      %v1930 = vpop.f32.mrb[0].mxu0
      %v1931 = vadd.f32 0.0, %v1930
      %v1932 = vpop.f32.mrb[0].mxu0
      %v1933 = vpop.f32.mrb[0].mxu0
      %v1934 = vadd.f32 0.0, %v1933
      %v1935 = vpop.f32.mrb[0].mxu0
      %1936 = vmatprep.mubr.bf16.mxu0 0
      %1937 = vmatmul.mubr.bf16.gmra.mrb[0].mxu0 %v1444
      %v1938 = vpop.f32.mrb[0].mxu0
      %v1939 = vadd.f32 0.0, %v1938
      %v1940 = vpop.f32.mrb[0].mxu0
      %v1941 = vpop.f32.mrb[0].mxu0
      %v1942 = vadd.f32 0.0, %v1941
      %v1943 = vpop.f32.mrb[0].mxu0
      %1944 = vmatprep.mubr.bf16.mxu0 0
      %1945 = vmatmul.mubr.bf16.gmra.mrb[0].mxu0 %v1447
      %v1946 = vpop.f32.mrb[0].mxu0
      %v1947 = vadd.f32 0.0, %v1946
      %v1948 = vpop.f32.mrb[0].mxu0
      %v1949 = vpop.f32.mrb[0].mxu0
      %v1950 = vadd.f32 0.0, %v1949
      %v1951 = vpop.f32.mrb[0].mxu0
      %1952 = vmatprep.mubr.bf16.mxu0 0
      %1953 = vmatmul.mubr.bf16.gmra.mrb[0].mxu0 %v1450
      %v1954 = vpop.f32.mrb[0].mxu0
      %v1955 = vadd.f32 0.0, %v1954
      %v1956 = vpop.f32.mrb[0].mxu0
      %v1957 = vpop.f32.mrb[0].mxu0
      %v1958 = vadd.f32 0.0, %v1957
      %v1959 = vpop.f32.mrb[0].mxu0
      %1960 = vmatprep.mubr.bf16.mxu0 0
      %1961 = vmatmul.mubr.bf16.gmra.mrb[0].mxu0 %v1453
      %v1962 = vpop.f32.mrb[0].mxu0
      %v1963 = vadd.f32 0.0, %v1962
      %v1964 = vpop.f32.mrb[0].mxu0
      %v1965 = vpop.f32.mrb[0].mxu0
      %v1966 = vadd.f32 0.0, %v1965
      %v1967 = vpop.f32.mrb[0].mxu0
      %1968 = vmatprep.mubr.bf16.mxu0 0
      %1969 = vmatmul.mubr.bf16.gmra.mrb[0].mxu0 %v1456
      %v1970 = vpop.f32.mrb[0].mxu0
      %v1971 = vadd.f32 0.0, %v1970
      %v1972 = vpop.f32.mrb[0].mxu0
      %v1973 = vpop.f32.mrb[0].mxu0
      %v1974 = vadd.f32 0.0, %v1973
      %v1975 = vpop.f32.mrb[0].mxu0
      %1976 = vmatprep.mubr.bf16.mxu0 0
      %1977 = vmatmul.mubr.bf16.gmra.mrb[0].mxu0 %v1459
      %v1978 = vpop.f32.mrb[0].mxu0
      %v1979 = vadd.f32 0.0, %v1978
      %v1980 = vpop.f32.mrb[0].mxu0
      %v1981 = vpop.f32.mrb[0].mxu0
      %v1982 = vadd.f32 0.0, %v1981
      %v1983 = vpop.f32.mrb[0].mxu0
      %1984 = vmatprep.mubr.bf16.mxu0 0
      %1985 = vmatmul.mubr.bf16.gmra.mrb[0].mxu0 %v1462
      %v1986 = vpop.f32.mrb[0].mxu0
      %v1987 = vadd.f32 0.0, %v1986
      %v1988 = vpop.f32.mrb[0].mxu0
      %v1989 = vpop.f32.mrb[0].mxu0
      %v1990 = vadd.f32 0.0, %v1989
      %v1991 = vpop.f32.mrb[0].mxu0
      %1992 = vmatprep.mubr.bf16.mxu0 0
      %1993 = vmatmul.mubr.bf16.gmra.mrb[0].mxu0 %v1465
      %v1994 = vpop.f32.mrb[0].mxu0
      %v1995 = vadd.f32 0.0, %v1994
      %v1996 = vpop.f32.mrb[0].mxu0
      %v1997 = vpop.f32.mrb[0].mxu0
      %v1998 = vadd.f32 0.0, %v1997
      %v1999 = vpop.f32.mrb[0].mxu0
      %2000 = vmatprep.mubr.bf16.mxu0 0
      %2001 = vmatmul.mubr.bf16.gmra.mrb[0].mxu0 %v1468
      %v2002 = vpop.f32.mrb[0].mxu0
      %v2003 = vadd.f32 0.0, %v2002
      %v2004 = vpop.f32.mrb[0].mxu0
      %v2005 = vpop.f32.mrb[0].mxu0
      %v2006 = vadd.f32 0.0, %v2005
      %v2007 = vpop.f32.mrb[0].mxu0
      %2008 = vmatprep.mubr.bf16.mxu0 0
      %2009 = vmatmul.mubr.bf16.gmra.mrb[0].mxu0 %v1471
      %v2010 = vpop.f32.mrb[0].mxu0
      %v2011 = vadd.f32 0.0, %v2010
      %v2012 = vpop.f32.mrb[0].mxu0
      %v2013 = vpop.f32.mrb[0].mxu0
      %v2014 = vadd.f32 0.0, %v2013
      %v2015 = vpop.f32.mrb[0].mxu0
      %2016 = vmatprep.mubr.bf16.mxu0 0
      %2017 = vmatmul.mubr.bf16.gmra.mrb[0].mxu0 %v1474
      %v2018 = vpop.f32.mrb[0].mxu0
      %v2019 = vadd.f32 0.0, %v2018
      %v2020 = vpop.f32.mrb[0].mxu0
      %v2021 = vpop.f32.mrb[0].mxu0
      %v2022 = vadd.f32 0.0, %v2021
      %v2023 = vpop.f32.mrb[0].mxu0
      %2024 = vdwg.mxu0
      %v2025 = vsel %vm1283, %v694, 0
      %v2027 = vsel %vm1283, %v695, 0
      %v2029 = vsel %vm1283, %v696, 0
      %v2031 = vsel %vm1283, %v697, 0
      %v2033 = vsel %vm1283, %v698, 0
      %v2035 = vsel %vm1283, %v699, 0
      %v2037 = vsel %vm1283, %v700, 0
      %v2039 = vsel %vm1283, %v701, 0
      %v2041 = vsel %vm1283, %v702, 0
      %v2043 = vsel %vm1283, %v703, 0
      %v2045 = vsel %vm1283, %v704, 0
      %v2047 = vsel %vm1283, %v705, 0
      %v2049 = vsel %vm1283, %v706, 0
      %v2051 = vsel %vm1283, %v707, 0
      %v2053 = vsel %vm1283, %v708, 0
      %v2055 = vsel %vm1283, %v709, 0
      %v2057 = vsel %vm1283, %v710, 0
      %v2059 = vsel %vm1283, %v711, 0
      %v2061 = vsel %vm1283, %v712, 0
      %v2063 = vsel %vm1283, %v713, 0
      %v2065 = vsel %vm1283, %v714, 0
      %v2067 = vsel %vm1283, %v715, 0
      %v2069 = vsel %vm1283, %v716, 0
      %v2071 = vsel %vm1283, %v717, 0
      %v2073 = vsel %vm1283, %v718, 0
      %v2075 = vsel %vm1283, %v719, 0
      %v2077 = vsel %vm1283, %v720, 0
      %v2079 = vsel %vm1283, %v721, 0
      %v2081 = vsel %vm1283, %v722, 0
      %v2083 = vsel %vm1283, %v723, 0
      %v2085 = vsel %vm1283, %v724, 0
      %v2087 = vsel %vm1283, %v725, 0
      %v2089 = vsel %vm1283, %v726, 0
      %v2091 = vsel %vm1283, %v727, 0
      %v2093 = vsel %vm1283, %v728, 0
      %v2095 = vsel %vm1283, %v729, 0
      %v2097 = vsel %vm1283, %v730, 0
      %v2099 = vsel %vm1283, %v731, 0
      %v2101 = vsel %vm1283, %v732, 0
      %v2103 = vsel %vm1283, %v733, 0
      %v2105 = vsel %vm1283, %v734, 0
      %v2107 = vsel %vm1283, %v735, 0
      %v2109 = vsel %vm1283, %v736, 0
      %v2111 = vsel %vm1283, %v737, 0
      %v2113 = vsel %vm1283, %v738, 0
      %v2115 = vsel %vm1283, %v739, 0
      %v2117 = vsel %vm1283, %v740, 0
      %v2119 = vsel %vm1283, %v741, 0
      %v2121 = vsel %vm1283, %v742, 0
      %v2123 = vsel %vm1283, %v743, 0
      %v2125 = vsel %vm1283, %v744, 0
      %v2127 = vsel %vm1283, %v745, 0
      %v2129 = vsel %vm1283, %v746, 0
      %v2131 = vsel %vm1283, %v747, 0
      %v2133 = vsel %vm1283, %v748, 0
      %v2135 = vsel %vm1283, %v749, 0
      %v2137 = vsel %vm1283, %v750, 0
      %v2139 = vsel %vm1283, %v751, 0
      %v2141 = vsel %vm1283, %v752, 0
      %v2143 = vsel %vm1283, %v753, 0
      %v2145 = vsel %vm1283, %v754, 0
      %v2147 = vsel %vm1283, %v755, 0
      %v2149 = vsel %vm1283, %v756, 0
      %v2151 = vsel %vm1283, %v757, 0
      %v2154 = vsel %vm1476, %v763, 0
      %2156 = vmatprep.subr.bf16.mxu0 0
      %2157 = vmatpush1.bf16.msra.mxu0 %v2154
      %2158 = vmatprep.subr.bf16.mxu0 0
      %2159 = vmatpush1.bf16.msra.mxu0 0
      %2160 = vmatprep.subr.bf16.mxu0 0
      %2161 = vmatpush1.bf16.msra.mxu0 0
      %2162 = vmatprep.subr.bf16.mxu0 0
      %2163 = vmatpush1.bf16.msra.mxu0 0
      %2164 = vmatprep.subr.bf16.mxu0 0
      %2165 = vmatpush1.bf16.msra.mxu0 0
      %2166 = vmatprep.subr.bf16.mxu0 0
      %2167 = vmatpush1.bf16.msra.mxu0 0
      %2168 = vmatprep.subr.bf16.mxu0 0
      %2169 = vmatpush1.bf16.msra.mxu0 0
      %2170 = vmatprep.subr.bf16.mxu0 0
      %2171 = vmatpush1.bf16.msra.mxu0 0
      %2172 = vmatprep.subr.bf16.mxu0 0
      %2173 = vmatpush1.bf16.msra.mxu0 0
      %2174 = vmatprep.subr.bf16.mxu0 0
      %2175 = vmatpush1.bf16.msra.mxu0 0
      %2176 = vmatprep.subr.bf16.mxu0 0
      %2177 = vmatpush1.bf16.msra.mxu0 0
      %2178 = vmatprep.subr.bf16.mxu0 0
      %2179 = vmatpush1.bf16.msra.mxu0 0
      %2180 = vmatprep.subr.bf16.mxu0 0
      %2181 = vmatpush1.bf16.msra.mxu0 0
      %2182 = vmatprep.subr.bf16.mxu0 0
      %2183 = vmatpush1.bf16.msra.mxu0 0
      %2184 = vmatprep.subr.bf16.mxu0 0
      %2185 = vmatpush1.bf16.msra.mxu0 0
      %2186 = vmatprep.subr.bf16.mxu0 0
      %2187 = vmatpush1.bf16.msra.mxu0 0
      %2188 = vmatprep.mubr.bf16.mxu0 0
      %2189 = vmatmul.mubr.bf16.gmra.mrb[0].mxu0 %v2025
      %v2190 = vpop.f32.mrb[0].mxu0
      %v2191 = vadd.f32 %v1515, %v2190
      %v2192 = vpop.f32.mrb[0].mxu0
      %v2193 = vpop.f32.mrb[0].mxu0
      %v2194 = vadd.f32 %v1518, %v2193
      %v2195 = vpop.f32.mrb[0].mxu0
      %2196 = vmatprep.mubr.bf16.mxu0 0
      %2197 = vmatmul.mubr.bf16.gmra.mrb[0].mxu0 %v2027
      %v2198 = vpop.f32.mrb[0].mxu0
      %v2199 = vadd.f32 %v1523, %v2198
      %v2200 = vpop.f32.mrb[0].mxu0
      %v2201 = vpop.f32.mrb[0].mxu0
      %v2202 = vadd.f32 %v1526, %v2201
      %v2203 = vpop.f32.mrb[0].mxu0
      %2204 = vmatprep.mubr.bf16.mxu0 0
      %2205 = vmatmul.mubr.bf16.gmra.mrb[0].mxu0 %v2029
      %v2206 = vpop.f32.mrb[0].mxu0
      %v2207 = vadd.f32 %v1531, %v2206
      %v2208 = vpop.f32.mrb[0].mxu0
      %v2209 = vpop.f32.mrb[0].mxu0
      %v2210 = vadd.f32 %v1534, %v2209
      %v2211 = vpop.f32.mrb[0].mxu0
      %2212 = vmatprep.mubr.bf16.mxu0 0
      %2213 = vmatmul.mubr.bf16.gmra.mrb[0].mxu0 %v2031
      %v2214 = vpop.f32.mrb[0].mxu0
      %v2215 = vadd.f32 %v1539, %v2214
      %v2216 = vpop.f32.mrb[0].mxu0
      %v2217 = vpop.f32.mrb[0].mxu0
      %v2218 = vadd.f32 %v1542, %v2217
      %v2219 = vpop.f32.mrb[0].mxu0
      %2220 = vmatprep.mubr.bf16.mxu0 0
      %2221 = vmatmul.mubr.bf16.gmra.mrb[0].mxu0 %v2033
      %v2222 = vpop.f32.mrb[0].mxu0
      %v2223 = vadd.f32 %v1547, %v2222
      %v2224 = vpop.f32.mrb[0].mxu0
      %v2225 = vpop.f32.mrb[0].mxu0
      %v2226 = vadd.f32 %v1550, %v2225
      %v2227 = vpop.f32.mrb[0].mxu0
      %2228 = vmatprep.mubr.bf16.mxu0 0
      %2229 = vmatmul.mubr.bf16.gmra.mrb[0].mxu0 %v2035
      %v2230 = vpop.f32.mrb[0].mxu0
      %v2231 = vadd.f32 %v1555, %v2230
      %v2232 = vpop.f32.mrb[0].mxu0
      %v2233 = vpop.f32.mrb[0].mxu0
      %v2234 = vadd.f32 %v1558, %v2233
      %v2235 = vpop.f32.mrb[0].mxu0
      %2236 = vmatprep.mubr.bf16.mxu0 0
      %2237 = vmatmul.mubr.bf16.gmra.mrb[0].mxu0 %v2037
      %v2238 = vpop.f32.mrb[0].mxu0
      %v2239 = vadd.f32 %v1563, %v2238
      %v2240 = vpop.f32.mrb[0].mxu0
      %v2241 = vpop.f32.mrb[0].mxu0
      %v2242 = vadd.f32 %v1566, %v2241
      %v2243 = vpop.f32.mrb[0].mxu0
      %2244 = vmatprep.mubr.bf16.mxu0 0
      %2245 = vmatmul.mubr.bf16.gmra.mrb[0].mxu0 %v2039
      %v2246 = vpop.f32.mrb[0].mxu0
      %v2247 = vadd.f32 %v1571, %v2246
      %v2248 = vpop.f32.mrb[0].mxu0
      %v2249 = vpop.f32.mrb[0].mxu0
      %v2250 = vadd.f32 %v1574, %v2249
      %v2251 = vpop.f32.mrb[0].mxu0
      %2252 = vmatprep.mubr.bf16.mxu0 0
      %2253 = vmatmul.mubr.bf16.gmra.mrb[0].mxu0 %v2041
      %v2254 = vpop.f32.mrb[0].mxu0
      %v2255 = vadd.f32 %v1579, %v2254
      %v2256 = vpop.f32.mrb[0].mxu0
      %v2257 = vpop.f32.mrb[0].mxu0
      %v2258 = vadd.f32 %v1582, %v2257
      %v2259 = vpop.f32.mrb[0].mxu0
      %2260 = vmatprep.mubr.bf16.mxu0 0
      %2261 = vmatmul.mubr.bf16.gmra.mrb[0].mxu0 %v2043
      %v2262 = vpop.f32.mrb[0].mxu0
      %v2263 = vadd.f32 %v1587, %v2262
      %v2264 = vpop.f32.mrb[0].mxu0
      %v2265 = vpop.f32.mrb[0].mxu0
      %v2266 = vadd.f32 %v1590, %v2265
      %v2267 = vpop.f32.mrb[0].mxu0
      %2268 = vmatprep.mubr.bf16.mxu0 0
      %2269 = vmatmul.mubr.bf16.gmra.mrb[0].mxu0 %v2045
      %v2270 = vpop.f32.mrb[0].mxu0
      %v2271 = vadd.f32 %v1595, %v2270
      %v2272 = vpop.f32.mrb[0].mxu0
      %v2273 = vpop.f32.mrb[0].mxu0
      %v2274 = vadd.f32 %v1598, %v2273
      %v2275 = vpop.f32.mrb[0].mxu0
      %2276 = vmatprep.mubr.bf16.mxu0 0
      %2277 = vmatmul.mubr.bf16.gmra.mrb[0].mxu0 %v2047
      %v2278 = vpop.f32.mrb[0].mxu0
      %v2279 = vadd.f32 %v1603, %v2278
      %v2280 = vpop.f32.mrb[0].mxu0
      %v2281 = vpop.f32.mrb[0].mxu0
      %v2282 = vadd.f32 %v1606, %v2281
      %v2283 = vpop.f32.mrb[0].mxu0
      %2284 = vmatprep.mubr.bf16.mxu0 0
      %2285 = vmatmul.mubr.bf16.gmra.mrb[0].mxu0 %v2049
      %v2286 = vpop.f32.mrb[0].mxu0
      %v2287 = vadd.f32 %v1611, %v2286
      %v2288 = vpop.f32.mrb[0].mxu0
      %v2289 = vpop.f32.mrb[0].mxu0
      %v2290 = vadd.f32 %v1614, %v2289
      %v2291 = vpop.f32.mrb[0].mxu0
      %2292 = vmatprep.mubr.bf16.mxu0 0
      %2293 = vmatmul.mubr.bf16.gmra.mrb[0].mxu0 %v2051
      %v2294 = vpop.f32.mrb[0].mxu0
      %v2295 = vadd.f32 %v1619, %v2294
      %v2296 = vpop.f32.mrb[0].mxu0
      %v2297 = vpop.f32.mrb[0].mxu0
      %v2298 = vadd.f32 %v1622, %v2297
      %v2299 = vpop.f32.mrb[0].mxu0
      %2300 = vmatprep.mubr.bf16.mxu0 0
      %2301 = vmatmul.mubr.bf16.gmra.mrb[0].mxu0 %v2053
      %v2302 = vpop.f32.mrb[0].mxu0
      %v2303 = vadd.f32 %v1627, %v2302
      %v2304 = vpop.f32.mrb[0].mxu0
      %v2305 = vpop.f32.mrb[0].mxu0
      %v2306 = vadd.f32 %v1630, %v2305
      %v2307 = vpop.f32.mrb[0].mxu0
      %2308 = vmatprep.mubr.bf16.mxu0 0
      %2309 = vmatmul.mubr.bf16.gmra.mrb[0].mxu0 %v2055
      %v2310 = vpop.f32.mrb[0].mxu0
      %v2311 = vadd.f32 %v1635, %v2310
      %v2312 = vpop.f32.mrb[0].mxu0
      %v2313 = vpop.f32.mrb[0].mxu0
      %v2314 = vadd.f32 %v1638, %v2313
      %v2315 = vpop.f32.mrb[0].mxu0
      %2316 = vmatprep.mubr.bf16.mxu0 0
      %2317 = vmatmul.mubr.bf16.gmra.mrb[0].mxu0 %v2057
      %v2318 = vpop.f32.mrb[0].mxu0
      %v2319 = vadd.f32 %v1643, %v2318
      %v2320 = vpop.f32.mrb[0].mxu0
      %v2321 = vpop.f32.mrb[0].mxu0
      %v2322 = vadd.f32 %v1646, %v2321
      %v2323 = vpop.f32.mrb[0].mxu0
      %2324 = vmatprep.mubr.bf16.mxu0 0
      %2325 = vmatmul.mubr.bf16.gmra.mrb[0].mxu0 %v2059
      %v2326 = vpop.f32.mrb[0].mxu0
      %v2327 = vadd.f32 %v1651, %v2326
      %v2328 = vpop.f32.mrb[0].mxu0
      %v2329 = vpop.f32.mrb[0].mxu0
      %v2330 = vadd.f32 %v1654, %v2329
      %v2331 = vpop.f32.mrb[0].mxu0
      %2332 = vmatprep.mubr.bf16.mxu0 0
      %2333 = vmatmul.mubr.bf16.gmra.mrb[0].mxu0 %v2061
      %v2334 = vpop.f32.mrb[0].mxu0
      %v2335 = vadd.f32 %v1659, %v2334
      %v2336 = vpop.f32.mrb[0].mxu0
      %v2337 = vpop.f32.mrb[0].mxu0
      %v2338 = vadd.f32 %v1662, %v2337
      %v2339 = vpop.f32.mrb[0].mxu0
      %2340 = vmatprep.mubr.bf16.mxu0 0
      %2341 = vmatmul.mubr.bf16.gmra.mrb[0].mxu0 %v2063
      %v2342 = vpop.f32.mrb[0].mxu0
      %v2343 = vadd.f32 %v1667, %v2342
      %v2344 = vpop.f32.mrb[0].mxu0
      %v2345 = vpop.f32.mrb[0].mxu0
      %v2346 = vadd.f32 %v1670, %v2345
      %v2347 = vpop.f32.mrb[0].mxu0
      %2348 = vmatprep.mubr.bf16.mxu0 0
      %2349 = vmatmul.mubr.bf16.gmra.mrb[0].mxu0 %v2065
      %v2350 = vpop.f32.mrb[0].mxu0
      %v2351 = vadd.f32 %v1675, %v2350
      %v2352 = vpop.f32.mrb[0].mxu0
      %v2353 = vpop.f32.mrb[0].mxu0
      %v2354 = vadd.f32 %v1678, %v2353
      %v2355 = vpop.f32.mrb[0].mxu0
      %2356 = vmatprep.mubr.bf16.mxu0 0
      %2357 = vmatmul.mubr.bf16.gmra.mrb[0].mxu0 %v2067
      %v2358 = vpop.f32.mrb[0].mxu0
      %v2359 = vadd.f32 %v1683, %v2358
      %v2360 = vpop.f32.mrb[0].mxu0
      %v2361 = vpop.f32.mrb[0].mxu0
      %v2362 = vadd.f32 %v1686, %v2361
      %v2363 = vpop.f32.mrb[0].mxu0
      %2364 = vmatprep.mubr.bf16.mxu0 0
      %2365 = vmatmul.mubr.bf16.gmra.mrb[0].mxu0 %v2069
      %v2366 = vpop.f32.mrb[0].mxu0
      %v2367 = vadd.f32 %v1691, %v2366
      %v2368 = vpop.f32.mrb[0].mxu0
      %v2369 = vpop.f32.mrb[0].mxu0
      %v2370 = vadd.f32 %v1694, %v2369
      %v2371 = vpop.f32.mrb[0].mxu0
      %2372 = vmatprep.mubr.bf16.mxu0 0
      %2373 = vmatmul.mubr.bf16.gmra.mrb[0].mxu0 %v2071
      %v2374 = vpop.f32.mrb[0].mxu0
      %v2375 = vadd.f32 %v1699, %v2374
      %v2376 = vpop.f32.mrb[0].mxu0
      %v2377 = vpop.f32.mrb[0].mxu0
      %v2378 = vadd.f32 %v1702, %v2377
      %v2379 = vpop.f32.mrb[0].mxu0
      %2380 = vmatprep.mubr.bf16.mxu0 0
      %2381 = vmatmul.mubr.bf16.gmra.mrb[0].mxu0 %v2073
      %v2382 = vpop.f32.mrb[0].mxu0
      %v2383 = vadd.f32 %v1707, %v2382
      %v2384 = vpop.f32.mrb[0].mxu0
      %v2385 = vpop.f32.mrb[0].mxu0
      %v2386 = vadd.f32 %v1710, %v2385
      %v2387 = vpop.f32.mrb[0].mxu0
      %2388 = vmatprep.mubr.bf16.mxu0 0
      %2389 = vmatmul.mubr.bf16.gmra.mrb[0].mxu0 %v2075
      %v2390 = vpop.f32.mrb[0].mxu0
      %v2391 = vadd.f32 %v1715, %v2390
      %v2392 = vpop.f32.mrb[0].mxu0
      %v2393 = vpop.f32.mrb[0].mxu0
      %v2394 = vadd.f32 %v1718, %v2393
      %v2395 = vpop.f32.mrb[0].mxu0
      %2396 = vmatprep.mubr.bf16.mxu0 0
      %2397 = vmatmul.mubr.bf16.gmra.mrb[0].mxu0 %v2077
      %v2398 = vpop.f32.mrb[0].mxu0
      %v2399 = vadd.f32 %v1723, %v2398
      %v2400 = vpop.f32.mrb[0].mxu0
      %v2401 = vpop.f32.mrb[0].mxu0
      %v2402 = vadd.f32 %v1726, %v2401
      %v2403 = vpop.f32.mrb[0].mxu0
      %2404 = vmatprep.mubr.bf16.mxu0 0
      %2405 = vmatmul.mubr.bf16.gmra.mrb[0].mxu0 %v2079
      %v2406 = vpop.f32.mrb[0].mxu0
      %v2407 = vadd.f32 %v1731, %v2406
      %v2408 = vpop.f32.mrb[0].mxu0
      %v2409 = vpop.f32.mrb[0].mxu0
      %v2410 = vadd.f32 %v1734, %v2409
      %v2411 = vpop.f32.mrb[0].mxu0
      %2412 = vmatprep.mubr.bf16.mxu0 0
      %2413 = vmatmul.mubr.bf16.gmra.mrb[0].mxu0 %v2081
      %v2414 = vpop.f32.mrb[0].mxu0
      %v2415 = vadd.f32 %v1739, %v2414
      %v2416 = vpop.f32.mrb[0].mxu0
      %v2417 = vpop.f32.mrb[0].mxu0
      %v2418 = vadd.f32 %v1742, %v2417
      %v2419 = vpop.f32.mrb[0].mxu0
      %2420 = vmatprep.mubr.bf16.mxu0 0
      %2421 = vmatmul.mubr.bf16.gmra.mrb[0].mxu0 %v2083
      %v2422 = vpop.f32.mrb[0].mxu0
      %v2423 = vadd.f32 %v1747, %v2422
      %v2424 = vpop.f32.mrb[0].mxu0
      %v2425 = vpop.f32.mrb[0].mxu0
      %v2426 = vadd.f32 %v1750, %v2425
      %v2427 = vpop.f32.mrb[0].mxu0
      %2428 = vmatprep.mubr.bf16.mxu0 0
      %2429 = vmatmul.mubr.bf16.gmra.mrb[0].mxu0 %v2085
      %v2430 = vpop.f32.mrb[0].mxu0
      %v2431 = vadd.f32 %v1755, %v2430
      %v2432 = vpop.f32.mrb[0].mxu0
      %v2433 = vpop.f32.mrb[0].mxu0
      %v2434 = vadd.f32 %v1758, %v2433
      %v2435 = vpop.f32.mrb[0].mxu0
      %2436 = vmatprep.mubr.bf16.mxu0 0
      %2437 = vmatmul.mubr.bf16.gmra.mrb[0].mxu0 %v2087
      %v2438 = vpop.f32.mrb[0].mxu0
      %v2439 = vadd.f32 %v1763, %v2438
      %v2440 = vpop.f32.mrb[0].mxu0
      %v2441 = vpop.f32.mrb[0].mxu0
      %v2442 = vadd.f32 %v1766, %v2441
      %v2443 = vpop.f32.mrb[0].mxu0
      %2444 = vmatprep.mubr.bf16.mxu0 0
      %2445 = vmatmul.mubr.bf16.gmra.mrb[0].mxu0 %v2089
      %v2446 = vpop.f32.mrb[0].mxu0
      %v2447 = vadd.f32 %v1771, %v2446
      %v2448 = vpop.f32.mrb[0].mxu0
      %v2449 = vpop.f32.mrb[0].mxu0
      %v2450 = vadd.f32 %v1774, %v2449
      %v2451 = vpop.f32.mrb[0].mxu0
      %2452 = vmatprep.mubr.bf16.mxu0 0
      %2453 = vmatmul.mubr.bf16.gmra.mrb[0].mxu0 %v2091
      %v2454 = vpop.f32.mrb[0].mxu0
      %v2455 = vadd.f32 %v1779, %v2454
      %v2456 = vpop.f32.mrb[0].mxu0
      %v2457 = vpop.f32.mrb[0].mxu0
      %v2458 = vadd.f32 %v1782, %v2457
      %v2459 = vpop.f32.mrb[0].mxu0
      %2460 = vmatprep.mubr.bf16.mxu0 0
      %2461 = vmatmul.mubr.bf16.gmra.mrb[0].mxu0 %v2093
      %v2462 = vpop.f32.mrb[0].mxu0
      %v2463 = vadd.f32 %v1787, %v2462
      %v2464 = vpop.f32.mrb[0].mxu0
      %v2465 = vpop.f32.mrb[0].mxu0
      %v2466 = vadd.f32 %v1790, %v2465
      %v2467 = vpop.f32.mrb[0].mxu0
      %2468 = vmatprep.mubr.bf16.mxu0 0
      %2469 = vmatmul.mubr.bf16.gmra.mrb[0].mxu0 %v2095
      %v2470 = vpop.f32.mrb[0].mxu0
      %v2471 = vadd.f32 %v1795, %v2470
      %v2472 = vpop.f32.mrb[0].mxu0
      %v2473 = vpop.f32.mrb[0].mxu0
      %v2474 = vadd.f32 %v1798, %v2473
      %v2475 = vpop.f32.mrb[0].mxu0
      %2476 = vmatprep.mubr.bf16.mxu0 0
      %2477 = vmatmul.mubr.bf16.gmra.mrb[0].mxu0 %v2097
      %v2478 = vpop.f32.mrb[0].mxu0
      %v2479 = vadd.f32 %v1803, %v2478
      %v2480 = vpop.f32.mrb[0].mxu0
      %v2481 = vpop.f32.mrb[0].mxu0
      %v2482 = vadd.f32 %v1806, %v2481
      %v2483 = vpop.f32.mrb[0].mxu0
      %2484 = vmatprep.mubr.bf16.mxu0 0
      %2485 = vmatmul.mubr.bf16.gmra.mrb[0].mxu0 %v2099
      %v2486 = vpop.f32.mrb[0].mxu0
      %v2487 = vadd.f32 %v1811, %v2486
      %v2488 = vpop.f32.mrb[0].mxu0
      %v2489 = vpop.f32.mrb[0].mxu0
      %v2490 = vadd.f32 %v1814, %v2489
      %v2491 = vpop.f32.mrb[0].mxu0
      %2492 = vmatprep.mubr.bf16.mxu0 0
      %2493 = vmatmul.mubr.bf16.gmra.mrb[0].mxu0 %v2101
      %v2494 = vpop.f32.mrb[0].mxu0
      %v2495 = vadd.f32 %v1819, %v2494
      %v2496 = vpop.f32.mrb[0].mxu0
      %v2497 = vpop.f32.mrb[0].mxu0
      %v2498 = vadd.f32 %v1822, %v2497
      %v2499 = vpop.f32.mrb[0].mxu0
      %2500 = vmatprep.mubr.bf16.mxu0 0
      %2501 = vmatmul.mubr.bf16.gmra.mrb[0].mxu0 %v2103
      %v2502 = vpop.f32.mrb[0].mxu0
      %v2503 = vadd.f32 %v1827, %v2502
      %v2504 = vpop.f32.mrb[0].mxu0
      %v2505 = vpop.f32.mrb[0].mxu0
      %v2506 = vadd.f32 %v1830, %v2505
      %v2507 = vpop.f32.mrb[0].mxu0
      %2508 = vmatprep.mubr.bf16.mxu0 0
      %2509 = vmatmul.mubr.bf16.gmra.mrb[0].mxu0 %v2105
      %v2510 = vpop.f32.mrb[0].mxu0
      %v2511 = vadd.f32 %v1835, %v2510
      %v2512 = vpop.f32.mrb[0].mxu0
      %v2513 = vpop.f32.mrb[0].mxu0
      %v2514 = vadd.f32 %v1838, %v2513
      %v2515 = vpop.f32.mrb[0].mxu0
      %2516 = vmatprep.mubr.bf16.mxu0 0
      %2517 = vmatmul.mubr.bf16.gmra.mrb[0].mxu0 %v2107
      %v2518 = vpop.f32.mrb[0].mxu0
      %v2519 = vadd.f32 %v1843, %v2518
      %v2520 = vpop.f32.mrb[0].mxu0
      %v2521 = vpop.f32.mrb[0].mxu0
      %v2522 = vadd.f32 %v1846, %v2521
      %v2523 = vpop.f32.mrb[0].mxu0
      %2524 = vmatprep.mubr.bf16.mxu0 0
      %2525 = vmatmul.mubr.bf16.gmra.mrb[0].mxu0 %v2109
      %v2526 = vpop.f32.mrb[0].mxu0
      %v2527 = vadd.f32 %v1851, %v2526
      %v2528 = vpop.f32.mrb[0].mxu0
      %v2529 = vpop.f32.mrb[0].mxu0
      %v2530 = vadd.f32 %v1854, %v2529
      %v2531 = vpop.f32.mrb[0].mxu0
      %2532 = vmatprep.mubr.bf16.mxu0 0
      %2533 = vmatmul.mubr.bf16.gmra.mrb[0].mxu0 %v2111
      %v2534 = vpop.f32.mrb[0].mxu0
      %v2535 = vadd.f32 %v1859, %v2534
      %v2536 = vpop.f32.mrb[0].mxu0
      %v2537 = vpop.f32.mrb[0].mxu0
      %v2538 = vadd.f32 %v1862, %v2537
      %v2539 = vpop.f32.mrb[0].mxu0
      %2540 = vmatprep.mubr.bf16.mxu0 0
      %2541 = vmatmul.mubr.bf16.gmra.mrb[0].mxu0 %v2113
      %v2542 = vpop.f32.mrb[0].mxu0
      %v2543 = vadd.f32 %v1867, %v2542
      %v2544 = vpop.f32.mrb[0].mxu0
      %v2545 = vpop.f32.mrb[0].mxu0
      %v2546 = vadd.f32 %v1870, %v2545
      %v2547 = vpop.f32.mrb[0].mxu0
      %2548 = vmatprep.mubr.bf16.mxu0 0
      %2549 = vmatmul.mubr.bf16.gmra.mrb[0].mxu0 %v2115
      %v2550 = vpop.f32.mrb[0].mxu0
      %v2551 = vadd.f32 %v1875, %v2550
      %v2552 = vpop.f32.mrb[0].mxu0
      %v2553 = vpop.f32.mrb[0].mxu0
      %v2554 = vadd.f32 %v1878, %v2553
      %v2555 = vpop.f32.mrb[0].mxu0
      %2556 = vmatprep.mubr.bf16.mxu0 0
      %2557 = vmatmul.mubr.bf16.gmra.mrb[0].mxu0 %v2117
      %v2558 = vpop.f32.mrb[0].mxu0
      %v2559 = vadd.f32 %v1883, %v2558
      %v2560 = vpop.f32.mrb[0].mxu0
      %v2561 = vpop.f32.mrb[0].mxu0
      %v2562 = vadd.f32 %v1886, %v2561
      %v2563 = vpop.f32.mrb[0].mxu0
      %2564 = vmatprep.mubr.bf16.mxu0 0
      %2565 = vmatmul.mubr.bf16.gmra.mrb[0].mxu0 %v2119
      %v2566 = vpop.f32.mrb[0].mxu0
      %v2567 = vadd.f32 %v1891, %v2566
      %v2568 = vpop.f32.mrb[0].mxu0
      %v2569 = vpop.f32.mrb[0].mxu0
      %v2570 = vadd.f32 %v1894, %v2569
      %v2571 = vpop.f32.mrb[0].mxu0
      %2572 = vmatprep.mubr.bf16.mxu0 0
      %2573 = vmatmul.mubr.bf16.gmra.mrb[0].mxu0 %v2121
      %v2574 = vpop.f32.mrb[0].mxu0
      %v2575 = vadd.f32 %v1899, %v2574
      %v2576 = vpop.f32.mrb[0].mxu0
      %v2577 = vpop.f32.mrb[0].mxu0
      %v2578 = vadd.f32 %v1902, %v2577
      %v2579 = vpop.f32.mrb[0].mxu0
      %2580 = vmatprep.mubr.bf16.mxu0 0
      %2581 = vmatmul.mubr.bf16.gmra.mrb[0].mxu0 %v2123
      %v2582 = vpop.f32.mrb[0].mxu0
      %v2583 = vadd.f32 %v1907, %v2582
      %v2584 = vpop.f32.mrb[0].mxu0
      %v2585 = vpop.f32.mrb[0].mxu0
      %v2586 = vadd.f32 %v1910, %v2585
      %v2587 = vpop.f32.mrb[0].mxu0
      %2588 = vmatprep.mubr.bf16.mxu0 0
      %2589 = vmatmul.mubr.bf16.gmra.mrb[0].mxu0 %v2125
      %v2590 = vpop.f32.mrb[0].mxu0
      %v2591 = vadd.f32 %v1915, %v2590
      %v2592 = vpop.f32.mrb[0].mxu0
      %v2593 = vpop.f32.mrb[0].mxu0
      %v2594 = vadd.f32 %v1918, %v2593
      %v2595 = vpop.f32.mrb[0].mxu0
      %2596 = vmatprep.mubr.bf16.mxu0 0
      %2597 = vmatmul.mubr.bf16.gmra.mrb[0].mxu0 %v2127
      %v2598 = vpop.f32.mrb[0].mxu0
      %v2599 = vadd.f32 %v1923, %v2598
      %v2600 = vpop.f32.mrb[0].mxu0
      %v2601 = vpop.f32.mrb[0].mxu0
      %v2602 = vadd.f32 %v1926, %v2601
      %v2603 = vpop.f32.mrb[0].mxu0
      %2604 = vmatprep.mubr.bf16.mxu0 0
      %2605 = vmatmul.mubr.bf16.gmra.mrb[0].mxu0 %v2129
      %v2606 = vpop.f32.mrb[0].mxu0
      %v2607 = vadd.f32 %v1931, %v2606
      %v2608 = vpop.f32.mrb[0].mxu0
      %v2609 = vpop.f32.mrb[0].mxu0
      %v2610 = vadd.f32 %v1934, %v2609
      %v2611 = vpop.f32.mrb[0].mxu0
      %2612 = vmatprep.mubr.bf16.mxu0 0
      %2613 = vmatmul.mubr.bf16.gmra.mrb[0].mxu0 %v2131
      %v2614 = vpop.f32.mrb[0].mxu0
      %v2615 = vadd.f32 %v1939, %v2614
      %v2616 = vpop.f32.mrb[0].mxu0
      %v2617 = vpop.f32.mrb[0].mxu0
      %v2618 = vadd.f32 %v1942, %v2617
      %v2619 = vpop.f32.mrb[0].mxu0
      %2620 = vmatprep.mubr.bf16.mxu0 0
      %2621 = vmatmul.mubr.bf16.gmra.mrb[0].mxu0 %v2133
      %v2622 = vpop.f32.mrb[0].mxu0
      %v2623 = vadd.f32 %v1947, %v2622
      %v2624 = vpop.f32.mrb[0].mxu0
      %v2625 = vpop.f32.mrb[0].mxu0
      %v2626 = vadd.f32 %v1950, %v2625
      %v2627 = vpop.f32.mrb[0].mxu0
      %2628 = vmatprep.mubr.bf16.mxu0 0
      %2629 = vmatmul.mubr.bf16.gmra.mrb[0].mxu0 %v2135
      %v2630 = vpop.f32.mrb[0].mxu0
      %v2631 = vadd.f32 %v1955, %v2630
      %v2632 = vpop.f32.mrb[0].mxu0
      %v2633 = vpop.f32.mrb[0].mxu0
      %v2634 = vadd.f32 %v1958, %v2633
      %v2635 = vpop.f32.mrb[0].mxu0
      %2636 = vmatprep.mubr.bf16.mxu0 0
      %2637 = vmatmul.mubr.bf16.gmra.mrb[0].mxu0 %v2137
      %v2638 = vpop.f32.mrb[0].mxu0
      %v2639 = vadd.f32 %v1963, %v2638
      %v2640 = vpop.f32.mrb[0].mxu0
      %v2641 = vpop.f32.mrb[0].mxu0
      %v2642 = vadd.f32 %v1966, %v2641
      %v2643 = vpop.f32.mrb[0].mxu0
      %2644 = vmatprep.mubr.bf16.mxu0 0
      %2645 = vmatmul.mubr.bf16.gmra.mrb[0].mxu0 %v2139
      %v2646 = vpop.f32.mrb[0].mxu0
      %v2647 = vadd.f32 %v1971, %v2646
      %v2648 = vpop.f32.mrb[0].mxu0
      %v2649 = vpop.f32.mrb[0].mxu0
      %v2650 = vadd.f32 %v1974, %v2649
      %v2651 = vpop.f32.mrb[0].mxu0
      %2652 = vmatprep.mubr.bf16.mxu0 0
      %2653 = vmatmul.mubr.bf16.gmra.mrb[0].mxu0 %v2141
      %v2654 = vpop.f32.mrb[0].mxu0
      %v2655 = vadd.f32 %v1979, %v2654
      %v2656 = vpop.f32.mrb[0].mxu0
      %v2657 = vpop.f32.mrb[0].mxu0
      %v2658 = vadd.f32 %v1982, %v2657
      %v2659 = vpop.f32.mrb[0].mxu0
      %2660 = vmatprep.mubr.bf16.mxu0 0
      %2661 = vmatmul.mubr.bf16.gmra.mrb[0].mxu0 %v2143
      %v2662 = vpop.f32.mrb[0].mxu0
      %v2663 = vadd.f32 %v1987, %v2662
      %v2664 = vpop.f32.mrb[0].mxu0
      %v2665 = vpop.f32.mrb[0].mxu0
      %v2666 = vadd.f32 %v1990, %v2665
      %v2667 = vpop.f32.mrb[0].mxu0
      %2668 = vmatprep.mubr.bf16.mxu0 0
      %2669 = vmatmul.mubr.bf16.gmra.mrb[0].mxu0 %v2145
      %v2670 = vpop.f32.mrb[0].mxu0
      %v2671 = vadd.f32 %v1995, %v2670
      %v2672 = vpop.f32.mrb[0].mxu0
      %v2673 = vpop.f32.mrb[0].mxu0
      %v2674 = vadd.f32 %v1998, %v2673
      %v2675 = vpop.f32.mrb[0].mxu0
      %2676 = vmatprep.mubr.bf16.mxu0 0
      %2677 = vmatmul.mubr.bf16.gmra.mrb[0].mxu0 %v2147
      %v2678 = vpop.f32.mrb[0].mxu0
      %v2679 = vadd.f32 %v2003, %v2678
      %v2680 = vpop.f32.mrb[0].mxu0
      %v2681 = vpop.f32.mrb[0].mxu0
      %v2682 = vadd.f32 %v2006, %v2681
      %v2683 = vpop.f32.mrb[0].mxu0
      %2684 = vmatprep.mubr.bf16.mxu0 0
      %2685 = vmatmul.mubr.bf16.gmra.mrb[0].mxu0 %v2149
      %v2686 = vpop.f32.mrb[0].mxu0
      %v2687 = vadd.f32 %v2011, %v2686
      %v2688 = vpop.f32.mrb[0].mxu0
      %v2689 = vpop.f32.mrb[0].mxu0
      %v2690 = vadd.f32 %v2014, %v2689
      %v2691 = vpop.f32.mrb[0].mxu0
      %2692 = vmatprep.mubr.bf16.mxu0 0
      %2693 = vmatmul.mubr.bf16.gmra.mrb[0].mxu0 %v2151
      %v2694 = vpop.f32.mrb[0].mxu0
      %v2695 = vadd.f32 %v2019, %v2694
      %v2696 = vpop.f32.mrb[0].mxu0
      %v2697 = vpop.f32.mrb[0].mxu0
      %v2698 = vadd.f32 %v2022, %v2697
      %v2699 = vpop.f32.mrb[0].mxu0
      %2700 = vdwg.mxu0
      %s2701 = scalar_lea.vmem %s2, 4
      %v2702 = vld [vmem:[%s2701] sm:$0x3]
      %vm2703 = vcmask 1046528
      %v2704 = vrot.slane %v694, 1
      %v2705 = vrot.slane %v695, 1
      %v2706 = vsel %vm2703, %v2704, %v2705
      %v2707 = vrot.slane %v696, 1
      %v2708 = vsel %vm2703, %v2705, %v2707
      %v2709 = vrot.slane %v697, 1
      %v2710 = vsel %vm2703, %v2707, %v2709
      %v2711 = vrot.slane %v698, 1
      %v2712 = vsel %vm2703, %v2709, %v2711
      %v2713 = vrot.slane %v699, 1
      %v2714 = vsel %vm2703, %v2711, %v2713
      %v2715 = vrot.slane %v700, 1
      %v2716 = vsel %vm2703, %v2713, %v2715
      %v2717 = vrot.slane %v701, 1
      %v2718 = vsel %vm2703, %v2715, %v2717
      %v2719 = vrot.slane %v702, 1
      %v2720 = vsel %vm2703, %v2717, %v2719
      %v2721 = vrot.slane %v703, 1
      %v2722 = vsel %vm2703, %v2719, %v2721
      %v2723 = vrot.slane %v704, 1
      %v2724 = vsel %vm2703, %v2721, %v2723
      %v2725 = vrot.slane %v705, 1
      %v2726 = vsel %vm2703, %v2723, %v2725
      %v2727 = vrot.slane %v706, 1
      %v2728 = vsel %vm2703, %v2725, %v2727
      %v2729 = vrot.slane %v707, 1
      %v2730 = vsel %vm2703, %v2727, %v2729
      %v2731 = vrot.slane %v708, 1
      %v2732 = vsel %vm2703, %v2729, %v2731
      %v2733 = vrot.slane %v709, 1
      %v2734 = vsel %vm2703, %v2731, %v2733
      %v2735 = vrot.slane %v710, 1
      %v2736 = vsel %vm2703, %v2733, %v2735
      %v2737 = vrot.slane %v711, 1
      %v2738 = vsel %vm2703, %v2735, %v2737
      %v2739 = vrot.slane %v712, 1
      %v2740 = vsel %vm2703, %v2737, %v2739
      %v2741 = vrot.slane %v713, 1
      %v2742 = vsel %vm2703, %v2739, %v2741
      %v2743 = vrot.slane %v714, 1
      %v2744 = vsel %vm2703, %v2741, %v2743
      %v2745 = vrot.slane %v715, 1
      %v2746 = vsel %vm2703, %v2743, %v2745
      %v2747 = vrot.slane %v716, 1
      %v2748 = vsel %vm2703, %v2745, %v2747
      %v2749 = vrot.slane %v717, 1
      %v2750 = vsel %vm2703, %v2747, %v2749
      %v2751 = vrot.slane %v718, 1
      %v2752 = vsel %vm2703, %v2749, %v2751
      %v2753 = vrot.slane %v719, 1
      %v2754 = vsel %vm2703, %v2751, %v2753
      %v2755 = vrot.slane %v720, 1
      %v2756 = vsel %vm2703, %v2753, %v2755
      %v2757 = vrot.slane %v721, 1
      %v2758 = vsel %vm2703, %v2755, %v2757
      %v2759 = vrot.slane %v722, 1
      %v2760 = vsel %vm2703, %v2757, %v2759
      %v2761 = vrot.slane %v723, 1
      %v2762 = vsel %vm2703, %v2759, %v2761
      %v2763 = vrot.slane %v724, 1
      %v2764 = vsel %vm2703, %v2761, %v2763
      %v2765 = vrot.slane %v725, 1
      %v2766 = vsel %vm2703, %v2763, %v2765
      %v2767 = vrot.slane %v726, 1
      %v2768 = vsel %vm2703, %v2765, %v2767
      %v2769 = vrot.slane %v727, 1
      %v2770 = vsel %vm2703, %v2767, %v2769
      %v2771 = vrot.slane %v728, 1
      %v2772 = vsel %vm2703, %v2769, %v2771
      %v2773 = vrot.slane %v729, 1
      %v2774 = vsel %vm2703, %v2771, %v2773
      %v2775 = vrot.slane %v730, 1
      %v2776 = vsel %vm2703, %v2773, %v2775
      %v2777 = vrot.slane %v731, 1
      %v2778 = vsel %vm2703, %v2775, %v2777
      %v2779 = vrot.slane %v732, 1
      %v2780 = vsel %vm2703, %v2777, %v2779
      %v2781 = vrot.slane %v733, 1
      %v2782 = vsel %vm2703, %v2779, %v2781
      %v2783 = vrot.slane %v734, 1
      %v2784 = vsel %vm2703, %v2781, %v2783
      %v2785 = vrot.slane %v735, 1
      %v2786 = vsel %vm2703, %v2783, %v2785
      %v2787 = vrot.slane %v736, 1
      %v2788 = vsel %vm2703, %v2785, %v2787
      %v2789 = vrot.slane %v737, 1
      %v2790 = vsel %vm2703, %v2787, %v2789
      %v2791 = vrot.slane %v738, 1
      %v2792 = vsel %vm2703, %v2789, %v2791
      %v2793 = vrot.slane %v739, 1
      %v2794 = vsel %vm2703, %v2791, %v2793
      %v2795 = vrot.slane %v740, 1
      %v2796 = vsel %vm2703, %v2793, %v2795
      %v2797 = vrot.slane %v741, 1
      %v2798 = vsel %vm2703, %v2795, %v2797
      %v2799 = vrot.slane %v742, 1
      %v2800 = vsel %vm2703, %v2797, %v2799
      %v2801 = vrot.slane %v743, 1
      %v2802 = vsel %vm2703, %v2799, %v2801
      %v2803 = vrot.slane %v744, 1
      %v2804 = vsel %vm2703, %v2801, %v2803
      %v2805 = vrot.slane %v745, 1
      %v2806 = vsel %vm2703, %v2803, %v2805
      %v2807 = vrot.slane %v746, 1
      %v2808 = vsel %vm2703, %v2805, %v2807
      %v2809 = vrot.slane %v747, 1
      %v2810 = vsel %vm2703, %v2807, %v2809
      %v2811 = vrot.slane %v748, 1
      %v2812 = vsel %vm2703, %v2809, %v2811
      %v2813 = vrot.slane %v749, 1
      %v2814 = vsel %vm2703, %v2811, %v2813
      %v2815 = vrot.slane %v750, 1
      %v2816 = vsel %vm2703, %v2813, %v2815
      %v2817 = vrot.slane %v751, 1
      %v2818 = vsel %vm2703, %v2815, %v2817
      %v2819 = vrot.slane %v752, 1
      %v2820 = vsel %vm2703, %v2817, %v2819
      %v2821 = vrot.slane %v753, 1
      %v2822 = vsel %vm2703, %v2819, %v2821
      %v2823 = vrot.slane %v754, 1
      %v2824 = vsel %vm2703, %v2821, %v2823
      %v2825 = vrot.slane %v755, 1
      %v2826 = vsel %vm2703, %v2823, %v2825
      %v2827 = vrot.slane %v756, 1
      %v2828 = vsel %vm2703, %v2825, %v2827
      %v2829 = vrot.slane %v757, 1
      %v2830 = vsel %vm2703, %v2827, %v2829
      %v2831 = vrot.slane %v762, 1
      %v2832 = vsel %vm2703, %v2829, %v2831
      %v2834 = vsel %vm1283, %v2706, 0
      %v2837 = vsel %vm1283, %v2708, 0
      %v2840 = vsel %vm1283, %v2710, 0
      %v2843 = vsel %vm1283, %v2712, 0
      %v2846 = vsel %vm1283, %v2714, 0
      %v2849 = vsel %vm1283, %v2716, 0
      %v2852 = vsel %vm1283, %v2718, 0
      %v2855 = vsel %vm1283, %v2720, 0
      %v2858 = vsel %vm1283, %v2722, 0
      %v2861 = vsel %vm1283, %v2724, 0
      %v2864 = vsel %vm1283, %v2726, 0
      %v2867 = vsel %vm1283, %v2728, 0
      %v2870 = vsel %vm1283, %v2730, 0
      %v2873 = vsel %vm1283, %v2732, 0
      %v2876 = vsel %vm1283, %v2734, 0
      %v2879 = vsel %vm1283, %v2736, 0
      %v2882 = vsel %vm1283, %v2738, 0
      %v2885 = vsel %vm1283, %v2740, 0
      %v2888 = vsel %vm1283, %v2742, 0
      %v2891 = vsel %vm1283, %v2744, 0
      %v2894 = vsel %vm1283, %v2746, 0
      %v2897 = vsel %vm1283, %v2748, 0
      %v2900 = vsel %vm1283, %v2750, 0
      %v2903 = vsel %vm1283, %v2752, 0
      %v2906 = vsel %vm1283, %v2754, 0
      %v2909 = vsel %vm1283, %v2756, 0
      %v2912 = vsel %vm1283, %v2758, 0
      %v2915 = vsel %vm1283, %v2760, 0
      %v2918 = vsel %vm1283, %v2762, 0
      %v2921 = vsel %vm1283, %v2764, 0
      %v2924 = vsel %vm1283, %v2766, 0
      %v2927 = vsel %vm1283, %v2768, 0
      %v2930 = vsel %vm1283, %v2770, 0
      %v2933 = vsel %vm1283, %v2772, 0
      %v2936 = vsel %vm1283, %v2774, 0
      %v2939 = vsel %vm1283, %v2776, 0
      %v2942 = vsel %vm1283, %v2778, 0
      %v2945 = vsel %vm1283, %v2780, 0
      %v2948 = vsel %vm1283, %v2782, 0
      %v2951 = vsel %vm1283, %v2784, 0
      %v2954 = vsel %vm1283, %v2786, 0
      %v2957 = vsel %vm1283, %v2788, 0
      %v2960 = vsel %vm1283, %v2790, 0
      %v2963 = vsel %vm1283, %v2792, 0
      %v2966 = vsel %vm1283, %v2794, 0
      %v2969 = vsel %vm1283, %v2796, 0
      %v2972 = vsel %vm1283, %v2798, 0
      %v2975 = vsel %vm1283, %v2800, 0
      %v2978 = vsel %vm1283, %v2802, 0
      %v2981 = vsel %vm1283, %v2804, 0
      %v2984 = vsel %vm1283, %v2806, 0
      %v2987 = vsel %vm1283, %v2808, 0
      %v2990 = vsel %vm1283, %v2810, 0
      %v2993 = vsel %vm1283, %v2812, 0
      %v2996 = vsel %vm1283, %v2814, 0
      %v2999 = vsel %vm1283, %v2816, 0
      %v3002 = vsel %vm1283, %v2818, 0
      %v3005 = vsel %vm1283, %v2820, 0
      %v3008 = vsel %vm1283, %v2822, 0
      %v3011 = vsel %vm1283, %v2824, 0
      %v3014 = vsel %vm1283, %v2826, 0
      %v3017 = vsel %vm1283, %v2828, 0
      %v3020 = vsel %vm1283, %v2830, 0
      %v3023 = vsel %vm1283, %v2832, 0
      %v3026 = vsel %vm1476, %v2702, 0
      %3028 = vmatprep.subr.bf16.mxu0 0
      %3029 = vmatpush1.bf16.msra.mxu0 %v3026
      %3030 = vmatprep.subr.bf16.mxu0 0
      %3031 = vmatpush1.bf16.msra.mxu0 0
      %3032 = vmatprep.subr.bf16.mxu0 0
      %3033 = vmatpush1.bf16.msra.mxu0 0
      %3034 = vmatprep.subr.bf16.mxu0 0
      %3035 = vmatpush1.bf16.msra.mxu0 0
      %3036 = vmatprep.subr.bf16.mxu0 0
      %3037 = vmatpush1.bf16.msra.mxu0 0
      %3038 = vmatprep.subr.bf16.mxu0 0
      %3039 = vmatpush1.bf16.msra.mxu0 0
      %3040 = vmatprep.subr.bf16.mxu0 0
      %3041 = vmatpush1.bf16.msra.mxu0 0
      %3042 = vmatprep.subr.bf16.mxu0 0
      %3043 = vmatpush1.bf16.msra.mxu0 0
      %3044 = vmatprep.subr.bf16.mxu0 0
      %3045 = vmatpush1.bf16.msra.mxu0 0
      %3046 = vmatprep.subr.bf16.mxu0 0
      %3047 = vmatpush1.bf16.msra.mxu0 0
      %3048 = vmatprep.subr.bf16.mxu0 0
      %3049 = vmatpush1.bf16.msra.mxu0 0
      %3050 = vmatprep.subr.bf16.mxu0 0
      %3051 = vmatpush1.bf16.msra.mxu0 0
      %3052 = vmatprep.subr.bf16.mxu0 0
      %3053 = vmatpush1.bf16.msra.mxu0 0
      %3054 = vmatprep.subr.bf16.mxu0 0
      %3055 = vmatpush1.bf16.msra.mxu0 0
      %3056 = vmatprep.subr.bf16.mxu0 0
      %3057 = vmatpush1.bf16.msra.mxu0 0
      %3058 = vmatprep.subr.bf16.mxu0 0
      %3059 = vmatpush1.bf16.msra.mxu0 0
      %3060 = vmatprep.mubr.bf16.mxu0 0
      %3061 = vmatmul.mubr.bf16.gmra.mrb[0].mxu0 %v2834
      %v3062 = vpop.f32.mrb[0].mxu0
      %v3063 = vadd.f32 0.0, %v3062
      %v3064 = vpop.f32.mrb[0].mxu0
      %v3065 = vpop.f32.mrb[0].mxu0
      %v3066 = vadd.f32 0.0, %v3065
      %v3067 = vpop.f32.mrb[0].mxu0
      %3068 = vmatprep.mubr.bf16.mxu0 0
      %3069 = vmatmul.mubr.bf16.gmra.mrb[0].mxu0 %v2837
      %v3070 = vpop.f32.mrb[0].mxu0
      %v3071 = vadd.f32 0.0, %v3070
      %v3072 = vpop.f32.mrb[0].mxu0
      %v3073 = vpop.f32.mrb[0].mxu0
      %v3074 = vadd.f32 0.0, %v3073
      %v3075 = vpop.f32.mrb[0].mxu0
      %3076 = vmatprep.mubr.bf16.mxu0 0
      %3077 = vmatmul.mubr.bf16.gmra.mrb[0].mxu0 %v2840
      %v3078 = vpop.f32.mrb[0].mxu0
      %v3079 = vadd.f32 0.0, %v3078
      %v3080 = vpop.f32.mrb[0].mxu0
      %v3081 = vpop.f32.mrb[0].mxu0
      %v3082 = vadd.f32 0.0, %v3081
      %v3083 = vpop.f32.mrb[0].mxu0
      %3084 = vmatprep.mubr.bf16.mxu0 0
      %3085 = vmatmul.mubr.bf16.gmra.mrb[0].mxu0 %v2843
      %v3086 = vpop.f32.mrb[0].mxu0
      %v3087 = vadd.f32 0.0, %v3086
      %v3088 = vpop.f32.mrb[0].mxu0
      %v3089 = vpop.f32.mrb[0].mxu0
      %v3090 = vadd.f32 0.0, %v3089
      %v3091 = vpop.f32.mrb[0].mxu0
      %3092 = vmatprep.mubr.bf16.mxu0 0
      %3093 = vmatmul.mubr.bf16.gmra.mrb[0].mxu0 %v2846
      %v3094 = vpop.f32.mrb[0].mxu0
      %v3095 = vadd.f32 0.0, %v3094
      %v3096 = vpop.f32.mrb[0].mxu0
      %v3097 = vpop.f32.mrb[0].mxu0
      %v3098 = vadd.f32 0.0, %v3097
      %v3099 = vpop.f32.mrb[0].mxu0
      %3100 = vmatprep.mubr.bf16.mxu0 0
      %3101 = vmatmul.mubr.bf16.gmra.mrb[0].mxu0 %v2849
      %v3102 = vpop.f32.mrb[0].mxu0
      %v3103 = vadd.f32 0.0, %v3102
      %v3104 = vpop.f32.mrb[0].mxu0
      %v3105 = vpop.f32.mrb[0].mxu0
      %v3106 = vadd.f32 0.0, %v3105
      %v3107 = vpop.f32.mrb[0].mxu0
      %3108 = vmatprep.mubr.bf16.mxu0 0
      %3109 = vmatmul.mubr.bf16.gmra.mrb[0].mxu0 %v2852
      %v3110 = vpop.f32.mrb[0].mxu0
      %v3111 = vadd.f32 0.0, %v3110
      %v3112 = vpop.f32.mrb[0].mxu0
      %v3113 = vpop.f32.mrb[0].mxu0
      %v3114 = vadd.f32 0.0, %v3113
      %v3115 = vpop.f32.mrb[0].mxu0
      %3116 = vmatprep.mubr.bf16.mxu0 0
      %3117 = vmatmul.mubr.bf16.gmra.mrb[0].mxu0 %v2855
      %v3118 = vpop.f32.mrb[0].mxu0
      %v3119 = vadd.f32 0.0, %v3118
      %v3120 = vpop.f32.mrb[0].mxu0
      %v3121 = vpop.f32.mrb[0].mxu0
      %v3122 = vadd.f32 0.0, %v3121
      %v3123 = vpop.f32.mrb[0].mxu0
      %3124 = vmatprep.mubr.bf16.mxu0 0
      %3125 = vmatmul.mubr.bf16.gmra.mrb[0].mxu0 %v2858
      %v3126 = vpop.f32.mrb[0].mxu0
      %v3127 = vadd.f32 0.0, %v3126
      %v3128 = vpop.f32.mrb[0].mxu0
      %v3129 = vpop.f32.mrb[0].mxu0
      %v3130 = vadd.f32 0.0, %v3129
      %v3131 = vpop.f32.mrb[0].mxu0
      %3132 = vmatprep.mubr.bf16.mxu0 0
      %3133 = vmatmul.mubr.bf16.gmra.mrb[0].mxu0 %v2861
      %v3134 = vpop.f32.mrb[0].mxu0
      %v3135 = vadd.f32 0.0, %v3134
      %v3136 = vpop.f32.mrb[0].mxu0
      %v3137 = vpop.f32.mrb[0].mxu0
      %v3138 = vadd.f32 0.0, %v3137
      %v3139 = vpop.f32.mrb[0].mxu0
      %3140 = vmatprep.mubr.bf16.mxu0 0
      %3141 = vmatmul.mubr.bf16.gmra.mrb[0].mxu0 %v2864
      %v3142 = vpop.f32.mrb[0].mxu0
      %v3143 = vadd.f32 0.0, %v3142
      %v3144 = vpop.f32.mrb[0].mxu0
      %v3145 = vpop.f32.mrb[0].mxu0
      %v3146 = vadd.f32 0.0, %v3145
      %v3147 = vpop.f32.mrb[0].mxu0
      %3148 = vmatprep.mubr.bf16.mxu0 0
      %3149 = vmatmul.mubr.bf16.gmra.mrb[0].mxu0 %v2867
      %v3150 = vpop.f32.mrb[0].mxu0
      %v3151 = vadd.f32 0.0, %v3150
      %v3152 = vpop.f32.mrb[0].mxu0
      %v3153 = vpop.f32.mrb[0].mxu0
      %v3154 = vadd.f32 0.0, %v3153
      %v3155 = vpop.f32.mrb[0].mxu0
      %3156 = vmatprep.mubr.bf16.mxu0 0
      %3157 = vmatmul.mubr.bf16.gmra.mrb[0].mxu0 %v2870
      %v3158 = vpop.f32.mrb[0].mxu0
      %v3159 = vadd.f32 0.0, %v3158
      %v3160 = vpop.f32.mrb[0].mxu0
      %v3161 = vpop.f32.mrb[0].mxu0
      %v3162 = vadd.f32 0.0, %v3161
      %v3163 = vpop.f32.mrb[0].mxu0
      %3164 = vmatprep.mubr.bf16.mxu0 0
      %3165 = vmatmul.mubr.bf16.gmra.mrb[0].mxu0 %v2873
      %v3166 = vpop.f32.mrb[0].mxu0
      %v3167 = vadd.f32 0.0, %v3166
      %v3168 = vpop.f32.mrb[0].mxu0
      %v3169 = vpop.f32.mrb[0].mxu0
      %v3170 = vadd.f32 0.0, %v3169
      %v3171 = vpop.f32.mrb[0].mxu0
      %3172 = vmatprep.mubr.bf16.mxu0 0
      %3173 = vmatmul.mubr.bf16.gmra.mrb[0].mxu0 %v2876
      %v3174 = vpop.f32.mrb[0].mxu0
      %v3175 = vadd.f32 0.0, %v3174
      %v3176 = vpop.f32.mrb[0].mxu0
      %v3177 = vpop.f32.mrb[0].mxu0
      %v3178 = vadd.f32 0.0, %v3177
      %v3179 = vpop.f32.mrb[0].mxu0
      %3180 = vmatprep.mubr.bf16.mxu0 0
      %3181 = vmatmul.mubr.bf16.gmra.mrb[0].mxu0 %v2879
      %v3182 = vpop.f32.mrb[0].mxu0
      %v3183 = vadd.f32 0.0, %v3182
      %v3184 = vpop.f32.mrb[0].mxu0
      %v3185 = vpop.f32.mrb[0].mxu0
      %v3186 = vadd.f32 0.0, %v3185
      %v3187 = vpop.f32.mrb[0].mxu0
      %3188 = vmatprep.mubr.bf16.mxu0 0
      %3189 = vmatmul.mubr.bf16.gmra.mrb[0].mxu0 %v2882
      %v3190 = vpop.f32.mrb[0].mxu0
      %v3191 = vadd.f32 0.0, %v3190
      %v3192 = vpop.f32.mrb[0].mxu0
      %v3193 = vpop.f32.mrb[0].mxu0
      %v3194 = vadd.f32 0.0, %v3193
      %v3195 = vpop.f32.mrb[0].mxu0
      %3196 = vmatprep.mubr.bf16.mxu0 0
      %3197 = vmatmul.mubr.bf16.gmra.mrb[0].mxu0 %v2885
      %v3198 = vpop.f32.mrb[0].mxu0
      %v3199 = vadd.f32 0.0, %v3198
      %v3200 = vpop.f32.mrb[0].mxu0
      %v3201 = vpop.f32.mrb[0].mxu0
      %v3202 = vadd.f32 0.0, %v3201
      %v3203 = vpop.f32.mrb[0].mxu0
      %3204 = vmatprep.mubr.bf16.mxu0 0
      %3205 = vmatmul.mubr.bf16.gmra.mrb[0].mxu0 %v2888
      %v3206 = vpop.f32.mrb[0].mxu0
      %v3207 = vadd.f32 0.0, %v3206
      %v3208 = vpop.f32.mrb[0].mxu0
      %v3209 = vpop.f32.mrb[0].mxu0
      %v3210 = vadd.f32 0.0, %v3209
      %v3211 = vpop.f32.mrb[0].mxu0
      %3212 = vmatprep.mubr.bf16.mxu0 0
      %3213 = vmatmul.mubr.bf16.gmra.mrb[0].mxu0 %v2891
      %v3214 = vpop.f32.mrb[0].mxu0
      %v3215 = vadd.f32 0.0, %v3214
      %v3216 = vpop.f32.mrb[0].mxu0
      %v3217 = vpop.f32.mrb[0].mxu0
      %v3218 = vadd.f32 0.0, %v3217
      %v3219 = vpop.f32.mrb[0].mxu0
      %3220 = vmatprep.mubr.bf16.mxu0 0
      %3221 = vmatmul.mubr.bf16.gmra.mrb[0].mxu0 %v2894
      %v3222 = vpop.f32.mrb[0].mxu0
      %v3223 = vadd.f32 0.0, %v3222
      %v3224 = vpop.f32.mrb[0].mxu0
      %v3225 = vpop.f32.mrb[0].mxu0
      %v3226 = vadd.f32 0.0, %v3225
      %v3227 = vpop.f32.mrb[0].mxu0
      %3228 = vmatprep.mubr.bf16.mxu0 0
      %3229 = vmatmul.mubr.bf16.gmra.mrb[0].mxu0 %v2897
      %v3230 = vpop.f32.mrb[0].mxu0
      %v3231 = vadd.f32 0.0, %v3230
      %v3232 = vpop.f32.mrb[0].mxu0
      %v3233 = vpop.f32.mrb[0].mxu0
      %v3234 = vadd.f32 0.0, %v3233
      %v3235 = vpop.f32.mrb[0].mxu0
      %3236 = vmatprep.mubr.bf16.mxu0 0
      %3237 = vmatmul.mubr.bf16.gmra.mrb[0].mxu0 %v2900
      %v3238 = vpop.f32.mrb[0].mxu0
      %v3239 = vadd.f32 0.0, %v3238
      %v3240 = vpop.f32.mrb[0].mxu0
      %v3241 = vpop.f32.mrb[0].mxu0
      %v3242 = vadd.f32 0.0, %v3241
      %v3243 = vpop.f32.mrb[0].mxu0
      %3244 = vmatprep.mubr.bf16.mxu0 0
      %3245 = vmatmul.mubr.bf16.gmra.mrb[0].mxu0 %v2903
      %v3246 = vpop.f32.mrb[0].mxu0
      %v3247 = vadd.f32 0.0, %v3246
      %v3248 = vpop.f32.mrb[0].mxu0
      %v3249 = vpop.f32.mrb[0].mxu0
      %v3250 = vadd.f32 0.0, %v3249
      %v3251 = vpop.f32.mrb[0].mxu0
      %3252 = vmatprep.mubr.bf16.mxu0 0
      %3253 = vmatmul.mubr.bf16.gmra.mrb[0].mxu0 %v2906
      %v3254 = vpop.f32.mrb[0].mxu0
      %v3255 = vadd.f32 0.0, %v3254
      %v3256 = vpop.f32.mrb[0].mxu0
      %v3257 = vpop.f32.mrb[0].mxu0
      %v3258 = vadd.f32 0.0, %v3257
      %v3259 = vpop.f32.mrb[0].mxu0
      %3260 = vmatprep.mubr.bf16.mxu0 0
      %3261 = vmatmul.mubr.bf16.gmra.mrb[0].mxu0 %v2909
      %v3262 = vpop.f32.mrb[0].mxu0
      %v3263 = vadd.f32 0.0, %v3262
      %v3264 = vpop.f32.mrb[0].mxu0
      %v3265 = vpop.f32.mrb[0].mxu0
      %v3266 = vadd.f32 0.0, %v3265
      %v3267 = vpop.f32.mrb[0].mxu0
      %3268 = vmatprep.mubr.bf16.mxu0 0
      %3269 = vmatmul.mubr.bf16.gmra.mrb[0].mxu0 %v2912
      %v3270 = vpop.f32.mrb[0].mxu0
      %v3271 = vadd.f32 0.0, %v3270
      %v3272 = vpop.f32.mrb[0].mxu0
      %v3273 = vpop.f32.mrb[0].mxu0
      %v3274 = vadd.f32 0.0, %v3273
      %v3275 = vpop.f32.mrb[0].mxu0
      %3276 = vmatprep.mubr.bf16.mxu0 0
      %3277 = vmatmul.mubr.bf16.gmra.mrb[0].mxu0 %v2915
      %v3278 = vpop.f32.mrb[0].mxu0
      %v3279 = vadd.f32 0.0, %v3278
      %v3280 = vpop.f32.mrb[0].mxu0
      %v3281 = vpop.f32.mrb[0].mxu0
      %v3282 = vadd.f32 0.0, %v3281
      %v3283 = vpop.f32.mrb[0].mxu0
      %3284 = vmatprep.mubr.bf16.mxu0 0
      %3285 = vmatmul.mubr.bf16.gmra.mrb[0].mxu0 %v2918
      %v3286 = vpop.f32.mrb[0].mxu0
      %v3287 = vadd.f32 0.0, %v3286
      %v3288 = vpop.f32.mrb[0].mxu0
      %v3289 = vpop.f32.mrb[0].mxu0
      %v3290 = vadd.f32 0.0, %v3289
      %v3291 = vpop.f32.mrb[0].mxu0
      %3292 = vmatprep.mubr.bf16.mxu0 0
      %3293 = vmatmul.mubr.bf16.gmra.mrb[0].mxu0 %v2921
      %v3294 = vpop.f32.mrb[0].mxu0
      %v3295 = vadd.f32 0.0, %v3294
      %v3296 = vpop.f32.mrb[0].mxu0
      %v3297 = vpop.f32.mrb[0].mxu0
      %v3298 = vadd.f32 0.0, %v3297
      %v3299 = vpop.f32.mrb[0].mxu0
      %3300 = vmatprep.mubr.bf16.mxu0 0
      %3301 = vmatmul.mubr.bf16.gmra.mrb[0].mxu0 %v2924
      %v3302 = vpop.f32.mrb[0].mxu0
      %v3303 = vadd.f32 0.0, %v3302
      %v3304 = vpop.f32.mrb[0].mxu0
      %v3305 = vpop.f32.mrb[0].mxu0
      %v3306 = vadd.f32 0.0, %v3305
      %v3307 = vpop.f32.mrb[0].mxu0
      %3308 = vmatprep.mubr.bf16.mxu0 0
      %3309 = vmatmul.mubr.bf16.gmra.mrb[0].mxu0 %v2927
      %v3310 = vpop.f32.mrb[0].mxu0
      %v3311 = vadd.f32 0.0, %v3310
      %v3312 = vpop.f32.mrb[0].mxu0
      %v3313 = vpop.f32.mrb[0].mxu0
      %v3314 = vadd.f32 0.0, %v3313
      %v3315 = vpop.f32.mrb[0].mxu0
      %3316 = vmatprep.mubr.bf16.mxu0 0
      %3317 = vmatmul.mubr.bf16.gmra.mrb[0].mxu0 %v2930
      %v3318 = vpop.f32.mrb[0].mxu0
      %v3319 = vadd.f32 0.0, %v3318
      %v3320 = vpop.f32.mrb[0].mxu0
      %v3321 = vpop.f32.mrb[0].mxu0
      %v3322 = vadd.f32 0.0, %v3321
      %v3323 = vpop.f32.mrb[0].mxu0
      %3324 = vmatprep.mubr.bf16.mxu0 0
      %3325 = vmatmul.mubr.bf16.gmra.mrb[0].mxu0 %v2933
      %v3326 = vpop.f32.mrb[0].mxu0
      %v3327 = vadd.f32 0.0, %v3326
      %v3328 = vpop.f32.mrb[0].mxu0
      %v3329 = vpop.f32.mrb[0].mxu0
      %v3330 = vadd.f32 0.0, %v3329
      %v3331 = vpop.f32.mrb[0].mxu0
      %3332 = vmatprep.mubr.bf16.mxu0 0
      %3333 = vmatmul.mubr.bf16.gmra.mrb[0].mxu0 %v2936
      %v3334 = vpop.f32.mrb[0].mxu0
      %v3335 = vadd.f32 0.0, %v3334
      %v3336 = vpop.f32.mrb[0].mxu0
      %v3337 = vpop.f32.mrb[0].mxu0
      %v3338 = vadd.f32 0.0, %v3337
      %v3339 = vpop.f32.mrb[0].mxu0
      %3340 = vmatprep.mubr.bf16.mxu0 0
      %3341 = vmatmul.mubr.bf16.gmra.mrb[0].mxu0 %v2939
      %v3342 = vpop.f32.mrb[0].mxu0
      %v3343 = vadd.f32 0.0, %v3342
      %v3344 = vpop.f32.mrb[0].mxu0
      %v3345 = vpop.f32.mrb[0].mxu0
      %v3346 = vadd.f32 0.0, %v3345
      %v3347 = vpop.f32.mrb[0].mxu0
      %3348 = vmatprep.mubr.bf16.mxu0 0
      %3349 = vmatmul.mubr.bf16.gmra.mrb[0].mxu0 %v2942
      %v3350 = vpop.f32.mrb[0].mxu0
      %v3351 = vadd.f32 0.0, %v3350
      %v3352 = vpop.f32.mrb[0].mxu0
      %v3353 = vpop.f32.mrb[0].mxu0
      %v3354 = vadd.f32 0.0, %v3353
      %v3355 = vpop.f32.mrb[0].mxu0
      %3356 = vmatprep.mubr.bf16.mxu0 0
      %3357 = vmatmul.mubr.bf16.gmra.mrb[0].mxu0 %v2945
      %v3358 = vpop.f32.mrb[0].mxu0
      %v3359 = vadd.f32 0.0, %v3358
      %v3360 = vpop.f32.mrb[0].mxu0
      %v3361 = vpop.f32.mrb[0].mxu0
      %v3362 = vadd.f32 0.0, %v3361
      %v3363 = vpop.f32.mrb[0].mxu0
      %3364 = vmatprep.mubr.bf16.mxu0 0
      %3365 = vmatmul.mubr.bf16.gmra.mrb[0].mxu0 %v2948
      %v3366 = vpop.f32.mrb[0].mxu0
      %v3367 = vadd.f32 0.0, %v3366
      %v3368 = vpop.f32.mrb[0].mxu0
      %v3369 = vpop.f32.mrb[0].mxu0
      %v3370 = vadd.f32 0.0, %v3369
      %v3371 = vpop.f32.mrb[0].mxu0
      %3372 = vmatprep.mubr.bf16.mxu0 0
      %3373 = vmatmul.mubr.bf16.gmra.mrb[0].mxu0 %v2951
      %v3374 = vpop.f32.mrb[0].mxu0
      %v3375 = vadd.f32 0.0, %v3374
      %v3376 = vpop.f32.mrb[0].mxu0
      %v3377 = vpop.f32.mrb[0].mxu0
      %v3378 = vadd.f32 0.0, %v3377
      %v3379 = vpop.f32.mrb[0].mxu0
      %3380 = vmatprep.mubr.bf16.mxu0 0
      %3381 = vmatmul.mubr.bf16.gmra.mrb[0].mxu0 %v2954
      %v3382 = vpop.f32.mrb[0].mxu0
      %v3383 = vadd.f32 0.0, %v3382
      %v3384 = vpop.f32.mrb[0].mxu0
      %v3385 = vpop.f32.mrb[0].mxu0
      %v3386 = vadd.f32 0.0, %v3385
      %v3387 = vpop.f32.mrb[0].mxu0
      %3388 = vmatprep.mubr.bf16.mxu0 0
      %3389 = vmatmul.mubr.bf16.gmra.mrb[0].mxu0 %v2957
      %v3390 = vpop.f32.mrb[0].mxu0
      %v3391 = vadd.f32 0.0, %v3390
      %v3392 = vpop.f32.mrb[0].mxu0
      %v3393 = vpop.f32.mrb[0].mxu0
      %v3394 = vadd.f32 0.0, %v3393
      %v3395 = vpop.f32.mrb[0].mxu0
      %3396 = vmatprep.mubr.bf16.mxu0 0
      %3397 = vmatmul.mubr.bf16.gmra.mrb[0].mxu0 %v2960
      %v3398 = vpop.f32.mrb[0].mxu0
      %v3399 = vadd.f32 0.0, %v3398
      %v3400 = vpop.f32.mrb[0].mxu0
      %v3401 = vpop.f32.mrb[0].mxu0
      %v3402 = vadd.f32 0.0, %v3401
      %v3403 = vpop.f32.mrb[0].mxu0
      %3404 = vmatprep.mubr.bf16.mxu0 0
      %3405 = vmatmul.mubr.bf16.gmra.mrb[0].mxu0 %v2963
      %v3406 = vpop.f32.mrb[0].mxu0
      %v3407 = vadd.f32 0.0, %v3406
      %v3408 = vpop.f32.mrb[0].mxu0
      %v3409 = vpop.f32.mrb[0].mxu0
      %v3410 = vadd.f32 0.0, %v3409
      %v3411 = vpop.f32.mrb[0].mxu0
      %3412 = vmatprep.mubr.bf16.mxu0 0
      %3413 = vmatmul.mubr.bf16.gmra.mrb[0].mxu0 %v2966
      %v3414 = vpop.f32.mrb[0].mxu0
      %v3415 = vadd.f32 0.0, %v3414
      %v3416 = vpop.f32.mrb[0].mxu0
      %v3417 = vpop.f32.mrb[0].mxu0
      %v3418 = vadd.f32 0.0, %v3417
      %v3419 = vpop.f32.mrb[0].mxu0
      %3420 = vmatprep.mubr.bf16.mxu0 0
      %3421 = vmatmul.mubr.bf16.gmra.mrb[0].mxu0 %v2969
      %v3422 = vpop.f32.mrb[0].mxu0
      %v3423 = vadd.f32 0.0, %v3422
      %v3424 = vpop.f32.mrb[0].mxu0
      %v3425 = vpop.f32.mrb[0].mxu0
      %v3426 = vadd.f32 0.0, %v3425
      %v3427 = vpop.f32.mrb[0].mxu0
      %3428 = vmatprep.mubr.bf16.mxu0 0
      %3429 = vmatmul.mubr.bf16.gmra.mrb[0].mxu0 %v2972
      %v3430 = vpop.f32.mrb[0].mxu0
      %v3431 = vadd.f32 0.0, %v3430
      %v3432 = vpop.f32.mrb[0].mxu0
      %v3433 = vpop.f32.mrb[0].mxu0
      %v3434 = vadd.f32 0.0, %v3433
      %v3435 = vpop.f32.mrb[0].mxu0
      %3436 = vmatprep.mubr.bf16.mxu0 0
      %3437 = vmatmul.mubr.bf16.gmra.mrb[0].mxu0 %v2975
      %v3438 = vpop.f32.mrb[0].mxu0
      %v3439 = vadd.f32 0.0, %v3438
      %v3440 = vpop.f32.mrb[0].mxu0
      %v3441 = vpop.f32.mrb[0].mxu0
      %v3442 = vadd.f32 0.0, %v3441
      %v3443 = vpop.f32.mrb[0].mxu0
      %3444 = vmatprep.mubr.bf16.mxu0 0
      %3445 = vmatmul.mubr.bf16.gmra.mrb[0].mxu0 %v2978
      %v3446 = vpop.f32.mrb[0].mxu0
      %v3447 = vadd.f32 0.0, %v3446
      %v3448 = vpop.f32.mrb[0].mxu0
      %v3449 = vpop.f32.mrb[0].mxu0
      %v3450 = vadd.f32 0.0, %v3449
      %v3451 = vpop.f32.mrb[0].mxu0
      %3452 = vmatprep.mubr.bf16.mxu0 0
      %3453 = vmatmul.mubr.bf16.gmra.mrb[0].mxu0 %v2981
      %v3454 = vpop.f32.mrb[0].mxu0
      %v3455 = vadd.f32 0.0, %v3454
      %v3456 = vpop.f32.mrb[0].mxu0
      %v3457 = vpop.f32.mrb[0].mxu0
      %v3458 = vadd.f32 0.0, %v3457
      %v3459 = vpop.f32.mrb[0].mxu0
      %3460 = vmatprep.mubr.bf16.mxu0 0
      %3461 = vmatmul.mubr.bf16.gmra.mrb[0].mxu0 %v2984
      %v3462 = vpop.f32.mrb[0].mxu0
      %v3463 = vadd.f32 0.0, %v3462
      %v3464 = vpop.f32.mrb[0].mxu0
      %v3465 = vpop.f32.mrb[0].mxu0
      %v3466 = vadd.f32 0.0, %v3465
      %v3467 = vpop.f32.mrb[0].mxu0
      %3468 = vmatprep.mubr.bf16.mxu0 0
      %3469 = vmatmul.mubr.bf16.gmra.mrb[0].mxu0 %v2987
      %v3470 = vpop.f32.mrb[0].mxu0
      %v3471 = vadd.f32 0.0, %v3470
      %v3472 = vpop.f32.mrb[0].mxu0
      %v3473 = vpop.f32.mrb[0].mxu0
      %v3474 = vadd.f32 0.0, %v3473
      %v3475 = vpop.f32.mrb[0].mxu0
      %3476 = vmatprep.mubr.bf16.mxu0 0
      %3477 = vmatmul.mubr.bf16.gmra.mrb[0].mxu0 %v2990
      %v3478 = vpop.f32.mrb[0].mxu0
      %v3479 = vadd.f32 0.0, %v3478
      %v3480 = vpop.f32.mrb[0].mxu0
      %v3481 = vpop.f32.mrb[0].mxu0
      %v3482 = vadd.f32 0.0, %v3481
      %v3483 = vpop.f32.mrb[0].mxu0
      %3484 = vmatprep.mubr.bf16.mxu0 0
      %3485 = vmatmul.mubr.bf16.gmra.mrb[0].mxu0 %v2993
      %v3486 = vpop.f32.mrb[0].mxu0
      %v3487 = vadd.f32 0.0, %v3486
      %v3488 = vpop.f32.mrb[0].mxu0
      %v3489 = vpop.f32.mrb[0].mxu0
      %v3490 = vadd.f32 0.0, %v3489
      %v3491 = vpop.f32.mrb[0].mxu0
      %3492 = vmatprep.mubr.bf16.mxu0 0
      %3493 = vmatmul.mubr.bf16.gmra.mrb[0].mxu0 %v2996
      %v3494 = vpop.f32.mrb[0].mxu0
      %v3495 = vadd.f32 0.0, %v3494
      %v3496 = vpop.f32.mrb[0].mxu0
      %v3497 = vpop.f32.mrb[0].mxu0
      %v3498 = vadd.f32 0.0, %v3497
      %v3499 = vpop.f32.mrb[0].mxu0
      %3500 = vmatprep.mubr.bf16.mxu0 0
      %3501 = vmatmul.mubr.bf16.gmra.mrb[0].mxu0 %v2999
      %v3502 = vpop.f32.mrb[0].mxu0
      %v3503 = vadd.f32 0.0, %v3502
      %v3504 = vpop.f32.mrb[0].mxu0
      %v3505 = vpop.f32.mrb[0].mxu0
      %v3506 = vadd.f32 0.0, %v3505
      %v3507 = vpop.f32.mrb[0].mxu0
      %3508 = vmatprep.mubr.bf16.mxu0 0
      %3509 = vmatmul.mubr.bf16.gmra.mrb[0].mxu0 %v3002
      %v3510 = vpop.f32.mrb[0].mxu0
      %v3511 = vadd.f32 0.0, %v3510
      %v3512 = vpop.f32.mrb[0].mxu0
      %v3513 = vpop.f32.mrb[0].mxu0
      %v3514 = vadd.f32 0.0, %v3513
      %v3515 = vpop.f32.mrb[0].mxu0
      %3516 = vmatprep.mubr.bf16.mxu0 0
      %3517 = vmatmul.mubr.bf16.gmra.mrb[0].mxu0 %v3005
      %v3518 = vpop.f32.mrb[0].mxu0
      %v3519 = vadd.f32 0.0, %v3518
      %v3520 = vpop.f32.mrb[0].mxu0
      %v3521 = vpop.f32.mrb[0].mxu0
      %v3522 = vadd.f32 0.0, %v3521
      %v3523 = vpop.f32.mrb[0].mxu0
      %3524 = vmatprep.mubr.bf16.mxu0 0
      %3525 = vmatmul.mubr.bf16.gmra.mrb[0].mxu0 %v3008
      %v3526 = vpop.f32.mrb[0].mxu0
      %v3527 = vadd.f32 0.0, %v3526
      %v3528 = vpop.f32.mrb[0].mxu0
      %v3529 = vpop.f32.mrb[0].mxu0
      %v3530 = vadd.f32 0.0, %v3529
      %v3531 = vpop.f32.mrb[0].mxu0
      %3532 = vmatprep.mubr.bf16.mxu0 0
      %3533 = vmatmul.mubr.bf16.gmra.mrb[0].mxu0 %v3011
      %v3534 = vpop.f32.mrb[0].mxu0
      %v3535 = vadd.f32 0.0, %v3534
      %v3536 = vpop.f32.mrb[0].mxu0
      %v3537 = vpop.f32.mrb[0].mxu0
      %v3538 = vadd.f32 0.0, %v3537
      %v3539 = vpop.f32.mrb[0].mxu0
      %3540 = vmatprep.mubr.bf16.mxu0 0
      %3541 = vmatmul.mubr.bf16.gmra.mrb[0].mxu0 %v3014
      %v3542 = vpop.f32.mrb[0].mxu0
      %v3543 = vadd.f32 0.0, %v3542
      %v3544 = vpop.f32.mrb[0].mxu0
      %v3545 = vpop.f32.mrb[0].mxu0
      %v3546 = vadd.f32 0.0, %v3545
      %v3547 = vpop.f32.mrb[0].mxu0
      %3548 = vmatprep.mubr.bf16.mxu0 0
      %3549 = vmatmul.mubr.bf16.gmra.mrb[0].mxu0 %v3017
      %v3550 = vpop.f32.mrb[0].mxu0
      %v3551 = vadd.f32 0.0, %v3550
      %v3552 = vpop.f32.mrb[0].mxu0
      %v3553 = vpop.f32.mrb[0].mxu0
      %v3554 = vadd.f32 0.0, %v3553
      %v3555 = vpop.f32.mrb[0].mxu0
      %3556 = vmatprep.mubr.bf16.mxu0 0
      %3557 = vmatmul.mubr.bf16.gmra.mrb[0].mxu0 %v3020
      %v3558 = vpop.f32.mrb[0].mxu0
      %v3559 = vadd.f32 0.0, %v3558
      %v3560 = vpop.f32.mrb[0].mxu0
      %v3561 = vpop.f32.mrb[0].mxu0
      %v3562 = vadd.f32 0.0, %v3561
      %v3563 = vpop.f32.mrb[0].mxu0
      %3564 = vmatprep.mubr.bf16.mxu0 0
      %3565 = vmatmul.mubr.bf16.gmra.mrb[0].mxu0 %v3023
      %v3566 = vpop.f32.mrb[0].mxu0
      %v3567 = vadd.f32 0.0, %v3566
      %v3568 = vpop.f32.mrb[0].mxu0
      %v3569 = vpop.f32.mrb[0].mxu0
      %v3570 = vadd.f32 0.0, %v3569
      %v3571 = vpop.f32.mrb[0].mxu0
      %3572 = vdwg.mxu0
      %v3573 = vadd.f32 %v2191, %v3063
      %v3574 = vadd.f32 %v2194, %v3066
      %v3575 = vadd.f32 %v2199, %v3071
      %v3576 = vadd.f32 %v2202, %v3074
      %v3577 = vadd.f32 %v2207, %v3079
      %v3578 = vadd.f32 %v2210, %v3082
      %v3579 = vadd.f32 %v2215, %v3087
      %v3580 = vadd.f32 %v2218, %v3090
      %v3581 = vadd.f32 %v2223, %v3095
      %v3582 = vadd.f32 %v2226, %v3098
      %v3583 = vadd.f32 %v2231, %v3103
      %v3584 = vadd.f32 %v2234, %v3106
      %v3585 = vadd.f32 %v2239, %v3111
      %v3586 = vadd.f32 %v2242, %v3114
      %v3587 = vadd.f32 %v2247, %v3119
      %v3588 = vadd.f32 %v2250, %v3122
      %v3589 = vadd.f32 %v2255, %v3127
      %v3590 = vadd.f32 %v2258, %v3130
      %v3591 = vadd.f32 %v2263, %v3135
      %v3592 = vadd.f32 %v2266, %v3138
      %v3593 = vadd.f32 %v2271, %v3143
      %v3594 = vadd.f32 %v2274, %v3146
      %v3595 = vadd.f32 %v2279, %v3151
      %v3596 = vadd.f32 %v2282, %v3154
      %v3597 = vadd.f32 %v2287, %v3159
      %v3598 = vadd.f32 %v2290, %v3162
      %v3599 = vadd.f32 %v2295, %v3167
      %v3600 = vadd.f32 %v2298, %v3170
      %v3601 = vadd.f32 %v2303, %v3175
      %v3602 = vadd.f32 %v2306, %v3178
      %v3603 = vadd.f32 %v2311, %v3183
      %v3604 = vadd.f32 %v2314, %v3186
      %v3605 = vadd.f32 %v2319, %v3191
      %v3606 = vadd.f32 %v2322, %v3194
      %v3607 = vadd.f32 %v2327, %v3199
      %v3608 = vadd.f32 %v2330, %v3202
      %v3609 = vadd.f32 %v2335, %v3207
      %v3610 = vadd.f32 %v2338, %v3210
      %v3611 = vadd.f32 %v2343, %v3215
      %v3612 = vadd.f32 %v2346, %v3218
      %v3613 = vadd.f32 %v2351, %v3223
      %v3614 = vadd.f32 %v2354, %v3226
      %v3615 = vadd.f32 %v2359, %v3231
      %v3616 = vadd.f32 %v2362, %v3234
      %v3617 = vadd.f32 %v2367, %v3239
      %v3618 = vadd.f32 %v2370, %v3242
      %v3619 = vadd.f32 %v2375, %v3247
      %v3620 = vadd.f32 %v2378, %v3250
      %v3621 = vadd.f32 %v2383, %v3255
      %v3622 = vadd.f32 %v2386, %v3258
      %v3623 = vadd.f32 %v2391, %v3263
      %v3624 = vadd.f32 %v2394, %v3266
      %v3625 = vadd.f32 %v2399, %v3271
      %v3626 = vadd.f32 %v2402, %v3274
      %v3627 = vadd.f32 %v2407, %v3279
      %v3628 = vadd.f32 %v2410, %v3282
      %v3629 = vadd.f32 %v2415, %v3287
      %v3630 = vadd.f32 %v2418, %v3290
      %v3631 = vadd.f32 %v2423, %v3295
      %v3632 = vadd.f32 %v2426, %v3298
      %v3633 = vadd.f32 %v2431, %v3303
      %v3634 = vadd.f32 %v2434, %v3306
      %v3635 = vadd.f32 %v2439, %v3311
      %v3636 = vadd.f32 %v2442, %v3314
      %v3637 = vadd.f32 %v2447, %v3319
      %v3638 = vadd.f32 %v2450, %v3322
      %v3639 = vadd.f32 %v2455, %v3327
      %v3640 = vadd.f32 %v2458, %v3330
      %v3641 = vadd.f32 %v2463, %v3335
      %v3642 = vadd.f32 %v2466, %v3338
      %v3643 = vadd.f32 %v2471, %v3343
      %v3644 = vadd.f32 %v2474, %v3346
      %v3645 = vadd.f32 %v2479, %v3351
      %v3646 = vadd.f32 %v2482, %v3354
      %v3647 = vadd.f32 %v2487, %v3359
      %v3648 = vadd.f32 %v2490, %v3362
      %v3649 = vadd.f32 %v2495, %v3367
      %v3650 = vadd.f32 %v2498, %v3370
      %v3651 = vadd.f32 %v2503, %v3375
      %v3652 = vadd.f32 %v2506, %v3378
      %v3653 = vadd.f32 %v2511, %v3383
      %v3654 = vadd.f32 %v2514, %v3386
      %v3655 = vadd.f32 %v2519, %v3391
      %v3656 = vadd.f32 %v2522, %v3394
      %v3657 = vadd.f32 %v2527, %v3399
      %v3658 = vadd.f32 %v2530, %v3402
      %v3659 = vadd.f32 %v2535, %v3407
      %v3660 = vadd.f32 %v2538, %v3410
      %v3661 = vadd.f32 %v2543, %v3415
      %v3662 = vadd.f32 %v2546, %v3418
      %v3663 = vadd.f32 %v2551, %v3423
      %v3664 = vadd.f32 %v2554, %v3426
      %v3665 = vadd.f32 %v2559, %v3431
      %v3666 = vadd.f32 %v2562, %v3434
      %v3667 = vadd.f32 %v2567, %v3439
      %v3668 = vadd.f32 %v2570, %v3442
      %v3669 = vadd.f32 %v2575, %v3447
      %v3670 = vadd.f32 %v2578, %v3450
      %v3671 = vadd.f32 %v2583, %v3455
      %v3672 = vadd.f32 %v2586, %v3458
      %v3673 = vadd.f32 %v2591, %v3463
      %v3674 = vadd.f32 %v2594, %v3466
      %v3675 = vadd.f32 %v2599, %v3471
      %v3676 = vadd.f32 %v2602, %v3474
      %v3677 = vadd.f32 %v2607, %v3479
      %v3678 = vadd.f32 %v2610, %v3482
      %v3679 = vadd.f32 %v2615, %v3487
      %v3680 = vadd.f32 %v2618, %v3490
      %v3681 = vadd.f32 %v2623, %v3495
      %v3682 = vadd.f32 %v2626, %v3498
      %v3683 = vadd.f32 %v2631, %v3503
      %v3684 = vadd.f32 %v2634, %v3506
      %v3685 = vadd.f32 %v2639, %v3511
      %v3686 = vadd.f32 %v2642, %v3514
      %v3687 = vadd.f32 %v2647, %v3519
      %v3688 = vadd.f32 %v2650, %v3522
      %v3689 = vadd.f32 %v2655, %v3527
      %v3690 = vadd.f32 %v2658, %v3530
      %v3691 = vadd.f32 %v2663, %v3535
      %v3692 = vadd.f32 %v2666, %v3538
      %v3693 = vadd.f32 %v2671, %v3543
      %v3694 = vadd.f32 %v2674, %v3546
      %v3695 = vadd.f32 %v2679, %v3551
      %v3696 = vadd.f32 %v2682, %v3554
      %v3697 = vadd.f32 %v2687, %v3559
      %v3698 = vadd.f32 %v2690, %v3562
      %v3699 = vadd.f32 %v2695, %v3567
      %v3700 = vadd.f32 %v2698, %v3570
      %s3701 = scalar_lea.vmem %s2, 6
      %v3702 = vld [vmem:[%s3701] sm:$0x3]
      %vm3703 = vsmask.f32 6400
      %v3704 = vrot.slane %v768, 1
      %v3705 = vrot.slane %v770, 2
      %v3706 = vor.u32 %v3704, %v3705
      %v3707 = vrot.slane %v779, 1
      %v3708 = vrot.slane %v775, 2
      %v3709 = vor.u32 %v3707, %v3708
      %v3710 = vsel %vm3703, %v3706, %v3709
      %v3711 = vrot.slane %v787, 1
      %v3712 = vrot.slane %v783, 2
      %v3713 = vor.u32 %v3711, %v3712
      %v3714 = vsel %vm3703, %v3709, %v3713
      %v3715 = vrot.slane %v795, 1
      %v3716 = vrot.slane %v791, 2
      %v3717 = vor.u32 %v3715, %v3716
      %v3718 = vsel %vm3703, %v3713, %v3717
      %v3719 = vrot.slane %v803, 1
      %v3720 = vrot.slane %v799, 2
      %v3721 = vor.u32 %v3719, %v3720
      %v3722 = vsel %vm3703, %v3717, %v3721
      %v3723 = vrot.slane %v811, 1
      %v3724 = vrot.slane %v807, 2
      %v3725 = vor.u32 %v3723, %v3724
      %v3726 = vsel %vm3703, %v3721, %v3725
      %v3727 = vrot.slane %v819, 1
      %v3728 = vrot.slane %v815, 2
      %v3729 = vor.u32 %v3727, %v3728
      %v3730 = vsel %vm3703, %v3725, %v3729
      %v3731 = vrot.slane %v827, 1
      %v3732 = vrot.slane %v823, 2
      %v3733 = vor.u32 %v3731, %v3732
      %v3734 = vsel %vm3703, %v3729, %v3733
      %v3735 = vrot.slane %v835, 1
      %v3736 = vrot.slane %v831, 2
      %v3737 = vor.u32 %v3735, %v3736
      %v3738 = vsel %vm3703, %v3733, %v3737
      %v3739 = vrot.slane %v843, 1
      %v3740 = vrot.slane %v839, 2
      %v3741 = vor.u32 %v3739, %v3740
      %v3742 = vsel %vm3703, %v3737, %v3741
      %v3743 = vrot.slane %v851, 1
      %v3744 = vrot.slane %v847, 2
      %v3745 = vor.u32 %v3743, %v3744
      %v3746 = vsel %vm3703, %v3741, %v3745
      %v3747 = vrot.slane %v859, 1
      %v3748 = vrot.slane %v855, 2
      %v3749 = vor.u32 %v3747, %v3748
      %v3750 = vsel %vm3703, %v3745, %v3749
      %v3751 = vrot.slane %v867, 1
      %v3752 = vrot.slane %v863, 2
      %v3753 = vor.u32 %v3751, %v3752
      %v3754 = vsel %vm3703, %v3749, %v3753
      %v3755 = vrot.slane %v875, 1
      %v3756 = vrot.slane %v871, 2
      %v3757 = vor.u32 %v3755, %v3756
      %v3758 = vsel %vm3703, %v3753, %v3757
      %v3759 = vrot.slane %v883, 1
      %v3760 = vrot.slane %v879, 2
      %v3761 = vor.u32 %v3759, %v3760
      %v3762 = vsel %vm3703, %v3757, %v3761
      %v3763 = vrot.slane %v891, 1
      %v3764 = vrot.slane %v887, 2
      %v3765 = vor.u32 %v3763, %v3764
      %v3766 = vsel %vm3703, %v3761, %v3765
      %v3767 = vrot.slane %v899, 1
      %v3768 = vrot.slane %v895, 2
      %v3769 = vor.u32 %v3767, %v3768
      %v3770 = vsel %vm3703, %v3765, %v3769
      %v3771 = vrot.slane %v907, 1
      %v3772 = vrot.slane %v903, 2
      %v3773 = vor.u32 %v3771, %v3772
      %v3774 = vsel %vm3703, %v3769, %v3773
      %v3775 = vrot.slane %v915, 1
      %v3776 = vrot.slane %v911, 2
      %v3777 = vor.u32 %v3775, %v3776
      %v3778 = vsel %vm3703, %v3773, %v3777
      %v3779 = vrot.slane %v923, 1
      %v3780 = vrot.slane %v919, 2
      %v3781 = vor.u32 %v3779, %v3780
      %v3782 = vsel %vm3703, %v3777, %v3781
      %v3783 = vrot.slane %v931, 1
      %v3784 = vrot.slane %v927, 2
      %v3785 = vor.u32 %v3783, %v3784
      %v3786 = vsel %vm3703, %v3781, %v3785
      %v3787 = vrot.slane %v939, 1
      %v3788 = vrot.slane %v935, 2
      %v3789 = vor.u32 %v3787, %v3788
      %v3790 = vsel %vm3703, %v3785, %v3789
      %v3791 = vrot.slane %v947, 1
      %v3792 = vrot.slane %v943, 2
      %v3793 = vor.u32 %v3791, %v3792
      %v3794 = vsel %vm3703, %v3789, %v3793
      %v3795 = vrot.slane %v955, 1
      %v3796 = vrot.slane %v951, 2
      %v3797 = vor.u32 %v3795, %v3796
      %v3798 = vsel %vm3703, %v3793, %v3797
      %v3799 = vrot.slane %v963, 1
      %v3800 = vrot.slane %v959, 2
      %v3801 = vor.u32 %v3799, %v3800
      %v3802 = vsel %vm3703, %v3797, %v3801
      %v3803 = vrot.slane %v971, 1
      %v3804 = vrot.slane %v967, 2
      %v3805 = vor.u32 %v3803, %v3804
      %v3806 = vsel %vm3703, %v3801, %v3805
      %v3807 = vrot.slane %v979, 1
      %v3808 = vrot.slane %v975, 2
      %v3809 = vor.u32 %v3807, %v3808
      %v3810 = vsel %vm3703, %v3805, %v3809
      %v3811 = vrot.slane %v987, 1
      %v3812 = vrot.slane %v983, 2
      %v3813 = vor.u32 %v3811, %v3812
      %v3814 = vsel %vm3703, %v3809, %v3813
      %v3815 = vrot.slane %v995, 1
      %v3816 = vrot.slane %v991, 2
      %v3817 = vor.u32 %v3815, %v3816
      %v3818 = vsel %vm3703, %v3813, %v3817
      %v3819 = vrot.slane %v1003, 1
      %v3820 = vrot.slane %v999, 2
      %v3821 = vor.u32 %v3819, %v3820
      %v3822 = vsel %vm3703, %v3817, %v3821
      %v3823 = vrot.slane %v1011, 1
      %v3824 = vrot.slane %v1007, 2
      %v3825 = vor.u32 %v3823, %v3824
      %v3826 = vsel %vm3703, %v3821, %v3825
      %v3827 = vrot.slane %v1019, 1
      %v3828 = vrot.slane %v1015, 2
      %v3829 = vor.u32 %v3827, %v3828
      %v3830 = vsel %vm3703, %v3825, %v3829
      %v3831 = vrot.slane %v1027, 1
      %v3832 = vrot.slane %v1023, 2
      %v3833 = vor.u32 %v3831, %v3832
      %v3834 = vsel %vm3703, %v3829, %v3833
      %v3835 = vrot.slane %v1035, 1
      %v3836 = vrot.slane %v1031, 2
      %v3837 = vor.u32 %v3835, %v3836
      %v3838 = vsel %vm3703, %v3833, %v3837
      %v3839 = vrot.slane %v1043, 1
      %v3840 = vrot.slane %v1039, 2
      %v3841 = vor.u32 %v3839, %v3840
      %v3842 = vsel %vm3703, %v3837, %v3841
      %v3843 = vrot.slane %v1051, 1
      %v3844 = vrot.slane %v1047, 2
      %v3845 = vor.u32 %v3843, %v3844
      %v3846 = vsel %vm3703, %v3841, %v3845
      %v3847 = vrot.slane %v1059, 1
      %v3848 = vrot.slane %v1055, 2
      %v3849 = vor.u32 %v3847, %v3848
      %v3850 = vsel %vm3703, %v3845, %v3849
      %v3851 = vrot.slane %v1067, 1
      %v3852 = vrot.slane %v1063, 2
      %v3853 = vor.u32 %v3851, %v3852
      %v3854 = vsel %vm3703, %v3849, %v3853
      %v3855 = vrot.slane %v1075, 1
      %v3856 = vrot.slane %v1071, 2
      %v3857 = vor.u32 %v3855, %v3856
      %v3858 = vsel %vm3703, %v3853, %v3857
      %v3859 = vrot.slane %v1083, 1
      %v3860 = vrot.slane %v1079, 2
      %v3861 = vor.u32 %v3859, %v3860
      %v3862 = vsel %vm3703, %v3857, %v3861
      %v3863 = vrot.slane %v1091, 1
      %v3864 = vrot.slane %v1087, 2
      %v3865 = vor.u32 %v3863, %v3864
      %v3866 = vsel %vm3703, %v3861, %v3865
      %v3867 = vrot.slane %v1099, 1
      %v3868 = vrot.slane %v1095, 2
      %v3869 = vor.u32 %v3867, %v3868
      %v3870 = vsel %vm3703, %v3865, %v3869
      %v3871 = vrot.slane %v1107, 1
      %v3872 = vrot.slane %v1103, 2
      %v3873 = vor.u32 %v3871, %v3872
      %v3874 = vsel %vm3703, %v3869, %v3873
      %v3875 = vrot.slane %v1115, 1
      %v3876 = vrot.slane %v1111, 2
      %v3877 = vor.u32 %v3875, %v3876
      %v3878 = vsel %vm3703, %v3873, %v3877
      %v3879 = vrot.slane %v1123, 1
      %v3880 = vrot.slane %v1119, 2
      %v3881 = vor.u32 %v3879, %v3880
      %v3882 = vsel %vm3703, %v3877, %v3881
      %v3883 = vrot.slane %v1131, 1
      %v3884 = vrot.slane %v1127, 2
      %v3885 = vor.u32 %v3883, %v3884
      %v3886 = vsel %vm3703, %v3881, %v3885
      %v3887 = vrot.slane %v1139, 1
      %v3888 = vrot.slane %v1135, 2
      %v3889 = vor.u32 %v3887, %v3888
      %v3890 = vsel %vm3703, %v3885, %v3889
      %v3891 = vrot.slane %v1147, 1
      %v3892 = vrot.slane %v1143, 2
      %v3893 = vor.u32 %v3891, %v3892
      %v3894 = vsel %vm3703, %v3889, %v3893
      %v3895 = vrot.slane %v1155, 1
      %v3896 = vrot.slane %v1151, 2
      %v3897 = vor.u32 %v3895, %v3896
      %v3898 = vsel %vm3703, %v3893, %v3897
      %v3899 = vrot.slane %v1163, 1
      %v3900 = vrot.slane %v1159, 2
      %v3901 = vor.u32 %v3899, %v3900
      %v3902 = vsel %vm3703, %v3897, %v3901
      %v3903 = vrot.slane %v1171, 1
      %v3904 = vrot.slane %v1167, 2
      %v3905 = vor.u32 %v3903, %v3904
      %v3906 = vsel %vm3703, %v3901, %v3905
      %v3907 = vrot.slane %v1179, 1
      %v3908 = vrot.slane %v1175, 2
      %v3909 = vor.u32 %v3907, %v3908
      %v3910 = vsel %vm3703, %v3905, %v3909
      %v3911 = vrot.slane %v1187, 1
      %v3912 = vrot.slane %v1183, 2
      %v3913 = vor.u32 %v3911, %v3912
      %v3914 = vsel %vm3703, %v3909, %v3913
      %v3915 = vrot.slane %v1195, 1
      %v3916 = vrot.slane %v1191, 2
      %v3917 = vor.u32 %v3915, %v3916
      %v3918 = vsel %vm3703, %v3913, %v3917
      %v3919 = vrot.slane %v1203, 1
      %v3920 = vrot.slane %v1199, 2
      %v3921 = vor.u32 %v3919, %v3920
      %v3922 = vsel %vm3703, %v3917, %v3921
      %v3923 = vrot.slane %v1211, 1
      %v3924 = vrot.slane %v1207, 2
      %v3925 = vor.u32 %v3923, %v3924
      %v3926 = vsel %vm3703, %v3921, %v3925
      %v3927 = vrot.slane %v1219, 1
      %v3928 = vrot.slane %v1215, 2
      %v3929 = vor.u32 %v3927, %v3928
      %v3930 = vsel %vm3703, %v3925, %v3929
      %v3931 = vrot.slane %v1227, 1
      %v3932 = vrot.slane %v1223, 2
      %v3933 = vor.u32 %v3931, %v3932
      %v3934 = vsel %vm3703, %v3929, %v3933
      %v3935 = vrot.slane %v1235, 1
      %v3936 = vrot.slane %v1231, 2
      %v3937 = vor.u32 %v3935, %v3936
      %v3938 = vsel %vm3703, %v3933, %v3937
      %v3939 = vrot.slane %v1243, 1
      %v3940 = vrot.slane %v1239, 2
      %v3941 = vor.u32 %v3939, %v3940
      %v3942 = vsel %vm3703, %v3937, %v3941
      %v3943 = vrot.slane %v1251, 1
      %v3944 = vrot.slane %v1247, 2
      %v3945 = vor.u32 %v3943, %v3944
      %v3946 = vsel %vm3703, %v3941, %v3945
      %v3947 = vrot.slane %v1259, 1
      %v3948 = vrot.slane %v1255, 2
      %v3949 = vor.u32 %v3947, %v3948
      %v3950 = vsel %vm3703, %v3945, %v3949
      %v3951 = vrot.slane %v1267, 1
      %v3952 = vrot.slane %v1263, 2
      %v3953 = vor.u32 %v3951, %v3952
      %v3954 = vsel %vm3703, %v3949, %v3953
      %v3955 = vrot.slane %v1275, 1
      %v3956 = vrot.slane %v1271, 2
      %v3957 = vor.u32 %v3955, %v3956
      %v3958 = vsel %vm3703, %v3953, %v3957
      %v3959 = vshrl.u32 %v762, 16
      %v3961 = vrot.slane %v3959, 1
      %v3962 = vrot.slane %v1279, 2
      %v3963 = vor.u32 %v3961, %v3962
      %v3964 = vsel %vm3703, %v3957, %v3963
      %v3966 = vsel %vm1283, %v3710, 0
      %v3969 = vsel %vm1283, %v3714, 0
      %v3972 = vsel %vm1283, %v3718, 0
      %v3975 = vsel %vm1283, %v3722, 0
      %v3978 = vsel %vm1283, %v3726, 0
      %v3981 = vsel %vm1283, %v3730, 0
      %v3984 = vsel %vm1283, %v3734, 0
      %v3987 = vsel %vm1283, %v3738, 0
      %v3990 = vsel %vm1283, %v3742, 0
      %v3993 = vsel %vm1283, %v3746, 0
      %v3996 = vsel %vm1283, %v3750, 0
      %v3999 = vsel %vm1283, %v3754, 0
      %v4002 = vsel %vm1283, %v3758, 0
      %v4005 = vsel %vm1283, %v3762, 0
      %v4008 = vsel %vm1283, %v3766, 0
      %v4011 = vsel %vm1283, %v3770, 0
      %v4014 = vsel %vm1283, %v3774, 0
      %v4017 = vsel %vm1283, %v3778, 0
      %v4020 = vsel %vm1283, %v3782, 0
      %v4023 = vsel %vm1283, %v3786, 0
      %v4026 = vsel %vm1283, %v3790, 0
      %v4029 = vsel %vm1283, %v3794, 0
      %v4032 = vsel %vm1283, %v3798, 0
      %v4035 = vsel %vm1283, %v3802, 0
      %v4038 = vsel %vm1283, %v3806, 0
      %v4041 = vsel %vm1283, %v3810, 0
      %v4044 = vsel %vm1283, %v3814, 0
      %v4047 = vsel %vm1283, %v3818, 0
      %v4050 = vsel %vm1283, %v3822, 0
      %v4053 = vsel %vm1283, %v3826, 0
      %v4056 = vsel %vm1283, %v3830, 0
      %v4059 = vsel %vm1283, %v3834, 0
      %v4062 = vsel %vm1283, %v3838, 0
      %v4065 = vsel %vm1283, %v3842, 0
      %v4068 = vsel %vm1283, %v3846, 0
      %v4071 = vsel %vm1283, %v3850, 0
      %v4074 = vsel %vm1283, %v3854, 0
      %v4077 = vsel %vm1283, %v3858, 0
      %v4080 = vsel %vm1283, %v3862, 0
      %v4083 = vsel %vm1283, %v3866, 0
      %v4086 = vsel %vm1283, %v3870, 0
      %v4089 = vsel %vm1283, %v3874, 0
      %v4092 = vsel %vm1283, %v3878, 0
      %v4095 = vsel %vm1283, %v3882, 0
      %v4098 = vsel %vm1283, %v3886, 0
      %v4101 = vsel %vm1283, %v3890, 0
      %v4104 = vsel %vm1283, %v3894, 0
      %v4107 = vsel %vm1283, %v3898, 0
      %v4110 = vsel %vm1283, %v3902, 0
      %v4113 = vsel %vm1283, %v3906, 0
      %v4116 = vsel %vm1283, %v3910, 0
      %v4119 = vsel %vm1283, %v3914, 0
      %v4122 = vsel %vm1283, %v3918, 0
      %v4125 = vsel %vm1283, %v3922, 0
      %v4128 = vsel %vm1283, %v3926, 0
      %v4131 = vsel %vm1283, %v3930, 0
      %v4134 = vsel %vm1283, %v3934, 0
      %v4137 = vsel %vm1283, %v3938, 0
      %v4140 = vsel %vm1283, %v3942, 0
      %v4143 = vsel %vm1283, %v3946, 0
      %v4146 = vsel %vm1283, %v3950, 0
      %v4149 = vsel %vm1283, %v3954, 0
      %v4152 = vsel %vm1283, %v3958, 0
      %v4155 = vsel %vm1283, %v3964, 0
      %v4158 = vsel %vm1476, %v3702, 0
      %4160 = vmatprep.subr.bf16.mxu0 0
      %4161 = vmatpush1.bf16.msra.mxu0 %v4158
      %4162 = vmatprep.subr.bf16.mxu0 0
      %4163 = vmatpush1.bf16.msra.mxu0 0
      %4164 = vmatprep.subr.bf16.mxu0 0
      %4165 = vmatpush1.bf16.msra.mxu0 0
      %4166 = vmatprep.subr.bf16.mxu0 0
      %4167 = vmatpush1.bf16.msra.mxu0 0
      %4168 = vmatprep.subr.bf16.mxu0 0
      %4169 = vmatpush1.bf16.msra.mxu0 0
      %4170 = vmatprep.subr.bf16.mxu0 0
      %4171 = vmatpush1.bf16.msra.mxu0 0
      %4172 = vmatprep.subr.bf16.mxu0 0
      %4173 = vmatpush1.bf16.msra.mxu0 0
      %4174 = vmatprep.subr.bf16.mxu0 0
      %4175 = vmatpush1.bf16.msra.mxu0 0
      %4176 = vmatprep.subr.bf16.mxu0 0
      %4177 = vmatpush1.bf16.msra.mxu0 0
      %4178 = vmatprep.subr.bf16.mxu0 0
      %4179 = vmatpush1.bf16.msra.mxu0 0
      %4180 = vmatprep.subr.bf16.mxu0 0
      %4181 = vmatpush1.bf16.msra.mxu0 0
      %4182 = vmatprep.subr.bf16.mxu0 0
      %4183 = vmatpush1.bf16.msra.mxu0 0
      %4184 = vmatprep.subr.bf16.mxu0 0
      %4185 = vmatpush1.bf16.msra.mxu0 0
      %4186 = vmatprep.subr.bf16.mxu0 0
      %4187 = vmatpush1.bf16.msra.mxu0 0
      %4188 = vmatprep.subr.bf16.mxu0 0
      %4189 = vmatpush1.bf16.msra.mxu0 0
      %4190 = vmatprep.subr.bf16.mxu0 0
      %4191 = vmatpush1.bf16.msra.mxu0 0
      %4192 = vmatprep.mubr.bf16.mxu0 0
      %4193 = vmatmul.mubr.bf16.gmra.mrb[0].mxu0 %v3966
      %v4194 = vpop.f32.mrb[0].mxu0
      %v4195 = vadd.f32 0.0, %v4194
      %v4196 = vpop.f32.mrb[0].mxu0
      %v4197 = vpop.f32.mrb[0].mxu0
      %v4198 = vadd.f32 0.0, %v4197
      %v4199 = vpop.f32.mrb[0].mxu0
      %4200 = vmatprep.mubr.bf16.mxu0 0
      %4201 = vmatmul.mubr.bf16.gmra.mrb[0].mxu0 %v3969
      %v4202 = vpop.f32.mrb[0].mxu0
      %v4203 = vadd.f32 0.0, %v4202
      %v4204 = vpop.f32.mrb[0].mxu0
      %v4205 = vpop.f32.mrb[0].mxu0
      %v4206 = vadd.f32 0.0, %v4205
      %v4207 = vpop.f32.mrb[0].mxu0
      %4208 = vmatprep.mubr.bf16.mxu0 0
      %4209 = vmatmul.mubr.bf16.gmra.mrb[0].mxu0 %v3972
      %v4210 = vpop.f32.mrb[0].mxu0
      %v4211 = vadd.f32 0.0, %v4210
      %v4212 = vpop.f32.mrb[0].mxu0
      %v4213 = vpop.f32.mrb[0].mxu0
      %v4214 = vadd.f32 0.0, %v4213
      %v4215 = vpop.f32.mrb[0].mxu0
      %4216 = vmatprep.mubr.bf16.mxu0 0
      %4217 = vmatmul.mubr.bf16.gmra.mrb[0].mxu0 %v3975
      %v4218 = vpop.f32.mrb[0].mxu0
      %v4219 = vadd.f32 0.0, %v4218
      %v4220 = vpop.f32.mrb[0].mxu0
      %v4221 = vpop.f32.mrb[0].mxu0
      %v4222 = vadd.f32 0.0, %v4221
      %v4223 = vpop.f32.mrb[0].mxu0
      %4224 = vmatprep.mubr.bf16.mxu0 0
      %4225 = vmatmul.mubr.bf16.gmra.mrb[0].mxu0 %v3978
      %v4226 = vpop.f32.mrb[0].mxu0
      %v4227 = vadd.f32 0.0, %v4226
      %v4228 = vpop.f32.mrb[0].mxu0
      %v4229 = vpop.f32.mrb[0].mxu0
      %v4230 = vadd.f32 0.0, %v4229
      %v4231 = vpop.f32.mrb[0].mxu0
      %4232 = vmatprep.mubr.bf16.mxu0 0
      %4233 = vmatmul.mubr.bf16.gmra.mrb[0].mxu0 %v3981
      %v4234 = vpop.f32.mrb[0].mxu0
      %v4235 = vadd.f32 0.0, %v4234
      %v4236 = vpop.f32.mrb[0].mxu0
      %v4237 = vpop.f32.mrb[0].mxu0
      %v4238 = vadd.f32 0.0, %v4237
      %v4239 = vpop.f32.mrb[0].mxu0
      %4240 = vmatprep.mubr.bf16.mxu0 0
      %4241 = vmatmul.mubr.bf16.gmra.mrb[0].mxu0 %v3984
      %v4242 = vpop.f32.mrb[0].mxu0
      %v4243 = vadd.f32 0.0, %v4242
      %v4244 = vpop.f32.mrb[0].mxu0
      %v4245 = vpop.f32.mrb[0].mxu0
      %v4246 = vadd.f32 0.0, %v4245
      %v4247 = vpop.f32.mrb[0].mxu0
      %4248 = vmatprep.mubr.bf16.mxu0 0
      %4249 = vmatmul.mubr.bf16.gmra.mrb[0].mxu0 %v3987
      %v4250 = vpop.f32.mrb[0].mxu0
      %v4251 = vadd.f32 0.0, %v4250
      %v4252 = vpop.f32.mrb[0].mxu0
      %v4253 = vpop.f32.mrb[0].mxu0
      %v4254 = vadd.f32 0.0, %v4253
      %v4255 = vpop.f32.mrb[0].mxu0
      %4256 = vmatprep.mubr.bf16.mxu0 0
      %4257 = vmatmul.mubr.bf16.gmra.mrb[0].mxu0 %v3990
      %v4258 = vpop.f32.mrb[0].mxu0
      %v4259 = vadd.f32 0.0, %v4258
      %v4260 = vpop.f32.mrb[0].mxu0
      %v4261 = vpop.f32.mrb[0].mxu0
      %v4262 = vadd.f32 0.0, %v4261
      %v4263 = vpop.f32.mrb[0].mxu0
      %4264 = vmatprep.mubr.bf16.mxu0 0
      %4265 = vmatmul.mubr.bf16.gmra.mrb[0].mxu0 %v3993
      %v4266 = vpop.f32.mrb[0].mxu0
      %v4267 = vadd.f32 0.0, %v4266
      %v4268 = vpop.f32.mrb[0].mxu0
      %v4269 = vpop.f32.mrb[0].mxu0
      %v4270 = vadd.f32 0.0, %v4269
      %v4271 = vpop.f32.mrb[0].mxu0
      %4272 = vmatprep.mubr.bf16.mxu0 0
      %4273 = vmatmul.mubr.bf16.gmra.mrb[0].mxu0 %v3996
      %v4274 = vpop.f32.mrb[0].mxu0
      %v4275 = vadd.f32 0.0, %v4274
      %v4276 = vpop.f32.mrb[0].mxu0
      %v4277 = vpop.f32.mrb[0].mxu0
      %v4278 = vadd.f32 0.0, %v4277
      %v4279 = vpop.f32.mrb[0].mxu0
      %4280 = vmatprep.mubr.bf16.mxu0 0
      %4281 = vmatmul.mubr.bf16.gmra.mrb[0].mxu0 %v3999
      %v4282 = vpop.f32.mrb[0].mxu0
      %v4283 = vadd.f32 0.0, %v4282
      %v4284 = vpop.f32.mrb[0].mxu0
      %v4285 = vpop.f32.mrb[0].mxu0
      %v4286 = vadd.f32 0.0, %v4285
      %v4287 = vpop.f32.mrb[0].mxu0
      %4288 = vmatprep.mubr.bf16.mxu0 0
      %4289 = vmatmul.mubr.bf16.gmra.mrb[0].mxu0 %v4002
      %v4290 = vpop.f32.mrb[0].mxu0
      %v4291 = vadd.f32 0.0, %v4290
      %v4292 = vpop.f32.mrb[0].mxu0
      %v4293 = vpop.f32.mrb[0].mxu0
      %v4294 = vadd.f32 0.0, %v4293
      %v4295 = vpop.f32.mrb[0].mxu0
      %4296 = vmatprep.mubr.bf16.mxu0 0
      %4297 = vmatmul.mubr.bf16.gmra.mrb[0].mxu0 %v4005
      %v4298 = vpop.f32.mrb[0].mxu0
      %v4299 = vadd.f32 0.0, %v4298
      %v4300 = vpop.f32.mrb[0].mxu0
      %v4301 = vpop.f32.mrb[0].mxu0
      %v4302 = vadd.f32 0.0, %v4301
      %v4303 = vpop.f32.mrb[0].mxu0
      %4304 = vmatprep.mubr.bf16.mxu0 0
      %4305 = vmatmul.mubr.bf16.gmra.mrb[0].mxu0 %v4008
      %v4306 = vpop.f32.mrb[0].mxu0
      %v4307 = vadd.f32 0.0, %v4306
      %v4308 = vpop.f32.mrb[0].mxu0
      %v4309 = vpop.f32.mrb[0].mxu0
      %v4310 = vadd.f32 0.0, %v4309
      %v4311 = vpop.f32.mrb[0].mxu0
      %4312 = vmatprep.mubr.bf16.mxu0 0
      %4313 = vmatmul.mubr.bf16.gmra.mrb[0].mxu0 %v4011
      %v4314 = vpop.f32.mrb[0].mxu0
      %v4315 = vadd.f32 0.0, %v4314
      %v4316 = vpop.f32.mrb[0].mxu0
      %v4317 = vpop.f32.mrb[0].mxu0
      %v4318 = vadd.f32 0.0, %v4317
      %v4319 = vpop.f32.mrb[0].mxu0
      %4320 = vmatprep.mubr.bf16.mxu0 0
      %4321 = vmatmul.mubr.bf16.gmra.mrb[0].mxu0 %v4014
      %v4322 = vpop.f32.mrb[0].mxu0
      %v4323 = vadd.f32 0.0, %v4322
      %v4324 = vpop.f32.mrb[0].mxu0
      %v4325 = vpop.f32.mrb[0].mxu0
      %v4326 = vadd.f32 0.0, %v4325
      %v4327 = vpop.f32.mrb[0].mxu0
      %4328 = vmatprep.mubr.bf16.mxu0 0
      %4329 = vmatmul.mubr.bf16.gmra.mrb[0].mxu0 %v4017
      %v4330 = vpop.f32.mrb[0].mxu0
      %v4331 = vadd.f32 0.0, %v4330
      %v4332 = vpop.f32.mrb[0].mxu0
      %v4333 = vpop.f32.mrb[0].mxu0
      %v4334 = vadd.f32 0.0, %v4333
      %v4335 = vpop.f32.mrb[0].mxu0
      %4336 = vmatprep.mubr.bf16.mxu0 0
      %4337 = vmatmul.mubr.bf16.gmra.mrb[0].mxu0 %v4020
      %v4338 = vpop.f32.mrb[0].mxu0
      %v4339 = vadd.f32 0.0, %v4338
      %v4340 = vpop.f32.mrb[0].mxu0
      %v4341 = vpop.f32.mrb[0].mxu0
      %v4342 = vadd.f32 0.0, %v4341
      %v4343 = vpop.f32.mrb[0].mxu0
      %4344 = vmatprep.mubr.bf16.mxu0 0
      %4345 = vmatmul.mubr.bf16.gmra.mrb[0].mxu0 %v4023
      %v4346 = vpop.f32.mrb[0].mxu0
      %v4347 = vadd.f32 0.0, %v4346
      %v4348 = vpop.f32.mrb[0].mxu0
      %v4349 = vpop.f32.mrb[0].mxu0
      %v4350 = vadd.f32 0.0, %v4349
      %v4351 = vpop.f32.mrb[0].mxu0
      %4352 = vmatprep.mubr.bf16.mxu0 0
      %4353 = vmatmul.mubr.bf16.gmra.mrb[0].mxu0 %v4026
      %v4354 = vpop.f32.mrb[0].mxu0
      %v4355 = vadd.f32 0.0, %v4354
      %v4356 = vpop.f32.mrb[0].mxu0
      %v4357 = vpop.f32.mrb[0].mxu0
      %v4358 = vadd.f32 0.0, %v4357
      %v4359 = vpop.f32.mrb[0].mxu0
      %4360 = vmatprep.mubr.bf16.mxu0 0
      %4361 = vmatmul.mubr.bf16.gmra.mrb[0].mxu0 %v4029
      %v4362 = vpop.f32.mrb[0].mxu0
      %v4363 = vadd.f32 0.0, %v4362
      %v4364 = vpop.f32.mrb[0].mxu0
      %v4365 = vpop.f32.mrb[0].mxu0
      %v4366 = vadd.f32 0.0, %v4365
      %v4367 = vpop.f32.mrb[0].mxu0
      %4368 = vmatprep.mubr.bf16.mxu0 0
      %4369 = vmatmul.mubr.bf16.gmra.mrb[0].mxu0 %v4032
      %v4370 = vpop.f32.mrb[0].mxu0
      %v4371 = vadd.f32 0.0, %v4370
      %v4372 = vpop.f32.mrb[0].mxu0
      %v4373 = vpop.f32.mrb[0].mxu0
      %v4374 = vadd.f32 0.0, %v4373
      %v4375 = vpop.f32.mrb[0].mxu0
      %4376 = vmatprep.mubr.bf16.mxu0 0
      %4377 = vmatmul.mubr.bf16.gmra.mrb[0].mxu0 %v4035
      %v4378 = vpop.f32.mrb[0].mxu0
      %v4379 = vadd.f32 0.0, %v4378
      %v4380 = vpop.f32.mrb[0].mxu0
      %v4381 = vpop.f32.mrb[0].mxu0
      %v4382 = vadd.f32 0.0, %v4381
      %v4383 = vpop.f32.mrb[0].mxu0
      %4384 = vmatprep.mubr.bf16.mxu0 0
      %4385 = vmatmul.mubr.bf16.gmra.mrb[0].mxu0 %v4038
      %v4386 = vpop.f32.mrb[0].mxu0
      %v4387 = vadd.f32 0.0, %v4386
      %v4388 = vpop.f32.mrb[0].mxu0
      %v4389 = vpop.f32.mrb[0].mxu0
      %v4390 = vadd.f32 0.0, %v4389
      %v4391 = vpop.f32.mrb[0].mxu0
      %4392 = vmatprep.mubr.bf16.mxu0 0
      %4393 = vmatmul.mubr.bf16.gmra.mrb[0].mxu0 %v4041
      %v4394 = vpop.f32.mrb[0].mxu0
      %v4395 = vadd.f32 0.0, %v4394
      %v4396 = vpop.f32.mrb[0].mxu0
      %v4397 = vpop.f32.mrb[0].mxu0
      %v4398 = vadd.f32 0.0, %v4397
      %v4399 = vpop.f32.mrb[0].mxu0
      %4400 = vmatprep.mubr.bf16.mxu0 0
      %4401 = vmatmul.mubr.bf16.gmra.mrb[0].mxu0 %v4044
      %v4402 = vpop.f32.mrb[0].mxu0
      %v4403 = vadd.f32 0.0, %v4402
      %v4404 = vpop.f32.mrb[0].mxu0
      %v4405 = vpop.f32.mrb[0].mxu0
      %v4406 = vadd.f32 0.0, %v4405
      %v4407 = vpop.f32.mrb[0].mxu0
      %4408 = vmatprep.mubr.bf16.mxu0 0
      %4409 = vmatmul.mubr.bf16.gmra.mrb[0].mxu0 %v4047
      %v4410 = vpop.f32.mrb[0].mxu0
      %v4411 = vadd.f32 0.0, %v4410
      %v4412 = vpop.f32.mrb[0].mxu0
      %v4413 = vpop.f32.mrb[0].mxu0
      %v4414 = vadd.f32 0.0, %v4413
      %v4415 = vpop.f32.mrb[0].mxu0
      %4416 = vmatprep.mubr.bf16.mxu0 0
      %4417 = vmatmul.mubr.bf16.gmra.mrb[0].mxu0 %v4050
      %v4418 = vpop.f32.mrb[0].mxu0
      %v4419 = vadd.f32 0.0, %v4418
      %v4420 = vpop.f32.mrb[0].mxu0
      %v4421 = vpop.f32.mrb[0].mxu0
      %v4422 = vadd.f32 0.0, %v4421
      %v4423 = vpop.f32.mrb[0].mxu0
      %4424 = vmatprep.mubr.bf16.mxu0 0
      %4425 = vmatmul.mubr.bf16.gmra.mrb[0].mxu0 %v4053
      %v4426 = vpop.f32.mrb[0].mxu0
      %v4427 = vadd.f32 0.0, %v4426
      %v4428 = vpop.f32.mrb[0].mxu0
      %v4429 = vpop.f32.mrb[0].mxu0
      %v4430 = vadd.f32 0.0, %v4429
      %v4431 = vpop.f32.mrb[0].mxu0
      %4432 = vmatprep.mubr.bf16.mxu0 0
      %4433 = vmatmul.mubr.bf16.gmra.mrb[0].mxu0 %v4056
      %v4434 = vpop.f32.mrb[0].mxu0
      %v4435 = vadd.f32 0.0, %v4434
      %v4436 = vpop.f32.mrb[0].mxu0
      %v4437 = vpop.f32.mrb[0].mxu0
      %v4438 = vadd.f32 0.0, %v4437
      %v4439 = vpop.f32.mrb[0].mxu0
      %4440 = vmatprep.mubr.bf16.mxu0 0
      %4441 = vmatmul.mubr.bf16.gmra.mrb[0].mxu0 %v4059
      %v4442 = vpop.f32.mrb[0].mxu0
      %v4443 = vadd.f32 0.0, %v4442
      %v4444 = vpop.f32.mrb[0].mxu0
      %v4445 = vpop.f32.mrb[0].mxu0
      %v4446 = vadd.f32 0.0, %v4445
      %v4447 = vpop.f32.mrb[0].mxu0
      %4448 = vmatprep.mubr.bf16.mxu0 0
      %4449 = vmatmul.mubr.bf16.gmra.mrb[0].mxu0 %v4062
      %v4450 = vpop.f32.mrb[0].mxu0
      %v4451 = vadd.f32 0.0, %v4450
      %v4452 = vpop.f32.mrb[0].mxu0
      %v4453 = vpop.f32.mrb[0].mxu0
      %v4454 = vadd.f32 0.0, %v4453
      %v4455 = vpop.f32.mrb[0].mxu0
      %4456 = vmatprep.mubr.bf16.mxu0 0
      %4457 = vmatmul.mubr.bf16.gmra.mrb[0].mxu0 %v4065
      %v4458 = vpop.f32.mrb[0].mxu0
      %v4459 = vadd.f32 0.0, %v4458
      %v4460 = vpop.f32.mrb[0].mxu0
      %v4461 = vpop.f32.mrb[0].mxu0
      %v4462 = vadd.f32 0.0, %v4461
      %v4463 = vpop.f32.mrb[0].mxu0
      %4464 = vmatprep.mubr.bf16.mxu0 0
      %4465 = vmatmul.mubr.bf16.gmra.mrb[0].mxu0 %v4068
      %v4466 = vpop.f32.mrb[0].mxu0
      %v4467 = vadd.f32 0.0, %v4466
      %v4468 = vpop.f32.mrb[0].mxu0
      %v4469 = vpop.f32.mrb[0].mxu0
      %v4470 = vadd.f32 0.0, %v4469
      %v4471 = vpop.f32.mrb[0].mxu0
      %4472 = vmatprep.mubr.bf16.mxu0 0
      %4473 = vmatmul.mubr.bf16.gmra.mrb[0].mxu0 %v4071
      %v4474 = vpop.f32.mrb[0].mxu0
      %v4475 = vadd.f32 0.0, %v4474
      %v4476 = vpop.f32.mrb[0].mxu0
      %v4477 = vpop.f32.mrb[0].mxu0
      %v4478 = vadd.f32 0.0, %v4477
      %v4479 = vpop.f32.mrb[0].mxu0
      %4480 = vmatprep.mubr.bf16.mxu0 0
      %4481 = vmatmul.mubr.bf16.gmra.mrb[0].mxu0 %v4074
      %v4482 = vpop.f32.mrb[0].mxu0
      %v4483 = vadd.f32 0.0, %v4482
      %v4484 = vpop.f32.mrb[0].mxu0
      %v4485 = vpop.f32.mrb[0].mxu0
      %v4486 = vadd.f32 0.0, %v4485
      %v4487 = vpop.f32.mrb[0].mxu0
      %4488 = vmatprep.mubr.bf16.mxu0 0
      %4489 = vmatmul.mubr.bf16.gmra.mrb[0].mxu0 %v4077
      %v4490 = vpop.f32.mrb[0].mxu0
      %v4491 = vadd.f32 0.0, %v4490
      %v4492 = vpop.f32.mrb[0].mxu0
      %v4493 = vpop.f32.mrb[0].mxu0
      %v4494 = vadd.f32 0.0, %v4493
      %v4495 = vpop.f32.mrb[0].mxu0
      %4496 = vmatprep.mubr.bf16.mxu0 0
      %4497 = vmatmul.mubr.bf16.gmra.mrb[0].mxu0 %v4080
      %v4498 = vpop.f32.mrb[0].mxu0
      %v4499 = vadd.f32 0.0, %v4498
      %v4500 = vpop.f32.mrb[0].mxu0
      %v4501 = vpop.f32.mrb[0].mxu0
      %v4502 = vadd.f32 0.0, %v4501
      %v4503 = vpop.f32.mrb[0].mxu0
      %4504 = vmatprep.mubr.bf16.mxu0 0
      %4505 = vmatmul.mubr.bf16.gmra.mrb[0].mxu0 %v4083
      %v4506 = vpop.f32.mrb[0].mxu0
      %v4507 = vadd.f32 0.0, %v4506
      %v4508 = vpop.f32.mrb[0].mxu0
      %v4509 = vpop.f32.mrb[0].mxu0
      %v4510 = vadd.f32 0.0, %v4509
      %v4511 = vpop.f32.mrb[0].mxu0
      %4512 = vmatprep.mubr.bf16.mxu0 0
      %4513 = vmatmul.mubr.bf16.gmra.mrb[0].mxu0 %v4086
      %v4514 = vpop.f32.mrb[0].mxu0
      %v4515 = vadd.f32 0.0, %v4514
      %v4516 = vpop.f32.mrb[0].mxu0
      %v4517 = vpop.f32.mrb[0].mxu0
      %v4518 = vadd.f32 0.0, %v4517
      %v4519 = vpop.f32.mrb[0].mxu0
      %4520 = vmatprep.mubr.bf16.mxu0 0
      %4521 = vmatmul.mubr.bf16.gmra.mrb[0].mxu0 %v4089
      %v4522 = vpop.f32.mrb[0].mxu0
      %v4523 = vadd.f32 0.0, %v4522
      %v4524 = vpop.f32.mrb[0].mxu0
      %v4525 = vpop.f32.mrb[0].mxu0
      %v4526 = vadd.f32 0.0, %v4525
      %v4527 = vpop.f32.mrb[0].mxu0
      %4528 = vmatprep.mubr.bf16.mxu0 0
      %4529 = vmatmul.mubr.bf16.gmra.mrb[0].mxu0 %v4092
      %v4530 = vpop.f32.mrb[0].mxu0
      %v4531 = vadd.f32 0.0, %v4530
      %v4532 = vpop.f32.mrb[0].mxu0
      %v4533 = vpop.f32.mrb[0].mxu0
      %v4534 = vadd.f32 0.0, %v4533
      %v4535 = vpop.f32.mrb[0].mxu0
      %4536 = vmatprep.mubr.bf16.mxu0 0
      %4537 = vmatmul.mubr.bf16.gmra.mrb[0].mxu0 %v4095
      %v4538 = vpop.f32.mrb[0].mxu0
      %v4539 = vadd.f32 0.0, %v4538
      %v4540 = vpop.f32.mrb[0].mxu0
      %v4541 = vpop.f32.mrb[0].mxu0
      %v4542 = vadd.f32 0.0, %v4541
      %v4543 = vpop.f32.mrb[0].mxu0
      %4544 = vmatprep.mubr.bf16.mxu0 0
      %4545 = vmatmul.mubr.bf16.gmra.mrb[0].mxu0 %v4098
      %v4546 = vpop.f32.mrb[0].mxu0
      %v4547 = vadd.f32 0.0, %v4546
      %v4548 = vpop.f32.mrb[0].mxu0
      %v4549 = vpop.f32.mrb[0].mxu0
      %v4550 = vadd.f32 0.0, %v4549
      %v4551 = vpop.f32.mrb[0].mxu0
      %4552 = vmatprep.mubr.bf16.mxu0 0
      %4553 = vmatmul.mubr.bf16.gmra.mrb[0].mxu0 %v4101
      %v4554 = vpop.f32.mrb[0].mxu0
      %v4555 = vadd.f32 0.0, %v4554
      %v4556 = vpop.f32.mrb[0].mxu0
      %v4557 = vpop.f32.mrb[0].mxu0
      %v4558 = vadd.f32 0.0, %v4557
      %v4559 = vpop.f32.mrb[0].mxu0
      %4560 = vmatprep.mubr.bf16.mxu0 0
      %4561 = vmatmul.mubr.bf16.gmra.mrb[0].mxu0 %v4104
      %v4562 = vpop.f32.mrb[0].mxu0
      %v4563 = vadd.f32 0.0, %v4562
      %v4564 = vpop.f32.mrb[0].mxu0
      %v4565 = vpop.f32.mrb[0].mxu0
      %v4566 = vadd.f32 0.0, %v4565
      %v4567 = vpop.f32.mrb[0].mxu0
      %4568 = vmatprep.mubr.bf16.mxu0 0
      %4569 = vmatmul.mubr.bf16.gmra.mrb[0].mxu0 %v4107
      %v4570 = vpop.f32.mrb[0].mxu0
      %v4571 = vadd.f32 0.0, %v4570
      %v4572 = vpop.f32.mrb[0].mxu0
      %v4573 = vpop.f32.mrb[0].mxu0
      %v4574 = vadd.f32 0.0, %v4573
      %v4575 = vpop.f32.mrb[0].mxu0
      %4576 = vmatprep.mubr.bf16.mxu0 0
      %4577 = vmatmul.mubr.bf16.gmra.mrb[0].mxu0 %v4110
      %v4578 = vpop.f32.mrb[0].mxu0
      %v4579 = vadd.f32 0.0, %v4578
      %v4580 = vpop.f32.mrb[0].mxu0
      %v4581 = vpop.f32.mrb[0].mxu0
      %v4582 = vadd.f32 0.0, %v4581
      %v4583 = vpop.f32.mrb[0].mxu0
      %4584 = vmatprep.mubr.bf16.mxu0 0
      %4585 = vmatmul.mubr.bf16.gmra.mrb[0].mxu0 %v4113
      %v4586 = vpop.f32.mrb[0].mxu0
      %v4587 = vadd.f32 0.0, %v4586
      %v4588 = vpop.f32.mrb[0].mxu0
      %v4589 = vpop.f32.mrb[0].mxu0
      %v4590 = vadd.f32 0.0, %v4589
      %v4591 = vpop.f32.mrb[0].mxu0
      %4592 = vmatprep.mubr.bf16.mxu0 0
      %4593 = vmatmul.mubr.bf16.gmra.mrb[0].mxu0 %v4116
      %v4594 = vpop.f32.mrb[0].mxu0
      %v4595 = vadd.f32 0.0, %v4594
      %v4596 = vpop.f32.mrb[0].mxu0
      %v4597 = vpop.f32.mrb[0].mxu0
      %v4598 = vadd.f32 0.0, %v4597
      %v4599 = vpop.f32.mrb[0].mxu0
      %4600 = vmatprep.mubr.bf16.mxu0 0
      %4601 = vmatmul.mubr.bf16.gmra.mrb[0].mxu0 %v4119
      %v4602 = vpop.f32.mrb[0].mxu0
      %v4603 = vadd.f32 0.0, %v4602
      %v4604 = vpop.f32.mrb[0].mxu0
      %v4605 = vpop.f32.mrb[0].mxu0
      %v4606 = vadd.f32 0.0, %v4605
      %v4607 = vpop.f32.mrb[0].mxu0
      %4608 = vmatprep.mubr.bf16.mxu0 0
      %4609 = vmatmul.mubr.bf16.gmra.mrb[0].mxu0 %v4122
      %v4610 = vpop.f32.mrb[0].mxu0
      %v4611 = vadd.f32 0.0, %v4610
      %v4612 = vpop.f32.mrb[0].mxu0
      %v4613 = vpop.f32.mrb[0].mxu0
      %v4614 = vadd.f32 0.0, %v4613
      %v4615 = vpop.f32.mrb[0].mxu0
      %4616 = vmatprep.mubr.bf16.mxu0 0
      %4617 = vmatmul.mubr.bf16.gmra.mrb[0].mxu0 %v4125
      %v4618 = vpop.f32.mrb[0].mxu0
      %v4619 = vadd.f32 0.0, %v4618
      %v4620 = vpop.f32.mrb[0].mxu0
      %v4621 = vpop.f32.mrb[0].mxu0
      %v4622 = vadd.f32 0.0, %v4621
      %v4623 = vpop.f32.mrb[0].mxu0
      %4624 = vmatprep.mubr.bf16.mxu0 0
      %4625 = vmatmul.mubr.bf16.gmra.mrb[0].mxu0 %v4128
      %v4626 = vpop.f32.mrb[0].mxu0
      %v4627 = vadd.f32 0.0, %v4626
      %v4628 = vpop.f32.mrb[0].mxu0
      %v4629 = vpop.f32.mrb[0].mxu0
      %v4630 = vadd.f32 0.0, %v4629
      %v4631 = vpop.f32.mrb[0].mxu0
      %4632 = vmatprep.mubr.bf16.mxu0 0
      %4633 = vmatmul.mubr.bf16.gmra.mrb[0].mxu0 %v4131
      %v4634 = vpop.f32.mrb[0].mxu0
      %v4635 = vadd.f32 0.0, %v4634
      %v4636 = vpop.f32.mrb[0].mxu0
      %v4637 = vpop.f32.mrb[0].mxu0
      %v4638 = vadd.f32 0.0, %v4637
      %v4639 = vpop.f32.mrb[0].mxu0
      %4640 = vmatprep.mubr.bf16.mxu0 0
      %4641 = vmatmul.mubr.bf16.gmra.mrb[0].mxu0 %v4134
      %v4642 = vpop.f32.mrb[0].mxu0
      %v4643 = vadd.f32 0.0, %v4642
      %v4644 = vpop.f32.mrb[0].mxu0
      %v4645 = vpop.f32.mrb[0].mxu0
      %v4646 = vadd.f32 0.0, %v4645
      %v4647 = vpop.f32.mrb[0].mxu0
      %4648 = vmatprep.mubr.bf16.mxu0 0
      %4649 = vmatmul.mubr.bf16.gmra.mrb[0].mxu0 %v4137
      %v4650 = vpop.f32.mrb[0].mxu0
      %v4651 = vadd.f32 0.0, %v4650
      %v4652 = vpop.f32.mrb[0].mxu0
      %v4653 = vpop.f32.mrb[0].mxu0
      %v4654 = vadd.f32 0.0, %v4653
      %v4655 = vpop.f32.mrb[0].mxu0
      %4656 = vmatprep.mubr.bf16.mxu0 0
      %4657 = vmatmul.mubr.bf16.gmra.mrb[0].mxu0 %v4140
      %v4658 = vpop.f32.mrb[0].mxu0
      %v4659 = vadd.f32 0.0, %v4658
      %v4660 = vpop.f32.mrb[0].mxu0
      %v4661 = vpop.f32.mrb[0].mxu0
      %v4662 = vadd.f32 0.0, %v4661
      %v4663 = vpop.f32.mrb[0].mxu0
      %4664 = vmatprep.mubr.bf16.mxu0 0
      %4665 = vmatmul.mubr.bf16.gmra.mrb[0].mxu0 %v4143
      %v4666 = vpop.f32.mrb[0].mxu0
      %v4667 = vadd.f32 0.0, %v4666
      %v4668 = vpop.f32.mrb[0].mxu0
      %v4669 = vpop.f32.mrb[0].mxu0
      %v4670 = vadd.f32 0.0, %v4669
      %v4671 = vpop.f32.mrb[0].mxu0
      %4672 = vmatprep.mubr.bf16.mxu0 0
      %4673 = vmatmul.mubr.bf16.gmra.mrb[0].mxu0 %v4146
      %v4674 = vpop.f32.mrb[0].mxu0
      %v4675 = vadd.f32 0.0, %v4674
      %v4676 = vpop.f32.mrb[0].mxu0
      %v4677 = vpop.f32.mrb[0].mxu0
      %v4678 = vadd.f32 0.0, %v4677
      %v4679 = vpop.f32.mrb[0].mxu0
      %4680 = vmatprep.mubr.bf16.mxu0 0
      %4681 = vmatmul.mubr.bf16.gmra.mrb[0].mxu0 %v4149
      %v4682 = vpop.f32.mrb[0].mxu0
      %v4683 = vadd.f32 0.0, %v4682
      %v4684 = vpop.f32.mrb[0].mxu0
      %v4685 = vpop.f32.mrb[0].mxu0
      %v4686 = vadd.f32 0.0, %v4685
      %v4687 = vpop.f32.mrb[0].mxu0
      %4688 = vmatprep.mubr.bf16.mxu0 0
      %4689 = vmatmul.mubr.bf16.gmra.mrb[0].mxu0 %v4152
      %v4690 = vpop.f32.mrb[0].mxu0
      %v4691 = vadd.f32 0.0, %v4690
      %v4692 = vpop.f32.mrb[0].mxu0
      %v4693 = vpop.f32.mrb[0].mxu0
      %v4694 = vadd.f32 0.0, %v4693
      %v4695 = vpop.f32.mrb[0].mxu0
      %4696 = vmatprep.mubr.bf16.mxu0 0
      %4697 = vmatmul.mubr.bf16.gmra.mrb[0].mxu0 %v4155
      %v4698 = vpop.f32.mrb[0].mxu0
      %v4699 = vadd.f32 0.0, %v4698
      %v4700 = vpop.f32.mrb[0].mxu0
      %v4701 = vpop.f32.mrb[0].mxu0
      %v4702 = vadd.f32 0.0, %v4701
      %v4703 = vpop.f32.mrb[0].mxu0
      %4704 = vdwg.mxu0
      %v4705 = vadd.f32 %v3573, %v4195
      %v4706 = vadd.f32 %v3574, %v4198
      %v4707 = vadd.f32 %v3575, %v4203
      %v4708 = vadd.f32 %v3576, %v4206
      %v4709 = vadd.f32 %v3577, %v4211
      %v4710 = vadd.f32 %v3578, %v4214
      %v4711 = vadd.f32 %v3579, %v4219
      %v4712 = vadd.f32 %v3580, %v4222
      %v4713 = vadd.f32 %v3581, %v4227
      %v4714 = vadd.f32 %v3582, %v4230
      %v4715 = vadd.f32 %v3583, %v4235
      %v4716 = vadd.f32 %v3584, %v4238
      %v4717 = vadd.f32 %v3585, %v4243
      %v4718 = vadd.f32 %v3586, %v4246
      %v4719 = vadd.f32 %v3587, %v4251
      %v4720 = vadd.f32 %v3588, %v4254
      %v4721 = vadd.f32 %v3589, %v4259
      %v4722 = vadd.f32 %v3590, %v4262
      %v4723 = vadd.f32 %v3591, %v4267
      %v4724 = vadd.f32 %v3592, %v4270
      %v4725 = vadd.f32 %v3593, %v4275
      %v4726 = vadd.f32 %v3594, %v4278
      %v4727 = vadd.f32 %v3595, %v4283
      %v4728 = vadd.f32 %v3596, %v4286
      %v4729 = vadd.f32 %v3597, %v4291
      %v4730 = vadd.f32 %v3598, %v4294
      %v4731 = vadd.f32 %v3599, %v4299
      %v4732 = vadd.f32 %v3600, %v4302
      %v4733 = vadd.f32 %v3601, %v4307
      %v4734 = vadd.f32 %v3602, %v4310
      %v4735 = vadd.f32 %v3603, %v4315
      %v4736 = vadd.f32 %v3604, %v4318
      %v4737 = vadd.f32 %v3605, %v4323
      %v4738 = vadd.f32 %v3606, %v4326
      %v4739 = vadd.f32 %v3607, %v4331
      %v4740 = vadd.f32 %v3608, %v4334
      %v4741 = vadd.f32 %v3609, %v4339
      %v4742 = vadd.f32 %v3610, %v4342
      %v4743 = vadd.f32 %v3611, %v4347
      %v4744 = vadd.f32 %v3612, %v4350
      %v4745 = vadd.f32 %v3613, %v4355
      %v4746 = vadd.f32 %v3614, %v4358
      %v4747 = vadd.f32 %v3615, %v4363
      %v4748 = vadd.f32 %v3616, %v4366
      %v4749 = vadd.f32 %v3617, %v4371
      %v4750 = vadd.f32 %v3618, %v4374
      %v4751 = vadd.f32 %v3619, %v4379
      %v4752 = vadd.f32 %v3620, %v4382
      %v4753 = vadd.f32 %v3621, %v4387
      %v4754 = vadd.f32 %v3622, %v4390
      %v4755 = vadd.f32 %v3623, %v4395
      %v4756 = vadd.f32 %v3624, %v4398
      %v4757 = vadd.f32 %v3625, %v4403
      %v4758 = vadd.f32 %v3626, %v4406
      %v4759 = vadd.f32 %v3627, %v4411
      %v4760 = vadd.f32 %v3628, %v4414
      %v4761 = vadd.f32 %v3629, %v4419
      %v4762 = vadd.f32 %v3630, %v4422
      %v4763 = vadd.f32 %v3631, %v4427
      %v4764 = vadd.f32 %v3632, %v4430
      %v4765 = vadd.f32 %v3633, %v4435
      %v4766 = vadd.f32 %v3634, %v4438
      %v4767 = vadd.f32 %v3635, %v4443
      %v4768 = vadd.f32 %v3636, %v4446
      %v4769 = vadd.f32 %v3637, %v4451
      %v4770 = vadd.f32 %v3638, %v4454
      %v4771 = vadd.f32 %v3639, %v4459
      %v4772 = vadd.f32 %v3640, %v4462
      %v4773 = vadd.f32 %v3641, %v4467
      %v4774 = vadd.f32 %v3642, %v4470
      %v4775 = vadd.f32 %v3643, %v4475
      %v4776 = vadd.f32 %v3644, %v4478
      %v4777 = vadd.f32 %v3645, %v4483
      %v4778 = vadd.f32 %v3646, %v4486
      %v4779 = vadd.f32 %v3647, %v4491
      %v4780 = vadd.f32 %v3648, %v4494
      %v4781 = vadd.f32 %v3649, %v4499
      %v4782 = vadd.f32 %v3650, %v4502
      %v4783 = vadd.f32 %v3651, %v4507
      %v4784 = vadd.f32 %v3652, %v4510
      %v4785 = vadd.f32 %v3653, %v4515
      %v4786 = vadd.f32 %v3654, %v4518
      %v4787 = vadd.f32 %v3655, %v4523
      %v4788 = vadd.f32 %v3656, %v4526
      %v4789 = vadd.f32 %v3657, %v4531
      %v4790 = vadd.f32 %v3658, %v4534
      %v4791 = vadd.f32 %v3659, %v4539
      %v4792 = vadd.f32 %v3660, %v4542
      %v4793 = vadd.f32 %v3661, %v4547
      %v4794 = vadd.f32 %v3662, %v4550
      %v4795 = vadd.f32 %v3663, %v4555
      %v4796 = vadd.f32 %v3664, %v4558
      %v4797 = vadd.f32 %v3665, %v4563
      %v4798 = vadd.f32 %v3666, %v4566
      %v4799 = vadd.f32 %v3667, %v4571
      %v4800 = vadd.f32 %v3668, %v4574
      %v4801 = vadd.f32 %v3669, %v4579
      %v4802 = vadd.f32 %v3670, %v4582
      %v4803 = vadd.f32 %v3671, %v4587
      %v4804 = vadd.f32 %v3672, %v4590
      %v4805 = vadd.f32 %v3673, %v4595
      %v4806 = vadd.f32 %v3674, %v4598
      %v4807 = vadd.f32 %v3675, %v4603
      %v4808 = vadd.f32 %v3676, %v4606
      %v4809 = vadd.f32 %v3677, %v4611
      %v4810 = vadd.f32 %v3678, %v4614
      %v4811 = vadd.f32 %v3679, %v4619
      %v4812 = vadd.f32 %v3680, %v4622
      %v4813 = vadd.f32 %v3681, %v4627
      %v4814 = vadd.f32 %v3682, %v4630
      %v4815 = vadd.f32 %v3683, %v4635
      %v4816 = vadd.f32 %v3684, %v4638
      %v4817 = vadd.f32 %v3685, %v4643
      %v4818 = vadd.f32 %v3686, %v4646
      %v4819 = vadd.f32 %v3687, %v4651
      %v4820 = vadd.f32 %v3688, %v4654
      %v4821 = vadd.f32 %v3689, %v4659
      %v4822 = vadd.f32 %v3690, %v4662
      %v4823 = vadd.f32 %v3691, %v4667
      %v4824 = vadd.f32 %v3692, %v4670
      %v4825 = vadd.f32 %v3693, %v4675
      %v4826 = vadd.f32 %v3694, %v4678
      %v4827 = vadd.f32 %v3695, %v4683
      %v4828 = vadd.f32 %v3696, %v4686
      %v4829 = vadd.f32 %v3697, %v4691
      %v4830 = vadd.f32 %v3698, %v4694
      %v4831 = vadd.f32 %v3699, %v4699
      %v4832 = vadd.f32 %v3700, %v4702
      %s4833 = scalar_lea.vmem %s2, 8
      %v4834 = vld [vmem:[%s4833] sm:$0x3]
      %vm4835 = vcmask 1045504
      %v4836 = vrot.slane %v694, 2
      %v4837 = vrot.slane %v695, 2
      %v4838 = vsel %vm4835, %v4836, %v4837
      %v4839 = vrot.slane %v696, 2
      %v4840 = vsel %vm4835, %v4837, %v4839
      %v4841 = vrot.slane %v697, 2
      %v4842 = vsel %vm4835, %v4839, %v4841
      %v4843 = vrot.slane %v698, 2
      %v4844 = vsel %vm4835, %v4841, %v4843
      %v4845 = vrot.slane %v699, 2
      %v4846 = vsel %vm4835, %v4843, %v4845
      %v4847 = vrot.slane %v700, 2
      %v4848 = vsel %vm4835, %v4845, %v4847
      %v4849 = vrot.slane %v701, 2
      %v4850 = vsel %vm4835, %v4847, %v4849
      %v4851 = vrot.slane %v702, 2
      %v4852 = vsel %vm4835, %v4849, %v4851
      %v4853 = vrot.slane %v703, 2
      %v4854 = vsel %vm4835, %v4851, %v4853
      %v4855 = vrot.slane %v704, 2
      %v4856 = vsel %vm4835, %v4853, %v4855
      %v4857 = vrot.slane %v705, 2
      %v4858 = vsel %vm4835, %v4855, %v4857
      %v4859 = vrot.slane %v706, 2
      %v4860 = vsel %vm4835, %v4857, %v4859
      %v4861 = vrot.slane %v707, 2
      %v4862 = vsel %vm4835, %v4859, %v4861
      %v4863 = vrot.slane %v708, 2
      %v4864 = vsel %vm4835, %v4861, %v4863
      %v4865 = vrot.slane %v709, 2
      %v4866 = vsel %vm4835, %v4863, %v4865
      %v4867 = vrot.slane %v710, 2
      %v4868 = vsel %vm4835, %v4865, %v4867
      %v4869 = vrot.slane %v711, 2
      %v4870 = vsel %vm4835, %v4867, %v4869
      %v4871 = vrot.slane %v712, 2
      %v4872 = vsel %vm4835, %v4869, %v4871
      %v4873 = vrot.slane %v713, 2
      %v4874 = vsel %vm4835, %v4871, %v4873
      %v4875 = vrot.slane %v714, 2
      %v4876 = vsel %vm4835, %v4873, %v4875
      %v4877 = vrot.slane %v715, 2
      %v4878 = vsel %vm4835, %v4875, %v4877
      %v4879 = vrot.slane %v716, 2
      %v4880 = vsel %vm4835, %v4877, %v4879
      %v4881 = vrot.slane %v717, 2
      %v4882 = vsel %vm4835, %v4879, %v4881
      %v4883 = vrot.slane %v718, 2
      %v4884 = vsel %vm4835, %v4881, %v4883
      %v4885 = vrot.slane %v719, 2
      %v4886 = vsel %vm4835, %v4883, %v4885
      %v4887 = vrot.slane %v720, 2
      %v4888 = vsel %vm4835, %v4885, %v4887
      %v4889 = vrot.slane %v721, 2
      %v4890 = vsel %vm4835, %v4887, %v4889
      %v4891 = vrot.slane %v722, 2
      %v4892 = vsel %vm4835, %v4889, %v4891
      %v4893 = vrot.slane %v723, 2
      %v4894 = vsel %vm4835, %v4891, %v4893
      %v4895 = vrot.slane %v724, 2
      %v4896 = vsel %vm4835, %v4893, %v4895
      %v4897 = vrot.slane %v725, 2
      %v4898 = vsel %vm4835, %v4895, %v4897
      %v4899 = vrot.slane %v726, 2
      %v4900 = vsel %vm4835, %v4897, %v4899
      %v4901 = vrot.slane %v727, 2
      %v4902 = vsel %vm4835, %v4899, %v4901
      %v4903 = vrot.slane %v728, 2
      %v4904 = vsel %vm4835, %v4901, %v4903
      %v4905 = vrot.slane %v729, 2
      %v4906 = vsel %vm4835, %v4903, %v4905
      %v4907 = vrot.slane %v730, 2
      %v4908 = vsel %vm4835, %v4905, %v4907
      %v4909 = vrot.slane %v731, 2
      %v4910 = vsel %vm4835, %v4907, %v4909
      %v4911 = vrot.slane %v732, 2
      %v4912 = vsel %vm4835, %v4909, %v4911
      %v4913 = vrot.slane %v733, 2
      %v4914 = vsel %vm4835, %v4911, %v4913
      %v4915 = vrot.slane %v734, 2
      %v4916 = vsel %vm4835, %v4913, %v4915
      %v4917 = vrot.slane %v735, 2
      %v4918 = vsel %vm4835, %v4915, %v4917
      %v4919 = vrot.slane %v736, 2
      %v4920 = vsel %vm4835, %v4917, %v4919
      %v4921 = vrot.slane %v737, 2
      %v4922 = vsel %vm4835, %v4919, %v4921
      %v4923 = vrot.slane %v738, 2
      %v4924 = vsel %vm4835, %v4921, %v4923
      %v4925 = vrot.slane %v739, 2
      %v4926 = vsel %vm4835, %v4923, %v4925
      %v4927 = vrot.slane %v740, 2
      %v4928 = vsel %vm4835, %v4925, %v4927
      %v4929 = vrot.slane %v741, 2
      %v4930 = vsel %vm4835, %v4927, %v4929
      %v4931 = vrot.slane %v742, 2
      %v4932 = vsel %vm4835, %v4929, %v4931
      %v4933 = vrot.slane %v743, 2
      %v4934 = vsel %vm4835, %v4931, %v4933
      %v4935 = vrot.slane %v744, 2
      %v4936 = vsel %vm4835, %v4933, %v4935
      %v4937 = vrot.slane %v745, 2
      %v4938 = vsel %vm4835, %v4935, %v4937
      %v4939 = vrot.slane %v746, 2
      %v4940 = vsel %vm4835, %v4937, %v4939
      %v4941 = vrot.slane %v747, 2
      %v4942 = vsel %vm4835, %v4939, %v4941
      %v4943 = vrot.slane %v748, 2
      %v4944 = vsel %vm4835, %v4941, %v4943
      %v4945 = vrot.slane %v749, 2
      %v4946 = vsel %vm4835, %v4943, %v4945
      %v4947 = vrot.slane %v750, 2
      %v4948 = vsel %vm4835, %v4945, %v4947
      %v4949 = vrot.slane %v751, 2
      %v4950 = vsel %vm4835, %v4947, %v4949
      %v4951 = vrot.slane %v752, 2
      %v4952 = vsel %vm4835, %v4949, %v4951
      %v4953 = vrot.slane %v753, 2
      %v4954 = vsel %vm4835, %v4951, %v4953
      %v4955 = vrot.slane %v754, 2
      %v4956 = vsel %vm4835, %v4953, %v4955
      %v4957 = vrot.slane %v755, 2
      %v4958 = vsel %vm4835, %v4955, %v4957
      %v4959 = vrot.slane %v756, 2
      %v4960 = vsel %vm4835, %v4957, %v4959
      %v4961 = vrot.slane %v757, 2
      %v4962 = vsel %vm4835, %v4959, %v4961
      %v4963 = vrot.slane %v762, 2
      %v4964 = vsel %vm4835, %v4961, %v4963
      %v4966 = vsel %vm1283, %v4838, 0
      %v4969 = vsel %vm1283, %v4840, 0
      %v4972 = vsel %vm1283, %v4842, 0
      %v4975 = vsel %vm1283, %v4844, 0
      %v4978 = vsel %vm1283, %v4846, 0
      %v4981 = vsel %vm1283, %v4848, 0
      %v4984 = vsel %vm1283, %v4850, 0
      %v4987 = vsel %vm1283, %v4852, 0
      %v4990 = vsel %vm1283, %v4854, 0
      %v4993 = vsel %vm1283, %v4856, 0
      %v4996 = vsel %vm1283, %v4858, 0
      %v4999 = vsel %vm1283, %v4860, 0
      %v5002 = vsel %vm1283, %v4862, 0
      %v5005 = vsel %vm1283, %v4864, 0
      %v5008 = vsel %vm1283, %v4866, 0
      %v5011 = vsel %vm1283, %v4868, 0
      %v5014 = vsel %vm1283, %v4870, 0
      %v5017 = vsel %vm1283, %v4872, 0
      %v5020 = vsel %vm1283, %v4874, 0
      %v5023 = vsel %vm1283, %v4876, 0
      %v5026 = vsel %vm1283, %v4878, 0
      %v5029 = vsel %vm1283, %v4880, 0
      %v5032 = vsel %vm1283, %v4882, 0
      %v5035 = vsel %vm1283, %v4884, 0
      %v5038 = vsel %vm1283, %v4886, 0
      %v5041 = vsel %vm1283, %v4888, 0
      %v5044 = vsel %vm1283, %v4890, 0
      %v5047 = vsel %vm1283, %v4892, 0
      %v5050 = vsel %vm1283, %v4894, 0
      %v5053 = vsel %vm1283, %v4896, 0
      %v5056 = vsel %vm1283, %v4898, 0
      %v5059 = vsel %vm1283, %v4900, 0
      %v5062 = vsel %vm1283, %v4902, 0
      %v5065 = vsel %vm1283, %v4904, 0
      %v5068 = vsel %vm1283, %v4906, 0
      %v5071 = vsel %vm1283, %v4908, 0
      %v5074 = vsel %vm1283, %v4910, 0
      %v5077 = vsel %vm1283, %v4912, 0
      %v5080 = vsel %vm1283, %v4914, 0
      %v5083 = vsel %vm1283, %v4916, 0
      %v5086 = vsel %vm1283, %v4918, 0
      %v5089 = vsel %vm1283, %v4920, 0
      %v5092 = vsel %vm1283, %v4922, 0
      %v5095 = vsel %vm1283, %v4924, 0
      %v5098 = vsel %vm1283, %v4926, 0
      %v5101 = vsel %vm1283, %v4928, 0
      %v5104 = vsel %vm1283, %v4930, 0
      %v5107 = vsel %vm1283, %v4932, 0
      %v5110 = vsel %vm1283, %v4934, 0
      %v5113 = vsel %vm1283, %v4936, 0
      %v5116 = vsel %vm1283, %v4938, 0
      %v5119 = vsel %vm1283, %v4940, 0
      %v5122 = vsel %vm1283, %v4942, 0
      %v5125 = vsel %vm1283, %v4944, 0
      %v5128 = vsel %vm1283, %v4946, 0
      %v5131 = vsel %vm1283, %v4948, 0
      %v5134 = vsel %vm1283, %v4950, 0
      %v5137 = vsel %vm1283, %v4952, 0
      %v5140 = vsel %vm1283, %v4954, 0
      %v5143 = vsel %vm1283, %v4956, 0
      %v5146 = vsel %vm1283, %v4958, 0
      %v5149 = vsel %vm1283, %v4960, 0
      %v5152 = vsel %vm1283, %v4962, 0
      %v5155 = vsel %vm1283, %v4964, 0
      %v5158 = vsel %vm1476, %v4834, 0
      %5160 = vmatprep.subr.bf16.mxu0 0
      %5161 = vmatpush1.bf16.msra.mxu0 %v5158
      %5162 = vmatprep.subr.bf16.mxu0 0
      %5163 = vmatpush1.bf16.msra.mxu0 0
      %5164 = vmatprep.subr.bf16.mxu0 0
      %5165 = vmatpush1.bf16.msra.mxu0 0
      %5166 = vmatprep.subr.bf16.mxu0 0
      %5167 = vmatpush1.bf16.msra.mxu0 0
      %5168 = vmatprep.subr.bf16.mxu0 0
      %5169 = vmatpush1.bf16.msra.mxu0 0
      %5170 = vmatprep.subr.bf16.mxu0 0
      %5171 = vmatpush1.bf16.msra.mxu0 0
      %5172 = vmatprep.subr.bf16.mxu0 0
      %5173 = vmatpush1.bf16.msra.mxu0 0
      %5174 = vmatprep.subr.bf16.mxu0 0
      %5175 = vmatpush1.bf16.msra.mxu0 0
      %5176 = vmatprep.subr.bf16.mxu0 0
      %5177 = vmatpush1.bf16.msra.mxu0 0
      %5178 = vmatprep.subr.bf16.mxu0 0
      %5179 = vmatpush1.bf16.msra.mxu0 0
      %5180 = vmatprep.subr.bf16.mxu0 0
      %5181 = vmatpush1.bf16.msra.mxu0 0
      %5182 = vmatprep.subr.bf16.mxu0 0
      %5183 = vmatpush1.bf16.msra.mxu0 0
      %5184 = vmatprep.subr.bf16.mxu0 0
      %5185 = vmatpush1.bf16.msra.mxu0 0
      %5186 = vmatprep.subr.bf16.mxu0 0
      %5187 = vmatpush1.bf16.msra.mxu0 0
      %5188 = vmatprep.subr.bf16.mxu0 0
      %5189 = vmatpush1.bf16.msra.mxu0 0
      %5190 = vmatprep.subr.bf16.mxu0 0
      %5191 = vmatpush1.bf16.msra.mxu0 0
      %5192 = vmatprep.mubr.bf16.mxu0 0
      %5193 = vmatmul.mubr.bf16.gmra.mrb[0].mxu0 %v4966
      %v5194 = vpop.f32.mrb[0].mxu0
      %v5195 = vadd.f32 0.0, %v5194
      %v5196 = vpop.f32.mrb[0].mxu0
      %v5197 = vpop.f32.mrb[0].mxu0
      %v5198 = vadd.f32 0.0, %v5197
      %v5199 = vpop.f32.mrb[0].mxu0
      %5200 = vmatprep.mubr.bf16.mxu0 0
      %5201 = vmatmul.mubr.bf16.gmra.mrb[0].mxu0 %v4969
      %v5202 = vpop.f32.mrb[0].mxu0
      %v5203 = vadd.f32 0.0, %v5202
      %v5204 = vpop.f32.mrb[0].mxu0
      %v5205 = vpop.f32.mrb[0].mxu0
      %v5206 = vadd.f32 0.0, %v5205
      %v5207 = vpop.f32.mrb[0].mxu0
      %5208 = vmatprep.mubr.bf16.mxu0 0
      %5209 = vmatmul.mubr.bf16.gmra.mrb[0].mxu0 %v4972
      %v5210 = vpop.f32.mrb[0].mxu0
      %v5211 = vadd.f32 0.0, %v5210
      %v5212 = vpop.f32.mrb[0].mxu0
      %v5213 = vpop.f32.mrb[0].mxu0
      %v5214 = vadd.f32 0.0, %v5213
      %v5215 = vpop.f32.mrb[0].mxu0
      %5216 = vmatprep.mubr.bf16.mxu0 0
      %5217 = vmatmul.mubr.bf16.gmra.mrb[0].mxu0 %v4975
      %v5218 = vpop.f32.mrb[0].mxu0
      %v5219 = vadd.f32 0.0, %v5218
      %v5220 = vpop.f32.mrb[0].mxu0
      %v5221 = vpop.f32.mrb[0].mxu0
      %v5222 = vadd.f32 0.0, %v5221
      %v5223 = vpop.f32.mrb[0].mxu0
      %5224 = vmatprep.mubr.bf16.mxu0 0
      %5225 = vmatmul.mubr.bf16.gmra.mrb[0].mxu0 %v4978
      %v5226 = vpop.f32.mrb[0].mxu0
      %v5227 = vadd.f32 0.0, %v5226
      %v5228 = vpop.f32.mrb[0].mxu0
      %v5229 = vpop.f32.mrb[0].mxu0
      %v5230 = vadd.f32 0.0, %v5229
      %v5231 = vpop.f32.mrb[0].mxu0
      %5232 = vmatprep.mubr.bf16.mxu0 0
      %5233 = vmatmul.mubr.bf16.gmra.mrb[0].mxu0 %v4981
      %v5234 = vpop.f32.mrb[0].mxu0
      %v5235 = vadd.f32 0.0, %v5234
      %v5236 = vpop.f32.mrb[0].mxu0
      %v5237 = vpop.f32.mrb[0].mxu0
      %v5238 = vadd.f32 0.0, %v5237
      %v5239 = vpop.f32.mrb[0].mxu0
      %5240 = vmatprep.mubr.bf16.mxu0 0
      %5241 = vmatmul.mubr.bf16.gmra.mrb[0].mxu0 %v4984
      %v5242 = vpop.f32.mrb[0].mxu0
      %v5243 = vadd.f32 0.0, %v5242
      %v5244 = vpop.f32.mrb[0].mxu0
      %v5245 = vpop.f32.mrb[0].mxu0
      %v5246 = vadd.f32 0.0, %v5245
      %v5247 = vpop.f32.mrb[0].mxu0
      %5248 = vmatprep.mubr.bf16.mxu0 0
      %5249 = vmatmul.mubr.bf16.gmra.mrb[0].mxu0 %v4987
      %v5250 = vpop.f32.mrb[0].mxu0
      %v5251 = vadd.f32 0.0, %v5250
      %v5252 = vpop.f32.mrb[0].mxu0
      %v5253 = vpop.f32.mrb[0].mxu0
      %v5254 = vadd.f32 0.0, %v5253
      %v5255 = vpop.f32.mrb[0].mxu0
      %5256 = vmatprep.mubr.bf16.mxu0 0
      %5257 = vmatmul.mubr.bf16.gmra.mrb[0].mxu0 %v4990
      %v5258 = vpop.f32.mrb[0].mxu0
      %v5259 = vadd.f32 0.0, %v5258
      %v5260 = vpop.f32.mrb[0].mxu0
      %v5261 = vpop.f32.mrb[0].mxu0
      %v5262 = vadd.f32 0.0, %v5261
      %v5263 = vpop.f32.mrb[0].mxu0
      %5264 = vmatprep.mubr.bf16.mxu0 0
      %5265 = vmatmul.mubr.bf16.gmra.mrb[0].mxu0 %v4993
      %v5266 = vpop.f32.mrb[0].mxu0
      %v5267 = vadd.f32 0.0, %v5266
      %v5268 = vpop.f32.mrb[0].mxu0
      %v5269 = vpop.f32.mrb[0].mxu0
      %v5270 = vadd.f32 0.0, %v5269
      %v5271 = vpop.f32.mrb[0].mxu0
      %5272 = vmatprep.mubr.bf16.mxu0 0
      %5273 = vmatmul.mubr.bf16.gmra.mrb[0].mxu0 %v4996
      %v5274 = vpop.f32.mrb[0].mxu0
      %v5275 = vadd.f32 0.0, %v5274
      %v5276 = vpop.f32.mrb[0].mxu0
      %v5277 = vpop.f32.mrb[0].mxu0
      %v5278 = vadd.f32 0.0, %v5277
      %v5279 = vpop.f32.mrb[0].mxu0
      %5280 = vmatprep.mubr.bf16.mxu0 0
      %5281 = vmatmul.mubr.bf16.gmra.mrb[0].mxu0 %v4999
      %v5282 = vpop.f32.mrb[0].mxu0
      %v5283 = vadd.f32 0.0, %v5282
      %v5284 = vpop.f32.mrb[0].mxu0
      %v5285 = vpop.f32.mrb[0].mxu0
      %v5286 = vadd.f32 0.0, %v5285
      %v5287 = vpop.f32.mrb[0].mxu0
      %5288 = vmatprep.mubr.bf16.mxu0 0
      %5289 = vmatmul.mubr.bf16.gmra.mrb[0].mxu0 %v5002
      %v5290 = vpop.f32.mrb[0].mxu0
      %v5291 = vadd.f32 0.0, %v5290
      %v5292 = vpop.f32.mrb[0].mxu0
      %v5293 = vpop.f32.mrb[0].mxu0
      %v5294 = vadd.f32 0.0, %v5293
      %v5295 = vpop.f32.mrb[0].mxu0
      %5296 = vmatprep.mubr.bf16.mxu0 0
      %5297 = vmatmul.mubr.bf16.gmra.mrb[0].mxu0 %v5005
      %v5298 = vpop.f32.mrb[0].mxu0
      %v5299 = vadd.f32 0.0, %v5298
      %v5300 = vpop.f32.mrb[0].mxu0
      %v5301 = vpop.f32.mrb[0].mxu0
      %v5302 = vadd.f32 0.0, %v5301
      %v5303 = vpop.f32.mrb[0].mxu0
      %5304 = vmatprep.mubr.bf16.mxu0 0
      %5305 = vmatmul.mubr.bf16.gmra.mrb[0].mxu0 %v5008
      %v5306 = vpop.f32.mrb[0].mxu0
      %v5307 = vadd.f32 0.0, %v5306
      %v5308 = vpop.f32.mrb[0].mxu0
      %v5309 = vpop.f32.mrb[0].mxu0
      %v5310 = vadd.f32 0.0, %v5309
      %v5311 = vpop.f32.mrb[0].mxu0
      %5312 = vmatprep.mubr.bf16.mxu0 0
      %5313 = vmatmul.mubr.bf16.gmra.mrb[0].mxu0 %v5011
      %v5314 = vpop.f32.mrb[0].mxu0
      %v5315 = vadd.f32 0.0, %v5314
      %v5316 = vpop.f32.mrb[0].mxu0
      %v5317 = vpop.f32.mrb[0].mxu0
      %v5318 = vadd.f32 0.0, %v5317
      %v5319 = vpop.f32.mrb[0].mxu0
      %5320 = vmatprep.mubr.bf16.mxu0 0
      %5321 = vmatmul.mubr.bf16.gmra.mrb[0].mxu0 %v5014
      %v5322 = vpop.f32.mrb[0].mxu0
      %v5323 = vadd.f32 0.0, %v5322
      %v5324 = vpop.f32.mrb[0].mxu0
      %v5325 = vpop.f32.mrb[0].mxu0
      %v5326 = vadd.f32 0.0, %v5325
      %v5327 = vpop.f32.mrb[0].mxu0
      %5328 = vmatprep.mubr.bf16.mxu0 0
      %5329 = vmatmul.mubr.bf16.gmra.mrb[0].mxu0 %v5017
      %v5330 = vpop.f32.mrb[0].mxu0
      %v5331 = vadd.f32 0.0, %v5330
      %v5332 = vpop.f32.mrb[0].mxu0
      %v5333 = vpop.f32.mrb[0].mxu0
      %v5334 = vadd.f32 0.0, %v5333
      %v5335 = vpop.f32.mrb[0].mxu0
      %5336 = vmatprep.mubr.bf16.mxu0 0
      %5337 = vmatmul.mubr.bf16.gmra.mrb[0].mxu0 %v5020
      %v5338 = vpop.f32.mrb[0].mxu0
      %v5339 = vadd.f32 0.0, %v5338
      %v5340 = vpop.f32.mrb[0].mxu0
      %v5341 = vpop.f32.mrb[0].mxu0
      %v5342 = vadd.f32 0.0, %v5341
      %v5343 = vpop.f32.mrb[0].mxu0
      %5344 = vmatprep.mubr.bf16.mxu0 0
      %5345 = vmatmul.mubr.bf16.gmra.mrb[0].mxu0 %v5023
      %v5346 = vpop.f32.mrb[0].mxu0
      %v5347 = vadd.f32 0.0, %v5346
      %v5348 = vpop.f32.mrb[0].mxu0
      %v5349 = vpop.f32.mrb[0].mxu0
      %v5350 = vadd.f32 0.0, %v5349
      %v5351 = vpop.f32.mrb[0].mxu0
      %5352 = vmatprep.mubr.bf16.mxu0 0
      %5353 = vmatmul.mubr.bf16.gmra.mrb[0].mxu0 %v5026
      %v5354 = vpop.f32.mrb[0].mxu0
      %v5355 = vadd.f32 0.0, %v5354
      %v5356 = vpop.f32.mrb[0].mxu0
      %v5357 = vpop.f32.mrb[0].mxu0
      %v5358 = vadd.f32 0.0, %v5357
      %v5359 = vpop.f32.mrb[0].mxu0
      %5360 = vmatprep.mubr.bf16.mxu0 0
      %5361 = vmatmul.mubr.bf16.gmra.mrb[0].mxu0 %v5029
      %v5362 = vpop.f32.mrb[0].mxu0
      %v5363 = vadd.f32 0.0, %v5362
      %v5364 = vpop.f32.mrb[0].mxu0
      %v5365 = vpop.f32.mrb[0].mxu0
      %v5366 = vadd.f32 0.0, %v5365
      %v5367 = vpop.f32.mrb[0].mxu0
      %5368 = vmatprep.mubr.bf16.mxu0 0
      %5369 = vmatmul.mubr.bf16.gmra.mrb[0].mxu0 %v5032
      %v5370 = vpop.f32.mrb[0].mxu0
      %v5371 = vadd.f32 0.0, %v5370
      %v5372 = vpop.f32.mrb[0].mxu0
      %v5373 = vpop.f32.mrb[0].mxu0
      %v5374 = vadd.f32 0.0, %v5373
      %v5375 = vpop.f32.mrb[0].mxu0
      %5376 = vmatprep.mubr.bf16.mxu0 0
      %5377 = vmatmul.mubr.bf16.gmra.mrb[0].mxu0 %v5035
      %v5378 = vpop.f32.mrb[0].mxu0
      %v5379 = vadd.f32 0.0, %v5378
      %v5380 = vpop.f32.mrb[0].mxu0
      %v5381 = vpop.f32.mrb[0].mxu0
      %v5382 = vadd.f32 0.0, %v5381
      %v5383 = vpop.f32.mrb[0].mxu0
      %5384 = vmatprep.mubr.bf16.mxu0 0
      %5385 = vmatmul.mubr.bf16.gmra.mrb[0].mxu0 %v5038
      %v5386 = vpop.f32.mrb[0].mxu0
      %v5387 = vadd.f32 0.0, %v5386
      %v5388 = vpop.f32.mrb[0].mxu0
      %v5389 = vpop.f32.mrb[0].mxu0
      %v5390 = vadd.f32 0.0, %v5389
      %v5391 = vpop.f32.mrb[0].mxu0
      %5392 = vmatprep.mubr.bf16.mxu0 0
      %5393 = vmatmul.mubr.bf16.gmra.mrb[0].mxu0 %v5041
      %v5394 = vpop.f32.mrb[0].mxu0
      %v5395 = vadd.f32 0.0, %v5394
      %v5396 = vpop.f32.mrb[0].mxu0
      %v5397 = vpop.f32.mrb[0].mxu0
      %v5398 = vadd.f32 0.0, %v5397
      %v5399 = vpop.f32.mrb[0].mxu0
      %5400 = vmatprep.mubr.bf16.mxu0 0
      %5401 = vmatmul.mubr.bf16.gmra.mrb[0].mxu0 %v5044
      %v5402 = vpop.f32.mrb[0].mxu0
      %v5403 = vadd.f32 0.0, %v5402
      %v5404 = vpop.f32.mrb[0].mxu0
      %v5405 = vpop.f32.mrb[0].mxu0
      %v5406 = vadd.f32 0.0, %v5405
      %v5407 = vpop.f32.mrb[0].mxu0
      %5408 = vmatprep.mubr.bf16.mxu0 0
      %5409 = vmatmul.mubr.bf16.gmra.mrb[0].mxu0 %v5047
      %v5410 = vpop.f32.mrb[0].mxu0
      %v5411 = vadd.f32 0.0, %v5410
      %v5412 = vpop.f32.mrb[0].mxu0
      %v5413 = vpop.f32.mrb[0].mxu0
      %v5414 = vadd.f32 0.0, %v5413
      %v5415 = vpop.f32.mrb[0].mxu0
      %5416 = vmatprep.mubr.bf16.mxu0 0
      %5417 = vmatmul.mubr.bf16.gmra.mrb[0].mxu0 %v5050
      %v5418 = vpop.f32.mrb[0].mxu0
      %v5419 = vadd.f32 0.0, %v5418
      %v5420 = vpop.f32.mrb[0].mxu0
      %v5421 = vpop.f32.mrb[0].mxu0
      %v5422 = vadd.f32 0.0, %v5421
      %v5423 = vpop.f32.mrb[0].mxu0
      %5424 = vmatprep.mubr.bf16.mxu0 0
      %5425 = vmatmul.mubr.bf16.gmra.mrb[0].mxu0 %v5053
      %v5426 = vpop.f32.mrb[0].mxu0
      %v5427 = vadd.f32 0.0, %v5426
      %v5428 = vpop.f32.mrb[0].mxu0
      %v5429 = vpop.f32.mrb[0].mxu0
      %v5430 = vadd.f32 0.0, %v5429
      %v5431 = vpop.f32.mrb[0].mxu0
      %5432 = vmatprep.mubr.bf16.mxu0 0
      %5433 = vmatmul.mubr.bf16.gmra.mrb[0].mxu0 %v5056
      %v5434 = vpop.f32.mrb[0].mxu0
      %v5435 = vadd.f32 0.0, %v5434
      %v5436 = vpop.f32.mrb[0].mxu0
      %v5437 = vpop.f32.mrb[0].mxu0
      %v5438 = vadd.f32 0.0, %v5437
      %v5439 = vpop.f32.mrb[0].mxu0
      %5440 = vmatprep.mubr.bf16.mxu0 0
      %5441 = vmatmul.mubr.bf16.gmra.mrb[0].mxu0 %v5059
      %v5442 = vpop.f32.mrb[0].mxu0
      %v5443 = vadd.f32 0.0, %v5442
      %v5444 = vpop.f32.mrb[0].mxu0
      %v5445 = vpop.f32.mrb[0].mxu0
      %v5446 = vadd.f32 0.0, %v5445
      %v5447 = vpop.f32.mrb[0].mxu0
      %5448 = vmatprep.mubr.bf16.mxu0 0
      %5449 = vmatmul.mubr.bf16.gmra.mrb[0].mxu0 %v5062
      %v5450 = vpop.f32.mrb[0].mxu0
      %v5451 = vadd.f32 0.0, %v5450
      %v5452 = vpop.f32.mrb[0].mxu0
      %v5453 = vpop.f32.mrb[0].mxu0
      %v5454 = vadd.f32 0.0, %v5453
      %v5455 = vpop.f32.mrb[0].mxu0
      %5456 = vmatprep.mubr.bf16.mxu0 0
      %5457 = vmatmul.mubr.bf16.gmra.mrb[0].mxu0 %v5065
      %v5458 = vpop.f32.mrb[0].mxu0
      %v5459 = vadd.f32 0.0, %v5458
      %v5460 = vpop.f32.mrb[0].mxu0
      %v5461 = vpop.f32.mrb[0].mxu0
      %v5462 = vadd.f32 0.0, %v5461
      %v5463 = vpop.f32.mrb[0].mxu0
      %5464 = vmatprep.mubr.bf16.mxu0 0
      %5465 = vmatmul.mubr.bf16.gmra.mrb[0].mxu0 %v5068
      %v5466 = vpop.f32.mrb[0].mxu0
      %v5467 = vadd.f32 0.0, %v5466
      %v5468 = vpop.f32.mrb[0].mxu0
      %v5469 = vpop.f32.mrb[0].mxu0
      %v5470 = vadd.f32 0.0, %v5469
      %v5471 = vpop.f32.mrb[0].mxu0
      %5472 = vmatprep.mubr.bf16.mxu0 0
      %5473 = vmatmul.mubr.bf16.gmra.mrb[0].mxu0 %v5071
      %v5474 = vpop.f32.mrb[0].mxu0
      %v5475 = vadd.f32 0.0, %v5474
      %v5476 = vpop.f32.mrb[0].mxu0
      %v5477 = vpop.f32.mrb[0].mxu0
      %v5478 = vadd.f32 0.0, %v5477
      %v5479 = vpop.f32.mrb[0].mxu0
      %5480 = vmatprep.mubr.bf16.mxu0 0
      %5481 = vmatmul.mubr.bf16.gmra.mrb[0].mxu0 %v5074
      %v5482 = vpop.f32.mrb[0].mxu0
      %v5483 = vadd.f32 0.0, %v5482
      %v5484 = vpop.f32.mrb[0].mxu0
      %v5485 = vpop.f32.mrb[0].mxu0
      %v5486 = vadd.f32 0.0, %v5485
      %v5487 = vpop.f32.mrb[0].mxu0
      %5488 = vmatprep.mubr.bf16.mxu0 0
      %5489 = vmatmul.mubr.bf16.gmra.mrb[0].mxu0 %v5077
      %v5490 = vpop.f32.mrb[0].mxu0
      %v5491 = vadd.f32 0.0, %v5490
      %v5492 = vpop.f32.mrb[0].mxu0
      %v5493 = vpop.f32.mrb[0].mxu0
      %v5494 = vadd.f32 0.0, %v5493
      %v5495 = vpop.f32.mrb[0].mxu0
      %5496 = vmatprep.mubr.bf16.mxu0 0
      %5497 = vmatmul.mubr.bf16.gmra.mrb[0].mxu0 %v5080
      %v5498 = vpop.f32.mrb[0].mxu0
      %v5499 = vadd.f32 0.0, %v5498
      %v5500 = vpop.f32.mrb[0].mxu0
      %v5501 = vpop.f32.mrb[0].mxu0
      %v5502 = vadd.f32 0.0, %v5501
      %v5503 = vpop.f32.mrb[0].mxu0
      %5504 = vmatprep.mubr.bf16.mxu0 0
      %5505 = vmatmul.mubr.bf16.gmra.mrb[0].mxu0 %v5083
      %v5506 = vpop.f32.mrb[0].mxu0
      %v5507 = vadd.f32 0.0, %v5506
      %v5508 = vpop.f32.mrb[0].mxu0
      %v5509 = vpop.f32.mrb[0].mxu0
      %v5510 = vadd.f32 0.0, %v5509
      %v5511 = vpop.f32.mrb[0].mxu0
      %5512 = vmatprep.mubr.bf16.mxu0 0
      %5513 = vmatmul.mubr.bf16.gmra.mrb[0].mxu0 %v5086
      %v5514 = vpop.f32.mrb[0].mxu0
      %v5515 = vadd.f32 0.0, %v5514
      %v5516 = vpop.f32.mrb[0].mxu0
      %v5517 = vpop.f32.mrb[0].mxu0
      %v5518 = vadd.f32 0.0, %v5517
      %v5519 = vpop.f32.mrb[0].mxu0
      %5520 = vmatprep.mubr.bf16.mxu0 0
      %5521 = vmatmul.mubr.bf16.gmra.mrb[0].mxu0 %v5089
      %v5522 = vpop.f32.mrb[0].mxu0
      %v5523 = vadd.f32 0.0, %v5522
      %v5524 = vpop.f32.mrb[0].mxu0
      %v5525 = vpop.f32.mrb[0].mxu0
      %v5526 = vadd.f32 0.0, %v5525
      %v5527 = vpop.f32.mrb[0].mxu0
      %5528 = vmatprep.mubr.bf16.mxu0 0
      %5529 = vmatmul.mubr.bf16.gmra.mrb[0].mxu0 %v5092
      %v5530 = vpop.f32.mrb[0].mxu0
      %v5531 = vadd.f32 0.0, %v5530
      %v5532 = vpop.f32.mrb[0].mxu0
      %v5533 = vpop.f32.mrb[0].mxu0
      %v5534 = vadd.f32 0.0, %v5533
      %v5535 = vpop.f32.mrb[0].mxu0
      %5536 = vmatprep.mubr.bf16.mxu0 0
      %5537 = vmatmul.mubr.bf16.gmra.mrb[0].mxu0 %v5095
      %v5538 = vpop.f32.mrb[0].mxu0
      %v5539 = vadd.f32 0.0, %v5538
      %v5540 = vpop.f32.mrb[0].mxu0
      %v5541 = vpop.f32.mrb[0].mxu0
      %v5542 = vadd.f32 0.0, %v5541
      %v5543 = vpop.f32.mrb[0].mxu0
      %5544 = vmatprep.mubr.bf16.mxu0 0
      %5545 = vmatmul.mubr.bf16.gmra.mrb[0].mxu0 %v5098
      %v5546 = vpop.f32.mrb[0].mxu0
      %v5547 = vadd.f32 0.0, %v5546
      %v5548 = vpop.f32.mrb[0].mxu0
      %v5549 = vpop.f32.mrb[0].mxu0
      %v5550 = vadd.f32 0.0, %v5549
      %v5551 = vpop.f32.mrb[0].mxu0
      %5552 = vmatprep.mubr.bf16.mxu0 0
      %5553 = vmatmul.mubr.bf16.gmra.mrb[0].mxu0 %v5101
      %v5554 = vpop.f32.mrb[0].mxu0
      %v5555 = vadd.f32 0.0, %v5554
      %v5556 = vpop.f32.mrb[0].mxu0
      %v5557 = vpop.f32.mrb[0].mxu0
      %v5558 = vadd.f32 0.0, %v5557
      %v5559 = vpop.f32.mrb[0].mxu0
      %5560 = vmatprep.mubr.bf16.mxu0 0
      %5561 = vmatmul.mubr.bf16.gmra.mrb[0].mxu0 %v5104
      %v5562 = vpop.f32.mrb[0].mxu0
      %v5563 = vadd.f32 0.0, %v5562
      %v5564 = vpop.f32.mrb[0].mxu0
      %v5565 = vpop.f32.mrb[0].mxu0
      %v5566 = vadd.f32 0.0, %v5565
      %v5567 = vpop.f32.mrb[0].mxu0
      %5568 = vmatprep.mubr.bf16.mxu0 0
      %5569 = vmatmul.mubr.bf16.gmra.mrb[0].mxu0 %v5107
      %v5570 = vpop.f32.mrb[0].mxu0
      %v5571 = vadd.f32 0.0, %v5570
      %v5572 = vpop.f32.mrb[0].mxu0
      %v5573 = vpop.f32.mrb[0].mxu0
      %v5574 = vadd.f32 0.0, %v5573
      %v5575 = vpop.f32.mrb[0].mxu0
      %5576 = vmatprep.mubr.bf16.mxu0 0
      %5577 = vmatmul.mubr.bf16.gmra.mrb[0].mxu0 %v5110
      %v5578 = vpop.f32.mrb[0].mxu0
      %v5579 = vadd.f32 0.0, %v5578
      %v5580 = vpop.f32.mrb[0].mxu0
      %v5581 = vpop.f32.mrb[0].mxu0
      %v5582 = vadd.f32 0.0, %v5581
      %v5583 = vpop.f32.mrb[0].mxu0
      %5584 = vmatprep.mubr.bf16.mxu0 0
      %5585 = vmatmul.mubr.bf16.gmra.mrb[0].mxu0 %v5113
      %v5586 = vpop.f32.mrb[0].mxu0
      %v5587 = vadd.f32 0.0, %v5586
      %v5588 = vpop.f32.mrb[0].mxu0
      %v5589 = vpop.f32.mrb[0].mxu0
      %v5590 = vadd.f32 0.0, %v5589
      %v5591 = vpop.f32.mrb[0].mxu0
      %5592 = vmatprep.mubr.bf16.mxu0 0
      %5593 = vmatmul.mubr.bf16.gmra.mrb[0].mxu0 %v5116
      %v5594 = vpop.f32.mrb[0].mxu0
      %v5595 = vadd.f32 0.0, %v5594
      %v5596 = vpop.f32.mrb[0].mxu0
      %v5597 = vpop.f32.mrb[0].mxu0
      %v5598 = vadd.f32 0.0, %v5597
      %v5599 = vpop.f32.mrb[0].mxu0
      %5600 = vmatprep.mubr.bf16.mxu0 0
      %5601 = vmatmul.mubr.bf16.gmra.mrb[0].mxu0 %v5119
      %v5602 = vpop.f32.mrb[0].mxu0
      %v5603 = vadd.f32 0.0, %v5602
      %v5604 = vpop.f32.mrb[0].mxu0
      %v5605 = vpop.f32.mrb[0].mxu0
      %v5606 = vadd.f32 0.0, %v5605
      %v5607 = vpop.f32.mrb[0].mxu0
      %5608 = vmatprep.mubr.bf16.mxu0 0
      %5609 = vmatmul.mubr.bf16.gmra.mrb[0].mxu0 %v5122
      %v5610 = vpop.f32.mrb[0].mxu0
      %v5611 = vadd.f32 0.0, %v5610
      %v5612 = vpop.f32.mrb[0].mxu0
      %v5613 = vpop.f32.mrb[0].mxu0
      %v5614 = vadd.f32 0.0, %v5613
      %v5615 = vpop.f32.mrb[0].mxu0
      %5616 = vmatprep.mubr.bf16.mxu0 0
      %5617 = vmatmul.mubr.bf16.gmra.mrb[0].mxu0 %v5125
      %v5618 = vpop.f32.mrb[0].mxu0
      %v5619 = vadd.f32 0.0, %v5618
      %v5620 = vpop.f32.mrb[0].mxu0
      %v5621 = vpop.f32.mrb[0].mxu0
      %v5622 = vadd.f32 0.0, %v5621
      %v5623 = vpop.f32.mrb[0].mxu0
      %5624 = vmatprep.mubr.bf16.mxu0 0
      %5625 = vmatmul.mubr.bf16.gmra.mrb[0].mxu0 %v5128
      %v5626 = vpop.f32.mrb[0].mxu0
      %v5627 = vadd.f32 0.0, %v5626
      %v5628 = vpop.f32.mrb[0].mxu0
      %v5629 = vpop.f32.mrb[0].mxu0
      %v5630 = vadd.f32 0.0, %v5629
      %v5631 = vpop.f32.mrb[0].mxu0
      %5632 = vmatprep.mubr.bf16.mxu0 0
      %5633 = vmatmul.mubr.bf16.gmra.mrb[0].mxu0 %v5131
      %v5634 = vpop.f32.mrb[0].mxu0
      %v5635 = vadd.f32 0.0, %v5634
      %v5636 = vpop.f32.mrb[0].mxu0
      %v5637 = vpop.f32.mrb[0].mxu0
      %v5638 = vadd.f32 0.0, %v5637
      %v5639 = vpop.f32.mrb[0].mxu0
      %5640 = vmatprep.mubr.bf16.mxu0 0
      %5641 = vmatmul.mubr.bf16.gmra.mrb[0].mxu0 %v5134
      %v5642 = vpop.f32.mrb[0].mxu0
      %v5643 = vadd.f32 0.0, %v5642
      %v5644 = vpop.f32.mrb[0].mxu0
      %v5645 = vpop.f32.mrb[0].mxu0
      %v5646 = vadd.f32 0.0, %v5645
      %v5647 = vpop.f32.mrb[0].mxu0
      %5648 = vmatprep.mubr.bf16.mxu0 0
      %5649 = vmatmul.mubr.bf16.gmra.mrb[0].mxu0 %v5137
      %v5650 = vpop.f32.mrb[0].mxu0
      %v5651 = vadd.f32 0.0, %v5650
      %v5652 = vpop.f32.mrb[0].mxu0
      %v5653 = vpop.f32.mrb[0].mxu0
      %v5654 = vadd.f32 0.0, %v5653
      %v5655 = vpop.f32.mrb[0].mxu0
      %5656 = vmatprep.mubr.bf16.mxu0 0
      %5657 = vmatmul.mubr.bf16.gmra.mrb[0].mxu0 %v5140
      %v5658 = vpop.f32.mrb[0].mxu0
      %v5659 = vadd.f32 0.0, %v5658
      %v5660 = vpop.f32.mrb[0].mxu0
      %v5661 = vpop.f32.mrb[0].mxu0
      %v5662 = vadd.f32 0.0, %v5661
      %v5663 = vpop.f32.mrb[0].mxu0
      %5664 = vmatprep.mubr.bf16.mxu0 0
      %5665 = vmatmul.mubr.bf16.gmra.mrb[0].mxu0 %v5143
      %v5666 = vpop.f32.mrb[0].mxu0
      %v5667 = vadd.f32 0.0, %v5666
      %v5668 = vpop.f32.mrb[0].mxu0
      %v5669 = vpop.f32.mrb[0].mxu0
      %v5670 = vadd.f32 0.0, %v5669
      %v5671 = vpop.f32.mrb[0].mxu0
      %5672 = vmatprep.mubr.bf16.mxu0 0
      %5673 = vmatmul.mubr.bf16.gmra.mrb[0].mxu0 %v5146
      %v5674 = vpop.f32.mrb[0].mxu0
      %v5675 = vadd.f32 0.0, %v5674
      %v5676 = vpop.f32.mrb[0].mxu0
      %v5677 = vpop.f32.mrb[0].mxu0
      %v5678 = vadd.f32 0.0, %v5677
      %v5679 = vpop.f32.mrb[0].mxu0
      %5680 = vmatprep.mubr.bf16.mxu0 0
      %5681 = vmatmul.mubr.bf16.gmra.mrb[0].mxu0 %v5149
      %v5682 = vpop.f32.mrb[0].mxu0
      %v5683 = vadd.f32 0.0, %v5682
      %v5684 = vpop.f32.mrb[0].mxu0
      %v5685 = vpop.f32.mrb[0].mxu0
      %v5686 = vadd.f32 0.0, %v5685
      %v5687 = vpop.f32.mrb[0].mxu0
      %5688 = vmatprep.mubr.bf16.mxu0 0
      %5689 = vmatmul.mubr.bf16.gmra.mrb[0].mxu0 %v5152
      %v5690 = vpop.f32.mrb[0].mxu0
      %v5691 = vadd.f32 0.0, %v5690
      %v5692 = vpop.f32.mrb[0].mxu0
      %v5693 = vpop.f32.mrb[0].mxu0
      %v5694 = vadd.f32 0.0, %v5693
      %v5695 = vpop.f32.mrb[0].mxu0
      %5696 = vmatprep.mubr.bf16.mxu0 0
      %5697 = vmatmul.mubr.bf16.gmra.mrb[0].mxu0 %v5155
      %v5698 = vpop.f32.mrb[0].mxu0
      %v5699 = vadd.f32 0.0, %v5698
      %v5700 = vpop.f32.mrb[0].mxu0
      %v5701 = vpop.f32.mrb[0].mxu0
      %v5702 = vadd.f32 0.0, %v5701
      %v5703 = vpop.f32.mrb[0].mxu0
      %5704 = vdwg.mxu0
      %v5705 = vadd.f32 %v4705, %v5195
      %v5706 = vadd.f32 %v4706, %v5198
      %v5707 = vadd.f32 %v4707, %v5203
      %v5708 = vadd.f32 %v4708, %v5206
      %v5709 = vadd.f32 %v4709, %v5211
      %v5710 = vadd.f32 %v4710, %v5214
      %v5711 = vadd.f32 %v4711, %v5219
      %v5712 = vadd.f32 %v4712, %v5222
      %v5713 = vadd.f32 %v4713, %v5227
      %v5714 = vadd.f32 %v4714, %v5230
      %v5715 = vadd.f32 %v4715, %v5235
      %v5716 = vadd.f32 %v4716, %v5238
      %v5717 = vadd.f32 %v4717, %v5243
      %v5718 = vadd.f32 %v4718, %v5246
      %v5719 = vadd.f32 %v4719, %v5251
      %v5720 = vadd.f32 %v4720, %v5254
      %v5721 = vadd.f32 %v4721, %v5259
      %v5722 = vadd.f32 %v4722, %v5262
      %v5723 = vadd.f32 %v4723, %v5267
      %v5724 = vadd.f32 %v4724, %v5270
      %v5725 = vadd.f32 %v4725, %v5275
      %v5726 = vadd.f32 %v4726, %v5278
      %v5727 = vadd.f32 %v4727, %v5283
      %v5728 = vadd.f32 %v4728, %v5286
      %v5729 = vadd.f32 %v4729, %v5291
      %v5730 = vadd.f32 %v4730, %v5294
      %v5731 = vadd.f32 %v4731, %v5299
      %v5732 = vadd.f32 %v4732, %v5302
      %v5733 = vadd.f32 %v4733, %v5307
      %v5734 = vadd.f32 %v4734, %v5310
      %v5735 = vadd.f32 %v4735, %v5315
      %v5736 = vadd.f32 %v4736, %v5318
      %v5737 = vadd.f32 %v4737, %v5323
      %v5738 = vadd.f32 %v4738, %v5326
      %v5739 = vadd.f32 %v4739, %v5331
      %v5740 = vadd.f32 %v4740, %v5334
      %v5741 = vadd.f32 %v4741, %v5339
      %v5742 = vadd.f32 %v4742, %v5342
      %v5743 = vadd.f32 %v4743, %v5347
      %v5744 = vadd.f32 %v4744, %v5350
      %v5745 = vadd.f32 %v4745, %v5355
      %v5746 = vadd.f32 %v4746, %v5358
      %v5747 = vadd.f32 %v4747, %v5363
      %v5748 = vadd.f32 %v4748, %v5366
      %v5749 = vadd.f32 %v4749, %v5371
      %v5750 = vadd.f32 %v4750, %v5374
      %v5751 = vadd.f32 %v4751, %v5379
      %v5752 = vadd.f32 %v4752, %v5382
      %v5753 = vadd.f32 %v4753, %v5387
      %v5754 = vadd.f32 %v4754, %v5390
      %v5755 = vadd.f32 %v4755, %v5395
      %v5756 = vadd.f32 %v4756, %v5398
      %v5757 = vadd.f32 %v4757, %v5403
      %v5758 = vadd.f32 %v4758, %v5406
      %v5759 = vadd.f32 %v4759, %v5411
      %v5760 = vadd.f32 %v4760, %v5414
      %v5761 = vadd.f32 %v4761, %v5419
      %v5762 = vadd.f32 %v4762, %v5422
      %v5763 = vadd.f32 %v4763, %v5427
      %v5764 = vadd.f32 %v4764, %v5430
      %v5765 = vadd.f32 %v4765, %v5435
      %v5766 = vadd.f32 %v4766, %v5438
      %v5767 = vadd.f32 %v4767, %v5443
      %v5768 = vadd.f32 %v4768, %v5446
      %v5769 = vadd.f32 %v4769, %v5451
      %v5770 = vadd.f32 %v4770, %v5454
      %v5771 = vadd.f32 %v4771, %v5459
      %v5772 = vadd.f32 %v4772, %v5462
      %v5773 = vadd.f32 %v4773, %v5467
      %v5774 = vadd.f32 %v4774, %v5470
      %v5775 = vadd.f32 %v4775, %v5475
      %v5776 = vadd.f32 %v4776, %v5478
      %v5777 = vadd.f32 %v4777, %v5483
      %v5778 = vadd.f32 %v4778, %v5486
      %v5779 = vadd.f32 %v4779, %v5491
      %v5780 = vadd.f32 %v4780, %v5494
      %v5781 = vadd.f32 %v4781, %v5499
      %v5782 = vadd.f32 %v4782, %v5502
      %v5783 = vadd.f32 %v4783, %v5507
      %v5784 = vadd.f32 %v4784, %v5510
      %v5785 = vadd.f32 %v4785, %v5515
      %v5786 = vadd.f32 %v4786, %v5518
      %v5787 = vadd.f32 %v4787, %v5523
      %v5788 = vadd.f32 %v4788, %v5526
      %v5789 = vadd.f32 %v4789, %v5531
      %v5790 = vadd.f32 %v4790, %v5534
      %v5791 = vadd.f32 %v4791, %v5539
      %v5792 = vadd.f32 %v4792, %v5542
      %v5793 = vadd.f32 %v4793, %v5547
      %v5794 = vadd.f32 %v4794, %v5550
      %v5795 = vadd.f32 %v4795, %v5555
      %v5796 = vadd.f32 %v4796, %v5558
      %v5797 = vadd.f32 %v4797, %v5563
      %v5798 = vadd.f32 %v4798, %v5566
      %v5799 = vadd.f32 %v4799, %v5571
      %v5800 = vadd.f32 %v4800, %v5574
      %v5801 = vadd.f32 %v4801, %v5579
      %v5802 = vadd.f32 %v4802, %v5582
      %v5803 = vadd.f32 %v4803, %v5587
      %v5804 = vadd.f32 %v4804, %v5590
      %v5805 = vadd.f32 %v4805, %v5595
      %v5806 = vadd.f32 %v4806, %v5598
      %v5807 = vadd.f32 %v4807, %v5603
      %v5808 = vadd.f32 %v4808, %v5606
      %v5809 = vadd.f32 %v4809, %v5611
      %v5810 = vadd.f32 %v4810, %v5614
      %v5811 = vadd.f32 %v4811, %v5619
      %v5812 = vadd.f32 %v4812, %v5622
      %v5813 = vadd.f32 %v4813, %v5627
      %v5814 = vadd.f32 %v4814, %v5630
      %v5815 = vadd.f32 %v4815, %v5635
      %v5816 = vadd.f32 %v4816, %v5638
      %v5817 = vadd.f32 %v4817, %v5643
      %v5818 = vadd.f32 %v4818, %v5646
      %v5819 = vadd.f32 %v4819, %v5651
      %v5820 = vadd.f32 %v4820, %v5654
      %v5821 = vadd.f32 %v4821, %v5659
      %v5822 = vadd.f32 %v4822, %v5662
      %v5823 = vadd.f32 %v4823, %v5667
      %v5824 = vadd.f32 %v4824, %v5670
      %v5825 = vadd.f32 %v4825, %v5675
      %v5826 = vadd.f32 %v4826, %v5678
      %v5827 = vadd.f32 %v4827, %v5683
      %v5828 = vadd.f32 %v4828, %v5686
      %v5829 = vadd.f32 %v4829, %v5691
      %v5830 = vadd.f32 %v4830, %v5694
      %v5831 = vadd.f32 %v4831, %v5699
      %v5832 = vadd.f32 %v4832, %v5702
      %s5833 = scalar_lea.vmem %s2, 10
      %v5834 = vld [vmem:[%s5833] sm:$0x3]
      %vm5835 = vsmask.f32 5376
      %v5836 = vrot.slane %v768, 2
      %v5837 = vrot.slane %v770, 3
      %v5838 = vor.u32 %v5836, %v5837
      %v5839 = vrot.slane %v779, 2
      %v5840 = vrot.slane %v775, 3
      %v5841 = vor.u32 %v5839, %v5840
      %v5842 = vsel %vm5835, %v5838, %v5841
      %v5843 = vrot.slane %v787, 2
      %v5844 = vrot.slane %v783, 3
      %v5845 = vor.u32 %v5843, %v5844
      %v5846 = vsel %vm5835, %v5841, %v5845
      %v5847 = vrot.slane %v795, 2
      %v5848 = vrot.slane %v791, 3
      %v5849 = vor.u32 %v5847, %v5848
      %v5850 = vsel %vm5835, %v5845, %v5849
      %v5851 = vrot.slane %v803, 2
      %v5852 = vrot.slane %v799, 3
      %v5853 = vor.u32 %v5851, %v5852
      %v5854 = vsel %vm5835, %v5849, %v5853
      %v5855 = vrot.slane %v811, 2
      %v5856 = vrot.slane %v807, 3
      %v5857 = vor.u32 %v5855, %v5856
      %v5858 = vsel %vm5835, %v5853, %v5857
      %v5859 = vrot.slane %v819, 2
      %v5860 = vrot.slane %v815, 3
      %v5861 = vor.u32 %v5859, %v5860
      %v5862 = vsel %vm5835, %v5857, %v5861
      %v5863 = vrot.slane %v827, 2
      %v5864 = vrot.slane %v823, 3
      %v5865 = vor.u32 %v5863, %v5864
      %v5866 = vsel %vm5835, %v5861, %v5865
      %v5867 = vrot.slane %v835, 2
      %v5868 = vrot.slane %v831, 3
      %v5869 = vor.u32 %v5867, %v5868
      %v5870 = vsel %vm5835, %v5865, %v5869
      %v5871 = vrot.slane %v843, 2
      %v5872 = vrot.slane %v839, 3
      %v5873 = vor.u32 %v5871, %v5872
      %v5874 = vsel %vm5835, %v5869, %v5873
      %v5875 = vrot.slane %v851, 2
      %v5876 = vrot.slane %v847, 3
      %v5877 = vor.u32 %v5875, %v5876
      %v5878 = vsel %vm5835, %v5873, %v5877
      %v5879 = vrot.slane %v859, 2
      %v5880 = vrot.slane %v855, 3
      %v5881 = vor.u32 %v5879, %v5880
      %v5882 = vsel %vm5835, %v5877, %v5881
      %v5883 = vrot.slane %v867, 2
      %v5884 = vrot.slane %v863, 3
      %v5885 = vor.u32 %v5883, %v5884
      %v5886 = vsel %vm5835, %v5881, %v5885
      %v5887 = vrot.slane %v875, 2
      %v5888 = vrot.slane %v871, 3
      %v5889 = vor.u32 %v5887, %v5888
      %v5890 = vsel %vm5835, %v5885, %v5889
      %v5891 = vrot.slane %v883, 2
      %v5892 = vrot.slane %v879, 3
      %v5893 = vor.u32 %v5891, %v5892
      %v5894 = vsel %vm5835, %v5889, %v5893
      %v5895 = vrot.slane %v891, 2
      %v5896 = vrot.slane %v887, 3
      %v5897 = vor.u32 %v5895, %v5896
      %v5898 = vsel %vm5835, %v5893, %v5897
      %v5899 = vrot.slane %v899, 2
      %v5900 = vrot.slane %v895, 3
      %v5901 = vor.u32 %v5899, %v5900
      %v5902 = vsel %vm5835, %v5897, %v5901
      %v5903 = vrot.slane %v907, 2
      %v5904 = vrot.slane %v903, 3
      %v5905 = vor.u32 %v5903, %v5904
      %v5906 = vsel %vm5835, %v5901, %v5905
      %v5907 = vrot.slane %v915, 2
      %v5908 = vrot.slane %v911, 3
      %v5909 = vor.u32 %v5907, %v5908
      %v5910 = vsel %vm5835, %v5905, %v5909
      %v5911 = vrot.slane %v923, 2
      %v5912 = vrot.slane %v919, 3
      %v5913 = vor.u32 %v5911, %v5912
      %v5914 = vsel %vm5835, %v5909, %v5913
      %v5915 = vrot.slane %v931, 2
      %v5916 = vrot.slane %v927, 3
      %v5917 = vor.u32 %v5915, %v5916
      %v5918 = vsel %vm5835, %v5913, %v5917
      %v5919 = vrot.slane %v939, 2
      %v5920 = vrot.slane %v935, 3
      %v5921 = vor.u32 %v5919, %v5920
      %v5922 = vsel %vm5835, %v5917, %v5921
      %v5923 = vrot.slane %v947, 2
      %v5924 = vrot.slane %v943, 3
      %v5925 = vor.u32 %v5923, %v5924
      %v5926 = vsel %vm5835, %v5921, %v5925
      %v5927 = vrot.slane %v955, 2
      %v5928 = vrot.slane %v951, 3
      %v5929 = vor.u32 %v5927, %v5928
      %v5930 = vsel %vm5835, %v5925, %v5929
      %v5931 = vrot.slane %v963, 2
      %v5932 = vrot.slane %v959, 3
      %v5933 = vor.u32 %v5931, %v5932
      %v5934 = vsel %vm5835, %v5929, %v5933
      %v5935 = vrot.slane %v971, 2
      %v5936 = vrot.slane %v967, 3
      %v5937 = vor.u32 %v5935, %v5936
      %v5938 = vsel %vm5835, %v5933, %v5937
      %v5939 = vrot.slane %v979, 2
      %v5940 = vrot.slane %v975, 3
      %v5941 = vor.u32 %v5939, %v5940
      %v5942 = vsel %vm5835, %v5937, %v5941
      %v5943 = vrot.slane %v987, 2
      %v5944 = vrot.slane %v983, 3
      %v5945 = vor.u32 %v5943, %v5944
      %v5946 = vsel %vm5835, %v5941, %v5945
      %v5947 = vrot.slane %v995, 2
      %v5948 = vrot.slane %v991, 3
      %v5949 = vor.u32 %v5947, %v5948
      %v5950 = vsel %vm5835, %v5945, %v5949
      %v5951 = vrot.slane %v1003, 2
      %v5952 = vrot.slane %v999, 3
      %v5953 = vor.u32 %v5951, %v5952
      %v5954 = vsel %vm5835, %v5949, %v5953
      %v5955 = vrot.slane %v1011, 2
      %v5956 = vrot.slane %v1007, 3
      %v5957 = vor.u32 %v5955, %v5956
      %v5958 = vsel %vm5835, %v5953, %v5957
      %v5959 = vrot.slane %v1019, 2
      %v5960 = vrot.slane %v1015, 3
      %v5961 = vor.u32 %v5959, %v5960
      %v5962 = vsel %vm5835, %v5957, %v5961
      %v5963 = vrot.slane %v1027, 2
      %v5964 = vrot.slane %v1023, 3
      %v5965 = vor.u32 %v5963, %v5964
      %v5966 = vsel %vm5835, %v5961, %v5965
      %v5967 = vrot.slane %v1035, 2
      %v5968 = vrot.slane %v1031, 3
      %v5969 = vor.u32 %v5967, %v5968
      %v5970 = vsel %vm5835, %v5965, %v5969
      %v5971 = vrot.slane %v1043, 2
      %v5972 = vrot.slane %v1039, 3
      %v5973 = vor.u32 %v5971, %v5972
      %v5974 = vsel %vm5835, %v5969, %v5973
      %v5975 = vrot.slane %v1051, 2
      %v5976 = vrot.slane %v1047, 3
      %v5977 = vor.u32 %v5975, %v5976
      %v5978 = vsel %vm5835, %v5973, %v5977
      %v5979 = vrot.slane %v1059, 2
      %v5980 = vrot.slane %v1055, 3
      %v5981 = vor.u32 %v5979, %v5980
      %v5982 = vsel %vm5835, %v5977, %v5981
      %v5983 = vrot.slane %v1067, 2
      %v5984 = vrot.slane %v1063, 3
      %v5985 = vor.u32 %v5983, %v5984
      %v5986 = vsel %vm5835, %v5981, %v5985
      %v5987 = vrot.slane %v1075, 2
      %v5988 = vrot.slane %v1071, 3
      %v5989 = vor.u32 %v5987, %v5988
      %v5990 = vsel %vm5835, %v5985, %v5989
      %v5991 = vrot.slane %v1083, 2
      %v5992 = vrot.slane %v1079, 3
      %v5993 = vor.u32 %v5991, %v5992
      %v5994 = vsel %vm5835, %v5989, %v5993
      %v5995 = vrot.slane %v1091, 2
      %v5996 = vrot.slane %v1087, 3
      %v5997 = vor.u32 %v5995, %v5996
      %v5998 = vsel %vm5835, %v5993, %v5997
      %v5999 = vrot.slane %v1099, 2
      %v6000 = vrot.slane %v1095, 3
      %v6001 = vor.u32 %v5999, %v6000
      %v6002 = vsel %vm5835, %v5997, %v6001
      %v6003 = vrot.slane %v1107, 2
      %v6004 = vrot.slane %v1103, 3
      %v6005 = vor.u32 %v6003, %v6004
      %v6006 = vsel %vm5835, %v6001, %v6005
      %v6007 = vrot.slane %v1115, 2
      %v6008 = vrot.slane %v1111, 3
      %v6009 = vor.u32 %v6007, %v6008
      %v6010 = vsel %vm5835, %v6005, %v6009
      %v6011 = vrot.slane %v1123, 2
      %v6012 = vrot.slane %v1119, 3
      %v6013 = vor.u32 %v6011, %v6012
      %v6014 = vsel %vm5835, %v6009, %v6013
      %v6015 = vrot.slane %v1131, 2
      %v6016 = vrot.slane %v1127, 3
      %v6017 = vor.u32 %v6015, %v6016
      %v6018 = vsel %vm5835, %v6013, %v6017
      %v6019 = vrot.slane %v1139, 2
      %v6020 = vrot.slane %v1135, 3
      %v6021 = vor.u32 %v6019, %v6020
      %v6022 = vsel %vm5835, %v6017, %v6021
      %v6023 = vrot.slane %v1147, 2
      %v6024 = vrot.slane %v1143, 3
      %v6025 = vor.u32 %v6023, %v6024
      %v6026 = vsel %vm5835, %v6021, %v6025
      %v6027 = vrot.slane %v1155, 2
      %v6028 = vrot.slane %v1151, 3
      %v6029 = vor.u32 %v6027, %v6028
      %v6030 = vsel %vm5835, %v6025, %v6029
      %v6031 = vrot.slane %v1163, 2
      %v6032 = vrot.slane %v1159, 3
      %v6033 = vor.u32 %v6031, %v6032
      %v6034 = vsel %vm5835, %v6029, %v6033
      %v6035 = vrot.slane %v1171, 2
      %v6036 = vrot.slane %v1167, 3
      %v6037 = vor.u32 %v6035, %v6036
      %v6038 = vsel %vm5835, %v6033, %v6037
      %v6039 = vrot.slane %v1179, 2
      %v6040 = vrot.slane %v1175, 3
      %v6041 = vor.u32 %v6039, %v6040
      %v6042 = vsel %vm5835, %v6037, %v6041
      %v6043 = vrot.slane %v1187, 2
      %v6044 = vrot.slane %v1183, 3
      %v6045 = vor.u32 %v6043, %v6044
      %v6046 = vsel %vm5835, %v6041, %v6045
      %v6047 = vrot.slane %v1195, 2
      %v6048 = vrot.slane %v1191, 3
      %v6049 = vor.u32 %v6047, %v6048
      %v6050 = vsel %vm5835, %v6045, %v6049
      %v6051 = vrot.slane %v1203, 2
      %v6052 = vrot.slane %v1199, 3
      %v6053 = vor.u32 %v6051, %v6052
      %v6054 = vsel %vm5835, %v6049, %v6053
      %v6055 = vrot.slane %v1211, 2
      %v6056 = vrot.slane %v1207, 3
      %v6057 = vor.u32 %v6055, %v6056
      %v6058 = vsel %vm5835, %v6053, %v6057
      %v6059 = vrot.slane %v1219, 2
      %v6060 = vrot.slane %v1215, 3
      %v6061 = vor.u32 %v6059, %v6060
      %v6062 = vsel %vm5835, %v6057, %v6061
      %v6063 = vrot.slane %v1227, 2
      %v6064 = vrot.slane %v1223, 3
      %v6065 = vor.u32 %v6063, %v6064
      %v6066 = vsel %vm5835, %v6061, %v6065
      %v6067 = vrot.slane %v1235, 2
      %v6068 = vrot.slane %v1231, 3
      %v6069 = vor.u32 %v6067, %v6068
      %v6070 = vsel %vm5835, %v6065, %v6069
      %v6071 = vrot.slane %v1243, 2
      %v6072 = vrot.slane %v1239, 3
      %v6073 = vor.u32 %v6071, %v6072
      %v6074 = vsel %vm5835, %v6069, %v6073
      %v6075 = vrot.slane %v1251, 2
      %v6076 = vrot.slane %v1247, 3
      %v6077 = vor.u32 %v6075, %v6076
      %v6078 = vsel %vm5835, %v6073, %v6077
      %v6079 = vrot.slane %v1259, 2
      %v6080 = vrot.slane %v1255, 3
      %v6081 = vor.u32 %v6079, %v6080
      %v6082 = vsel %vm5835, %v6077, %v6081
      %v6083 = vrot.slane %v1267, 2
      %v6084 = vrot.slane %v1263, 3
      %v6085 = vor.u32 %v6083, %v6084
      %v6086 = vsel %vm5835, %v6081, %v6085
      %v6087 = vrot.slane %v1275, 2
      %v6088 = vrot.slane %v1271, 3
      %v6089 = vor.u32 %v6087, %v6088
      %v6090 = vsel %vm5835, %v6085, %v6089
      %v6091 = vrot.slane %v3959, 2
      %v6092 = vrot.slane %v1279, 3
      %v6093 = vor.u32 %v6091, %v6092
      %v6094 = vsel %vm5835, %v6089, %v6093
      %v6096 = vsel %vm1283, %v5842, 0
      %v6099 = vsel %vm1283, %v5846, 0
      %v6102 = vsel %vm1283, %v5850, 0
      %v6105 = vsel %vm1283, %v5854, 0
      %v6108 = vsel %vm1283, %v5858, 0
      %v6111 = vsel %vm1283, %v5862, 0
      %v6114 = vsel %vm1283, %v5866, 0
      %v6117 = vsel %vm1283, %v5870, 0
      %v6120 = vsel %vm1283, %v5874, 0
      %v6123 = vsel %vm1283, %v5878, 0
      %v6126 = vsel %vm1283, %v5882, 0
      %v6129 = vsel %vm1283, %v5886, 0
      %v6132 = vsel %vm1283, %v5890, 0
      %v6135 = vsel %vm1283, %v5894, 0
      %v6138 = vsel %vm1283, %v5898, 0
      %v6141 = vsel %vm1283, %v5902, 0
      %v6144 = vsel %vm1283, %v5906, 0
      %v6147 = vsel %vm1283, %v5910, 0
      %v6150 = vsel %vm1283, %v5914, 0
      %v6153 = vsel %vm1283, %v5918, 0
      %v6156 = vsel %vm1283, %v5922, 0
      %v6159 = vsel %vm1283, %v5926, 0
      %v6162 = vsel %vm1283, %v5930, 0
      %v6165 = vsel %vm1283, %v5934, 0
      %v6168 = vsel %vm1283, %v5938, 0
      %v6171 = vsel %vm1283, %v5942, 0
      %v6174 = vsel %vm1283, %v5946, 0
      %v6177 = vsel %vm1283, %v5950, 0
      %v6180 = vsel %vm1283, %v5954, 0
      %v6183 = vsel %vm1283, %v5958, 0
      %v6186 = vsel %vm1283, %v5962, 0
      %v6189 = vsel %vm1283, %v5966, 0
      %v6192 = vsel %vm1283, %v5970, 0
      %v6195 = vsel %vm1283, %v5974, 0
      %v6198 = vsel %vm1283, %v5978, 0
      %v6201 = vsel %vm1283, %v5982, 0
      %v6204 = vsel %vm1283, %v5986, 0
      %v6207 = vsel %vm1283, %v5990, 0
      %v6210 = vsel %vm1283, %v5994, 0
      %v6213 = vsel %vm1283, %v5998, 0
      %v6216 = vsel %vm1283, %v6002, 0
      %v6219 = vsel %vm1283, %v6006, 0
      %v6222 = vsel %vm1283, %v6010, 0
      %v6225 = vsel %vm1283, %v6014, 0
      %v6228 = vsel %vm1283, %v6018, 0
      %v6231 = vsel %vm1283, %v6022, 0
      %v6234 = vsel %vm1283, %v6026, 0
      %v6237 = vsel %vm1283, %v6030, 0
      %v6240 = vsel %vm1283, %v6034, 0
      %v6243 = vsel %vm1283, %v6038, 0
      %v6246 = vsel %vm1283, %v6042, 0
      %v6249 = vsel %vm1283, %v6046, 0
      %v6252 = vsel %vm1283, %v6050, 0
      %v6255 = vsel %vm1283, %v6054, 0
      %v6258 = vsel %vm1283, %v6058, 0
      %v6261 = vsel %vm1283, %v6062, 0
      %v6264 = vsel %vm1283, %v6066, 0
      %v6267 = vsel %vm1283, %v6070, 0
      %v6270 = vsel %vm1283, %v6074, 0
      %v6273 = vsel %vm1283, %v6078, 0
      %v6276 = vsel %vm1283, %v6082, 0
      %v6279 = vsel %vm1283, %v6086, 0
      %v6282 = vsel %vm1283, %v6090, 0
      %v6285 = vsel %vm1283, %v6094, 0
      %v6288 = vsel %vm1476, %v5834, 0
      %6290 = vmatprep.subr.bf16.mxu0 0
      %6291 = vmatpush1.bf16.msra.mxu0 %v6288
      %6292 = vmatprep.subr.bf16.mxu0 0
      %6293 = vmatpush1.bf16.msra.mxu0 0
      %6294 = vmatprep.subr.bf16.mxu0 0
      %6295 = vmatpush1.bf16.msra.mxu0 0
      %6296 = vmatprep.subr.bf16.mxu0 0
      %6297 = vmatpush1.bf16.msra.mxu0 0
      %6298 = vmatprep.subr.bf16.mxu0 0
      %6299 = vmatpush1.bf16.msra.mxu0 0
      %6300 = vmatprep.subr.bf16.mxu0 0
      %6301 = vmatpush1.bf16.msra.mxu0 0
      %6302 = vmatprep.subr.bf16.mxu0 0
      %6303 = vmatpush1.bf16.msra.mxu0 0
      %6304 = vmatprep.subr.bf16.mxu0 0
      %6305 = vmatpush1.bf16.msra.mxu0 0
      %6306 = vmatprep.subr.bf16.mxu0 0
      %6307 = vmatpush1.bf16.msra.mxu0 0
      %6308 = vmatprep.subr.bf16.mxu0 0
      %6309 = vmatpush1.bf16.msra.mxu0 0
      %6310 = vmatprep.subr.bf16.mxu0 0
      %6311 = vmatpush1.bf16.msra.mxu0 0
      %6312 = vmatprep.subr.bf16.mxu0 0
      %6313 = vmatpush1.bf16.msra.mxu0 0
      %6314 = vmatprep.subr.bf16.mxu0 0
      %6315 = vmatpush1.bf16.msra.mxu0 0
      %6316 = vmatprep.subr.bf16.mxu0 0
      %6317 = vmatpush1.bf16.msra.mxu0 0
      %6318 = vmatprep.subr.bf16.mxu0 0
      %6319 = vmatpush1.bf16.msra.mxu0 0
      %6320 = vmatprep.subr.bf16.mxu0 0
      %6321 = vmatpush1.bf16.msra.mxu0 0
      %6322 = vmatprep.mubr.bf16.mxu0 0
      %6323 = vmatmul.mubr.bf16.gmra.mrb[0].mxu0 %v6096
      %v6324 = vpop.f32.mrb[0].mxu0
      %v6325 = vadd.f32 0.0, %v6324
      %v6326 = vpop.f32.mrb[0].mxu0
      %v6327 = vpop.f32.mrb[0].mxu0
      %v6328 = vadd.f32 0.0, %v6327
      %v6329 = vpop.f32.mrb[0].mxu0
      %6330 = vmatprep.mubr.bf16.mxu0 0
      %6331 = vmatmul.mubr.bf16.gmra.mrb[0].mxu0 %v6099
      %v6332 = vpop.f32.mrb[0].mxu0
      %v6333 = vadd.f32 0.0, %v6332
      %v6334 = vpop.f32.mrb[0].mxu0
      %v6335 = vpop.f32.mrb[0].mxu0
      %v6336 = vadd.f32 0.0, %v6335
      %v6337 = vpop.f32.mrb[0].mxu0
      %6338 = vmatprep.mubr.bf16.mxu0 0
      %6339 = vmatmul.mubr.bf16.gmra.mrb[0].mxu0 %v6102
      %v6340 = vpop.f32.mrb[0].mxu0
      %v6341 = vadd.f32 0.0, %v6340
      %v6342 = vpop.f32.mrb[0].mxu0
      %v6343 = vpop.f32.mrb[0].mxu0
      %v6344 = vadd.f32 0.0, %v6343
      %v6345 = vpop.f32.mrb[0].mxu0
      %6346 = vmatprep.mubr.bf16.mxu0 0
      %6347 = vmatmul.mubr.bf16.gmra.mrb[0].mxu0 %v6105
      %v6348 = vpop.f32.mrb[0].mxu0
      %v6349 = vadd.f32 0.0, %v6348
      %v6350 = vpop.f32.mrb[0].mxu0
      %v6351 = vpop.f32.mrb[0].mxu0
      %v6352 = vadd.f32 0.0, %v6351
      %v6353 = vpop.f32.mrb[0].mxu0
      %6354 = vmatprep.mubr.bf16.mxu0 0
      %6355 = vmatmul.mubr.bf16.gmra.mrb[0].mxu0 %v6108
      %v6356 = vpop.f32.mrb[0].mxu0
      %v6357 = vadd.f32 0.0, %v6356
      %v6358 = vpop.f32.mrb[0].mxu0
      %v6359 = vpop.f32.mrb[0].mxu0
      %v6360 = vadd.f32 0.0, %v6359
      %v6361 = vpop.f32.mrb[0].mxu0
      %6362 = vmatprep.mubr.bf16.mxu0 0
      %6363 = vmatmul.mubr.bf16.gmra.mrb[0].mxu0 %v6111
      %v6364 = vpop.f32.mrb[0].mxu0
      %v6365 = vadd.f32 0.0, %v6364
      %v6366 = vpop.f32.mrb[0].mxu0
      %v6367 = vpop.f32.mrb[0].mxu0
      %v6368 = vadd.f32 0.0, %v6367
      %v6369 = vpop.f32.mrb[0].mxu0
      %6370 = vmatprep.mubr.bf16.mxu0 0
      %6371 = vmatmul.mubr.bf16.gmra.mrb[0].mxu0 %v6114
      %v6372 = vpop.f32.mrb[0].mxu0
      %v6373 = vadd.f32 0.0, %v6372
      %v6374 = vpop.f32.mrb[0].mxu0
      %v6375 = vpop.f32.mrb[0].mxu0
      %v6376 = vadd.f32 0.0, %v6375
      %v6377 = vpop.f32.mrb[0].mxu0
      %6378 = vmatprep.mubr.bf16.mxu0 0
      %6379 = vmatmul.mubr.bf16.gmra.mrb[0].mxu0 %v6117
      %v6380 = vpop.f32.mrb[0].mxu0
      %v6381 = vadd.f32 0.0, %v6380
      %v6382 = vpop.f32.mrb[0].mxu0
      %v6383 = vpop.f32.mrb[0].mxu0
      %v6384 = vadd.f32 0.0, %v6383
      %v6385 = vpop.f32.mrb[0].mxu0
      %6386 = vmatprep.mubr.bf16.mxu0 0
      %6387 = vmatmul.mubr.bf16.gmra.mrb[0].mxu0 %v6120
      %v6388 = vpop.f32.mrb[0].mxu0
      %v6389 = vadd.f32 0.0, %v6388
      %v6390 = vpop.f32.mrb[0].mxu0
      %v6391 = vpop.f32.mrb[0].mxu0
      %v6392 = vadd.f32 0.0, %v6391
      %v6393 = vpop.f32.mrb[0].mxu0
      %6394 = vmatprep.mubr.bf16.mxu0 0
      %6395 = vmatmul.mubr.bf16.gmra.mrb[0].mxu0 %v6123
      %v6396 = vpop.f32.mrb[0].mxu0
      %v6397 = vadd.f32 0.0, %v6396
      %v6398 = vpop.f32.mrb[0].mxu0
      %v6399 = vpop.f32.mrb[0].mxu0
      %v6400 = vadd.f32 0.0, %v6399
      %v6401 = vpop.f32.mrb[0].mxu0
      %6402 = vmatprep.mubr.bf16.mxu0 0
      %6403 = vmatmul.mubr.bf16.gmra.mrb[0].mxu0 %v6126
      %v6404 = vpop.f32.mrb[0].mxu0
      %v6405 = vadd.f32 0.0, %v6404
      %v6406 = vpop.f32.mrb[0].mxu0
      %v6407 = vpop.f32.mrb[0].mxu0
      %v6408 = vadd.f32 0.0, %v6407
      %v6409 = vpop.f32.mrb[0].mxu0
      %6410 = vmatprep.mubr.bf16.mxu0 0
      %6411 = vmatmul.mubr.bf16.gmra.mrb[0].mxu0 %v6129
      %v6412 = vpop.f32.mrb[0].mxu0
      %v6413 = vadd.f32 0.0, %v6412
      %v6414 = vpop.f32.mrb[0].mxu0
      %v6415 = vpop.f32.mrb[0].mxu0
      %v6416 = vadd.f32 0.0, %v6415
      %v6417 = vpop.f32.mrb[0].mxu0
      %6418 = vmatprep.mubr.bf16.mxu0 0
      %6419 = vmatmul.mubr.bf16.gmra.mrb[0].mxu0 %v6132
      %v6420 = vpop.f32.mrb[0].mxu0
      %v6421 = vadd.f32 0.0, %v6420
      %v6422 = vpop.f32.mrb[0].mxu0
      %v6423 = vpop.f32.mrb[0].mxu0
      %v6424 = vadd.f32 0.0, %v6423
      %v6425 = vpop.f32.mrb[0].mxu0
      %6426 = vmatprep.mubr.bf16.mxu0 0
      %6427 = vmatmul.mubr.bf16.gmra.mrb[0].mxu0 %v6135
      %v6428 = vpop.f32.mrb[0].mxu0
      %v6429 = vadd.f32 0.0, %v6428
      %v6430 = vpop.f32.mrb[0].mxu0
      %v6431 = vpop.f32.mrb[0].mxu0
      %v6432 = vadd.f32 0.0, %v6431
      %v6433 = vpop.f32.mrb[0].mxu0
      %6434 = vmatprep.mubr.bf16.mxu0 0
      %6435 = vmatmul.mubr.bf16.gmra.mrb[0].mxu0 %v6138
      %v6436 = vpop.f32.mrb[0].mxu0
      %v6437 = vadd.f32 0.0, %v6436
      %v6438 = vpop.f32.mrb[0].mxu0
      %v6439 = vpop.f32.mrb[0].mxu0
      %v6440 = vadd.f32 0.0, %v6439
      %v6441 = vpop.f32.mrb[0].mxu0
      %6442 = vmatprep.mubr.bf16.mxu0 0
      %6443 = vmatmul.mubr.bf16.gmra.mrb[0].mxu0 %v6141
      %v6444 = vpop.f32.mrb[0].mxu0
      %v6445 = vadd.f32 0.0, %v6444
      %v6446 = vpop.f32.mrb[0].mxu0
      %v6447 = vpop.f32.mrb[0].mxu0
      %v6448 = vadd.f32 0.0, %v6447
      %v6449 = vpop.f32.mrb[0].mxu0
      %6450 = vmatprep.mubr.bf16.mxu0 0
      %6451 = vmatmul.mubr.bf16.gmra.mrb[0].mxu0 %v6144
      %v6452 = vpop.f32.mrb[0].mxu0
      %v6453 = vadd.f32 0.0, %v6452
      %v6454 = vpop.f32.mrb[0].mxu0
      %v6455 = vpop.f32.mrb[0].mxu0
      %v6456 = vadd.f32 0.0, %v6455
      %v6457 = vpop.f32.mrb[0].mxu0
      %6458 = vmatprep.mubr.bf16.mxu0 0
      %6459 = vmatmul.mubr.bf16.gmra.mrb[0].mxu0 %v6147
      %v6460 = vpop.f32.mrb[0].mxu0
      %v6461 = vadd.f32 0.0, %v6460
      %v6462 = vpop.f32.mrb[0].mxu0
      %v6463 = vpop.f32.mrb[0].mxu0
      %v6464 = vadd.f32 0.0, %v6463
      %v6465 = vpop.f32.mrb[0].mxu0
      %6466 = vmatprep.mubr.bf16.mxu0 0
      %6467 = vmatmul.mubr.bf16.gmra.mrb[0].mxu0 %v6150
      %v6468 = vpop.f32.mrb[0].mxu0
      %v6469 = vadd.f32 0.0, %v6468
      %v6470 = vpop.f32.mrb[0].mxu0
      %v6471 = vpop.f32.mrb[0].mxu0
      %v6472 = vadd.f32 0.0, %v6471
      %v6473 = vpop.f32.mrb[0].mxu0
      %6474 = vmatprep.mubr.bf16.mxu0 0
      %6475 = vmatmul.mubr.bf16.gmra.mrb[0].mxu0 %v6153
      %v6476 = vpop.f32.mrb[0].mxu0
      %v6477 = vadd.f32 0.0, %v6476
      %v6478 = vpop.f32.mrb[0].mxu0
      %v6479 = vpop.f32.mrb[0].mxu0
      %v6480 = vadd.f32 0.0, %v6479
      %v6481 = vpop.f32.mrb[0].mxu0
      %6482 = vmatprep.mubr.bf16.mxu0 0
      %6483 = vmatmul.mubr.bf16.gmra.mrb[0].mxu0 %v6156
      %v6484 = vpop.f32.mrb[0].mxu0
      %v6485 = vadd.f32 0.0, %v6484
      %v6486 = vpop.f32.mrb[0].mxu0
      %v6487 = vpop.f32.mrb[0].mxu0
      %v6488 = vadd.f32 0.0, %v6487
      %v6489 = vpop.f32.mrb[0].mxu0
      %6490 = vmatprep.mubr.bf16.mxu0 0
      %6491 = vmatmul.mubr.bf16.gmra.mrb[0].mxu0 %v6159
      %v6492 = vpop.f32.mrb[0].mxu0
      %v6493 = vadd.f32 0.0, %v6492
      %v6494 = vpop.f32.mrb[0].mxu0
      %v6495 = vpop.f32.mrb[0].mxu0
      %v6496 = vadd.f32 0.0, %v6495
      %v6497 = vpop.f32.mrb[0].mxu0
      %6498 = vmatprep.mubr.bf16.mxu0 0
      %6499 = vmatmul.mubr.bf16.gmra.mrb[0].mxu0 %v6162
      %v6500 = vpop.f32.mrb[0].mxu0
      %v6501 = vadd.f32 0.0, %v6500
      %v6502 = vpop.f32.mrb[0].mxu0
      %v6503 = vpop.f32.mrb[0].mxu0
      %v6504 = vadd.f32 0.0, %v6503
      %v6505 = vpop.f32.mrb[0].mxu0
      %6506 = vmatprep.mubr.bf16.mxu0 0
      %6507 = vmatmul.mubr.bf16.gmra.mrb[0].mxu0 %v6165
      %v6508 = vpop.f32.mrb[0].mxu0
      %v6509 = vadd.f32 0.0, %v6508
      %v6510 = vpop.f32.mrb[0].mxu0
      %v6511 = vpop.f32.mrb[0].mxu0
      %v6512 = vadd.f32 0.0, %v6511
      %v6513 = vpop.f32.mrb[0].mxu0
      %6514 = vmatprep.mubr.bf16.mxu0 0
      %6515 = vmatmul.mubr.bf16.gmra.mrb[0].mxu0 %v6168
      %v6516 = vpop.f32.mrb[0].mxu0
      %v6517 = vadd.f32 0.0, %v6516
      %v6518 = vpop.f32.mrb[0].mxu0
      %v6519 = vpop.f32.mrb[0].mxu0
      %v6520 = vadd.f32 0.0, %v6519
      %v6521 = vpop.f32.mrb[0].mxu0
      %6522 = vmatprep.mubr.bf16.mxu0 0
      %6523 = vmatmul.mubr.bf16.gmra.mrb[0].mxu0 %v6171
      %v6524 = vpop.f32.mrb[0].mxu0
      %v6525 = vadd.f32 0.0, %v6524
      %v6526 = vpop.f32.mrb[0].mxu0
      %v6527 = vpop.f32.mrb[0].mxu0
      %v6528 = vadd.f32 0.0, %v6527
      %v6529 = vpop.f32.mrb[0].mxu0
      %6530 = vmatprep.mubr.bf16.mxu0 0
      %6531 = vmatmul.mubr.bf16.gmra.mrb[0].mxu0 %v6174
      %v6532 = vpop.f32.mrb[0].mxu0
      %v6533 = vadd.f32 0.0, %v6532
      %v6534 = vpop.f32.mrb[0].mxu0
      %v6535 = vpop.f32.mrb[0].mxu0
      %v6536 = vadd.f32 0.0, %v6535
      %v6537 = vpop.f32.mrb[0].mxu0
      %6538 = vmatprep.mubr.bf16.mxu0 0
      %6539 = vmatmul.mubr.bf16.gmra.mrb[0].mxu0 %v6177
      %v6540 = vpop.f32.mrb[0].mxu0
      %v6541 = vadd.f32 0.0, %v6540
      %v6542 = vpop.f32.mrb[0].mxu0
      %v6543 = vpop.f32.mrb[0].mxu0
      %v6544 = vadd.f32 0.0, %v6543
      %v6545 = vpop.f32.mrb[0].mxu0
      %6546 = vmatprep.mubr.bf16.mxu0 0
      %6547 = vmatmul.mubr.bf16.gmra.mrb[0].mxu0 %v6180
      %v6548 = vpop.f32.mrb[0].mxu0
      %v6549 = vadd.f32 0.0, %v6548
      %v6550 = vpop.f32.mrb[0].mxu0
      %v6551 = vpop.f32.mrb[0].mxu0
      %v6552 = vadd.f32 0.0, %v6551
      %v6553 = vpop.f32.mrb[0].mxu0
      %6554 = vmatprep.mubr.bf16.mxu0 0
      %6555 = vmatmul.mubr.bf16.gmra.mrb[0].mxu0 %v6183
      %v6556 = vpop.f32.mrb[0].mxu0
      %v6557 = vadd.f32 0.0, %v6556
      %v6558 = vpop.f32.mrb[0].mxu0
      %v6559 = vpop.f32.mrb[0].mxu0
      %v6560 = vadd.f32 0.0, %v6559
      %v6561 = vpop.f32.mrb[0].mxu0
      %6562 = vmatprep.mubr.bf16.mxu0 0
      %6563 = vmatmul.mubr.bf16.gmra.mrb[0].mxu0 %v6186
      %v6564 = vpop.f32.mrb[0].mxu0
      %v6565 = vadd.f32 0.0, %v6564
      %v6566 = vpop.f32.mrb[0].mxu0
      %v6567 = vpop.f32.mrb[0].mxu0
      %v6568 = vadd.f32 0.0, %v6567
      %v6569 = vpop.f32.mrb[0].mxu0
      %6570 = vmatprep.mubr.bf16.mxu0 0
      %6571 = vmatmul.mubr.bf16.gmra.mrb[0].mxu0 %v6189
      %v6572 = vpop.f32.mrb[0].mxu0
      %v6573 = vadd.f32 0.0, %v6572
      %v6574 = vpop.f32.mrb[0].mxu0
      %v6575 = vpop.f32.mrb[0].mxu0
      %v6576 = vadd.f32 0.0, %v6575
      %v6577 = vpop.f32.mrb[0].mxu0
      %6578 = vmatprep.mubr.bf16.mxu0 0
      %6579 = vmatmul.mubr.bf16.gmra.mrb[0].mxu0 %v6192
      %v6580 = vpop.f32.mrb[0].mxu0
      %v6581 = vadd.f32 0.0, %v6580
      %v6582 = vpop.f32.mrb[0].mxu0
      %v6583 = vpop.f32.mrb[0].mxu0
      %v6584 = vadd.f32 0.0, %v6583
      %v6585 = vpop.f32.mrb[0].mxu0
      %6586 = vmatprep.mubr.bf16.mxu0 0
      %6587 = vmatmul.mubr.bf16.gmra.mrb[0].mxu0 %v6195
      %v6588 = vpop.f32.mrb[0].mxu0
      %v6589 = vadd.f32 0.0, %v6588
      %v6590 = vpop.f32.mrb[0].mxu0
      %v6591 = vpop.f32.mrb[0].mxu0
      %v6592 = vadd.f32 0.0, %v6591
      %v6593 = vpop.f32.mrb[0].mxu0
      %6594 = vmatprep.mubr.bf16.mxu0 0
      %6595 = vmatmul.mubr.bf16.gmra.mrb[0].mxu0 %v6198
      %v6596 = vpop.f32.mrb[0].mxu0
      %v6597 = vadd.f32 0.0, %v6596
      %v6598 = vpop.f32.mrb[0].mxu0
      %v6599 = vpop.f32.mrb[0].mxu0
      %v6600 = vadd.f32 0.0, %v6599
      %v6601 = vpop.f32.mrb[0].mxu0
      %6602 = vmatprep.mubr.bf16.mxu0 0
      %6603 = vmatmul.mubr.bf16.gmra.mrb[0].mxu0 %v6201
      %v6604 = vpop.f32.mrb[0].mxu0
      %v6605 = vadd.f32 0.0, %v6604
      %v6606 = vpop.f32.mrb[0].mxu0
      %v6607 = vpop.f32.mrb[0].mxu0
      %v6608 = vadd.f32 0.0, %v6607
      %v6609 = vpop.f32.mrb[0].mxu0
      %6610 = vmatprep.mubr.bf16.mxu0 0
      %6611 = vmatmul.mubr.bf16.gmra.mrb[0].mxu0 %v6204
      %v6612 = vpop.f32.mrb[0].mxu0
      %v6613 = vadd.f32 0.0, %v6612
      %v6614 = vpop.f32.mrb[0].mxu0
      %v6615 = vpop.f32.mrb[0].mxu0
      %v6616 = vadd.f32 0.0, %v6615
      %v6617 = vpop.f32.mrb[0].mxu0
      %6618 = vmatprep.mubr.bf16.mxu0 0
      %6619 = vmatmul.mubr.bf16.gmra.mrb[0].mxu0 %v6207
      %v6620 = vpop.f32.mrb[0].mxu0
      %v6621 = vadd.f32 0.0, %v6620
      %v6622 = vpop.f32.mrb[0].mxu0
      %v6623 = vpop.f32.mrb[0].mxu0
      %v6624 = vadd.f32 0.0, %v6623
      %v6625 = vpop.f32.mrb[0].mxu0
      %6626 = vmatprep.mubr.bf16.mxu0 0
      %6627 = vmatmul.mubr.bf16.gmra.mrb[0].mxu0 %v6210
      %v6628 = vpop.f32.mrb[0].mxu0
      %v6629 = vadd.f32 0.0, %v6628
      %v6630 = vpop.f32.mrb[0].mxu0
      %v6631 = vpop.f32.mrb[0].mxu0
      %v6632 = vadd.f32 0.0, %v6631
      %v6633 = vpop.f32.mrb[0].mxu0
      %6634 = vmatprep.mubr.bf16.mxu0 0
      %6635 = vmatmul.mubr.bf16.gmra.mrb[0].mxu0 %v6213
      %v6636 = vpop.f32.mrb[0].mxu0
      %v6637 = vadd.f32 0.0, %v6636
      %v6638 = vpop.f32.mrb[0].mxu0
      %v6639 = vpop.f32.mrb[0].mxu0
      %v6640 = vadd.f32 0.0, %v6639
      %v6641 = vpop.f32.mrb[0].mxu0
      %6642 = vmatprep.mubr.bf16.mxu0 0
      %6643 = vmatmul.mubr.bf16.gmra.mrb[0].mxu0 %v6216
      %v6644 = vpop.f32.mrb[0].mxu0
      %v6645 = vadd.f32 0.0, %v6644
      %v6646 = vpop.f32.mrb[0].mxu0
      %v6647 = vpop.f32.mrb[0].mxu0
      %v6648 = vadd.f32 0.0, %v6647
      %v6649 = vpop.f32.mrb[0].mxu0
      %6650 = vmatprep.mubr.bf16.mxu0 0
      %6651 = vmatmul.mubr.bf16.gmra.mrb[0].mxu0 %v6219
      %v6652 = vpop.f32.mrb[0].mxu0
      %v6653 = vadd.f32 0.0, %v6652
      %v6654 = vpop.f32.mrb[0].mxu0
      %v6655 = vpop.f32.mrb[0].mxu0
      %v6656 = vadd.f32 0.0, %v6655
      %v6657 = vpop.f32.mrb[0].mxu0
      %6658 = vmatprep.mubr.bf16.mxu0 0
      %6659 = vmatmul.mubr.bf16.gmra.mrb[0].mxu0 %v6222
      %v6660 = vpop.f32.mrb[0].mxu0
      %v6661 = vadd.f32 0.0, %v6660
      %v6662 = vpop.f32.mrb[0].mxu0
      %v6663 = vpop.f32.mrb[0].mxu0
      %v6664 = vadd.f32 0.0, %v6663
      %v6665 = vpop.f32.mrb[0].mxu0
      %6666 = vmatprep.mubr.bf16.mxu0 0
      %6667 = vmatmul.mubr.bf16.gmra.mrb[0].mxu0 %v6225
      %v6668 = vpop.f32.mrb[0].mxu0
      %v6669 = vadd.f32 0.0, %v6668
      %v6670 = vpop.f32.mrb[0].mxu0
      %v6671 = vpop.f32.mrb[0].mxu0
      %v6672 = vadd.f32 0.0, %v6671
      %v6673 = vpop.f32.mrb[0].mxu0
      %6674 = vmatprep.mubr.bf16.mxu0 0
      %6675 = vmatmul.mubr.bf16.gmra.mrb[0].mxu0 %v6228
      %v6676 = vpop.f32.mrb[0].mxu0
      %v6677 = vadd.f32 0.0, %v6676
      %v6678 = vpop.f32.mrb[0].mxu0
      %v6679 = vpop.f32.mrb[0].mxu0
      %v6680 = vadd.f32 0.0, %v6679
      %v6681 = vpop.f32.mrb[0].mxu0
      %6682 = vmatprep.mubr.bf16.mxu0 0
      %6683 = vmatmul.mubr.bf16.gmra.mrb[0].mxu0 %v6231
      %v6684 = vpop.f32.mrb[0].mxu0
      %v6685 = vadd.f32 0.0, %v6684
      %v6686 = vpop.f32.mrb[0].mxu0
      %v6687 = vpop.f32.mrb[0].mxu0
      %v6688 = vadd.f32 0.0, %v6687
      %v6689 = vpop.f32.mrb[0].mxu0
      %6690 = vmatprep.mubr.bf16.mxu0 0
      %6691 = vmatmul.mubr.bf16.gmra.mrb[0].mxu0 %v6234
      %v6692 = vpop.f32.mrb[0].mxu0
      %v6693 = vadd.f32 0.0, %v6692
      %v6694 = vpop.f32.mrb[0].mxu0
      %v6695 = vpop.f32.mrb[0].mxu0
      %v6696 = vadd.f32 0.0, %v6695
      %v6697 = vpop.f32.mrb[0].mxu0
      %6698 = vmatprep.mubr.bf16.mxu0 0
      %6699 = vmatmul.mubr.bf16.gmra.mrb[0].mxu0 %v6237
      %v6700 = vpop.f32.mrb[0].mxu0
      %v6701 = vadd.f32 0.0, %v6700
      %v6702 = vpop.f32.mrb[0].mxu0
      %v6703 = vpop.f32.mrb[0].mxu0
      %v6704 = vadd.f32 0.0, %v6703
      %v6705 = vpop.f32.mrb[0].mxu0
      %6706 = vmatprep.mubr.bf16.mxu0 0
      %6707 = vmatmul.mubr.bf16.gmra.mrb[0].mxu0 %v6240
      %v6708 = vpop.f32.mrb[0].mxu0
      %v6709 = vadd.f32 0.0, %v6708
      %v6710 = vpop.f32.mrb[0].mxu0
      %v6711 = vpop.f32.mrb[0].mxu0
      %v6712 = vadd.f32 0.0, %v6711
      %v6713 = vpop.f32.mrb[0].mxu0
      %6714 = vmatprep.mubr.bf16.mxu0 0
      %6715 = vmatmul.mubr.bf16.gmra.mrb[0].mxu0 %v6243
      %v6716 = vpop.f32.mrb[0].mxu0
      %v6717 = vadd.f32 0.0, %v6716
      %v6718 = vpop.f32.mrb[0].mxu0
      %v6719 = vpop.f32.mrb[0].mxu0
      %v6720 = vadd.f32 0.0, %v6719
      %v6721 = vpop.f32.mrb[0].mxu0
      %6722 = vmatprep.mubr.bf16.mxu0 0
      %6723 = vmatmul.mubr.bf16.gmra.mrb[0].mxu0 %v6246
      %v6724 = vpop.f32.mrb[0].mxu0
      %v6725 = vadd.f32 0.0, %v6724
      %v6726 = vpop.f32.mrb[0].mxu0
      %v6727 = vpop.f32.mrb[0].mxu0
      %v6728 = vadd.f32 0.0, %v6727
      %v6729 = vpop.f32.mrb[0].mxu0
      %6730 = vmatprep.mubr.bf16.mxu0 0
      %6731 = vmatmul.mubr.bf16.gmra.mrb[0].mxu0 %v6249
      %v6732 = vpop.f32.mrb[0].mxu0
      %v6733 = vadd.f32 0.0, %v6732
      %v6734 = vpop.f32.mrb[0].mxu0
      %v6735 = vpop.f32.mrb[0].mxu0
      %v6736 = vadd.f32 0.0, %v6735
      %v6737 = vpop.f32.mrb[0].mxu0
      %6738 = vmatprep.mubr.bf16.mxu0 0
      %6739 = vmatmul.mubr.bf16.gmra.mrb[0].mxu0 %v6252
      %v6740 = vpop.f32.mrb[0].mxu0
      %v6741 = vadd.f32 0.0, %v6740
      %v6742 = vpop.f32.mrb[0].mxu0
      %v6743 = vpop.f32.mrb[0].mxu0
      %v6744 = vadd.f32 0.0, %v6743
      %v6745 = vpop.f32.mrb[0].mxu0
      %6746 = vmatprep.mubr.bf16.mxu0 0
      %6747 = vmatmul.mubr.bf16.gmra.mrb[0].mxu0 %v6255
      %v6748 = vpop.f32.mrb[0].mxu0
      %v6749 = vadd.f32 0.0, %v6748
      %v6750 = vpop.f32.mrb[0].mxu0
      %v6751 = vpop.f32.mrb[0].mxu0
      %v6752 = vadd.f32 0.0, %v6751
      %v6753 = vpop.f32.mrb[0].mxu0
      %6754 = vmatprep.mubr.bf16.mxu0 0
      %6755 = vmatmul.mubr.bf16.gmra.mrb[0].mxu0 %v6258
      %v6756 = vpop.f32.mrb[0].mxu0
      %v6757 = vadd.f32 0.0, %v6756
      %v6758 = vpop.f32.mrb[0].mxu0
      %v6759 = vpop.f32.mrb[0].mxu0
      %v6760 = vadd.f32 0.0, %v6759
      %v6761 = vpop.f32.mrb[0].mxu0
      %6762 = vmatprep.mubr.bf16.mxu0 0
      %6763 = vmatmul.mubr.bf16.gmra.mrb[0].mxu0 %v6261
      %v6764 = vpop.f32.mrb[0].mxu0
      %v6765 = vadd.f32 0.0, %v6764
      %v6766 = vpop.f32.mrb[0].mxu0
      %v6767 = vpop.f32.mrb[0].mxu0
      %v6768 = vadd.f32 0.0, %v6767
      %v6769 = vpop.f32.mrb[0].mxu0
      %6770 = vmatprep.mubr.bf16.mxu0 0
      %6771 = vmatmul.mubr.bf16.gmra.mrb[0].mxu0 %v6264
      %v6772 = vpop.f32.mrb[0].mxu0
      %v6773 = vadd.f32 0.0, %v6772
      %v6774 = vpop.f32.mrb[0].mxu0
      %v6775 = vpop.f32.mrb[0].mxu0
      %v6776 = vadd.f32 0.0, %v6775
      %v6777 = vpop.f32.mrb[0].mxu0
      %6778 = vmatprep.mubr.bf16.mxu0 0
      %6779 = vmatmul.mubr.bf16.gmra.mrb[0].mxu0 %v6267
      %v6780 = vpop.f32.mrb[0].mxu0
      %v6781 = vadd.f32 0.0, %v6780
      %v6782 = vpop.f32.mrb[0].mxu0
      %v6783 = vpop.f32.mrb[0].mxu0
      %v6784 = vadd.f32 0.0, %v6783
      %v6785 = vpop.f32.mrb[0].mxu0
      %6786 = vmatprep.mubr.bf16.mxu0 0
      %6787 = vmatmul.mubr.bf16.gmra.mrb[0].mxu0 %v6270
      %v6788 = vpop.f32.mrb[0].mxu0
      %v6789 = vadd.f32 0.0, %v6788
      %v6790 = vpop.f32.mrb[0].mxu0
      %v6791 = vpop.f32.mrb[0].mxu0
      %v6792 = vadd.f32 0.0, %v6791
      %v6793 = vpop.f32.mrb[0].mxu0
      %6794 = vmatprep.mubr.bf16.mxu0 0
      %6795 = vmatmul.mubr.bf16.gmra.mrb[0].mxu0 %v6273
      %v6796 = vpop.f32.mrb[0].mxu0
      %v6797 = vadd.f32 0.0, %v6796
      %v6798 = vpop.f32.mrb[0].mxu0
      %v6799 = vpop.f32.mrb[0].mxu0
      %v6800 = vadd.f32 0.0, %v6799
      %v6801 = vpop.f32.mrb[0].mxu0
      %6802 = vmatprep.mubr.bf16.mxu0 0
      %6803 = vmatmul.mubr.bf16.gmra.mrb[0].mxu0 %v6276
      %v6804 = vpop.f32.mrb[0].mxu0
      %v6805 = vadd.f32 0.0, %v6804
      %v6806 = vpop.f32.mrb[0].mxu0
      %v6807 = vpop.f32.mrb[0].mxu0
      %v6808 = vadd.f32 0.0, %v6807
      %v6809 = vpop.f32.mrb[0].mxu0
      %6810 = vmatprep.mubr.bf16.mxu0 0
      %6811 = vmatmul.mubr.bf16.gmra.mrb[0].mxu0 %v6279
      %v6812 = vpop.f32.mrb[0].mxu0
      %v6813 = vadd.f32 0.0, %v6812
      %v6814 = vpop.f32.mrb[0].mxu0
      %v6815 = vpop.f32.mrb[0].mxu0
      %v6816 = vadd.f32 0.0, %v6815
      %v6817 = vpop.f32.mrb[0].mxu0
      %6818 = vmatprep.mubr.bf16.mxu0 0
      %6819 = vmatmul.mubr.bf16.gmra.mrb[0].mxu0 %v6282
      %v6820 = vpop.f32.mrb[0].mxu0
      %v6821 = vadd.f32 0.0, %v6820
      %v6822 = vpop.f32.mrb[0].mxu0
      %v6823 = vpop.f32.mrb[0].mxu0
      %v6824 = vadd.f32 0.0, %v6823
      %v6825 = vpop.f32.mrb[0].mxu0
      %6826 = vmatprep.mubr.bf16.mxu0 0
      %6827 = vmatmul.mubr.bf16.gmra.mrb[0].mxu0 %v6285
      %v6828 = vpop.f32.mrb[0].mxu0
      %v6829 = vadd.f32 0.0, %v6828
      %v6830 = vpop.f32.mrb[0].mxu0
      %v6831 = vpop.f32.mrb[0].mxu0
      %v6832 = vadd.f32 0.0, %v6831
      %v6833 = vpop.f32.mrb[0].mxu0
      %6834 = vdwg.mxu0
      %v6835 = vadd.f32 %v5705, %v6325
      %v6836 = vadd.f32 %v5706, %v6328
      %v6837 = vadd.f32 %v5707, %v6333
      %v6838 = vadd.f32 %v5708, %v6336
      %v6839 = vadd.f32 %v5709, %v6341
      %v6840 = vadd.f32 %v5710, %v6344
      %v6841 = vadd.f32 %v5711, %v6349
      %v6842 = vadd.f32 %v5712, %v6352
      %v6843 = vadd.f32 %v5713, %v6357
      %v6844 = vadd.f32 %v5714, %v6360
      %v6845 = vadd.f32 %v5715, %v6365
      %v6846 = vadd.f32 %v5716, %v6368
      %v6847 = vadd.f32 %v5717, %v6373
      %v6848 = vadd.f32 %v5718, %v6376
      %v6849 = vadd.f32 %v5719, %v6381
      %v6850 = vadd.f32 %v5720, %v6384
      %v6851 = vadd.f32 %v5721, %v6389
      %v6852 = vadd.f32 %v5722, %v6392
      %v6853 = vadd.f32 %v5723, %v6397
      %v6854 = vadd.f32 %v5724, %v6400
      %v6855 = vadd.f32 %v5725, %v6405
      %v6856 = vadd.f32 %v5726, %v6408
      %v6857 = vadd.f32 %v5727, %v6413
      %v6858 = vadd.f32 %v5728, %v6416
      %v6859 = vadd.f32 %v5729, %v6421
      %v6860 = vadd.f32 %v5730, %v6424
      %v6861 = vadd.f32 %v5731, %v6429
      %v6862 = vadd.f32 %v5732, %v6432
      %v6863 = vadd.f32 %v5733, %v6437
      %v6864 = vadd.f32 %v5734, %v6440
      %v6865 = vadd.f32 %v5735, %v6445
      %v6866 = vadd.f32 %v5736, %v6448
      %v6867 = vadd.f32 %v5737, %v6453
      %v6868 = vadd.f32 %v5738, %v6456
      %v6869 = vadd.f32 %v5739, %v6461
      %v6870 = vadd.f32 %v5740, %v6464
      %v6871 = vadd.f32 %v5741, %v6469
      %v6872 = vadd.f32 %v5742, %v6472
      %v6873 = vadd.f32 %v5743, %v6477
      %v6874 = vadd.f32 %v5744, %v6480
      %v6875 = vadd.f32 %v5745, %v6485
      %v6876 = vadd.f32 %v5746, %v6488
      %v6877 = vadd.f32 %v5747, %v6493
      %v6878 = vadd.f32 %v5748, %v6496
      %v6879 = vadd.f32 %v5749, %v6501
      %v6880 = vadd.f32 %v5750, %v6504
      %v6881 = vadd.f32 %v5751, %v6509
      %v6882 = vadd.f32 %v5752, %v6512
      %v6883 = vadd.f32 %v5753, %v6517
      %v6884 = vadd.f32 %v5754, %v6520
      %v6885 = vadd.f32 %v5755, %v6525
      %v6886 = vadd.f32 %v5756, %v6528
      %v6887 = vadd.f32 %v5757, %v6533
      %v6888 = vadd.f32 %v5758, %v6536
      %v6889 = vadd.f32 %v5759, %v6541
      %v6890 = vadd.f32 %v5760, %v6544
      %v6891 = vadd.f32 %v5761, %v6549
      %v6892 = vadd.f32 %v5762, %v6552
      %v6893 = vadd.f32 %v5763, %v6557
      %v6894 = vadd.f32 %v5764, %v6560
      %v6895 = vadd.f32 %v5765, %v6565
      %v6896 = vadd.f32 %v5766, %v6568
      %v6897 = vadd.f32 %v5767, %v6573
      %v6898 = vadd.f32 %v5768, %v6576
      %v6899 = vadd.f32 %v5769, %v6581
      %v6900 = vadd.f32 %v5770, %v6584
      %v6901 = vadd.f32 %v5771, %v6589
      %v6902 = vadd.f32 %v5772, %v6592
      %v6903 = vadd.f32 %v5773, %v6597
      %v6904 = vadd.f32 %v5774, %v6600
      %v6905 = vadd.f32 %v5775, %v6605
      %v6906 = vadd.f32 %v5776, %v6608
      %v6907 = vadd.f32 %v5777, %v6613
      %v6908 = vadd.f32 %v5778, %v6616
      %v6909 = vadd.f32 %v5779, %v6621
      %v6910 = vadd.f32 %v5780, %v6624
      %v6911 = vadd.f32 %v5781, %v6629
      %v6912 = vadd.f32 %v5782, %v6632
      %v6913 = vadd.f32 %v5783, %v6637
      %v6914 = vadd.f32 %v5784, %v6640
      %v6915 = vadd.f32 %v5785, %v6645
      %v6916 = vadd.f32 %v5786, %v6648
      %v6917 = vadd.f32 %v5787, %v6653
      %v6918 = vadd.f32 %v5788, %v6656
      %v6919 = vadd.f32 %v5789, %v6661
      %v6920 = vadd.f32 %v5790, %v6664
      %v6921 = vadd.f32 %v5791, %v6669
      %v6922 = vadd.f32 %v5792, %v6672
      %v6923 = vadd.f32 %v5793, %v6677
      %v6924 = vadd.f32 %v5794, %v6680
      %v6925 = vadd.f32 %v5795, %v6685
      %v6926 = vadd.f32 %v5796, %v6688
      %v6927 = vadd.f32 %v5797, %v6693
      %v6928 = vadd.f32 %v5798, %v6696
      %v6929 = vadd.f32 %v5799, %v6701
      %v6930 = vadd.f32 %v5800, %v6704
      %v6931 = vadd.f32 %v5801, %v6709
      %v6932 = vadd.f32 %v5802, %v6712
      %v6933 = vadd.f32 %v5803, %v6717
      %v6934 = vadd.f32 %v5804, %v6720
      %v6935 = vadd.f32 %v5805, %v6725
      %v6936 = vadd.f32 %v5806, %v6728
      %v6937 = vadd.f32 %v5807, %v6733
      %v6938 = vadd.f32 %v5808, %v6736
      %v6939 = vadd.f32 %v5809, %v6741
      %v6940 = vadd.f32 %v5810, %v6744
      %v6941 = vadd.f32 %v5811, %v6749
      %v6942 = vadd.f32 %v5812, %v6752
      %v6943 = vadd.f32 %v5813, %v6757
      %v6944 = vadd.f32 %v5814, %v6760
      %v6945 = vadd.f32 %v5815, %v6765
      %v6946 = vadd.f32 %v5816, %v6768
      %v6947 = vadd.f32 %v5817, %v6773
      %v6948 = vadd.f32 %v5818, %v6776
      %v6949 = vadd.f32 %v5819, %v6781
      %v6950 = vadd.f32 %v5820, %v6784
      %v6951 = vadd.f32 %v5821, %v6789
      %v6952 = vadd.f32 %v5822, %v6792
      %v6953 = vadd.f32 %v5823, %v6797
      %v6954 = vadd.f32 %v5824, %v6800
      %v6955 = vadd.f32 %v5825, %v6805
      %v6956 = vadd.f32 %v5826, %v6808
      %v6957 = vadd.f32 %v5827, %v6813
      %v6958 = vadd.f32 %v5828, %v6816
      %v6959 = vadd.f32 %v5829, %v6821
      %v6960 = vadd.f32 %v5830, %v6824
      %v6961 = vadd.f32 %v5831, %v6829
      %v6962 = vadd.f32 %v5832, %v6832
      %s6963 = scalar_lea.vmem %s2, 12
      %v6964 = vld [vmem:[%s6963] sm:$0x3]
      %vm6965 = vcmask 1044480
      %v6966 = vrot.slane %v694, 3
      %v6967 = vrot.slane %v695, 3
      %v6968 = vsel %vm6965, %v6966, %v6967
      %v6969 = vrot.slane %v696, 3
      %v6970 = vsel %vm6965, %v6967, %v6969
      %v6971 = vrot.slane %v697, 3
      %v6972 = vsel %vm6965, %v6969, %v6971
      %v6973 = vrot.slane %v698, 3
      %v6974 = vsel %vm6965, %v6971, %v6973
      %v6975 = vrot.slane %v699, 3
      %v6976 = vsel %vm6965, %v6973, %v6975
      %v6977 = vrot.slane %v700, 3
      %v6978 = vsel %vm6965, %v6975, %v6977
      %v6979 = vrot.slane %v701, 3
      %v6980 = vsel %vm6965, %v6977, %v6979
      %v6981 = vrot.slane %v702, 3
      %v6982 = vsel %vm6965, %v6979, %v6981
      %v6983 = vrot.slane %v703, 3
      %v6984 = vsel %vm6965, %v6981, %v6983
      %v6985 = vrot.slane %v704, 3
      %v6986 = vsel %vm6965, %v6983, %v6985
      %v6987 = vrot.slane %v705, 3
      %v6988 = vsel %vm6965, %v6985, %v6987
      %v6989 = vrot.slane %v706, 3
      %v6990 = vsel %vm6965, %v6987, %v6989
      %v6991 = vrot.slane %v707, 3
      %v6992 = vsel %vm6965, %v6989, %v6991
      %v6993 = vrot.slane %v708, 3
      %v6994 = vsel %vm6965, %v6991, %v6993
      %v6995 = vrot.slane %v709, 3
      %v6996 = vsel %vm6965, %v6993, %v6995
      %v6997 = vrot.slane %v710, 3
      %v6998 = vsel %vm6965, %v6995, %v6997
      %v6999 = vrot.slane %v711, 3
      %v7000 = vsel %vm6965, %v6997, %v6999
      %v7001 = vrot.slane %v712, 3
      %v7002 = vsel %vm6965, %v6999, %v7001
      %v7003 = vrot.slane %v713, 3
      %v7004 = vsel %vm6965, %v7001, %v7003
      %v7005 = vrot.slane %v714, 3
      %v7006 = vsel %vm6965, %v7003, %v7005
      %v7007 = vrot.slane %v715, 3
      %v7008 = vsel %vm6965, %v7005, %v7007
      %v7009 = vrot.slane %v716, 3
      %v7010 = vsel %vm6965, %v7007, %v7009
      %v7011 = vrot.slane %v717, 3
      %v7012 = vsel %vm6965, %v7009, %v7011
      %v7013 = vrot.slane %v718, 3
      %v7014 = vsel %vm6965, %v7011, %v7013
      %v7015 = vrot.slane %v719, 3
      %v7016 = vsel %vm6965, %v7013, %v7015
      %v7017 = vrot.slane %v720, 3
      %v7018 = vsel %vm6965, %v7015, %v7017
      %v7019 = vrot.slane %v721, 3
      %v7020 = vsel %vm6965, %v7017, %v7019
      %v7021 = vrot.slane %v722, 3
      %v7022 = vsel %vm6965, %v7019, %v7021
      %v7023 = vrot.slane %v723, 3
      %v7024 = vsel %vm6965, %v7021, %v7023
      %v7025 = vrot.slane %v724, 3
      %v7026 = vsel %vm6965, %v7023, %v7025
      %v7027 = vrot.slane %v725, 3
      %v7028 = vsel %vm6965, %v7025, %v7027
      %v7029 = vrot.slane %v726, 3
      %v7030 = vsel %vm6965, %v7027, %v7029
      %v7031 = vrot.slane %v727, 3
      %v7032 = vsel %vm6965, %v7029, %v7031
      %v7033 = vrot.slane %v728, 3
      %v7034 = vsel %vm6965, %v7031, %v7033
      %v7035 = vrot.slane %v729, 3
      %v7036 = vsel %vm6965, %v7033, %v7035
      %v7037 = vrot.slane %v730, 3
      %v7038 = vsel %vm6965, %v7035, %v7037
      %v7039 = vrot.slane %v731, 3
      %v7040 = vsel %vm6965, %v7037, %v7039
      %v7041 = vrot.slane %v732, 3
      %v7042 = vsel %vm6965, %v7039, %v7041
      %v7043 = vrot.slane %v733, 3
      %v7044 = vsel %vm6965, %v7041, %v7043
      %v7045 = vrot.slane %v734, 3
      %v7046 = vsel %vm6965, %v7043, %v7045
      %v7047 = vrot.slane %v735, 3
      %v7048 = vsel %vm6965, %v7045, %v7047
      %v7049 = vrot.slane %v736, 3
      %v7050 = vsel %vm6965, %v7047, %v7049
      %v7051 = vrot.slane %v737, 3
      %v7052 = vsel %vm6965, %v7049, %v7051
      %v7053 = vrot.slane %v738, 3
      %v7054 = vsel %vm6965, %v7051, %v7053
      %v7055 = vrot.slane %v739, 3
      %v7056 = vsel %vm6965, %v7053, %v7055
      %v7057 = vrot.slane %v740, 3
      %v7058 = vsel %vm6965, %v7055, %v7057
      %v7059 = vrot.slane %v741, 3
      %v7060 = vsel %vm6965, %v7057, %v7059
      %v7061 = vrot.slane %v742, 3
      %v7062 = vsel %vm6965, %v7059, %v7061
      %v7063 = vrot.slane %v743, 3
      %v7064 = vsel %vm6965, %v7061, %v7063
      %v7065 = vrot.slane %v744, 3
      %v7066 = vsel %vm6965, %v7063, %v7065
      %v7067 = vrot.slane %v745, 3
      %v7068 = vsel %vm6965, %v7065, %v7067
      %v7069 = vrot.slane %v746, 3
      %v7070 = vsel %vm6965, %v7067, %v7069
      %v7071 = vrot.slane %v747, 3
      %v7072 = vsel %vm6965, %v7069, %v7071
      %v7073 = vrot.slane %v748, 3
      %v7074 = vsel %vm6965, %v7071, %v7073
      %v7075 = vrot.slane %v749, 3
      %v7076 = vsel %vm6965, %v7073, %v7075
      %v7077 = vrot.slane %v750, 3
      %v7078 = vsel %vm6965, %v7075, %v7077
      %v7079 = vrot.slane %v751, 3
      %v7080 = vsel %vm6965, %v7077, %v7079
      %v7081 = vrot.slane %v752, 3
      %v7082 = vsel %vm6965, %v7079, %v7081
      %v7083 = vrot.slane %v753, 3
      %v7084 = vsel %vm6965, %v7081, %v7083
      %v7085 = vrot.slane %v754, 3
      %v7086 = vsel %vm6965, %v7083, %v7085
      %v7087 = vrot.slane %v755, 3
      %v7088 = vsel %vm6965, %v7085, %v7087
      %v7089 = vrot.slane %v756, 3
      %v7090 = vsel %vm6965, %v7087, %v7089
      %v7091 = vrot.slane %v757, 3
      %v7092 = vsel %vm6965, %v7089, %v7091
      %v7093 = vrot.slane %v762, 3
      %v7094 = vsel %vm6965, %v7091, %v7093
      %v7096 = vsel %vm1283, %v6968, 0
      %v7099 = vsel %vm1283, %v6970, 0
      %v7102 = vsel %vm1283, %v6972, 0
      %v7105 = vsel %vm1283, %v6974, 0
      %v7108 = vsel %vm1283, %v6976, 0
      %v7111 = vsel %vm1283, %v6978, 0
      %v7114 = vsel %vm1283, %v6980, 0
      %v7117 = vsel %vm1283, %v6982, 0
      %v7120 = vsel %vm1283, %v6984, 0
      %v7123 = vsel %vm1283, %v6986, 0
      %v7126 = vsel %vm1283, %v6988, 0
      %v7129 = vsel %vm1283, %v6990, 0
      %v7132 = vsel %vm1283, %v6992, 0
      %v7135 = vsel %vm1283, %v6994, 0
      %v7138 = vsel %vm1283, %v6996, 0
      %v7141 = vsel %vm1283, %v6998, 0
      %v7144 = vsel %vm1283, %v7000, 0
      %v7147 = vsel %vm1283, %v7002, 0
      %v7150 = vsel %vm1283, %v7004, 0
      %v7153 = vsel %vm1283, %v7006, 0
      %v7156 = vsel %vm1283, %v7008, 0
      %v7159 = vsel %vm1283, %v7010, 0
      %v7162 = vsel %vm1283, %v7012, 0
      %v7165 = vsel %vm1283, %v7014, 0
      %v7168 = vsel %vm1283, %v7016, 0
      %v7171 = vsel %vm1283, %v7018, 0
      %v7174 = vsel %vm1283, %v7020, 0
      %v7177 = vsel %vm1283, %v7022, 0
      %v7180 = vsel %vm1283, %v7024, 0
      %v7183 = vsel %vm1283, %v7026, 0
      %v7186 = vsel %vm1283, %v7028, 0
      %v7189 = vsel %vm1283, %v7030, 0
      %v7192 = vsel %vm1283, %v7032, 0
      %v7195 = vsel %vm1283, %v7034, 0
      %v7198 = vsel %vm1283, %v7036, 0
      %v7201 = vsel %vm1283, %v7038, 0
      %v7204 = vsel %vm1283, %v7040, 0
      %v7207 = vsel %vm1283, %v7042, 0
      %v7210 = vsel %vm1283, %v7044, 0
      %v7213 = vsel %vm1283, %v7046, 0
      %v7216 = vsel %vm1283, %v7048, 0
      %v7219 = vsel %vm1283, %v7050, 0
      %v7222 = vsel %vm1283, %v7052, 0
      %v7225 = vsel %vm1283, %v7054, 0
      %v7228 = vsel %vm1283, %v7056, 0
      %v7231 = vsel %vm1283, %v7058, 0
      %v7234 = vsel %vm1283, %v7060, 0
      %v7237 = vsel %vm1283, %v7062, 0
      %v7240 = vsel %vm1283, %v7064, 0
      %v7243 = vsel %vm1283, %v7066, 0
      %v7246 = vsel %vm1283, %v7068, 0
      %v7249 = vsel %vm1283, %v7070, 0
      %v7252 = vsel %vm1283, %v7072, 0
      %v7255 = vsel %vm1283, %v7074, 0
      %v7258 = vsel %vm1283, %v7076, 0
      %v7261 = vsel %vm1283, %v7078, 0
      %v7264 = vsel %vm1283, %v7080, 0
      %v7267 = vsel %vm1283, %v7082, 0
      %v7270 = vsel %vm1283, %v7084, 0
      %v7273 = vsel %vm1283, %v7086, 0
      %v7276 = vsel %vm1283, %v7088, 0
      %v7279 = vsel %vm1283, %v7090, 0
      %v7282 = vsel %vm1283, %v7092, 0
      %v7285 = vsel %vm1283, %v7094, 0
      %v7288 = vsel %vm1476, %v6964, 0
      %7290 = vmatprep.subr.bf16.mxu0 0
      %7291 = vmatpush1.bf16.msra.mxu0 %v7288
      %7292 = vmatprep.subr.bf16.mxu0 0
      %7293 = vmatpush1.bf16.msra.mxu0 0
      %7294 = vmatprep.subr.bf16.mxu0 0
      %7295 = vmatpush1.bf16.msra.mxu0 0
      %7296 = vmatprep.subr.bf16.mxu0 0
      %7297 = vmatpush1.bf16.msra.mxu0 0
      %7298 = vmatprep.subr.bf16.mxu0 0
      %7299 = vmatpush1.bf16.msra.mxu0 0
      %7300 = vmatprep.subr.bf16.mxu0 0
      %7301 = vmatpush1.bf16.msra.mxu0 0
      %7302 = vmatprep.subr.bf16.mxu0 0
      %7303 = vmatpush1.bf16.msra.mxu0 0
      %7304 = vmatprep.subr.bf16.mxu0 0
      %7305 = vmatpush1.bf16.msra.mxu0 0
      %7306 = vmatprep.subr.bf16.mxu0 0
      %7307 = vmatpush1.bf16.msra.mxu0 0
      %7308 = vmatprep.subr.bf16.mxu0 0
      %7309 = vmatpush1.bf16.msra.mxu0 0
      %7310 = vmatprep.subr.bf16.mxu0 0
      %7311 = vmatpush1.bf16.msra.mxu0 0
      %7312 = vmatprep.subr.bf16.mxu0 0
      %7313 = vmatpush1.bf16.msra.mxu0 0
      %7314 = vmatprep.subr.bf16.mxu0 0
      %7315 = vmatpush1.bf16.msra.mxu0 0
      %7316 = vmatprep.subr.bf16.mxu0 0
      %7317 = vmatpush1.bf16.msra.mxu0 0
      %7318 = vmatprep.subr.bf16.mxu0 0
      %7319 = vmatpush1.bf16.msra.mxu0 0
      %7320 = vmatprep.subr.bf16.mxu0 0
      %7321 = vmatpush1.bf16.msra.mxu0 0
      %7322 = vmatprep.mubr.bf16.mxu0 0
      %7323 = vmatmul.mubr.bf16.gmra.mrb[0].mxu0 %v7096
      %v7324 = vpop.f32.mrb[0].mxu0
      %v7325 = vadd.f32 0.0, %v7324
      %v7326 = vpop.f32.mrb[0].mxu0
      %v7327 = vpop.f32.mrb[0].mxu0
      %v7328 = vadd.f32 0.0, %v7327
      %v7329 = vpop.f32.mrb[0].mxu0
      %7330 = vmatprep.mubr.bf16.mxu0 0
      %7331 = vmatmul.mubr.bf16.gmra.mrb[0].mxu0 %v7099
      %v7332 = vpop.f32.mrb[0].mxu0
      %v7333 = vadd.f32 0.0, %v7332
      %v7334 = vpop.f32.mrb[0].mxu0
      %v7335 = vpop.f32.mrb[0].mxu0
      %v7336 = vadd.f32 0.0, %v7335
      %v7337 = vpop.f32.mrb[0].mxu0
      %7338 = vmatprep.mubr.bf16.mxu0 0
      %7339 = vmatmul.mubr.bf16.gmra.mrb[0].mxu0 %v7102
      %v7340 = vpop.f32.mrb[0].mxu0
      %v7341 = vadd.f32 0.0, %v7340
      %v7342 = vpop.f32.mrb[0].mxu0
      %v7343 = vpop.f32.mrb[0].mxu0
      %v7344 = vadd.f32 0.0, %v7343
      %v7345 = vpop.f32.mrb[0].mxu0
      %7346 = vmatprep.mubr.bf16.mxu0 0
      %7347 = vmatmul.mubr.bf16.gmra.mrb[0].mxu0 %v7105
      %v7348 = vpop.f32.mrb[0].mxu0
      %v7349 = vadd.f32 0.0, %v7348
      %v7350 = vpop.f32.mrb[0].mxu0
      %v7351 = vpop.f32.mrb[0].mxu0
      %v7352 = vadd.f32 0.0, %v7351
      %v7353 = vpop.f32.mrb[0].mxu0
      %7354 = vmatprep.mubr.bf16.mxu0 0
      %7355 = vmatmul.mubr.bf16.gmra.mrb[0].mxu0 %v7108
      %v7356 = vpop.f32.mrb[0].mxu0
      %v7357 = vadd.f32 0.0, %v7356
      %v7358 = vpop.f32.mrb[0].mxu0
      %v7359 = vpop.f32.mrb[0].mxu0
      %v7360 = vadd.f32 0.0, %v7359
      %v7361 = vpop.f32.mrb[0].mxu0
      %7362 = vmatprep.mubr.bf16.mxu0 0
      %7363 = vmatmul.mubr.bf16.gmra.mrb[0].mxu0 %v7111
      %v7364 = vpop.f32.mrb[0].mxu0
      %v7365 = vadd.f32 0.0, %v7364
      %v7366 = vpop.f32.mrb[0].mxu0
      %v7367 = vpop.f32.mrb[0].mxu0
      %v7368 = vadd.f32 0.0, %v7367
      %v7369 = vpop.f32.mrb[0].mxu0
      %7370 = vmatprep.mubr.bf16.mxu0 0
      %7371 = vmatmul.mubr.bf16.gmra.mrb[0].mxu0 %v7114
      %v7372 = vpop.f32.mrb[0].mxu0
      %v7373 = vadd.f32 0.0, %v7372
      %v7374 = vpop.f32.mrb[0].mxu0
      %v7375 = vpop.f32.mrb[0].mxu0
      %v7376 = vadd.f32 0.0, %v7375
      %v7377 = vpop.f32.mrb[0].mxu0
      %7378 = vmatprep.mubr.bf16.mxu0 0
      %7379 = vmatmul.mubr.bf16.gmra.mrb[0].mxu0 %v7117
      %v7380 = vpop.f32.mrb[0].mxu0
      %v7381 = vadd.f32 0.0, %v7380
      %v7382 = vpop.f32.mrb[0].mxu0
      %v7383 = vpop.f32.mrb[0].mxu0
      %v7384 = vadd.f32 0.0, %v7383
      %v7385 = vpop.f32.mrb[0].mxu0
      %7386 = vmatprep.mubr.bf16.mxu0 0
      %7387 = vmatmul.mubr.bf16.gmra.mrb[0].mxu0 %v7120
      %v7388 = vpop.f32.mrb[0].mxu0
      %v7389 = vadd.f32 0.0, %v7388
      %v7390 = vpop.f32.mrb[0].mxu0
      %v7391 = vpop.f32.mrb[0].mxu0
      %v7392 = vadd.f32 0.0, %v7391
      %v7393 = vpop.f32.mrb[0].mxu0
      %7394 = vmatprep.mubr.bf16.mxu0 0
      %7395 = vmatmul.mubr.bf16.gmra.mrb[0].mxu0 %v7123
      %v7396 = vpop.f32.mrb[0].mxu0
      %v7397 = vadd.f32 0.0, %v7396
      %v7398 = vpop.f32.mrb[0].mxu0
      %v7399 = vpop.f32.mrb[0].mxu0
      %v7400 = vadd.f32 0.0, %v7399
      %v7401 = vpop.f32.mrb[0].mxu0
      %7402 = vmatprep.mubr.bf16.mxu0 0
      %7403 = vmatmul.mubr.bf16.gmra.mrb[0].mxu0 %v7126
      %v7404 = vpop.f32.mrb[0].mxu0
      %v7405 = vadd.f32 0.0, %v7404
      %v7406 = vpop.f32.mrb[0].mxu0
      %v7407 = vpop.f32.mrb[0].mxu0
      %v7408 = vadd.f32 0.0, %v7407
      %v7409 = vpop.f32.mrb[0].mxu0
      %7410 = vmatprep.mubr.bf16.mxu0 0
      %7411 = vmatmul.mubr.bf16.gmra.mrb[0].mxu0 %v7129
      %v7412 = vpop.f32.mrb[0].mxu0
      %v7413 = vadd.f32 0.0, %v7412
      %v7414 = vpop.f32.mrb[0].mxu0
      %v7415 = vpop.f32.mrb[0].mxu0
      %v7416 = vadd.f32 0.0, %v7415
      %v7417 = vpop.f32.mrb[0].mxu0
      %7418 = vmatprep.mubr.bf16.mxu0 0
      %7419 = vmatmul.mubr.bf16.gmra.mrb[0].mxu0 %v7132
      %v7420 = vpop.f32.mrb[0].mxu0
      %v7421 = vadd.f32 0.0, %v7420
      %v7422 = vpop.f32.mrb[0].mxu0
      %v7423 = vpop.f32.mrb[0].mxu0
      %v7424 = vadd.f32 0.0, %v7423
      %v7425 = vpop.f32.mrb[0].mxu0
      %7426 = vmatprep.mubr.bf16.mxu0 0
      %7427 = vmatmul.mubr.bf16.gmra.mrb[0].mxu0 %v7135
      %v7428 = vpop.f32.mrb[0].mxu0
      %v7429 = vadd.f32 0.0, %v7428
      %v7430 = vpop.f32.mrb[0].mxu0
      %v7431 = vpop.f32.mrb[0].mxu0
      %v7432 = vadd.f32 0.0, %v7431
      %v7433 = vpop.f32.mrb[0].mxu0
      %7434 = vmatprep.mubr.bf16.mxu0 0
      %7435 = vmatmul.mubr.bf16.gmra.mrb[0].mxu0 %v7138
      %v7436 = vpop.f32.mrb[0].mxu0
      %v7437 = vadd.f32 0.0, %v7436
      %v7438 = vpop.f32.mrb[0].mxu0
      %v7439 = vpop.f32.mrb[0].mxu0
      %v7440 = vadd.f32 0.0, %v7439
      %v7441 = vpop.f32.mrb[0].mxu0
      %7442 = vmatprep.mubr.bf16.mxu0 0
      %7443 = vmatmul.mubr.bf16.gmra.mrb[0].mxu0 %v7141
      %v7444 = vpop.f32.mrb[0].mxu0
      %v7445 = vadd.f32 0.0, %v7444
      %v7446 = vpop.f32.mrb[0].mxu0
      %v7447 = vpop.f32.mrb[0].mxu0
      %v7448 = vadd.f32 0.0, %v7447
      %v7449 = vpop.f32.mrb[0].mxu0
      %7450 = vmatprep.mubr.bf16.mxu0 0
      %7451 = vmatmul.mubr.bf16.gmra.mrb[0].mxu0 %v7144
      %v7452 = vpop.f32.mrb[0].mxu0
      %v7453 = vadd.f32 0.0, %v7452
      %v7454 = vpop.f32.mrb[0].mxu0
      %v7455 = vpop.f32.mrb[0].mxu0
      %v7456 = vadd.f32 0.0, %v7455
      %v7457 = vpop.f32.mrb[0].mxu0
      %7458 = vmatprep.mubr.bf16.mxu0 0
      %7459 = vmatmul.mubr.bf16.gmra.mrb[0].mxu0 %v7147
      %v7460 = vpop.f32.mrb[0].mxu0
      %v7461 = vadd.f32 0.0, %v7460
      %v7462 = vpop.f32.mrb[0].mxu0
      %v7463 = vpop.f32.mrb[0].mxu0
      %v7464 = vadd.f32 0.0, %v7463
      %v7465 = vpop.f32.mrb[0].mxu0
      %7466 = vmatprep.mubr.bf16.mxu0 0
      %7467 = vmatmul.mubr.bf16.gmra.mrb[0].mxu0 %v7150
      %v7468 = vpop.f32.mrb[0].mxu0
      %v7469 = vadd.f32 0.0, %v7468
      %v7470 = vpop.f32.mrb[0].mxu0
      %v7471 = vpop.f32.mrb[0].mxu0
      %v7472 = vadd.f32 0.0, %v7471
      %v7473 = vpop.f32.mrb[0].mxu0
      %7474 = vmatprep.mubr.bf16.mxu0 0
      %7475 = vmatmul.mubr.bf16.gmra.mrb[0].mxu0 %v7153
      %v7476 = vpop.f32.mrb[0].mxu0
      %v7477 = vadd.f32 0.0, %v7476
      %v7478 = vpop.f32.mrb[0].mxu0
      %v7479 = vpop.f32.mrb[0].mxu0
      %v7480 = vadd.f32 0.0, %v7479
      %v7481 = vpop.f32.mrb[0].mxu0
      %7482 = vmatprep.mubr.bf16.mxu0 0
      %7483 = vmatmul.mubr.bf16.gmra.mrb[0].mxu0 %v7156
      %v7484 = vpop.f32.mrb[0].mxu0
      %v7485 = vadd.f32 0.0, %v7484
      %v7486 = vpop.f32.mrb[0].mxu0
      %v7487 = vpop.f32.mrb[0].mxu0
      %v7488 = vadd.f32 0.0, %v7487
      %v7489 = vpop.f32.mrb[0].mxu0
      %7490 = vmatprep.mubr.bf16.mxu0 0
      %7491 = vmatmul.mubr.bf16.gmra.mrb[0].mxu0 %v7159
      %v7492 = vpop.f32.mrb[0].mxu0
      %v7493 = vadd.f32 0.0, %v7492
      %v7494 = vpop.f32.mrb[0].mxu0
      %v7495 = vpop.f32.mrb[0].mxu0
      %v7496 = vadd.f32 0.0, %v7495
      %v7497 = vpop.f32.mrb[0].mxu0
      %7498 = vmatprep.mubr.bf16.mxu0 0
      %7499 = vmatmul.mubr.bf16.gmra.mrb[0].mxu0 %v7162
      %v7500 = vpop.f32.mrb[0].mxu0
      %v7501 = vadd.f32 0.0, %v7500
      %v7502 = vpop.f32.mrb[0].mxu0
      %v7503 = vpop.f32.mrb[0].mxu0
      %v7504 = vadd.f32 0.0, %v7503
      %v7505 = vpop.f32.mrb[0].mxu0
      %7506 = vmatprep.mubr.bf16.mxu0 0
      %7507 = vmatmul.mubr.bf16.gmra.mrb[0].mxu0 %v7165
      %v7508 = vpop.f32.mrb[0].mxu0
      %v7509 = vadd.f32 0.0, %v7508
      %v7510 = vpop.f32.mrb[0].mxu0
      %v7511 = vpop.f32.mrb[0].mxu0
      %v7512 = vadd.f32 0.0, %v7511
      %v7513 = vpop.f32.mrb[0].mxu0
      %7514 = vmatprep.mubr.bf16.mxu0 0
      %7515 = vmatmul.mubr.bf16.gmra.mrb[0].mxu0 %v7168
      %v7516 = vpop.f32.mrb[0].mxu0
      %v7517 = vadd.f32 0.0, %v7516
      %v7518 = vpop.f32.mrb[0].mxu0
      %v7519 = vpop.f32.mrb[0].mxu0
      %v7520 = vadd.f32 0.0, %v7519
      %v7521 = vpop.f32.mrb[0].mxu0
      %7522 = vmatprep.mubr.bf16.mxu0 0
      %7523 = vmatmul.mubr.bf16.gmra.mrb[0].mxu0 %v7171
      %v7524 = vpop.f32.mrb[0].mxu0
      %v7525 = vadd.f32 0.0, %v7524
      %v7526 = vpop.f32.mrb[0].mxu0
      %v7527 = vpop.f32.mrb[0].mxu0
      %v7528 = vadd.f32 0.0, %v7527
      %v7529 = vpop.f32.mrb[0].mxu0
      %7530 = vmatprep.mubr.bf16.mxu0 0
      %7531 = vmatmul.mubr.bf16.gmra.mrb[0].mxu0 %v7174
      %v7532 = vpop.f32.mrb[0].mxu0
      %v7533 = vadd.f32 0.0, %v7532
      %v7534 = vpop.f32.mrb[0].mxu0
      %v7535 = vpop.f32.mrb[0].mxu0
      %v7536 = vadd.f32 0.0, %v7535
      %v7537 = vpop.f32.mrb[0].mxu0
      %7538 = vmatprep.mubr.bf16.mxu0 0
      %7539 = vmatmul.mubr.bf16.gmra.mrb[0].mxu0 %v7177
      %v7540 = vpop.f32.mrb[0].mxu0
      %v7541 = vadd.f32 0.0, %v7540
      %v7542 = vpop.f32.mrb[0].mxu0
      %v7543 = vpop.f32.mrb[0].mxu0
      %v7544 = vadd.f32 0.0, %v7543
      %v7545 = vpop.f32.mrb[0].mxu0
      %7546 = vmatprep.mubr.bf16.mxu0 0
      %7547 = vmatmul.mubr.bf16.gmra.mrb[0].mxu0 %v7180
      %v7548 = vpop.f32.mrb[0].mxu0
      %v7549 = vadd.f32 0.0, %v7548
      %v7550 = vpop.f32.mrb[0].mxu0
      %v7551 = vpop.f32.mrb[0].mxu0
      %v7552 = vadd.f32 0.0, %v7551
      %v7553 = vpop.f32.mrb[0].mxu0
      %7554 = vmatprep.mubr.bf16.mxu0 0
      %7555 = vmatmul.mubr.bf16.gmra.mrb[0].mxu0 %v7183
      %v7556 = vpop.f32.mrb[0].mxu0
      %v7557 = vadd.f32 0.0, %v7556
      %v7558 = vpop.f32.mrb[0].mxu0
      %v7559 = vpop.f32.mrb[0].mxu0
      %v7560 = vadd.f32 0.0, %v7559
      %v7561 = vpop.f32.mrb[0].mxu0
      %7562 = vmatprep.mubr.bf16.mxu0 0
      %7563 = vmatmul.mubr.bf16.gmra.mrb[0].mxu0 %v7186
      %v7564 = vpop.f32.mrb[0].mxu0
      %v7565 = vadd.f32 0.0, %v7564
      %v7566 = vpop.f32.mrb[0].mxu0
      %v7567 = vpop.f32.mrb[0].mxu0
      %v7568 = vadd.f32 0.0, %v7567
      %v7569 = vpop.f32.mrb[0].mxu0
      %7570 = vmatprep.mubr.bf16.mxu0 0
      %7571 = vmatmul.mubr.bf16.gmra.mrb[0].mxu0 %v7189
      %v7572 = vpop.f32.mrb[0].mxu0
      %v7573 = vadd.f32 0.0, %v7572
      %v7574 = vpop.f32.mrb[0].mxu0
      %v7575 = vpop.f32.mrb[0].mxu0
      %v7576 = vadd.f32 0.0, %v7575
      %v7577 = vpop.f32.mrb[0].mxu0
      %7578 = vmatprep.mubr.bf16.mxu0 0
      %7579 = vmatmul.mubr.bf16.gmra.mrb[0].mxu0 %v7192
      %v7580 = vpop.f32.mrb[0].mxu0
      %v7581 = vadd.f32 0.0, %v7580
      %v7582 = vpop.f32.mrb[0].mxu0
      %v7583 = vpop.f32.mrb[0].mxu0
      %v7584 = vadd.f32 0.0, %v7583
      %v7585 = vpop.f32.mrb[0].mxu0
      %7586 = vmatprep.mubr.bf16.mxu0 0
      %7587 = vmatmul.mubr.bf16.gmra.mrb[0].mxu0 %v7195
      %v7588 = vpop.f32.mrb[0].mxu0
      %v7589 = vadd.f32 0.0, %v7588
      %v7590 = vpop.f32.mrb[0].mxu0
      %v7591 = vpop.f32.mrb[0].mxu0
      %v7592 = vadd.f32 0.0, %v7591
      %v7593 = vpop.f32.mrb[0].mxu0
      %7594 = vmatprep.mubr.bf16.mxu0 0
      %7595 = vmatmul.mubr.bf16.gmra.mrb[0].mxu0 %v7198
      %v7596 = vpop.f32.mrb[0].mxu0
      %v7597 = vadd.f32 0.0, %v7596
      %v7598 = vpop.f32.mrb[0].mxu0
      %v7599 = vpop.f32.mrb[0].mxu0
      %v7600 = vadd.f32 0.0, %v7599
      %v7601 = vpop.f32.mrb[0].mxu0
      %7602 = vmatprep.mubr.bf16.mxu0 0
      %7603 = vmatmul.mubr.bf16.gmra.mrb[0].mxu0 %v7201
      %v7604 = vpop.f32.mrb[0].mxu0
      %v7605 = vadd.f32 0.0, %v7604
      %v7606 = vpop.f32.mrb[0].mxu0
      %v7607 = vpop.f32.mrb[0].mxu0
      %v7608 = vadd.f32 0.0, %v7607
      %v7609 = vpop.f32.mrb[0].mxu0
      %7610 = vmatprep.mubr.bf16.mxu0 0
      %7611 = vmatmul.mubr.bf16.gmra.mrb[0].mxu0 %v7204
      %v7612 = vpop.f32.mrb[0].mxu0
      %v7613 = vadd.f32 0.0, %v7612
      %v7614 = vpop.f32.mrb[0].mxu0
      %v7615 = vpop.f32.mrb[0].mxu0
      %v7616 = vadd.f32 0.0, %v7615
      %v7617 = vpop.f32.mrb[0].mxu0
      %7618 = vmatprep.mubr.bf16.mxu0 0
      %7619 = vmatmul.mubr.bf16.gmra.mrb[0].mxu0 %v7207
      %v7620 = vpop.f32.mrb[0].mxu0
      %v7621 = vadd.f32 0.0, %v7620
      %v7622 = vpop.f32.mrb[0].mxu0
      %v7623 = vpop.f32.mrb[0].mxu0
      %v7624 = vadd.f32 0.0, %v7623
      %v7625 = vpop.f32.mrb[0].mxu0
      %7626 = vmatprep.mubr.bf16.mxu0 0
      %7627 = vmatmul.mubr.bf16.gmra.mrb[0].mxu0 %v7210
      %v7628 = vpop.f32.mrb[0].mxu0
      %v7629 = vadd.f32 0.0, %v7628
      %v7630 = vpop.f32.mrb[0].mxu0
      %v7631 = vpop.f32.mrb[0].mxu0
      %v7632 = vadd.f32 0.0, %v7631
      %v7633 = vpop.f32.mrb[0].mxu0
      %7634 = vmatprep.mubr.bf16.mxu0 0
      %7635 = vmatmul.mubr.bf16.gmra.mrb[0].mxu0 %v7213
      %v7636 = vpop.f32.mrb[0].mxu0
      %v7637 = vadd.f32 0.0, %v7636
      %v7638 = vpop.f32.mrb[0].mxu0
      %v7639 = vpop.f32.mrb[0].mxu0
      %v7640 = vadd.f32 0.0, %v7639
      %v7641 = vpop.f32.mrb[0].mxu0
      %7642 = vmatprep.mubr.bf16.mxu0 0
      %7643 = vmatmul.mubr.bf16.gmra.mrb[0].mxu0 %v7216
      %v7644 = vpop.f32.mrb[0].mxu0
      %v7645 = vadd.f32 0.0, %v7644
      %v7646 = vpop.f32.mrb[0].mxu0
      %v7647 = vpop.f32.mrb[0].mxu0
      %v7648 = vadd.f32 0.0, %v7647
      %v7649 = vpop.f32.mrb[0].mxu0
      %7650 = vmatprep.mubr.bf16.mxu0 0
      %7651 = vmatmul.mubr.bf16.gmra.mrb[0].mxu0 %v7219
      %v7652 = vpop.f32.mrb[0].mxu0
      %v7653 = vadd.f32 0.0, %v7652
      %v7654 = vpop.f32.mrb[0].mxu0
      %v7655 = vpop.f32.mrb[0].mxu0
      %v7656 = vadd.f32 0.0, %v7655
      %v7657 = vpop.f32.mrb[0].mxu0
      %7658 = vmatprep.mubr.bf16.mxu0 0
      %7659 = vmatmul.mubr.bf16.gmra.mrb[0].mxu0 %v7222
      %v7660 = vpop.f32.mrb[0].mxu0
      %v7661 = vadd.f32 0.0, %v7660
      %v7662 = vpop.f32.mrb[0].mxu0
      %v7663 = vpop.f32.mrb[0].mxu0
      %v7664 = vadd.f32 0.0, %v7663
      %v7665 = vpop.f32.mrb[0].mxu0
      %7666 = vmatprep.mubr.bf16.mxu0 0
      %7667 = vmatmul.mubr.bf16.gmra.mrb[0].mxu0 %v7225
      %v7668 = vpop.f32.mrb[0].mxu0
      %v7669 = vadd.f32 0.0, %v7668
      %v7670 = vpop.f32.mrb[0].mxu0
      %v7671 = vpop.f32.mrb[0].mxu0
      %v7672 = vadd.f32 0.0, %v7671
      %v7673 = vpop.f32.mrb[0].mxu0
      %7674 = vmatprep.mubr.bf16.mxu0 0
      %7675 = vmatmul.mubr.bf16.gmra.mrb[0].mxu0 %v7228
      %v7676 = vpop.f32.mrb[0].mxu0
      %v7677 = vadd.f32 0.0, %v7676
      %v7678 = vpop.f32.mrb[0].mxu0
      %v7679 = vpop.f32.mrb[0].mxu0
      %v7680 = vadd.f32 0.0, %v7679
      %v7681 = vpop.f32.mrb[0].mxu0
      %7682 = vmatprep.mubr.bf16.mxu0 0
      %7683 = vmatmul.mubr.bf16.gmra.mrb[0].mxu0 %v7231
      %v7684 = vpop.f32.mrb[0].mxu0
      %v7685 = vadd.f32 0.0, %v7684
      %v7686 = vpop.f32.mrb[0].mxu0
      %v7687 = vpop.f32.mrb[0].mxu0
      %v7688 = vadd.f32 0.0, %v7687
      %v7689 = vpop.f32.mrb[0].mxu0
      %7690 = vmatprep.mubr.bf16.mxu0 0
      %7691 = vmatmul.mubr.bf16.gmra.mrb[0].mxu0 %v7234
      %v7692 = vpop.f32.mrb[0].mxu0
      %v7693 = vadd.f32 0.0, %v7692
      %v7694 = vpop.f32.mrb[0].mxu0
      %v7695 = vpop.f32.mrb[0].mxu0
      %v7696 = vadd.f32 0.0, %v7695
      %v7697 = vpop.f32.mrb[0].mxu0
      %7698 = vmatprep.mubr.bf16.mxu0 0
      %7699 = vmatmul.mubr.bf16.gmra.mrb[0].mxu0 %v7237
      %v7700 = vpop.f32.mrb[0].mxu0
      %v7701 = vadd.f32 0.0, %v7700
      %v7702 = vpop.f32.mrb[0].mxu0
      %v7703 = vpop.f32.mrb[0].mxu0
      %v7704 = vadd.f32 0.0, %v7703
      %v7705 = vpop.f32.mrb[0].mxu0
      %7706 = vmatprep.mubr.bf16.mxu0 0
      %7707 = vmatmul.mubr.bf16.gmra.mrb[0].mxu0 %v7240
      %v7708 = vpop.f32.mrb[0].mxu0
      %v7709 = vadd.f32 0.0, %v7708
      %v7710 = vpop.f32.mrb[0].mxu0
      %v7711 = vpop.f32.mrb[0].mxu0
      %v7712 = vadd.f32 0.0, %v7711
      %v7713 = vpop.f32.mrb[0].mxu0
      %7714 = vmatprep.mubr.bf16.mxu0 0
      %7715 = vmatmul.mubr.bf16.gmra.mrb[0].mxu0 %v7243
      %v7716 = vpop.f32.mrb[0].mxu0
      %v7717 = vadd.f32 0.0, %v7716
      %v7718 = vpop.f32.mrb[0].mxu0
      %v7719 = vpop.f32.mrb[0].mxu0
      %v7720 = vadd.f32 0.0, %v7719
      %v7721 = vpop.f32.mrb[0].mxu0
      %7722 = vmatprep.mubr.bf16.mxu0 0
      %7723 = vmatmul.mubr.bf16.gmra.mrb[0].mxu0 %v7246
      %v7724 = vpop.f32.mrb[0].mxu0
      %v7725 = vadd.f32 0.0, %v7724
      %v7726 = vpop.f32.mrb[0].mxu0
      %v7727 = vpop.f32.mrb[0].mxu0
      %v7728 = vadd.f32 0.0, %v7727
      %v7729 = vpop.f32.mrb[0].mxu0
      %7730 = vmatprep.mubr.bf16.mxu0 0
      %7731 = vmatmul.mubr.bf16.gmra.mrb[0].mxu0 %v7249
      %v7732 = vpop.f32.mrb[0].mxu0
      %v7733 = vadd.f32 0.0, %v7732
      %v7734 = vpop.f32.mrb[0].mxu0
      %v7735 = vpop.f32.mrb[0].mxu0
      %v7736 = vadd.f32 0.0, %v7735
      %v7737 = vpop.f32.mrb[0].mxu0
      %7738 = vmatprep.mubr.bf16.mxu0 0
      %7739 = vmatmul.mubr.bf16.gmra.mrb[0].mxu0 %v7252
      %v7740 = vpop.f32.mrb[0].mxu0
      %v7741 = vadd.f32 0.0, %v7740
      %v7742 = vpop.f32.mrb[0].mxu0
      %v7743 = vpop.f32.mrb[0].mxu0
      %v7744 = vadd.f32 0.0, %v7743
      %v7745 = vpop.f32.mrb[0].mxu0
      %7746 = vmatprep.mubr.bf16.mxu0 0
      %7747 = vmatmul.mubr.bf16.gmra.mrb[0].mxu0 %v7255
      %v7748 = vpop.f32.mrb[0].mxu0
      %v7749 = vadd.f32 0.0, %v7748
      %v7750 = vpop.f32.mrb[0].mxu0
      %v7751 = vpop.f32.mrb[0].mxu0
      %v7752 = vadd.f32 0.0, %v7751
      %v7753 = vpop.f32.mrb[0].mxu0
      %7754 = vmatprep.mubr.bf16.mxu0 0
      %7755 = vmatmul.mubr.bf16.gmra.mrb[0].mxu0 %v7258
      %v7756 = vpop.f32.mrb[0].mxu0
      %v7757 = vadd.f32 0.0, %v7756
      %v7758 = vpop.f32.mrb[0].mxu0
      %v7759 = vpop.f32.mrb[0].mxu0
      %v7760 = vadd.f32 0.0, %v7759
      %v7761 = vpop.f32.mrb[0].mxu0
      %7762 = vmatprep.mubr.bf16.mxu0 0
      %7763 = vmatmul.mubr.bf16.gmra.mrb[0].mxu0 %v7261
      %v7764 = vpop.f32.mrb[0].mxu0
      %v7765 = vadd.f32 0.0, %v7764
      %v7766 = vpop.f32.mrb[0].mxu0
      %v7767 = vpop.f32.mrb[0].mxu0
      %v7768 = vadd.f32 0.0, %v7767
      %v7769 = vpop.f32.mrb[0].mxu0
      %7770 = vmatprep.mubr.bf16.mxu0 0
      %7771 = vmatmul.mubr.bf16.gmra.mrb[0].mxu0 %v7264
      %v7772 = vpop.f32.mrb[0].mxu0
      %v7773 = vadd.f32 0.0, %v7772
      %v7774 = vpop.f32.mrb[0].mxu0
      %v7775 = vpop.f32.mrb[0].mxu0
      %v7776 = vadd.f32 0.0, %v7775
      %v7777 = vpop.f32.mrb[0].mxu0
      %7778 = vmatprep.mubr.bf16.mxu0 0
      %7779 = vmatmul.mubr.bf16.gmra.mrb[0].mxu0 %v7267
      %v7780 = vpop.f32.mrb[0].mxu0
      %v7781 = vadd.f32 0.0, %v7780
      %v7782 = vpop.f32.mrb[0].mxu0
      %v7783 = vpop.f32.mrb[0].mxu0
      %v7784 = vadd.f32 0.0, %v7783
      %v7785 = vpop.f32.mrb[0].mxu0
      %7786 = vmatprep.mubr.bf16.mxu0 0
      %7787 = vmatmul.mubr.bf16.gmra.mrb[0].mxu0 %v7270
      %v7788 = vpop.f32.mrb[0].mxu0
      %v7789 = vadd.f32 0.0, %v7788
      %v7790 = vpop.f32.mrb[0].mxu0
      %v7791 = vpop.f32.mrb[0].mxu0
      %v7792 = vadd.f32 0.0, %v7791
      %v7793 = vpop.f32.mrb[0].mxu0
      %7794 = vmatprep.mubr.bf16.mxu0 0
      %7795 = vmatmul.mubr.bf16.gmra.mrb[0].mxu0 %v7273
      %v7796 = vpop.f32.mrb[0].mxu0
      %v7797 = vadd.f32 0.0, %v7796
      %v7798 = vpop.f32.mrb[0].mxu0
      %v7799 = vpop.f32.mrb[0].mxu0
      %v7800 = vadd.f32 0.0, %v7799
      %v7801 = vpop.f32.mrb[0].mxu0
      %7802 = vmatprep.mubr.bf16.mxu0 0
      %7803 = vmatmul.mubr.bf16.gmra.mrb[0].mxu0 %v7276
      %v7804 = vpop.f32.mrb[0].mxu0
      %v7805 = vadd.f32 0.0, %v7804
      %v7806 = vpop.f32.mrb[0].mxu0
      %v7807 = vpop.f32.mrb[0].mxu0
      %v7808 = vadd.f32 0.0, %v7807
      %v7809 = vpop.f32.mrb[0].mxu0
      %7810 = vmatprep.mubr.bf16.mxu0 0
      %7811 = vmatmul.mubr.bf16.gmra.mrb[0].mxu0 %v7279
      %v7812 = vpop.f32.mrb[0].mxu0
      %v7813 = vadd.f32 0.0, %v7812
      %v7814 = vpop.f32.mrb[0].mxu0
      %v7815 = vpop.f32.mrb[0].mxu0
      %v7816 = vadd.f32 0.0, %v7815
      %v7817 = vpop.f32.mrb[0].mxu0
      %7818 = vmatprep.mubr.bf16.mxu0 0
      %7819 = vmatmul.mubr.bf16.gmra.mrb[0].mxu0 %v7282
      %v7820 = vpop.f32.mrb[0].mxu0
      %v7821 = vadd.f32 0.0, %v7820
      %v7822 = vpop.f32.mrb[0].mxu0
      %v7823 = vpop.f32.mrb[0].mxu0
      %v7824 = vadd.f32 0.0, %v7823
      %v7825 = vpop.f32.mrb[0].mxu0
      %7826 = vmatprep.mubr.bf16.mxu0 0
      %7827 = vmatmul.mubr.bf16.gmra.mrb[0].mxu0 %v7285
      %v7828 = vpop.f32.mrb[0].mxu0
      %v7829 = vadd.f32 0.0, %v7828
      %v7830 = vpop.f32.mrb[0].mxu0
      %v7831 = vpop.f32.mrb[0].mxu0
      %v7832 = vadd.f32 0.0, %v7831
      %v7833 = vpop.f32.mrb[0].mxu0
      %7834 = vdwg.mxu0
      %v7835 = vadd.f32 %v6835, %v7325
      %v7836 = vadd.f32 %v6836, %v7328
      %v7837 = vadd.f32 %v6837, %v7333
      %v7838 = vadd.f32 %v6838, %v7336
      %v7839 = vadd.f32 %v6839, %v7341
      %v7840 = vadd.f32 %v6840, %v7344
      %v7841 = vadd.f32 %v6841, %v7349
      %v7842 = vadd.f32 %v6842, %v7352
      %v7843 = vadd.f32 %v6843, %v7357
      %v7844 = vadd.f32 %v6844, %v7360
      %v7845 = vadd.f32 %v6845, %v7365
      %v7846 = vadd.f32 %v6846, %v7368
      %v7847 = vadd.f32 %v6847, %v7373
      %v7848 = vadd.f32 %v6848, %v7376
      %v7849 = vadd.f32 %v6849, %v7381
      %v7850 = vadd.f32 %v6850, %v7384
      %v7851 = vadd.f32 %v6851, %v7389
      %v7852 = vadd.f32 %v6852, %v7392
      %v7853 = vadd.f32 %v6853, %v7397
      %v7854 = vadd.f32 %v6854, %v7400
      %v7855 = vadd.f32 %v6855, %v7405
      %v7856 = vadd.f32 %v6856, %v7408
      %v7857 = vadd.f32 %v6857, %v7413
      %v7858 = vadd.f32 %v6858, %v7416
      %v7859 = vadd.f32 %v6859, %v7421
      %v7860 = vadd.f32 %v6860, %v7424
      %v7861 = vadd.f32 %v6861, %v7429
      %v7862 = vadd.f32 %v6862, %v7432
      %v7863 = vadd.f32 %v6863, %v7437
      %v7864 = vadd.f32 %v6864, %v7440
      %v7865 = vadd.f32 %v6865, %v7445
      %v7866 = vadd.f32 %v6866, %v7448
      %v7867 = vadd.f32 %v6867, %v7453
      %v7868 = vadd.f32 %v6868, %v7456
      %v7869 = vadd.f32 %v6869, %v7461
      %v7870 = vadd.f32 %v6870, %v7464
      %v7871 = vadd.f32 %v6871, %v7469
      %v7872 = vadd.f32 %v6872, %v7472
      %v7873 = vadd.f32 %v6873, %v7477
      %v7874 = vadd.f32 %v6874, %v7480
      %v7875 = vadd.f32 %v6875, %v7485
      %v7876 = vadd.f32 %v6876, %v7488
      %v7877 = vadd.f32 %v6877, %v7493
      %v7878 = vadd.f32 %v6878, %v7496
      %v7879 = vadd.f32 %v6879, %v7501
      %v7880 = vadd.f32 %v6880, %v7504
      %v7881 = vadd.f32 %v6881, %v7509
      %v7882 = vadd.f32 %v6882, %v7512
      %v7883 = vadd.f32 %v6883, %v7517
      %v7884 = vadd.f32 %v6884, %v7520
      %v7885 = vadd.f32 %v6885, %v7525
      %v7886 = vadd.f32 %v6886, %v7528
      %v7887 = vadd.f32 %v6887, %v7533
      %v7888 = vadd.f32 %v6888, %v7536
      %v7889 = vadd.f32 %v6889, %v7541
      %v7890 = vadd.f32 %v6890, %v7544
      %v7891 = vadd.f32 %v6891, %v7549
      %v7892 = vadd.f32 %v6892, %v7552
      %v7893 = vadd.f32 %v6893, %v7557
      %v7894 = vadd.f32 %v6894, %v7560
      %v7895 = vadd.f32 %v6895, %v7565
      %v7896 = vadd.f32 %v6896, %v7568
      %v7897 = vadd.f32 %v6897, %v7573
      %v7898 = vadd.f32 %v6898, %v7576
      %v7899 = vadd.f32 %v6899, %v7581
      %v7900 = vadd.f32 %v6900, %v7584
      %v7901 = vadd.f32 %v6901, %v7589
      %v7902 = vadd.f32 %v6902, %v7592
      %v7903 = vadd.f32 %v6903, %v7597
      %v7904 = vadd.f32 %v6904, %v7600
      %v7905 = vadd.f32 %v6905, %v7605
      %v7906 = vadd.f32 %v6906, %v7608
      %v7907 = vadd.f32 %v6907, %v7613
      %v7908 = vadd.f32 %v6908, %v7616
      %v7909 = vadd.f32 %v6909, %v7621
      %v7910 = vadd.f32 %v6910, %v7624
      %v7911 = vadd.f32 %v6911, %v7629
      %v7912 = vadd.f32 %v6912, %v7632
      %v7913 = vadd.f32 %v6913, %v7637
      %v7914 = vadd.f32 %v6914, %v7640
      %v7915 = vadd.f32 %v6915, %v7645
      %v7916 = vadd.f32 %v6916, %v7648
      %v7917 = vadd.f32 %v6917, %v7653
      %v7918 = vadd.f32 %v6918, %v7656
      %v7919 = vadd.f32 %v6919, %v7661
      %v7920 = vadd.f32 %v6920, %v7664
      %v7921 = vadd.f32 %v6921, %v7669
      %v7922 = vadd.f32 %v6922, %v7672
      %v7923 = vadd.f32 %v6923, %v7677
      %v7924 = vadd.f32 %v6924, %v7680
      %v7925 = vadd.f32 %v6925, %v7685
      %v7926 = vadd.f32 %v6926, %v7688
      %v7927 = vadd.f32 %v6927, %v7693
      %v7928 = vadd.f32 %v6928, %v7696
      %v7929 = vadd.f32 %v6929, %v7701
      %v7930 = vadd.f32 %v6930, %v7704
      %v7931 = vadd.f32 %v6931, %v7709
      %v7932 = vadd.f32 %v6932, %v7712
      %v7933 = vadd.f32 %v6933, %v7717
      %v7934 = vadd.f32 %v6934, %v7720
      %v7935 = vadd.f32 %v6935, %v7725
      %v7936 = vadd.f32 %v6936, %v7728
      %v7937 = vadd.f32 %v6937, %v7733
      %v7938 = vadd.f32 %v6938, %v7736
      %v7939 = vadd.f32 %v6939, %v7741
      %v7940 = vadd.f32 %v6940, %v7744
      %v7941 = vadd.f32 %v6941, %v7749
      %v7942 = vadd.f32 %v6942, %v7752
      %v7943 = vadd.f32 %v6943, %v7757
      %v7944 = vadd.f32 %v6944, %v7760
      %v7945 = vadd.f32 %v6945, %v7765
      %v7946 = vadd.f32 %v6946, %v7768
      %v7947 = vadd.f32 %v6947, %v7773
      %v7948 = vadd.f32 %v6948, %v7776
      %v7949 = vadd.f32 %v6949, %v7781
      %v7950 = vadd.f32 %v6950, %v7784
      %v7951 = vadd.f32 %v6951, %v7789
      %v7952 = vadd.f32 %v6952, %v7792
      %v7953 = vadd.f32 %v6953, %v7797
      %v7954 = vadd.f32 %v6954, %v7800
      %v7955 = vadd.f32 %v6955, %v7805
      %v7956 = vadd.f32 %v6956, %v7808
      %v7957 = vadd.f32 %v6957, %v7813
      %v7958 = vadd.f32 %v6958, %v7816
      %v7959 = vadd.f32 %v6959, %v7821
      %v7960 = vadd.f32 %v6960, %v7824
      %v7961 = vadd.f32 %v6961, %v7829
      %v7962 = vadd.f32 %v6962, %v7832
      %s7963 = scalar_lea.vmem %s2, 14
      %v7964 = vld [vmem:[%s7963] sm:$0x3]
      %vm7965 = vsmask.f32 4352
      %v7966 = vrot.slane %v768, 3
      %v7967 = vrot.slane %v770, 4
      %v7968 = vor.u32 %v7966, %v7967
      %v7969 = vrot.slane %v779, 3
      %v7970 = vrot.slane %v775, 4
      %v7971 = vor.u32 %v7969, %v7970
      %v7972 = vsel %vm7965, %v7968, %v7971
      %v7973 = vrot.slane %v787, 3
      %v7974 = vrot.slane %v783, 4
      %v7975 = vor.u32 %v7973, %v7974
      %v7976 = vsel %vm7965, %v7971, %v7975
      %v7977 = vrot.slane %v795, 3
      %v7978 = vrot.slane %v791, 4
      %v7979 = vor.u32 %v7977, %v7978
      %v7980 = vsel %vm7965, %v7975, %v7979
      %v7981 = vrot.slane %v803, 3
      %v7982 = vrot.slane %v799, 4
      %v7983 = vor.u32 %v7981, %v7982
      %v7984 = vsel %vm7965, %v7979, %v7983
      %v7985 = vrot.slane %v811, 3
      %v7986 = vrot.slane %v807, 4
      %v7987 = vor.u32 %v7985, %v7986
      %v7988 = vsel %vm7965, %v7983, %v7987
      %v7989 = vrot.slane %v819, 3
      %v7990 = vrot.slane %v815, 4
      %v7991 = vor.u32 %v7989, %v7990
      %v7992 = vsel %vm7965, %v7987, %v7991
      %v7993 = vrot.slane %v827, 3
      %v7994 = vrot.slane %v823, 4
      %v7995 = vor.u32 %v7993, %v7994
      %v7996 = vsel %vm7965, %v7991, %v7995
      %v7997 = vrot.slane %v835, 3
      %v7998 = vrot.slane %v831, 4
      %v7999 = vor.u32 %v7997, %v7998
      %v8000 = vsel %vm7965, %v7995, %v7999
      %v8001 = vrot.slane %v843, 3
      %v8002 = vrot.slane %v839, 4
      %v8003 = vor.u32 %v8001, %v8002
      %v8004 = vsel %vm7965, %v7999, %v8003
      %v8005 = vrot.slane %v851, 3
      %v8006 = vrot.slane %v847, 4
      %v8007 = vor.u32 %v8005, %v8006
      %v8008 = vsel %vm7965, %v8003, %v8007
      %v8009 = vrot.slane %v859, 3
      %v8010 = vrot.slane %v855, 4
      %v8011 = vor.u32 %v8009, %v8010
      %v8012 = vsel %vm7965, %v8007, %v8011
      %v8013 = vrot.slane %v867, 3
      %v8014 = vrot.slane %v863, 4
      %v8015 = vor.u32 %v8013, %v8014
      %v8016 = vsel %vm7965, %v8011, %v8015
      %v8017 = vrot.slane %v875, 3
      %v8018 = vrot.slane %v871, 4
      %v8019 = vor.u32 %v8017, %v8018
      %v8020 = vsel %vm7965, %v8015, %v8019
      %v8021 = vrot.slane %v883, 3
      %v8022 = vrot.slane %v879, 4
      %v8023 = vor.u32 %v8021, %v8022
      %v8024 = vsel %vm7965, %v8019, %v8023
      %v8025 = vrot.slane %v891, 3
      %v8026 = vrot.slane %v887, 4
      %v8027 = vor.u32 %v8025, %v8026
      %v8028 = vsel %vm7965, %v8023, %v8027
      %v8029 = vrot.slane %v899, 3
      %v8030 = vrot.slane %v895, 4
      %v8031 = vor.u32 %v8029, %v8030
      %v8032 = vsel %vm7965, %v8027, %v8031
      %v8033 = vrot.slane %v907, 3
      %v8034 = vrot.slane %v903, 4
      %v8035 = vor.u32 %v8033, %v8034
      %v8036 = vsel %vm7965, %v8031, %v8035
      %v8037 = vrot.slane %v915, 3
      %v8038 = vrot.slane %v911, 4
      %v8039 = vor.u32 %v8037, %v8038
      %v8040 = vsel %vm7965, %v8035, %v8039
      %v8041 = vrot.slane %v923, 3
      %v8042 = vrot.slane %v919, 4
      %v8043 = vor.u32 %v8041, %v8042
      %v8044 = vsel %vm7965, %v8039, %v8043
      %v8045 = vrot.slane %v931, 3
      %v8046 = vrot.slane %v927, 4
      %v8047 = vor.u32 %v8045, %v8046
      %v8048 = vsel %vm7965, %v8043, %v8047
      %v8049 = vrot.slane %v939, 3
      %v8050 = vrot.slane %v935, 4
      %v8051 = vor.u32 %v8049, %v8050
      %v8052 = vsel %vm7965, %v8047, %v8051
      %v8053 = vrot.slane %v947, 3
      %v8054 = vrot.slane %v943, 4
      %v8055 = vor.u32 %v8053, %v8054
      %v8056 = vsel %vm7965, %v8051, %v8055
      %v8057 = vrot.slane %v955, 3
      %v8058 = vrot.slane %v951, 4
      %v8059 = vor.u32 %v8057, %v8058
      %v8060 = vsel %vm7965, %v8055, %v8059
      %v8061 = vrot.slane %v963, 3
      %v8062 = vrot.slane %v959, 4
      %v8063 = vor.u32 %v8061, %v8062
      %v8064 = vsel %vm7965, %v8059, %v8063
      %v8065 = vrot.slane %v971, 3
      %v8066 = vrot.slane %v967, 4
      %v8067 = vor.u32 %v8065, %v8066
      %v8068 = vsel %vm7965, %v8063, %v8067
      %v8069 = vrot.slane %v979, 3
      %v8070 = vrot.slane %v975, 4
      %v8071 = vor.u32 %v8069, %v8070
      %v8072 = vsel %vm7965, %v8067, %v8071
      %v8073 = vrot.slane %v987, 3
      %v8074 = vrot.slane %v983, 4
      %v8075 = vor.u32 %v8073, %v8074
      %v8076 = vsel %vm7965, %v8071, %v8075
      %v8077 = vrot.slane %v995, 3
      %v8078 = vrot.slane %v991, 4
      %v8079 = vor.u32 %v8077, %v8078
      %v8080 = vsel %vm7965, %v8075, %v8079
      %v8081 = vrot.slane %v1003, 3
      %v8082 = vrot.slane %v999, 4
      %v8083 = vor.u32 %v8081, %v8082
      %v8084 = vsel %vm7965, %v8079, %v8083
      %v8085 = vrot.slane %v1011, 3
      %v8086 = vrot.slane %v1007, 4
      %v8087 = vor.u32 %v8085, %v8086
      %v8088 = vsel %vm7965, %v8083, %v8087
      %v8089 = vrot.slane %v1019, 3
      %v8090 = vrot.slane %v1015, 4
      %v8091 = vor.u32 %v8089, %v8090
      %v8092 = vsel %vm7965, %v8087, %v8091
      %v8093 = vrot.slane %v1027, 3
      %v8094 = vrot.slane %v1023, 4
      %v8095 = vor.u32 %v8093, %v8094
      %v8096 = vsel %vm7965, %v8091, %v8095
      %v8097 = vrot.slane %v1035, 3
      %v8098 = vrot.slane %v1031, 4
      %v8099 = vor.u32 %v8097, %v8098
      %v8100 = vsel %vm7965, %v8095, %v8099
      %v8101 = vrot.slane %v1043, 3
      %v8102 = vrot.slane %v1039, 4
      %v8103 = vor.u32 %v8101, %v8102
      %v8104 = vsel %vm7965, %v8099, %v8103
      %v8105 = vrot.slane %v1051, 3
      %v8106 = vrot.slane %v1047, 4
      %v8107 = vor.u32 %v8105, %v8106
      %v8108 = vsel %vm7965, %v8103, %v8107
      %v8109 = vrot.slane %v1059, 3
      %v8110 = vrot.slane %v1055, 4
      %v8111 = vor.u32 %v8109, %v8110
      %v8112 = vsel %vm7965, %v8107, %v8111
      %v8113 = vrot.slane %v1067, 3
      %v8114 = vrot.slane %v1063, 4
      %v8115 = vor.u32 %v8113, %v8114
      %v8116 = vsel %vm7965, %v8111, %v8115
      %v8117 = vrot.slane %v1075, 3
      %v8118 = vrot.slane %v1071, 4
      %v8119 = vor.u32 %v8117, %v8118
      %v8120 = vsel %vm7965, %v8115, %v8119
      %v8121 = vrot.slane %v1083, 3
      %v8122 = vrot.slane %v1079, 4
      %v8123 = vor.u32 %v8121, %v8122
      %v8124 = vsel %vm7965, %v8119, %v8123
      %v8125 = vrot.slane %v1091, 3
      %v8126 = vrot.slane %v1087, 4
      %v8127 = vor.u32 %v8125, %v8126
      %v8128 = vsel %vm7965, %v8123, %v8127
      %v8129 = vrot.slane %v1099, 3
      %v8130 = vrot.slane %v1095, 4
      %v8131 = vor.u32 %v8129, %v8130
      %v8132 = vsel %vm7965, %v8127, %v8131
      %v8133 = vrot.slane %v1107, 3
      %v8134 = vrot.slane %v1103, 4
      %v8135 = vor.u32 %v8133, %v8134
      %v8136 = vsel %vm7965, %v8131, %v8135
      %v8137 = vrot.slane %v1115, 3
      %v8138 = vrot.slane %v1111, 4
      %v8139 = vor.u32 %v8137, %v8138
      %v8140 = vsel %vm7965, %v8135, %v8139
      %v8141 = vrot.slane %v1123, 3
      %v8142 = vrot.slane %v1119, 4
      %v8143 = vor.u32 %v8141, %v8142
      %v8144 = vsel %vm7965, %v8139, %v8143
      %v8145 = vrot.slane %v1131, 3
      %v8146 = vrot.slane %v1127, 4
      %v8147 = vor.u32 %v8145, %v8146
      %v8148 = vsel %vm7965, %v8143, %v8147
      %v8149 = vrot.slane %v1139, 3
      %v8150 = vrot.slane %v1135, 4
      %v8151 = vor.u32 %v8149, %v8150
      %v8152 = vsel %vm7965, %v8147, %v8151
      %v8153 = vrot.slane %v1147, 3
      %v8154 = vrot.slane %v1143, 4
      %v8155 = vor.u32 %v8153, %v8154
      %v8156 = vsel %vm7965, %v8151, %v8155
      %v8157 = vrot.slane %v1155, 3
      %v8158 = vrot.slane %v1151, 4
      %v8159 = vor.u32 %v8157, %v8158
      %v8160 = vsel %vm7965, %v8155, %v8159
      %v8161 = vrot.slane %v1163, 3
      %v8162 = vrot.slane %v1159, 4
      %v8163 = vor.u32 %v8161, %v8162
      %v8164 = vsel %vm7965, %v8159, %v8163
      %v8165 = vrot.slane %v1171, 3
      %v8166 = vrot.slane %v1167, 4
      %v8167 = vor.u32 %v8165, %v8166
      %v8168 = vsel %vm7965, %v8163, %v8167
      %v8169 = vrot.slane %v1179, 3
      %v8170 = vrot.slane %v1175, 4
      %v8171 = vor.u32 %v8169, %v8170
      %v8172 = vsel %vm7965, %v8167, %v8171
      %v8173 = vrot.slane %v1187, 3
      %v8174 = vrot.slane %v1183, 4
      %v8175 = vor.u32 %v8173, %v8174
      %v8176 = vsel %vm7965, %v8171, %v8175
      %v8177 = vrot.slane %v1195, 3
      %v8178 = vrot.slane %v1191, 4
      %v8179 = vor.u32 %v8177, %v8178
      %v8180 = vsel %vm7965, %v8175, %v8179
      %v8181 = vrot.slane %v1203, 3
      %v8182 = vrot.slane %v1199, 4
      %v8183 = vor.u32 %v8181, %v8182
      %v8184 = vsel %vm7965, %v8179, %v8183
      %v8185 = vrot.slane %v1211, 3
      %v8186 = vrot.slane %v1207, 4
      %v8187 = vor.u32 %v8185, %v8186
      %v8188 = vsel %vm7965, %v8183, %v8187
      %v8189 = vrot.slane %v1219, 3
      %v8190 = vrot.slane %v1215, 4
      %v8191 = vor.u32 %v8189, %v8190
      %v8192 = vsel %vm7965, %v8187, %v8191
      %v8193 = vrot.slane %v1227, 3
      %v8194 = vrot.slane %v1223, 4
      %v8195 = vor.u32 %v8193, %v8194
      %v8196 = vsel %vm7965, %v8191, %v8195
      %v8197 = vrot.slane %v1235, 3
      %v8198 = vrot.slane %v1231, 4
      %v8199 = vor.u32 %v8197, %v8198
      %v8200 = vsel %vm7965, %v8195, %v8199
      %v8201 = vrot.slane %v1243, 3
      %v8202 = vrot.slane %v1239, 4
      %v8203 = vor.u32 %v8201, %v8202
      %v8204 = vsel %vm7965, %v8199, %v8203
      %v8205 = vrot.slane %v1251, 3
      %v8206 = vrot.slane %v1247, 4
      %v8207 = vor.u32 %v8205, %v8206
      %v8208 = vsel %vm7965, %v8203, %v8207
      %v8209 = vrot.slane %v1259, 3
      %v8210 = vrot.slane %v1255, 4
      %v8211 = vor.u32 %v8209, %v8210
      %v8212 = vsel %vm7965, %v8207, %v8211
      %v8213 = vrot.slane %v1267, 3
      %v8214 = vrot.slane %v1263, 4
      %v8215 = vor.u32 %v8213, %v8214
      %v8216 = vsel %vm7965, %v8211, %v8215
      %v8217 = vrot.slane %v1275, 3
      %v8218 = vrot.slane %v1271, 4
      %v8219 = vor.u32 %v8217, %v8218
      %v8220 = vsel %vm7965, %v8215, %v8219
      %v8221 = vrot.slane %v3959, 3
      %v8222 = vrot.slane %v1279, 4
      %v8223 = vor.u32 %v8221, %v8222
      %v8224 = vsel %vm7965, %v8219, %v8223
      %v8226 = vsel %vm1283, %v7972, 0
      %v8229 = vsel %vm1283, %v7976, 0
      %v8232 = vsel %vm1283, %v7980, 0
      %v8235 = vsel %vm1283, %v7984, 0
      %v8238 = vsel %vm1283, %v7988, 0
      %v8241 = vsel %vm1283, %v7992, 0
      %v8244 = vsel %vm1283, %v7996, 0
      %v8247 = vsel %vm1283, %v8000, 0
      %v8250 = vsel %vm1283, %v8004, 0
      %v8253 = vsel %vm1283, %v8008, 0
      %v8256 = vsel %vm1283, %v8012, 0
      %v8259 = vsel %vm1283, %v8016, 0
      %v8262 = vsel %vm1283, %v8020, 0
      %v8265 = vsel %vm1283, %v8024, 0
      %v8268 = vsel %vm1283, %v8028, 0
      %v8271 = vsel %vm1283, %v8032, 0
      %v8274 = vsel %vm1283, %v8036, 0
      %v8277 = vsel %vm1283, %v8040, 0
      %v8280 = vsel %vm1283, %v8044, 0
      %v8283 = vsel %vm1283, %v8048, 0
      %v8286 = vsel %vm1283, %v8052, 0
      %v8289 = vsel %vm1283, %v8056, 0
      %v8292 = vsel %vm1283, %v8060, 0
      %v8295 = vsel %vm1283, %v8064, 0
      %v8298 = vsel %vm1283, %v8068, 0
      %v8301 = vsel %vm1283, %v8072, 0
      %v8304 = vsel %vm1283, %v8076, 0
      %v8307 = vsel %vm1283, %v8080, 0
      %v8310 = vsel %vm1283, %v8084, 0
      %v8313 = vsel %vm1283, %v8088, 0
      %v8316 = vsel %vm1283, %v8092, 0
      %v8319 = vsel %vm1283, %v8096, 0
      %v8322 = vsel %vm1283, %v8100, 0
      %v8325 = vsel %vm1283, %v8104, 0
      %v8328 = vsel %vm1283, %v8108, 0
      %v8331 = vsel %vm1283, %v8112, 0
      %v8334 = vsel %vm1283, %v8116, 0
      %v8337 = vsel %vm1283, %v8120, 0
      %v8340 = vsel %vm1283, %v8124, 0
      %v8343 = vsel %vm1283, %v8128, 0
      %v8346 = vsel %vm1283, %v8132, 0
      %v8349 = vsel %vm1283, %v8136, 0
      %v8352 = vsel %vm1283, %v8140, 0
      %v8355 = vsel %vm1283, %v8144, 0
      %v8358 = vsel %vm1283, %v8148, 0
      %v8361 = vsel %vm1283, %v8152, 0
      %v8364 = vsel %vm1283, %v8156, 0
      %v8367 = vsel %vm1283, %v8160, 0
      %v8370 = vsel %vm1283, %v8164, 0
      %v8373 = vsel %vm1283, %v8168, 0
      %v8376 = vsel %vm1283, %v8172, 0
      %v8379 = vsel %vm1283, %v8176, 0
      %v8382 = vsel %vm1283, %v8180, 0
      %v8385 = vsel %vm1283, %v8184, 0
      %v8388 = vsel %vm1283, %v8188, 0
      %v8391 = vsel %vm1283, %v8192, 0
      %v8394 = vsel %vm1283, %v8196, 0
      %v8397 = vsel %vm1283, %v8200, 0
      %v8400 = vsel %vm1283, %v8204, 0
      %v8403 = vsel %vm1283, %v8208, 0
      %v8406 = vsel %vm1283, %v8212, 0
      %v8409 = vsel %vm1283, %v8216, 0
      %v8412 = vsel %vm1283, %v8220, 0
      %v8415 = vsel %vm1283, %v8224, 0
      %v8418 = vsel %vm1476, %v7964, 0
      %8420 = vmatprep.subr.bf16.mxu0 0
      %8421 = vmatpush1.bf16.msra.mxu0 %v8418
      %8422 = vmatprep.subr.bf16.mxu0 0
      %8423 = vmatpush1.bf16.msra.mxu0 0
      %8424 = vmatprep.subr.bf16.mxu0 0
      %8425 = vmatpush1.bf16.msra.mxu0 0
      %8426 = vmatprep.subr.bf16.mxu0 0
      %8427 = vmatpush1.bf16.msra.mxu0 0
      %8428 = vmatprep.subr.bf16.mxu0 0
      %8429 = vmatpush1.bf16.msra.mxu0 0
      %8430 = vmatprep.subr.bf16.mxu0 0
      %8431 = vmatpush1.bf16.msra.mxu0 0
      %8432 = vmatprep.subr.bf16.mxu0 0
      %8433 = vmatpush1.bf16.msra.mxu0 0
      %8434 = vmatprep.subr.bf16.mxu0 0
      %8435 = vmatpush1.bf16.msra.mxu0 0
      %8436 = vmatprep.subr.bf16.mxu0 0
      %8437 = vmatpush1.bf16.msra.mxu0 0
      %8438 = vmatprep.subr.bf16.mxu0 0
      %8439 = vmatpush1.bf16.msra.mxu0 0
      %8440 = vmatprep.subr.bf16.mxu0 0
      %8441 = vmatpush1.bf16.msra.mxu0 0
      %8442 = vmatprep.subr.bf16.mxu0 0
      %8443 = vmatpush1.bf16.msra.mxu0 0
      %8444 = vmatprep.subr.bf16.mxu0 0
      %8445 = vmatpush1.bf16.msra.mxu0 0
      %8446 = vmatprep.subr.bf16.mxu0 0
      %8447 = vmatpush1.bf16.msra.mxu0 0
      %8448 = vmatprep.subr.bf16.mxu0 0
      %8449 = vmatpush1.bf16.msra.mxu0 0
      %8450 = vmatprep.subr.bf16.mxu0 0
      %8451 = vmatpush1.bf16.msra.mxu0 0
      %8452 = vmatprep.mubr.bf16.mxu0 0
      %8453 = vmatmul.mubr.bf16.gmra.mrb[0].mxu0 %v8226
      %v8454 = vpop.f32.mrb[0].mxu0
      %v8455 = vadd.f32 0.0, %v8454
      %v8456 = vpop.f32.mrb[0].mxu0
      %v8457 = vpop.f32.mrb[0].mxu0
      %v8458 = vadd.f32 0.0, %v8457
      %v8459 = vpop.f32.mrb[0].mxu0
      %8460 = vmatprep.mubr.bf16.mxu0 0
      %8461 = vmatmul.mubr.bf16.gmra.mrb[0].mxu0 %v8229
      %v8462 = vpop.f32.mrb[0].mxu0
      %v8463 = vadd.f32 0.0, %v8462
      %v8464 = vpop.f32.mrb[0].mxu0
      %v8465 = vpop.f32.mrb[0].mxu0
      %v8466 = vadd.f32 0.0, %v8465
      %v8467 = vpop.f32.mrb[0].mxu0
      %8468 = vmatprep.mubr.bf16.mxu0 0
      %8469 = vmatmul.mubr.bf16.gmra.mrb[0].mxu0 %v8232
      %v8470 = vpop.f32.mrb[0].mxu0
      %v8471 = vadd.f32 0.0, %v8470
      %v8472 = vpop.f32.mrb[0].mxu0
      %v8473 = vpop.f32.mrb[0].mxu0
      %v8474 = vadd.f32 0.0, %v8473
      %v8475 = vpop.f32.mrb[0].mxu0
      %8476 = vmatprep.mubr.bf16.mxu0 0
      %8477 = vmatmul.mubr.bf16.gmra.mrb[0].mxu0 %v8235
      %v8478 = vpop.f32.mrb[0].mxu0
      %v8479 = vadd.f32 0.0, %v8478
      %v8480 = vpop.f32.mrb[0].mxu0
      %v8481 = vpop.f32.mrb[0].mxu0
      %v8482 = vadd.f32 0.0, %v8481
      %v8483 = vpop.f32.mrb[0].mxu0
      %8484 = vmatprep.mubr.bf16.mxu0 0
      %8485 = vmatmul.mubr.bf16.gmra.mrb[0].mxu0 %v8238
      %v8486 = vpop.f32.mrb[0].mxu0
      %v8487 = vadd.f32 0.0, %v8486
      %v8488 = vpop.f32.mrb[0].mxu0
      %v8489 = vpop.f32.mrb[0].mxu0
      %v8490 = vadd.f32 0.0, %v8489
      %v8491 = vpop.f32.mrb[0].mxu0
      %8492 = vmatprep.mubr.bf16.mxu0 0
      %8493 = vmatmul.mubr.bf16.gmra.mrb[0].mxu0 %v8241
      %v8494 = vpop.f32.mrb[0].mxu0
      %v8495 = vadd.f32 0.0, %v8494
      %v8496 = vpop.f32.mrb[0].mxu0
      %v8497 = vpop.f32.mrb[0].mxu0
      %v8498 = vadd.f32 0.0, %v8497
      %v8499 = vpop.f32.mrb[0].mxu0
      %8500 = vmatprep.mubr.bf16.mxu0 0
      %8501 = vmatmul.mubr.bf16.gmra.mrb[0].mxu0 %v8244
      %v8502 = vpop.f32.mrb[0].mxu0
      %v8503 = vadd.f32 0.0, %v8502
      %v8504 = vpop.f32.mrb[0].mxu0
      %v8505 = vpop.f32.mrb[0].mxu0
      %v8506 = vadd.f32 0.0, %v8505
      %v8507 = vpop.f32.mrb[0].mxu0
      %8508 = vmatprep.mubr.bf16.mxu0 0
      %8509 = vmatmul.mubr.bf16.gmra.mrb[0].mxu0 %v8247
      %v8510 = vpop.f32.mrb[0].mxu0
      %v8511 = vadd.f32 0.0, %v8510
      %v8512 = vpop.f32.mrb[0].mxu0
      %v8513 = vpop.f32.mrb[0].mxu0
      %v8514 = vadd.f32 0.0, %v8513
      %v8515 = vpop.f32.mrb[0].mxu0
      %8516 = vmatprep.mubr.bf16.mxu0 0
      %8517 = vmatmul.mubr.bf16.gmra.mrb[0].mxu0 %v8250
      %v8518 = vpop.f32.mrb[0].mxu0
      %v8519 = vadd.f32 0.0, %v8518
      %v8520 = vpop.f32.mrb[0].mxu0
      %v8521 = vpop.f32.mrb[0].mxu0
      %v8522 = vadd.f32 0.0, %v8521
      %v8523 = vpop.f32.mrb[0].mxu0
      %8524 = vmatprep.mubr.bf16.mxu0 0
      %8525 = vmatmul.mubr.bf16.gmra.mrb[0].mxu0 %v8253
      %v8526 = vpop.f32.mrb[0].mxu0
      %v8527 = vadd.f32 0.0, %v8526
      %v8528 = vpop.f32.mrb[0].mxu0
      %v8529 = vpop.f32.mrb[0].mxu0
      %v8530 = vadd.f32 0.0, %v8529
      %v8531 = vpop.f32.mrb[0].mxu0
      %8532 = vmatprep.mubr.bf16.mxu0 0
      %8533 = vmatmul.mubr.bf16.gmra.mrb[0].mxu0 %v8256
      %v8534 = vpop.f32.mrb[0].mxu0
      %v8535 = vadd.f32 0.0, %v8534
      %v8536 = vpop.f32.mrb[0].mxu0
      %v8537 = vpop.f32.mrb[0].mxu0
      %v8538 = vadd.f32 0.0, %v8537
      %v8539 = vpop.f32.mrb[0].mxu0
      %8540 = vmatprep.mubr.bf16.mxu0 0
      %8541 = vmatmul.mubr.bf16.gmra.mrb[0].mxu0 %v8259
      %v8542 = vpop.f32.mrb[0].mxu0
      %v8543 = vadd.f32 0.0, %v8542
      %v8544 = vpop.f32.mrb[0].mxu0
      %v8545 = vpop.f32.mrb[0].mxu0
      %v8546 = vadd.f32 0.0, %v8545
      %v8547 = vpop.f32.mrb[0].mxu0
      %8548 = vmatprep.mubr.bf16.mxu0 0
      %8549 = vmatmul.mubr.bf16.gmra.mrb[0].mxu0 %v8262
      %v8550 = vpop.f32.mrb[0].mxu0
      %v8551 = vadd.f32 0.0, %v8550
      %v8552 = vpop.f32.mrb[0].mxu0
      %v8553 = vpop.f32.mrb[0].mxu0
      %v8554 = vadd.f32 0.0, %v8553
      %v8555 = vpop.f32.mrb[0].mxu0
      %8556 = vmatprep.mubr.bf16.mxu0 0
      %8557 = vmatmul.mubr.bf16.gmra.mrb[0].mxu0 %v8265
      %v8558 = vpop.f32.mrb[0].mxu0
      %v8559 = vadd.f32 0.0, %v8558
      %v8560 = vpop.f32.mrb[0].mxu0
      %v8561 = vpop.f32.mrb[0].mxu0
      %v8562 = vadd.f32 0.0, %v8561
      %v8563 = vpop.f32.mrb[0].mxu0
      %8564 = vmatprep.mubr.bf16.mxu0 0
      %8565 = vmatmul.mubr.bf16.gmra.mrb[0].mxu0 %v8268
      %v8566 = vpop.f32.mrb[0].mxu0
      %v8567 = vadd.f32 0.0, %v8566
      %v8568 = vpop.f32.mrb[0].mxu0
      %v8569 = vpop.f32.mrb[0].mxu0
      %v8570 = vadd.f32 0.0, %v8569
      %v8571 = vpop.f32.mrb[0].mxu0
      %8572 = vmatprep.mubr.bf16.mxu0 0
      %8573 = vmatmul.mubr.bf16.gmra.mrb[0].mxu0 %v8271
      %v8574 = vpop.f32.mrb[0].mxu0
      %v8575 = vadd.f32 0.0, %v8574
      %v8576 = vpop.f32.mrb[0].mxu0
      %v8577 = vpop.f32.mrb[0].mxu0
      %v8578 = vadd.f32 0.0, %v8577
      %v8579 = vpop.f32.mrb[0].mxu0
      %8580 = vmatprep.mubr.bf16.mxu0 0
      %8581 = vmatmul.mubr.bf16.gmra.mrb[0].mxu0 %v8274
      %v8582 = vpop.f32.mrb[0].mxu0
      %v8583 = vadd.f32 0.0, %v8582
      %v8584 = vpop.f32.mrb[0].mxu0
      %v8585 = vpop.f32.mrb[0].mxu0
      %v8586 = vadd.f32 0.0, %v8585
      %v8587 = vpop.f32.mrb[0].mxu0
      %8588 = vmatprep.mubr.bf16.mxu0 0
      %8589 = vmatmul.mubr.bf16.gmra.mrb[0].mxu0 %v8277
      %v8590 = vpop.f32.mrb[0].mxu0
      %v8591 = vadd.f32 0.0, %v8590
      %v8592 = vpop.f32.mrb[0].mxu0
      %v8593 = vpop.f32.mrb[0].mxu0
      %v8594 = vadd.f32 0.0, %v8593
      %v8595 = vpop.f32.mrb[0].mxu0
      %8596 = vmatprep.mubr.bf16.mxu0 0
      %8597 = vmatmul.mubr.bf16.gmra.mrb[0].mxu0 %v8280
      %v8598 = vpop.f32.mrb[0].mxu0
      %v8599 = vadd.f32 0.0, %v8598
      %v8600 = vpop.f32.mrb[0].mxu0
      %v8601 = vpop.f32.mrb[0].mxu0
      %v8602 = vadd.f32 0.0, %v8601
      %v8603 = vpop.f32.mrb[0].mxu0
      %8604 = vmatprep.mubr.bf16.mxu0 0
      %8605 = vmatmul.mubr.bf16.gmra.mrb[0].mxu0 %v8283
      %v8606 = vpop.f32.mrb[0].mxu0
      %v8607 = vadd.f32 0.0, %v8606
      %v8608 = vpop.f32.mrb[0].mxu0
      %v8609 = vpop.f32.mrb[0].mxu0
      %v8610 = vadd.f32 0.0, %v8609
      %v8611 = vpop.f32.mrb[0].mxu0
      %8612 = vmatprep.mubr.bf16.mxu0 0
      %8613 = vmatmul.mubr.bf16.gmra.mrb[0].mxu0 %v8286
      %v8614 = vpop.f32.mrb[0].mxu0
      %v8615 = vadd.f32 0.0, %v8614
      %v8616 = vpop.f32.mrb[0].mxu0
      %v8617 = vpop.f32.mrb[0].mxu0
      %v8618 = vadd.f32 0.0, %v8617
      %v8619 = vpop.f32.mrb[0].mxu0
      %8620 = vmatprep.mubr.bf16.mxu0 0
      %8621 = vmatmul.mubr.bf16.gmra.mrb[0].mxu0 %v8289
      %v8622 = vpop.f32.mrb[0].mxu0
      %v8623 = vadd.f32 0.0, %v8622
      %v8624 = vpop.f32.mrb[0].mxu0
      %v8625 = vpop.f32.mrb[0].mxu0
      %v8626 = vadd.f32 0.0, %v8625
      %v8627 = vpop.f32.mrb[0].mxu0
      %8628 = vmatprep.mubr.bf16.mxu0 0
      %8629 = vmatmul.mubr.bf16.gmra.mrb[0].mxu0 %v8292
      %v8630 = vpop.f32.mrb[0].mxu0
      %v8631 = vadd.f32 0.0, %v8630
      %v8632 = vpop.f32.mrb[0].mxu0
      %v8633 = vpop.f32.mrb[0].mxu0
      %v8634 = vadd.f32 0.0, %v8633
      %v8635 = vpop.f32.mrb[0].mxu0
      %8636 = vmatprep.mubr.bf16.mxu0 0
      %8637 = vmatmul.mubr.bf16.gmra.mrb[0].mxu0 %v8295
      %v8638 = vpop.f32.mrb[0].mxu0
      %v8639 = vadd.f32 0.0, %v8638
      %v8640 = vpop.f32.mrb[0].mxu0
      %v8641 = vpop.f32.mrb[0].mxu0
      %v8642 = vadd.f32 0.0, %v8641
      %v8643 = vpop.f32.mrb[0].mxu0
      %8644 = vmatprep.mubr.bf16.mxu0 0
      %8645 = vmatmul.mubr.bf16.gmra.mrb[0].mxu0 %v8298
      %v8646 = vpop.f32.mrb[0].mxu0
      %v8647 = vadd.f32 0.0, %v8646
      %v8648 = vpop.f32.mrb[0].mxu0
      %v8649 = vpop.f32.mrb[0].mxu0
      %v8650 = vadd.f32 0.0, %v8649
      %v8651 = vpop.f32.mrb[0].mxu0
      %8652 = vmatprep.mubr.bf16.mxu0 0
      %8653 = vmatmul.mubr.bf16.gmra.mrb[0].mxu0 %v8301
      %v8654 = vpop.f32.mrb[0].mxu0
      %v8655 = vadd.f32 0.0, %v8654
      %v8656 = vpop.f32.mrb[0].mxu0
      %v8657 = vpop.f32.mrb[0].mxu0
      %v8658 = vadd.f32 0.0, %v8657
      %v8659 = vpop.f32.mrb[0].mxu0
      %8660 = vmatprep.mubr.bf16.mxu0 0
      %8661 = vmatmul.mubr.bf16.gmra.mrb[0].mxu0 %v8304
      %v8662 = vpop.f32.mrb[0].mxu0
      %v8663 = vadd.f32 0.0, %v8662
      %v8664 = vpop.f32.mrb[0].mxu0
      %v8665 = vpop.f32.mrb[0].mxu0
      %v8666 = vadd.f32 0.0, %v8665
      %v8667 = vpop.f32.mrb[0].mxu0
      %8668 = vmatprep.mubr.bf16.mxu0 0
      %8669 = vmatmul.mubr.bf16.gmra.mrb[0].mxu0 %v8307
      %v8670 = vpop.f32.mrb[0].mxu0
      %v8671 = vadd.f32 0.0, %v8670
      %v8672 = vpop.f32.mrb[0].mxu0
      %v8673 = vpop.f32.mrb[0].mxu0
      %v8674 = vadd.f32 0.0, %v8673
      %v8675 = vpop.f32.mrb[0].mxu0
      %8676 = vmatprep.mubr.bf16.mxu0 0
      %8677 = vmatmul.mubr.bf16.gmra.mrb[0].mxu0 %v8310
      %v8678 = vpop.f32.mrb[0].mxu0
      %v8679 = vadd.f32 0.0, %v8678
      %v8680 = vpop.f32.mrb[0].mxu0
      %v8681 = vpop.f32.mrb[0].mxu0
      %v8682 = vadd.f32 0.0, %v8681
      %v8683 = vpop.f32.mrb[0].mxu0
      %8684 = vmatprep.mubr.bf16.mxu0 0
      %8685 = vmatmul.mubr.bf16.gmra.mrb[0].mxu0 %v8313
      %v8686 = vpop.f32.mrb[0].mxu0
      %v8687 = vadd.f32 0.0, %v8686
      %v8688 = vpop.f32.mrb[0].mxu0
      %v8689 = vpop.f32.mrb[0].mxu0
      %v8690 = vadd.f32 0.0, %v8689
      %v8691 = vpop.f32.mrb[0].mxu0
      %8692 = vmatprep.mubr.bf16.mxu0 0
      %8693 = vmatmul.mubr.bf16.gmra.mrb[0].mxu0 %v8316
      %v8694 = vpop.f32.mrb[0].mxu0
      %v8695 = vadd.f32 0.0, %v8694
      %v8696 = vpop.f32.mrb[0].mxu0
      %v8697 = vpop.f32.mrb[0].mxu0
      %v8698 = vadd.f32 0.0, %v8697
      %v8699 = vpop.f32.mrb[0].mxu0
      %8700 = vmatprep.mubr.bf16.mxu0 0
      %8701 = vmatmul.mubr.bf16.gmra.mrb[0].mxu0 %v8319
      %v8702 = vpop.f32.mrb[0].mxu0
      %v8703 = vadd.f32 0.0, %v8702
      %v8704 = vpop.f32.mrb[0].mxu0
      %v8705 = vpop.f32.mrb[0].mxu0
      %v8706 = vadd.f32 0.0, %v8705
      %v8707 = vpop.f32.mrb[0].mxu0
      %8708 = vmatprep.mubr.bf16.mxu0 0
      %8709 = vmatmul.mubr.bf16.gmra.mrb[0].mxu0 %v8322
      %v8710 = vpop.f32.mrb[0].mxu0
      %v8711 = vadd.f32 0.0, %v8710
      %v8712 = vpop.f32.mrb[0].mxu0
      %v8713 = vpop.f32.mrb[0].mxu0
      %v8714 = vadd.f32 0.0, %v8713
      %v8715 = vpop.f32.mrb[0].mxu0
      %8716 = vmatprep.mubr.bf16.mxu0 0
      %8717 = vmatmul.mubr.bf16.gmra.mrb[0].mxu0 %v8325
      %v8718 = vpop.f32.mrb[0].mxu0
      %v8719 = vadd.f32 0.0, %v8718
      %v8720 = vpop.f32.mrb[0].mxu0
      %v8721 = vpop.f32.mrb[0].mxu0
      %v8722 = vadd.f32 0.0, %v8721
      %v8723 = vpop.f32.mrb[0].mxu0
      %8724 = vmatprep.mubr.bf16.mxu0 0
      %8725 = vmatmul.mubr.bf16.gmra.mrb[0].mxu0 %v8328
      %v8726 = vpop.f32.mrb[0].mxu0
      %v8727 = vadd.f32 0.0, %v8726
      %v8728 = vpop.f32.mrb[0].mxu0
      %v8729 = vpop.f32.mrb[0].mxu0
      %v8730 = vadd.f32 0.0, %v8729
      %v8731 = vpop.f32.mrb[0].mxu0
      %8732 = vmatprep.mubr.bf16.mxu0 0
      %8733 = vmatmul.mubr.bf16.gmra.mrb[0].mxu0 %v8331
      %v8734 = vpop.f32.mrb[0].mxu0
      %v8735 = vadd.f32 0.0, %v8734
      %v8736 = vpop.f32.mrb[0].mxu0
      %v8737 = vpop.f32.mrb[0].mxu0
      %v8738 = vadd.f32 0.0, %v8737
      %v8739 = vpop.f32.mrb[0].mxu0
      %8740 = vmatprep.mubr.bf16.mxu0 0
      %8741 = vmatmul.mubr.bf16.gmra.mrb[0].mxu0 %v8334
      %v8742 = vpop.f32.mrb[0].mxu0
      %v8743 = vadd.f32 0.0, %v8742
      %v8744 = vpop.f32.mrb[0].mxu0
      %v8745 = vpop.f32.mrb[0].mxu0
      %v8746 = vadd.f32 0.0, %v8745
      %v8747 = vpop.f32.mrb[0].mxu0
      %8748 = vmatprep.mubr.bf16.mxu0 0
      %8749 = vmatmul.mubr.bf16.gmra.mrb[0].mxu0 %v8337
      %v8750 = vpop.f32.mrb[0].mxu0
      %v8751 = vadd.f32 0.0, %v8750
      %v8752 = vpop.f32.mrb[0].mxu0
      %v8753 = vpop.f32.mrb[0].mxu0
      %v8754 = vadd.f32 0.0, %v8753
      %v8755 = vpop.f32.mrb[0].mxu0
      %8756 = vmatprep.mubr.bf16.mxu0 0
      %8757 = vmatmul.mubr.bf16.gmra.mrb[0].mxu0 %v8340
      %v8758 = vpop.f32.mrb[0].mxu0
      %v8759 = vadd.f32 0.0, %v8758
      %v8760 = vpop.f32.mrb[0].mxu0
      %v8761 = vpop.f32.mrb[0].mxu0
      %v8762 = vadd.f32 0.0, %v8761
      %v8763 = vpop.f32.mrb[0].mxu0
      %8764 = vmatprep.mubr.bf16.mxu0 0
      %8765 = vmatmul.mubr.bf16.gmra.mrb[0].mxu0 %v8343
      %v8766 = vpop.f32.mrb[0].mxu0
      %v8767 = vadd.f32 0.0, %v8766
      %v8768 = vpop.f32.mrb[0].mxu0
      %v8769 = vpop.f32.mrb[0].mxu0
      %v8770 = vadd.f32 0.0, %v8769
      %v8771 = vpop.f32.mrb[0].mxu0
      %8772 = vmatprep.mubr.bf16.mxu0 0
      %8773 = vmatmul.mubr.bf16.gmra.mrb[0].mxu0 %v8346
      %v8774 = vpop.f32.mrb[0].mxu0
      %v8775 = vadd.f32 0.0, %v8774
      %v8776 = vpop.f32.mrb[0].mxu0
      %v8777 = vpop.f32.mrb[0].mxu0
      %v8778 = vadd.f32 0.0, %v8777
      %v8779 = vpop.f32.mrb[0].mxu0
      %8780 = vmatprep.mubr.bf16.mxu0 0
      %8781 = vmatmul.mubr.bf16.gmra.mrb[0].mxu0 %v8349
      %v8782 = vpop.f32.mrb[0].mxu0
      %v8783 = vadd.f32 0.0, %v8782
      %v8784 = vpop.f32.mrb[0].mxu0
      %v8785 = vpop.f32.mrb[0].mxu0
      %v8786 = vadd.f32 0.0, %v8785
      %v8787 = vpop.f32.mrb[0].mxu0
      %8788 = vmatprep.mubr.bf16.mxu0 0
      %8789 = vmatmul.mubr.bf16.gmra.mrb[0].mxu0 %v8352
      %v8790 = vpop.f32.mrb[0].mxu0
      %v8791 = vadd.f32 0.0, %v8790
      %v8792 = vpop.f32.mrb[0].mxu0
      %v8793 = vpop.f32.mrb[0].mxu0
      %v8794 = vadd.f32 0.0, %v8793
      %v8795 = vpop.f32.mrb[0].mxu0
      %8796 = vmatprep.mubr.bf16.mxu0 0
      %8797 = vmatmul.mubr.bf16.gmra.mrb[0].mxu0 %v8355
      %v8798 = vpop.f32.mrb[0].mxu0
      %v8799 = vadd.f32 0.0, %v8798
      %v8800 = vpop.f32.mrb[0].mxu0
      %v8801 = vpop.f32.mrb[0].mxu0
      %v8802 = vadd.f32 0.0, %v8801
      %v8803 = vpop.f32.mrb[0].mxu0
      %8804 = vmatprep.mubr.bf16.mxu0 0
      %8805 = vmatmul.mubr.bf16.gmra.mrb[0].mxu0 %v8358
      %v8806 = vpop.f32.mrb[0].mxu0
      %v8807 = vadd.f32 0.0, %v8806
      %v8808 = vpop.f32.mrb[0].mxu0
      %v8809 = vpop.f32.mrb[0].mxu0
      %v8810 = vadd.f32 0.0, %v8809
      %v8811 = vpop.f32.mrb[0].mxu0
      %8812 = vmatprep.mubr.bf16.mxu0 0
      %8813 = vmatmul.mubr.bf16.gmra.mrb[0].mxu0 %v8361
      %v8814 = vpop.f32.mrb[0].mxu0
      %v8815 = vadd.f32 0.0, %v8814
      %v8816 = vpop.f32.mrb[0].mxu0
      %v8817 = vpop.f32.mrb[0].mxu0
      %v8818 = vadd.f32 0.0, %v8817
      %v8819 = vpop.f32.mrb[0].mxu0
      %8820 = vmatprep.mubr.bf16.mxu0 0
      %8821 = vmatmul.mubr.bf16.gmra.mrb[0].mxu0 %v8364
      %v8822 = vpop.f32.mrb[0].mxu0
      %v8823 = vadd.f32 0.0, %v8822
      %v8824 = vpop.f32.mrb[0].mxu0
      %v8825 = vpop.f32.mrb[0].mxu0
      %v8826 = vadd.f32 0.0, %v8825
      %v8827 = vpop.f32.mrb[0].mxu0
      %8828 = vmatprep.mubr.bf16.mxu0 0
      %8829 = vmatmul.mubr.bf16.gmra.mrb[0].mxu0 %v8367
      %v8830 = vpop.f32.mrb[0].mxu0
      %v8831 = vadd.f32 0.0, %v8830
      %v8832 = vpop.f32.mrb[0].mxu0
      %v8833 = vpop.f32.mrb[0].mxu0
      %v8834 = vadd.f32 0.0, %v8833
      %v8835 = vpop.f32.mrb[0].mxu0
      %8836 = vmatprep.mubr.bf16.mxu0 0
      %8837 = vmatmul.mubr.bf16.gmra.mrb[0].mxu0 %v8370
      %v8838 = vpop.f32.mrb[0].mxu0
      %v8839 = vadd.f32 0.0, %v8838
      %v8840 = vpop.f32.mrb[0].mxu0
      %v8841 = vpop.f32.mrb[0].mxu0
      %v8842 = vadd.f32 0.0, %v8841
      %v8843 = vpop.f32.mrb[0].mxu0
      %8844 = vmatprep.mubr.bf16.mxu0 0
      %8845 = vmatmul.mubr.bf16.gmra.mrb[0].mxu0 %v8373
      %v8846 = vpop.f32.mrb[0].mxu0
      %v8847 = vadd.f32 0.0, %v8846
      %v8848 = vpop.f32.mrb[0].mxu0
      %v8849 = vpop.f32.mrb[0].mxu0
      %v8850 = vadd.f32 0.0, %v8849
      %v8851 = vpop.f32.mrb[0].mxu0
      %8852 = vmatprep.mubr.bf16.mxu0 0
      %8853 = vmatmul.mubr.bf16.gmra.mrb[0].mxu0 %v8376
      %v8854 = vpop.f32.mrb[0].mxu0
      %v8855 = vadd.f32 0.0, %v8854
      %v8856 = vpop.f32.mrb[0].mxu0
      %v8857 = vpop.f32.mrb[0].mxu0
      %v8858 = vadd.f32 0.0, %v8857
      %v8859 = vpop.f32.mrb[0].mxu0
      %8860 = vmatprep.mubr.bf16.mxu0 0
      %8861 = vmatmul.mubr.bf16.gmra.mrb[0].mxu0 %v8379
      %v8862 = vpop.f32.mrb[0].mxu0
      %v8863 = vadd.f32 0.0, %v8862
      %v8864 = vpop.f32.mrb[0].mxu0
      %v8865 = vpop.f32.mrb[0].mxu0
      %v8866 = vadd.f32 0.0, %v8865
      %v8867 = vpop.f32.mrb[0].mxu0
      %8868 = vmatprep.mubr.bf16.mxu0 0
      %8869 = vmatmul.mubr.bf16.gmra.mrb[0].mxu0 %v8382
      %v8870 = vpop.f32.mrb[0].mxu0
      %v8871 = vadd.f32 0.0, %v8870
      %v8872 = vpop.f32.mrb[0].mxu0
      %v8873 = vpop.f32.mrb[0].mxu0
      %v8874 = vadd.f32 0.0, %v8873
      %v8875 = vpop.f32.mrb[0].mxu0
      %8876 = vmatprep.mubr.bf16.mxu0 0
      %8877 = vmatmul.mubr.bf16.gmra.mrb[0].mxu0 %v8385
      %v8878 = vpop.f32.mrb[0].mxu0
      %v8879 = vadd.f32 0.0, %v8878
      %v8880 = vpop.f32.mrb[0].mxu0
      %v8881 = vpop.f32.mrb[0].mxu0
      %v8882 = vadd.f32 0.0, %v8881
      %v8883 = vpop.f32.mrb[0].mxu0
      %8884 = vmatprep.mubr.bf16.mxu0 0
      %8885 = vmatmul.mubr.bf16.gmra.mrb[0].mxu0 %v8388
      %v8886 = vpop.f32.mrb[0].mxu0
      %v8887 = vadd.f32 0.0, %v8886
      %v8888 = vpop.f32.mrb[0].mxu0
      %v8889 = vpop.f32.mrb[0].mxu0
      %v8890 = vadd.f32 0.0, %v8889
      %v8891 = vpop.f32.mrb[0].mxu0
      %8892 = vmatprep.mubr.bf16.mxu0 0
      %8893 = vmatmul.mubr.bf16.gmra.mrb[0].mxu0 %v8391
      %v8894 = vpop.f32.mrb[0].mxu0
      %v8895 = vadd.f32 0.0, %v8894
      %v8896 = vpop.f32.mrb[0].mxu0
      %v8897 = vpop.f32.mrb[0].mxu0
      %v8898 = vadd.f32 0.0, %v8897
      %v8899 = vpop.f32.mrb[0].mxu0
      %8900 = vmatprep.mubr.bf16.mxu0 0
      %8901 = vmatmul.mubr.bf16.gmra.mrb[0].mxu0 %v8394
      %v8902 = vpop.f32.mrb[0].mxu0
      %v8903 = vadd.f32 0.0, %v8902
      %v8904 = vpop.f32.mrb[0].mxu0
      %v8905 = vpop.f32.mrb[0].mxu0
      %v8906 = vadd.f32 0.0, %v8905
      %v8907 = vpop.f32.mrb[0].mxu0
      %8908 = vmatprep.mubr.bf16.mxu0 0
      %8909 = vmatmul.mubr.bf16.gmra.mrb[0].mxu0 %v8397
      %v8910 = vpop.f32.mrb[0].mxu0
      %v8911 = vadd.f32 0.0, %v8910
      %v8912 = vpop.f32.mrb[0].mxu0
      %v8913 = vpop.f32.mrb[0].mxu0
      %v8914 = vadd.f32 0.0, %v8913
      %v8915 = vpop.f32.mrb[0].mxu0
      %8916 = vmatprep.mubr.bf16.mxu0 0
      %8917 = vmatmul.mubr.bf16.gmra.mrb[0].mxu0 %v8400
      %v8918 = vpop.f32.mrb[0].mxu0
      %v8919 = vadd.f32 0.0, %v8918
      %v8920 = vpop.f32.mrb[0].mxu0
      %v8921 = vpop.f32.mrb[0].mxu0
      %v8922 = vadd.f32 0.0, %v8921
      %v8923 = vpop.f32.mrb[0].mxu0
      %8924 = vmatprep.mubr.bf16.mxu0 0
      %8925 = vmatmul.mubr.bf16.gmra.mrb[0].mxu0 %v8403
      %v8926 = vpop.f32.mrb[0].mxu0
      %v8927 = vadd.f32 0.0, %v8926
      %v8928 = vpop.f32.mrb[0].mxu0
      %v8929 = vpop.f32.mrb[0].mxu0
      %v8930 = vadd.f32 0.0, %v8929
      %v8931 = vpop.f32.mrb[0].mxu0
      %8932 = vmatprep.mubr.bf16.mxu0 0
      %8933 = vmatmul.mubr.bf16.gmra.mrb[0].mxu0 %v8406
      %v8934 = vpop.f32.mrb[0].mxu0
      %v8935 = vadd.f32 0.0, %v8934
      %v8936 = vpop.f32.mrb[0].mxu0
      %v8937 = vpop.f32.mrb[0].mxu0
      %v8938 = vadd.f32 0.0, %v8937
      %v8939 = vpop.f32.mrb[0].mxu0
      %8940 = vmatprep.mubr.bf16.mxu0 0
      %8941 = vmatmul.mubr.bf16.gmra.mrb[0].mxu0 %v8409
      %v8942 = vpop.f32.mrb[0].mxu0
      %v8943 = vadd.f32 0.0, %v8942
      %v8944 = vpop.f32.mrb[0].mxu0
      %v8945 = vpop.f32.mrb[0].mxu0
      %v8946 = vadd.f32 0.0, %v8945
      %v8947 = vpop.f32.mrb[0].mxu0
      %8948 = vmatprep.mubr.bf16.mxu0 0
      %8949 = vmatmul.mubr.bf16.gmra.mrb[0].mxu0 %v8412
      %v8950 = vpop.f32.mrb[0].mxu0
      %v8951 = vadd.f32 0.0, %v8950
      %v8952 = vpop.f32.mrb[0].mxu0
      %v8953 = vpop.f32.mrb[0].mxu0
      %v8954 = vadd.f32 0.0, %v8953
      %v8955 = vpop.f32.mrb[0].mxu0
      %8956 = vmatprep.mubr.bf16.mxu0 0
      %8957 = vmatmul.mubr.bf16.gmra.mrb[0].mxu0 %v8415
      %v8958 = vpop.f32.mrb[0].mxu0
      %v8959 = vadd.f32 0.0, %v8958
      %v8960 = vpop.f32.mrb[0].mxu0
      %v8961 = vpop.f32.mrb[0].mxu0
      %v8962 = vadd.f32 0.0, %v8961
      %v8963 = vpop.f32.mrb[0].mxu0
      %8964 = vdwg.mxu0
      %v8965 = vadd.f32 %v7835, %v8455
      %v8966 = vadd.f32 %v7836, %v8458
      %v8967 = vadd.f32 %v7837, %v8463
      %v8968 = vadd.f32 %v7838, %v8466
      %v8969 = vadd.f32 %v7839, %v8471
      %v8970 = vadd.f32 %v7840, %v8474
      %v8971 = vadd.f32 %v7841, %v8479
      %v8972 = vadd.f32 %v7842, %v8482
      %v8973 = vadd.f32 %v7843, %v8487
      %v8974 = vadd.f32 %v7844, %v8490
      %v8975 = vadd.f32 %v7845, %v8495
      %v8976 = vadd.f32 %v7846, %v8498
      %v8977 = vadd.f32 %v7847, %v8503
      %v8978 = vadd.f32 %v7848, %v8506
      %v8979 = vadd.f32 %v7849, %v8511
      %v8980 = vadd.f32 %v7850, %v8514
      %v8981 = vadd.f32 %v7851, %v8519
      %v8982 = vadd.f32 %v7852, %v8522
      %v8983 = vadd.f32 %v7853, %v8527
      %v8984 = vadd.f32 %v7854, %v8530
      %v8985 = vadd.f32 %v7855, %v8535
      %v8986 = vadd.f32 %v7856, %v8538
      %v8987 = vadd.f32 %v7857, %v8543
      %v8988 = vadd.f32 %v7858, %v8546
      %v8989 = vadd.f32 %v7859, %v8551
      %v8990 = vadd.f32 %v7860, %v8554
      %v8991 = vadd.f32 %v7861, %v8559
      %v8992 = vadd.f32 %v7862, %v8562
      %v8993 = vadd.f32 %v7863, %v8567
      %v8994 = vadd.f32 %v7864, %v8570
      %v8995 = vadd.f32 %v7865, %v8575
      %v8996 = vadd.f32 %v7866, %v8578
      %v8997 = vadd.f32 %v7867, %v8583
      %v8998 = vadd.f32 %v7868, %v8586
      %v8999 = vadd.f32 %v7869, %v8591
      %v9000 = vadd.f32 %v7870, %v8594
      %v9001 = vadd.f32 %v7871, %v8599
      %v9002 = vadd.f32 %v7872, %v8602
      %v9003 = vadd.f32 %v7873, %v8607
      %v9004 = vadd.f32 %v7874, %v8610
      %v9005 = vadd.f32 %v7875, %v8615
      %v9006 = vadd.f32 %v7876, %v8618
      %v9007 = vadd.f32 %v7877, %v8623
      %v9008 = vadd.f32 %v7878, %v8626
      %v9009 = vadd.f32 %v7879, %v8631
      %v9010 = vadd.f32 %v7880, %v8634
      %v9011 = vadd.f32 %v7881, %v8639
      %v9012 = vadd.f32 %v7882, %v8642
      %v9013 = vadd.f32 %v7883, %v8647
      %v9014 = vadd.f32 %v7884, %v8650
      %v9015 = vadd.f32 %v7885, %v8655
      %v9016 = vadd.f32 %v7886, %v8658
      %v9017 = vadd.f32 %v7887, %v8663
      %v9018 = vadd.f32 %v7888, %v8666
      %v9019 = vadd.f32 %v7889, %v8671
      %v9020 = vadd.f32 %v7890, %v8674
      %v9021 = vadd.f32 %v7891, %v8679
      %v9022 = vadd.f32 %v7892, %v8682
      %v9023 = vadd.f32 %v7893, %v8687
      %v9024 = vadd.f32 %v7894, %v8690
      %v9025 = vadd.f32 %v7895, %v8695
      %v9026 = vadd.f32 %v7896, %v8698
      %v9027 = vadd.f32 %v7897, %v8703
      %v9028 = vadd.f32 %v7898, %v8706
      %v9029 = vadd.f32 %v7899, %v8711
      %v9030 = vadd.f32 %v7900, %v8714
      %v9031 = vadd.f32 %v7901, %v8719
      %v9032 = vadd.f32 %v7902, %v8722
      %v9033 = vadd.f32 %v7903, %v8727
      %v9034 = vadd.f32 %v7904, %v8730
      %v9035 = vadd.f32 %v7905, %v8735
      %v9036 = vadd.f32 %v7906, %v8738
      %v9037 = vadd.f32 %v7907, %v8743
      %v9038 = vadd.f32 %v7908, %v8746
      %v9039 = vadd.f32 %v7909, %v8751
      %v9040 = vadd.f32 %v7910, %v8754
      %v9041 = vadd.f32 %v7911, %v8759
      %v9042 = vadd.f32 %v7912, %v8762
      %v9043 = vadd.f32 %v7913, %v8767
      %v9044 = vadd.f32 %v7914, %v8770
      %v9045 = vadd.f32 %v7915, %v8775
      %v9046 = vadd.f32 %v7916, %v8778
      %v9047 = vadd.f32 %v7917, %v8783
      %v9048 = vadd.f32 %v7918, %v8786
      %v9049 = vadd.f32 %v7919, %v8791
      %v9050 = vadd.f32 %v7920, %v8794
      %v9051 = vadd.f32 %v7921, %v8799
      %v9052 = vadd.f32 %v7922, %v8802
      %v9053 = vadd.f32 %v7923, %v8807
      %v9054 = vadd.f32 %v7924, %v8810
      %v9055 = vadd.f32 %v7925, %v8815
      %v9056 = vadd.f32 %v7926, %v8818
      %v9057 = vadd.f32 %v7927, %v8823
      %v9058 = vadd.f32 %v7928, %v8826
      %v9059 = vadd.f32 %v7929, %v8831
      %v9060 = vadd.f32 %v7930, %v8834
      %v9061 = vadd.f32 %v7931, %v8839
      %v9062 = vadd.f32 %v7932, %v8842
      %v9063 = vadd.f32 %v7933, %v8847
      %v9064 = vadd.f32 %v7934, %v8850
      %v9065 = vadd.f32 %v7935, %v8855
      %v9066 = vadd.f32 %v7936, %v8858
      %v9067 = vadd.f32 %v7937, %v8863
      %v9068 = vadd.f32 %v7938, %v8866
      %v9069 = vadd.f32 %v7939, %v8871
      %v9070 = vadd.f32 %v7940, %v8874
      %v9071 = vadd.f32 %v7941, %v8879
      %v9072 = vadd.f32 %v7942, %v8882
      %v9073 = vadd.f32 %v7943, %v8887
      %v9074 = vadd.f32 %v7944, %v8890
      %v9075 = vadd.f32 %v7945, %v8895
      %v9076 = vadd.f32 %v7946, %v8898
      %v9077 = vadd.f32 %v7947, %v8903
      %v9078 = vadd.f32 %v7948, %v8906
      %v9079 = vadd.f32 %v7949, %v8911
      %v9080 = vadd.f32 %v7950, %v8914
      %v9081 = vadd.f32 %v7951, %v8919
      %v9082 = vadd.f32 %v7952, %v8922
      %v9083 = vadd.f32 %v7953, %v8927
      %v9084 = vadd.f32 %v7954, %v8930
      %v9085 = vadd.f32 %v7955, %v8935
      %v9086 = vadd.f32 %v7956, %v8938
      %v9087 = vadd.f32 %v7957, %v8943
      %v9088 = vadd.f32 %v7958, %v8946
      %v9089 = vadd.f32 %v7959, %v8951
      %v9090 = vadd.f32 %v7960, %v8954
      %v9091 = vadd.f32 %v7961, %v8959
      %v9092 = vadd.f32 %v7962, %v8962
      %s9093 = scalar_lea.vmem %s2, 16
      %v9094 = vld [vmem:[%s9093] sm:$0x3]
      %vm9095 = vcmask 1043456
      %v9096 = vrot.slane %v694, 4
      %v9097 = vrot.slane %v695, 4
      %v9098 = vsel %vm9095, %v9096, %v9097
      %v9099 = vrot.slane %v696, 4
      %v9100 = vsel %vm9095, %v9097, %v9099
      %v9101 = vrot.slane %v697, 4
      %v9102 = vsel %vm9095, %v9099, %v9101
      %v9103 = vrot.slane %v698, 4
      %v9104 = vsel %vm9095, %v9101, %v9103
      %v9105 = vrot.slane %v699, 4
      %v9106 = vsel %vm9095, %v9103, %v9105
      %v9107 = vrot.slane %v700, 4
      %v9108 = vsel %vm9095, %v9105, %v9107
      %v9109 = vrot.slane %v701, 4
      %v9110 = vsel %vm9095, %v9107, %v9109
      %v9111 = vrot.slane %v702, 4
      %v9112 = vsel %vm9095, %v9109, %v9111
      %v9113 = vrot.slane %v703, 4
      %v9114 = vsel %vm9095, %v9111, %v9113
      %v9115 = vrot.slane %v704, 4
      %v9116 = vsel %vm9095, %v9113, %v9115
      %v9117 = vrot.slane %v705, 4
      %v9118 = vsel %vm9095, %v9115, %v9117
      %v9119 = vrot.slane %v706, 4
      %v9120 = vsel %vm9095, %v9117, %v9119
      %v9121 = vrot.slane %v707, 4
      %v9122 = vsel %vm9095, %v9119, %v9121
      %v9123 = vrot.slane %v708, 4
      %v9124 = vsel %vm9095, %v9121, %v9123
      %v9125 = vrot.slane %v709, 4
      %v9126 = vsel %vm9095, %v9123, %v9125
      %v9127 = vrot.slane %v710, 4
      %v9128 = vsel %vm9095, %v9125, %v9127
      %v9129 = vrot.slane %v711, 4
      %v9130 = vsel %vm9095, %v9127, %v9129
      %v9131 = vrot.slane %v712, 4
      %v9132 = vsel %vm9095, %v9129, %v9131
      %v9133 = vrot.slane %v713, 4
      %v9134 = vsel %vm9095, %v9131, %v9133
      %v9135 = vrot.slane %v714, 4
      %v9136 = vsel %vm9095, %v9133, %v9135
      %v9137 = vrot.slane %v715, 4
      %v9138 = vsel %vm9095, %v9135, %v9137
      %v9139 = vrot.slane %v716, 4
      %v9140 = vsel %vm9095, %v9137, %v9139
      %v9141 = vrot.slane %v717, 4
      %v9142 = vsel %vm9095, %v9139, %v9141
      %v9143 = vrot.slane %v718, 4
      %v9144 = vsel %vm9095, %v9141, %v9143
      %v9145 = vrot.slane %v719, 4
      %v9146 = vsel %vm9095, %v9143, %v9145
      %v9147 = vrot.slane %v720, 4
      %v9148 = vsel %vm9095, %v9145, %v9147
      %v9149 = vrot.slane %v721, 4
      %v9150 = vsel %vm9095, %v9147, %v9149
      %v9151 = vrot.slane %v722, 4
      %v9152 = vsel %vm9095, %v9149, %v9151
      %v9153 = vrot.slane %v723, 4
      %v9154 = vsel %vm9095, %v9151, %v9153
      %v9155 = vrot.slane %v724, 4
      %v9156 = vsel %vm9095, %v9153, %v9155
      %v9157 = vrot.slane %v725, 4
      %v9158 = vsel %vm9095, %v9155, %v9157
      %v9159 = vrot.slane %v726, 4
      %v9160 = vsel %vm9095, %v9157, %v9159
      %v9161 = vrot.slane %v727, 4
      %v9162 = vsel %vm9095, %v9159, %v9161
      %v9163 = vrot.slane %v728, 4
      %v9164 = vsel %vm9095, %v9161, %v9163
      %v9165 = vrot.slane %v729, 4
      %v9166 = vsel %vm9095, %v9163, %v9165
      %v9167 = vrot.slane %v730, 4
      %v9168 = vsel %vm9095, %v9165, %v9167
      %v9169 = vrot.slane %v731, 4
      %v9170 = vsel %vm9095, %v9167, %v9169
      %v9171 = vrot.slane %v732, 4
      %v9172 = vsel %vm9095, %v9169, %v9171
      %v9173 = vrot.slane %v733, 4
      %v9174 = vsel %vm9095, %v9171, %v9173
      %v9175 = vrot.slane %v734, 4
      %v9176 = vsel %vm9095, %v9173, %v9175
      %v9177 = vrot.slane %v735, 4
      %v9178 = vsel %vm9095, %v9175, %v9177
      %v9179 = vrot.slane %v736, 4
      %v9180 = vsel %vm9095, %v9177, %v9179
      %v9181 = vrot.slane %v737, 4
      %v9182 = vsel %vm9095, %v9179, %v9181
      %v9183 = vrot.slane %v738, 4
      %v9184 = vsel %vm9095, %v9181, %v9183
      %v9185 = vrot.slane %v739, 4
      %v9186 = vsel %vm9095, %v9183, %v9185
      %v9187 = vrot.slane %v740, 4
      %v9188 = vsel %vm9095, %v9185, %v9187
      %v9189 = vrot.slane %v741, 4
      %v9190 = vsel %vm9095, %v9187, %v9189
      %v9191 = vrot.slane %v742, 4
      %v9192 = vsel %vm9095, %v9189, %v9191
      %v9193 = vrot.slane %v743, 4
      %v9194 = vsel %vm9095, %v9191, %v9193
      %v9195 = vrot.slane %v744, 4
      %v9196 = vsel %vm9095, %v9193, %v9195
      %v9197 = vrot.slane %v745, 4
      %v9198 = vsel %vm9095, %v9195, %v9197
      %v9199 = vrot.slane %v746, 4
      %v9200 = vsel %vm9095, %v9197, %v9199
      %v9201 = vrot.slane %v747, 4
      %v9202 = vsel %vm9095, %v9199, %v9201
      %v9203 = vrot.slane %v748, 4
      %v9204 = vsel %vm9095, %v9201, %v9203
      %v9205 = vrot.slane %v749, 4
      %v9206 = vsel %vm9095, %v9203, %v9205
      %v9207 = vrot.slane %v750, 4
      %v9208 = vsel %vm9095, %v9205, %v9207
      %v9209 = vrot.slane %v751, 4
      %v9210 = vsel %vm9095, %v9207, %v9209
      %v9211 = vrot.slane %v752, 4
      %v9212 = vsel %vm9095, %v9209, %v9211
      %v9213 = vrot.slane %v753, 4
      %v9214 = vsel %vm9095, %v9211, %v9213
      %v9215 = vrot.slane %v754, 4
      %v9216 = vsel %vm9095, %v9213, %v9215
      %v9217 = vrot.slane %v755, 4
      %v9218 = vsel %vm9095, %v9215, %v9217
      %v9219 = vrot.slane %v756, 4
      %v9220 = vsel %vm9095, %v9217, %v9219
      %v9221 = vrot.slane %v757, 4
      %v9222 = vsel %vm9095, %v9219, %v9221
      %v9223 = vrot.slane %v762, 4
      %v9224 = vsel %vm9095, %v9221, %v9223
      %v9226 = vsel %vm1283, %v9098, 0
      %v9229 = vsel %vm1283, %v9100, 0
      %v9232 = vsel %vm1283, %v9102, 0
      %v9235 = vsel %vm1283, %v9104, 0
      %v9238 = vsel %vm1283, %v9106, 0
      %v9241 = vsel %vm1283, %v9108, 0
      %v9244 = vsel %vm1283, %v9110, 0
      %v9247 = vsel %vm1283, %v9112, 0
      %v9250 = vsel %vm1283, %v9114, 0
      %v9253 = vsel %vm1283, %v9116, 0
      %v9256 = vsel %vm1283, %v9118, 0
      %v9259 = vsel %vm1283, %v9120, 0
      %v9262 = vsel %vm1283, %v9122, 0
      %v9265 = vsel %vm1283, %v9124, 0
      %v9268 = vsel %vm1283, %v9126, 0
      %v9271 = vsel %vm1283, %v9128, 0
      %v9274 = vsel %vm1283, %v9130, 0
      %v9277 = vsel %vm1283, %v9132, 0
      %v9280 = vsel %vm1283, %v9134, 0
      %v9283 = vsel %vm1283, %v9136, 0
      %v9286 = vsel %vm1283, %v9138, 0
      %v9289 = vsel %vm1283, %v9140, 0
      %v9292 = vsel %vm1283, %v9142, 0
      %v9295 = vsel %vm1283, %v9144, 0
      %v9298 = vsel %vm1283, %v9146, 0
      %v9301 = vsel %vm1283, %v9148, 0
      %v9304 = vsel %vm1283, %v9150, 0
      %v9307 = vsel %vm1283, %v9152, 0
      %v9310 = vsel %vm1283, %v9154, 0
      %v9313 = vsel %vm1283, %v9156, 0
      %v9316 = vsel %vm1283, %v9158, 0
      %v9319 = vsel %vm1283, %v9160, 0
      %v9322 = vsel %vm1283, %v9162, 0
      %v9325 = vsel %vm1283, %v9164, 0
      %v9328 = vsel %vm1283, %v9166, 0
      %v9331 = vsel %vm1283, %v9168, 0
      %v9334 = vsel %vm1283, %v9170, 0
      %v9337 = vsel %vm1283, %v9172, 0
      %v9340 = vsel %vm1283, %v9174, 0
      %v9343 = vsel %vm1283, %v9176, 0
      %v9346 = vsel %vm1283, %v9178, 0
      %v9349 = vsel %vm1283, %v9180, 0
      %v9352 = vsel %vm1283, %v9182, 0
      %v9355 = vsel %vm1283, %v9184, 0
      %v9358 = vsel %vm1283, %v9186, 0
      %v9361 = vsel %vm1283, %v9188, 0
      %v9364 = vsel %vm1283, %v9190, 0
      %v9367 = vsel %vm1283, %v9192, 0
      %v9370 = vsel %vm1283, %v9194, 0
      %v9373 = vsel %vm1283, %v9196, 0
      %v9376 = vsel %vm1283, %v9198, 0
      %v9379 = vsel %vm1283, %v9200, 0
      %v9382 = vsel %vm1283, %v9202, 0
      %v9385 = vsel %vm1283, %v9204, 0
      %v9388 = vsel %vm1283, %v9206, 0
      %v9391 = vsel %vm1283, %v9208, 0
      %v9394 = vsel %vm1283, %v9210, 0
      %v9397 = vsel %vm1283, %v9212, 0
      %v9400 = vsel %vm1283, %v9214, 0
      %v9403 = vsel %vm1283, %v9216, 0
      %v9406 = vsel %vm1283, %v9218, 0
      %v9409 = vsel %vm1283, %v9220, 0
      %v9412 = vsel %vm1283, %v9222, 0
      %v9415 = vsel %vm1283, %v9224, 0
      %v9418 = vsel %vm1476, %v9094, 0
      %9420 = vmatprep.subr.bf16.mxu0 0
      %9421 = vmatpush1.bf16.msra.mxu0 %v9418
      %9422 = vmatprep.subr.bf16.mxu0 0
      %9423 = vmatpush1.bf16.msra.mxu0 0
      %9424 = vmatprep.subr.bf16.mxu0 0
      %9425 = vmatpush1.bf16.msra.mxu0 0
      %9426 = vmatprep.subr.bf16.mxu0 0
      %9427 = vmatpush1.bf16.msra.mxu0 0
      %9428 = vmatprep.subr.bf16.mxu0 0
      %9429 = vmatpush1.bf16.msra.mxu0 0
      %9430 = vmatprep.subr.bf16.mxu0 0
      %9431 = vmatpush1.bf16.msra.mxu0 0
      %9432 = vmatprep.subr.bf16.mxu0 0
      %9433 = vmatpush1.bf16.msra.mxu0 0
      %9434 = vmatprep.subr.bf16.mxu0 0
      %9435 = vmatpush1.bf16.msra.mxu0 0
      %9436 = vmatprep.subr.bf16.mxu0 0
      %9437 = vmatpush1.bf16.msra.mxu0 0
      %9438 = vmatprep.subr.bf16.mxu0 0
      %9439 = vmatpush1.bf16.msra.mxu0 0
      %9440 = vmatprep.subr.bf16.mxu0 0
      %9441 = vmatpush1.bf16.msra.mxu0 0
      %9442 = vmatprep.subr.bf16.mxu0 0
      %9443 = vmatpush1.bf16.msra.mxu0 0
      %9444 = vmatprep.subr.bf16.mxu0 0
      %9445 = vmatpush1.bf16.msra.mxu0 0
      %9446 = vmatprep.subr.bf16.mxu0 0
      %9447 = vmatpush1.bf16.msra.mxu0 0
      %9448 = vmatprep.subr.bf16.mxu0 0
      %9449 = vmatpush1.bf16.msra.mxu0 0
      %9450 = vmatprep.subr.bf16.mxu0 0
      %9451 = vmatpush1.bf16.msra.mxu0 0
      %9452 = vmatprep.mubr.bf16.mxu0 0
      %9453 = vmatmul.mubr.bf16.gmra.mrb[0].mxu0 %v9226
      %v9454 = vpop.f32.mrb[0].mxu0
      %v9455 = vadd.f32 0.0, %v9454
      %v9456 = vpop.f32.mrb[0].mxu0
      %v9457 = vpop.f32.mrb[0].mxu0
      %v9458 = vadd.f32 0.0, %v9457
      %v9459 = vpop.f32.mrb[0].mxu0
      %9460 = vmatprep.mubr.bf16.mxu0 0
      %9461 = vmatmul.mubr.bf16.gmra.mrb[0].mxu0 %v9229
      %v9462 = vpop.f32.mrb[0].mxu0
      %v9463 = vadd.f32 0.0, %v9462
      %v9464 = vpop.f32.mrb[0].mxu0
      %v9465 = vpop.f32.mrb[0].mxu0
      %v9466 = vadd.f32 0.0, %v9465
      %v9467 = vpop.f32.mrb[0].mxu0
      %9468 = vmatprep.mubr.bf16.mxu0 0
      %9469 = vmatmul.mubr.bf16.gmra.mrb[0].mxu0 %v9232
      %v9470 = vpop.f32.mrb[0].mxu0
      %v9471 = vadd.f32 0.0, %v9470
      %v9472 = vpop.f32.mrb[0].mxu0
      %v9473 = vpop.f32.mrb[0].mxu0
      %v9474 = vadd.f32 0.0, %v9473
      %v9475 = vpop.f32.mrb[0].mxu0
      %9476 = vmatprep.mubr.bf16.mxu0 0
      %9477 = vmatmul.mubr.bf16.gmra.mrb[0].mxu0 %v9235
      %v9478 = vpop.f32.mrb[0].mxu0
      %v9479 = vadd.f32 0.0, %v9478
      %v9480 = vpop.f32.mrb[0].mxu0
      %v9481 = vpop.f32.mrb[0].mxu0
      %v9482 = vadd.f32 0.0, %v9481
      %v9483 = vpop.f32.mrb[0].mxu0
      %9484 = vmatprep.mubr.bf16.mxu0 0
      %9485 = vmatmul.mubr.bf16.gmra.mrb[0].mxu0 %v9238
      %v9486 = vpop.f32.mrb[0].mxu0
      %v9487 = vadd.f32 0.0, %v9486
      %v9488 = vpop.f32.mrb[0].mxu0
      %v9489 = vpop.f32.mrb[0].mxu0
      %v9490 = vadd.f32 0.0, %v9489
      %v9491 = vpop.f32.mrb[0].mxu0
      %9492 = vmatprep.mubr.bf16.mxu0 0
      %9493 = vmatmul.mubr.bf16.gmra.mrb[0].mxu0 %v9241
      %v9494 = vpop.f32.mrb[0].mxu0
      %v9495 = vadd.f32 0.0, %v9494
      %v9496 = vpop.f32.mrb[0].mxu0
      %v9497 = vpop.f32.mrb[0].mxu0
      %v9498 = vadd.f32 0.0, %v9497
      %v9499 = vpop.f32.mrb[0].mxu0
      %9500 = vmatprep.mubr.bf16.mxu0 0
      %9501 = vmatmul.mubr.bf16.gmra.mrb[0].mxu0 %v9244
      %v9502 = vpop.f32.mrb[0].mxu0
      %v9503 = vadd.f32 0.0, %v9502
      %v9504 = vpop.f32.mrb[0].mxu0
      %v9505 = vpop.f32.mrb[0].mxu0
      %v9506 = vadd.f32 0.0, %v9505
      %v9507 = vpop.f32.mrb[0].mxu0
      %9508 = vmatprep.mubr.bf16.mxu0 0
      %9509 = vmatmul.mubr.bf16.gmra.mrb[0].mxu0 %v9247
      %v9510 = vpop.f32.mrb[0].mxu0
      %v9511 = vadd.f32 0.0, %v9510
      %v9512 = vpop.f32.mrb[0].mxu0
      %v9513 = vpop.f32.mrb[0].mxu0
      %v9514 = vadd.f32 0.0, %v9513
      %v9515 = vpop.f32.mrb[0].mxu0
      %9516 = vmatprep.mubr.bf16.mxu0 0
      %9517 = vmatmul.mubr.bf16.gmra.mrb[0].mxu0 %v9250
      %v9518 = vpop.f32.mrb[0].mxu0
      %v9519 = vadd.f32 0.0, %v9518
      %v9520 = vpop.f32.mrb[0].mxu0
      %v9521 = vpop.f32.mrb[0].mxu0
      %v9522 = vadd.f32 0.0, %v9521
      %v9523 = vpop.f32.mrb[0].mxu0
      %9524 = vmatprep.mubr.bf16.mxu0 0
      %9525 = vmatmul.mubr.bf16.gmra.mrb[0].mxu0 %v9253
      %v9526 = vpop.f32.mrb[0].mxu0
      %v9527 = vadd.f32 0.0, %v9526
      %v9528 = vpop.f32.mrb[0].mxu0
      %v9529 = vpop.f32.mrb[0].mxu0
      %v9530 = vadd.f32 0.0, %v9529
      %v9531 = vpop.f32.mrb[0].mxu0
      %9532 = vmatprep.mubr.bf16.mxu0 0
      %9533 = vmatmul.mubr.bf16.gmra.mrb[0].mxu0 %v9256
      %v9534 = vpop.f32.mrb[0].mxu0
      %v9535 = vadd.f32 0.0, %v9534
      %v9536 = vpop.f32.mrb[0].mxu0
      %v9537 = vpop.f32.mrb[0].mxu0
      %v9538 = vadd.f32 0.0, %v9537
      %v9539 = vpop.f32.mrb[0].mxu0
      %9540 = vmatprep.mubr.bf16.mxu0 0
      %9541 = vmatmul.mubr.bf16.gmra.mrb[0].mxu0 %v9259
      %v9542 = vpop.f32.mrb[0].mxu0
      %v9543 = vadd.f32 0.0, %v9542
      %v9544 = vpop.f32.mrb[0].mxu0
      %v9545 = vpop.f32.mrb[0].mxu0
      %v9546 = vadd.f32 0.0, %v9545
      %v9547 = vpop.f32.mrb[0].mxu0
      %9548 = vmatprep.mubr.bf16.mxu0 0
      %9549 = vmatmul.mubr.bf16.gmra.mrb[0].mxu0 %v9262
      %v9550 = vpop.f32.mrb[0].mxu0
      %v9551 = vadd.f32 0.0, %v9550
      %v9552 = vpop.f32.mrb[0].mxu0
      %v9553 = vpop.f32.mrb[0].mxu0
      %v9554 = vadd.f32 0.0, %v9553
      %v9555 = vpop.f32.mrb[0].mxu0
      %9556 = vmatprep.mubr.bf16.mxu0 0
      %9557 = vmatmul.mubr.bf16.gmra.mrb[0].mxu0 %v9265
      %v9558 = vpop.f32.mrb[0].mxu0
      %v9559 = vadd.f32 0.0, %v9558
      %v9560 = vpop.f32.mrb[0].mxu0
      %v9561 = vpop.f32.mrb[0].mxu0
      %v9562 = vadd.f32 0.0, %v9561
      %v9563 = vpop.f32.mrb[0].mxu0
      %9564 = vmatprep.mubr.bf16.mxu0 0
      %9565 = vmatmul.mubr.bf16.gmra.mrb[0].mxu0 %v9268
      %v9566 = vpop.f32.mrb[0].mxu0
      %v9567 = vadd.f32 0.0, %v9566
      %v9568 = vpop.f32.mrb[0].mxu0
      %v9569 = vpop.f32.mrb[0].mxu0
      %v9570 = vadd.f32 0.0, %v9569
      %v9571 = vpop.f32.mrb[0].mxu0
      %9572 = vmatprep.mubr.bf16.mxu0 0
      %9573 = vmatmul.mubr.bf16.gmra.mrb[0].mxu0 %v9271
      %v9574 = vpop.f32.mrb[0].mxu0
      %v9575 = vadd.f32 0.0, %v9574
      %v9576 = vpop.f32.mrb[0].mxu0
      %v9577 = vpop.f32.mrb[0].mxu0
      %v9578 = vadd.f32 0.0, %v9577
      %v9579 = vpop.f32.mrb[0].mxu0
      %9580 = vmatprep.mubr.bf16.mxu0 0
      %9581 = vmatmul.mubr.bf16.gmra.mrb[0].mxu0 %v9274
      %v9582 = vpop.f32.mrb[0].mxu0
      %v9583 = vadd.f32 0.0, %v9582
      %v9584 = vpop.f32.mrb[0].mxu0
      %v9585 = vpop.f32.mrb[0].mxu0
      %v9586 = vadd.f32 0.0, %v9585
      %v9587 = vpop.f32.mrb[0].mxu0
      %9588 = vmatprep.mubr.bf16.mxu0 0
      %9589 = vmatmul.mubr.bf16.gmra.mrb[0].mxu0 %v9277
      %v9590 = vpop.f32.mrb[0].mxu0
      %v9591 = vadd.f32 0.0, %v9590
      %v9592 = vpop.f32.mrb[0].mxu0
      %v9593 = vpop.f32.mrb[0].mxu0
      %v9594 = vadd.f32 0.0, %v9593
      %v9595 = vpop.f32.mrb[0].mxu0
      %9596 = vmatprep.mubr.bf16.mxu0 0
      %9597 = vmatmul.mubr.bf16.gmra.mrb[0].mxu0 %v9280
      %v9598 = vpop.f32.mrb[0].mxu0
      %v9599 = vadd.f32 0.0, %v9598
      %v9600 = vpop.f32.mrb[0].mxu0
      %v9601 = vpop.f32.mrb[0].mxu0
      %v9602 = vadd.f32 0.0, %v9601
      %v9603 = vpop.f32.mrb[0].mxu0
      %9604 = vmatprep.mubr.bf16.mxu0 0
      %9605 = vmatmul.mubr.bf16.gmra.mrb[0].mxu0 %v9283
      %v9606 = vpop.f32.mrb[0].mxu0
      %v9607 = vadd.f32 0.0, %v9606
      %v9608 = vpop.f32.mrb[0].mxu0
      %v9609 = vpop.f32.mrb[0].mxu0
      %v9610 = vadd.f32 0.0, %v9609
      %v9611 = vpop.f32.mrb[0].mxu0
      %9612 = vmatprep.mubr.bf16.mxu0 0
      %9613 = vmatmul.mubr.bf16.gmra.mrb[0].mxu0 %v9286
      %v9614 = vpop.f32.mrb[0].mxu0
      %v9615 = vadd.f32 0.0, %v9614
      %v9616 = vpop.f32.mrb[0].mxu0
      %v9617 = vpop.f32.mrb[0].mxu0
      %v9618 = vadd.f32 0.0, %v9617
      %v9619 = vpop.f32.mrb[0].mxu0
      %9620 = vmatprep.mubr.bf16.mxu0 0
      %9621 = vmatmul.mubr.bf16.gmra.mrb[0].mxu0 %v9289
      %v9622 = vpop.f32.mrb[0].mxu0
      %v9623 = vadd.f32 0.0, %v9622
      %v9624 = vpop.f32.mrb[0].mxu0
      %v9625 = vpop.f32.mrb[0].mxu0
      %v9626 = vadd.f32 0.0, %v9625
      %v9627 = vpop.f32.mrb[0].mxu0
      %9628 = vmatprep.mubr.bf16.mxu0 0
      %9629 = vmatmul.mubr.bf16.gmra.mrb[0].mxu0 %v9292
      %v9630 = vpop.f32.mrb[0].mxu0
      %v9631 = vadd.f32 0.0, %v9630
      %v9632 = vpop.f32.mrb[0].mxu0
      %v9633 = vpop.f32.mrb[0].mxu0
      %v9634 = vadd.f32 0.0, %v9633
      %v9635 = vpop.f32.mrb[0].mxu0
      %9636 = vmatprep.mubr.bf16.mxu0 0
      %9637 = vmatmul.mubr.bf16.gmra.mrb[0].mxu0 %v9295
      %v9638 = vpop.f32.mrb[0].mxu0
      %v9639 = vadd.f32 0.0, %v9638
      %v9640 = vpop.f32.mrb[0].mxu0
      %v9641 = vpop.f32.mrb[0].mxu0
      %v9642 = vadd.f32 0.0, %v9641
      %v9643 = vpop.f32.mrb[0].mxu0
      %9644 = vmatprep.mubr.bf16.mxu0 0
      %9645 = vmatmul.mubr.bf16.gmra.mrb[0].mxu0 %v9298
      %v9646 = vpop.f32.mrb[0].mxu0
      %v9647 = vadd.f32 0.0, %v9646
      %v9648 = vpop.f32.mrb[0].mxu0
      %v9649 = vpop.f32.mrb[0].mxu0
      %v9650 = vadd.f32 0.0, %v9649
      %v9651 = vpop.f32.mrb[0].mxu0
      %9652 = vmatprep.mubr.bf16.mxu0 0
      %9653 = vmatmul.mubr.bf16.gmra.mrb[0].mxu0 %v9301
      %v9654 = vpop.f32.mrb[0].mxu0
      %v9655 = vadd.f32 0.0, %v9654
      %v9656 = vpop.f32.mrb[0].mxu0
      %v9657 = vpop.f32.mrb[0].mxu0
      %v9658 = vadd.f32 0.0, %v9657
      %v9659 = vpop.f32.mrb[0].mxu0
      %9660 = vmatprep.mubr.bf16.mxu0 0
      %9661 = vmatmul.mubr.bf16.gmra.mrb[0].mxu0 %v9304
      %v9662 = vpop.f32.mrb[0].mxu0
      %v9663 = vadd.f32 0.0, %v9662
      %v9664 = vpop.f32.mrb[0].mxu0
      %v9665 = vpop.f32.mrb[0].mxu0
      %v9666 = vadd.f32 0.0, %v9665
      %v9667 = vpop.f32.mrb[0].mxu0
      %9668 = vmatprep.mubr.bf16.mxu0 0
      %9669 = vmatmul.mubr.bf16.gmra.mrb[0].mxu0 %v9307
      %v9670 = vpop.f32.mrb[0].mxu0
      %v9671 = vadd.f32 0.0, %v9670
      %v9672 = vpop.f32.mrb[0].mxu0
      %v9673 = vpop.f32.mrb[0].mxu0
      %v9674 = vadd.f32 0.0, %v9673
      %v9675 = vpop.f32.mrb[0].mxu0
      %9676 = vmatprep.mubr.bf16.mxu0 0
      %9677 = vmatmul.mubr.bf16.gmra.mrb[0].mxu0 %v9310
      %v9678 = vpop.f32.mrb[0].mxu0
      %v9679 = vadd.f32 0.0, %v9678
      %v9680 = vpop.f32.mrb[0].mxu0
      %v9681 = vpop.f32.mrb[0].mxu0
      %v9682 = vadd.f32 0.0, %v9681
      %v9683 = vpop.f32.mrb[0].mxu0
      %9684 = vmatprep.mubr.bf16.mxu0 0
      %9685 = vmatmul.mubr.bf16.gmra.mrb[0].mxu0 %v9313
      %v9686 = vpop.f32.mrb[0].mxu0
      %v9687 = vadd.f32 0.0, %v9686
      %v9688 = vpop.f32.mrb[0].mxu0
      %v9689 = vpop.f32.mrb[0].mxu0
      %v9690 = vadd.f32 0.0, %v9689
      %v9691 = vpop.f32.mrb[0].mxu0
      %9692 = vmatprep.mubr.bf16.mxu0 0
      %9693 = vmatmul.mubr.bf16.gmra.mrb[0].mxu0 %v9316
      %v9694 = vpop.f32.mrb[0].mxu0
      %v9695 = vadd.f32 0.0, %v9694
      %v9696 = vpop.f32.mrb[0].mxu0
      %v9697 = vpop.f32.mrb[0].mxu0
      %v9698 = vadd.f32 0.0, %v9697
      %v9699 = vpop.f32.mrb[0].mxu0
      %9700 = vmatprep.mubr.bf16.mxu0 0
      %9701 = vmatmul.mubr.bf16.gmra.mrb[0].mxu0 %v9319
      %v9702 = vpop.f32.mrb[0].mxu0
      %v9703 = vadd.f32 0.0, %v9702
      %v9704 = vpop.f32.mrb[0].mxu0
      %v9705 = vpop.f32.mrb[0].mxu0
      %v9706 = vadd.f32 0.0, %v9705
      %v9707 = vpop.f32.mrb[0].mxu0
      %9708 = vmatprep.mubr.bf16.mxu0 0
      %9709 = vmatmul.mubr.bf16.gmra.mrb[0].mxu0 %v9322
      %v9710 = vpop.f32.mrb[0].mxu0
      %v9711 = vadd.f32 0.0, %v9710
      %v9712 = vpop.f32.mrb[0].mxu0
      %v9713 = vpop.f32.mrb[0].mxu0
      %v9714 = vadd.f32 0.0, %v9713
      %v9715 = vpop.f32.mrb[0].mxu0
      %9716 = vmatprep.mubr.bf16.mxu0 0
      %9717 = vmatmul.mubr.bf16.gmra.mrb[0].mxu0 %v9325
      %v9718 = vpop.f32.mrb[0].mxu0
      %v9719 = vadd.f32 0.0, %v9718
      %v9720 = vpop.f32.mrb[0].mxu0
      %v9721 = vpop.f32.mrb[0].mxu0
      %v9722 = vadd.f32 0.0, %v9721
      %v9723 = vpop.f32.mrb[0].mxu0
      %9724 = vmatprep.mubr.bf16.mxu0 0
      %9725 = vmatmul.mubr.bf16.gmra.mrb[0].mxu0 %v9328
      %v9726 = vpop.f32.mrb[0].mxu0
      %v9727 = vadd.f32 0.0, %v9726
      %v9728 = vpop.f32.mrb[0].mxu0
      %v9729 = vpop.f32.mrb[0].mxu0
      %v9730 = vadd.f32 0.0, %v9729
      %v9731 = vpop.f32.mrb[0].mxu0
      %9732 = vmatprep.mubr.bf16.mxu0 0
      %9733 = vmatmul.mubr.bf16.gmra.mrb[0].mxu0 %v9331
      %v9734 = vpop.f32.mrb[0].mxu0
      %v9735 = vadd.f32 0.0, %v9734
      %v9736 = vpop.f32.mrb[0].mxu0
      %v9737 = vpop.f32.mrb[0].mxu0
      %v9738 = vadd.f32 0.0, %v9737
      %v9739 = vpop.f32.mrb[0].mxu0
      %9740 = vmatprep.mubr.bf16.mxu0 0
      %9741 = vmatmul.mubr.bf16.gmra.mrb[0].mxu0 %v9334
      %v9742 = vpop.f32.mrb[0].mxu0
      %v9743 = vadd.f32 0.0, %v9742
      %v9744 = vpop.f32.mrb[0].mxu0
      %v9745 = vpop.f32.mrb[0].mxu0
      %v9746 = vadd.f32 0.0, %v9745
      %v9747 = vpop.f32.mrb[0].mxu0
      %9748 = vmatprep.mubr.bf16.mxu0 0
      %9749 = vmatmul.mubr.bf16.gmra.mrb[0].mxu0 %v9337
      %v9750 = vpop.f32.mrb[0].mxu0
      %v9751 = vadd.f32 0.0, %v9750
      %v9752 = vpop.f32.mrb[0].mxu0
      %v9753 = vpop.f32.mrb[0].mxu0
      %v9754 = vadd.f32 0.0, %v9753
      %v9755 = vpop.f32.mrb[0].mxu0
      %9756 = vmatprep.mubr.bf16.mxu0 0
      %9757 = vmatmul.mubr.bf16.gmra.mrb[0].mxu0 %v9340
      %v9758 = vpop.f32.mrb[0].mxu0
      %v9759 = vadd.f32 0.0, %v9758
      %v9760 = vpop.f32.mrb[0].mxu0
      %v9761 = vpop.f32.mrb[0].mxu0
      %v9762 = vadd.f32 0.0, %v9761
      %v9763 = vpop.f32.mrb[0].mxu0
      %9764 = vmatprep.mubr.bf16.mxu0 0
      %9765 = vmatmul.mubr.bf16.gmra.mrb[0].mxu0 %v9343
      %v9766 = vpop.f32.mrb[0].mxu0
      %v9767 = vadd.f32 0.0, %v9766
      %v9768 = vpop.f32.mrb[0].mxu0
      %v9769 = vpop.f32.mrb[0].mxu0
      %v9770 = vadd.f32 0.0, %v9769
      %v9771 = vpop.f32.mrb[0].mxu0
      %9772 = vmatprep.mubr.bf16.mxu0 0
      %9773 = vmatmul.mubr.bf16.gmra.mrb[0].mxu0 %v9346
      %v9774 = vpop.f32.mrb[0].mxu0
      %v9775 = vadd.f32 0.0, %v9774
      %v9776 = vpop.f32.mrb[0].mxu0
      %v9777 = vpop.f32.mrb[0].mxu0
      %v9778 = vadd.f32 0.0, %v9777
      %v9779 = vpop.f32.mrb[0].mxu0
      %9780 = vmatprep.mubr.bf16.mxu0 0
      %9781 = vmatmul.mubr.bf16.gmra.mrb[0].mxu0 %v9349
      %v9782 = vpop.f32.mrb[0].mxu0
      %v9783 = vadd.f32 0.0, %v9782
      %v9784 = vpop.f32.mrb[0].mxu0
      %v9785 = vpop.f32.mrb[0].mxu0
      %v9786 = vadd.f32 0.0, %v9785
      %v9787 = vpop.f32.mrb[0].mxu0
      %9788 = vmatprep.mubr.bf16.mxu0 0
      %9789 = vmatmul.mubr.bf16.gmra.mrb[0].mxu0 %v9352
      %v9790 = vpop.f32.mrb[0].mxu0
      %v9791 = vadd.f32 0.0, %v9790
      %v9792 = vpop.f32.mrb[0].mxu0
      %v9793 = vpop.f32.mrb[0].mxu0
      %v9794 = vadd.f32 0.0, %v9793
      %v9795 = vpop.f32.mrb[0].mxu0
      %9796 = vmatprep.mubr.bf16.mxu0 0
      %9797 = vmatmul.mubr.bf16.gmra.mrb[0].mxu0 %v9355
      %v9798 = vpop.f32.mrb[0].mxu0
      %v9799 = vadd.f32 0.0, %v9798
      %v9800 = vpop.f32.mrb[0].mxu0
      %v9801 = vpop.f32.mrb[0].mxu0
      %v9802 = vadd.f32 0.0, %v9801
      %v9803 = vpop.f32.mrb[0].mxu0
      %9804 = vmatprep.mubr.bf16.mxu0 0
      %9805 = vmatmul.mubr.bf16.gmra.mrb[0].mxu0 %v9358
      %v9806 = vpop.f32.mrb[0].mxu0
      %v9807 = vadd.f32 0.0, %v9806
      %v9808 = vpop.f32.mrb[0].mxu0
      %v9809 = vpop.f32.mrb[0].mxu0
      %v9810 = vadd.f32 0.0, %v9809
      %v9811 = vpop.f32.mrb[0].mxu0
      %9812 = vmatprep.mubr.bf16.mxu0 0
      %9813 = vmatmul.mubr.bf16.gmra.mrb[0].mxu0 %v9361
      %v9814 = vpop.f32.mrb[0].mxu0
      %v9815 = vadd.f32 0.0, %v9814
      %v9816 = vpop.f32.mrb[0].mxu0
      %v9817 = vpop.f32.mrb[0].mxu0
      %v9818 = vadd.f32 0.0, %v9817
      %v9819 = vpop.f32.mrb[0].mxu0
      %9820 = vmatprep.mubr.bf16.mxu0 0
      %9821 = vmatmul.mubr.bf16.gmra.mrb[0].mxu0 %v9364
      %v9822 = vpop.f32.mrb[0].mxu0
      %v9823 = vadd.f32 0.0, %v9822
      %v9824 = vpop.f32.mrb[0].mxu0
      %v9825 = vpop.f32.mrb[0].mxu0
      %v9826 = vadd.f32 0.0, %v9825
      %v9827 = vpop.f32.mrb[0].mxu0
      %9828 = vmatprep.mubr.bf16.mxu0 0
      %9829 = vmatmul.mubr.bf16.gmra.mrb[0].mxu0 %v9367
      %v9830 = vpop.f32.mrb[0].mxu0
      %v9831 = vadd.f32 0.0, %v9830
      %v9832 = vpop.f32.mrb[0].mxu0
      %v9833 = vpop.f32.mrb[0].mxu0
      %v9834 = vadd.f32 0.0, %v9833
      %v9835 = vpop.f32.mrb[0].mxu0
      %9836 = vmatprep.mubr.bf16.mxu0 0
      %9837 = vmatmul.mubr.bf16.gmra.mrb[0].mxu0 %v9370
      %v9838 = vpop.f32.mrb[0].mxu0
      %v9839 = vadd.f32 0.0, %v9838
      %v9840 = vpop.f32.mrb[0].mxu0
      %v9841 = vpop.f32.mrb[0].mxu0
      %v9842 = vadd.f32 0.0, %v9841
      %v9843 = vpop.f32.mrb[0].mxu0
      %9844 = vmatprep.mubr.bf16.mxu0 0
      %9845 = vmatmul.mubr.bf16.gmra.mrb[0].mxu0 %v9373
      %v9846 = vpop.f32.mrb[0].mxu0
      %v9847 = vadd.f32 0.0, %v9846
      %v9848 = vpop.f32.mrb[0].mxu0
      %v9849 = vpop.f32.mrb[0].mxu0
      %v9850 = vadd.f32 0.0, %v9849
      %v9851 = vpop.f32.mrb[0].mxu0
      %9852 = vmatprep.mubr.bf16.mxu0 0
      %9853 = vmatmul.mubr.bf16.gmra.mrb[0].mxu0 %v9376
      %v9854 = vpop.f32.mrb[0].mxu0
      %v9855 = vadd.f32 0.0, %v9854
      %v9856 = vpop.f32.mrb[0].mxu0
      %v9857 = vpop.f32.mrb[0].mxu0
      %v9858 = vadd.f32 0.0, %v9857
      %v9859 = vpop.f32.mrb[0].mxu0
      %9860 = vmatprep.mubr.bf16.mxu0 0
      %9861 = vmatmul.mubr.bf16.gmra.mrb[0].mxu0 %v9379
      %v9862 = vpop.f32.mrb[0].mxu0
      %v9863 = vadd.f32 0.0, %v9862
      %v9864 = vpop.f32.mrb[0].mxu0
      %v9865 = vpop.f32.mrb[0].mxu0
      %v9866 = vadd.f32 0.0, %v9865
      %v9867 = vpop.f32.mrb[0].mxu0
      %9868 = vmatprep.mubr.bf16.mxu0 0
      %9869 = vmatmul.mubr.bf16.gmra.mrb[0].mxu0 %v9382
      %v9870 = vpop.f32.mrb[0].mxu0
      %v9871 = vadd.f32 0.0, %v9870
      %v9872 = vpop.f32.mrb[0].mxu0
      %v9873 = vpop.f32.mrb[0].mxu0
      %v9874 = vadd.f32 0.0, %v9873
      %v9875 = vpop.f32.mrb[0].mxu0
      %9876 = vmatprep.mubr.bf16.mxu0 0
      %9877 = vmatmul.mubr.bf16.gmra.mrb[0].mxu0 %v9385
      %v9878 = vpop.f32.mrb[0].mxu0
      %v9879 = vadd.f32 0.0, %v9878
      %v9880 = vpop.f32.mrb[0].mxu0
      %v9881 = vpop.f32.mrb[0].mxu0
      %v9882 = vadd.f32 0.0, %v9881
      %v9883 = vpop.f32.mrb[0].mxu0
      %9884 = vmatprep.mubr.bf16.mxu0 0
      %9885 = vmatmul.mubr.bf16.gmra.mrb[0].mxu0 %v9388
      %v9886 = vpop.f32.mrb[0].mxu0
      %v9887 = vadd.f32 0.0, %v9886
      %v9888 = vpop.f32.mrb[0].mxu0
      %v9889 = vpop.f32.mrb[0].mxu0
      %v9890 = vadd.f32 0.0, %v9889
      %v9891 = vpop.f32.mrb[0].mxu0
      %9892 = vmatprep.mubr.bf16.mxu0 0
      %9893 = vmatmul.mubr.bf16.gmra.mrb[0].mxu0 %v9391
      %v9894 = vpop.f32.mrb[0].mxu0
      %v9895 = vadd.f32 0.0, %v9894
      %v9896 = vpop.f32.mrb[0].mxu0
      %v9897 = vpop.f32.mrb[0].mxu0
      %v9898 = vadd.f32 0.0, %v9897
      %v9899 = vpop.f32.mrb[0].mxu0
      %9900 = vmatprep.mubr.bf16.mxu0 0
      %9901 = vmatmul.mubr.bf16.gmra.mrb[0].mxu0 %v9394
      %v9902 = vpop.f32.mrb[0].mxu0
      %v9903 = vadd.f32 0.0, %v9902
      %v9904 = vpop.f32.mrb[0].mxu0
      %v9905 = vpop.f32.mrb[0].mxu0
      %v9906 = vadd.f32 0.0, %v9905
      %v9907 = vpop.f32.mrb[0].mxu0
      %9908 = vmatprep.mubr.bf16.mxu0 0
      %9909 = vmatmul.mubr.bf16.gmra.mrb[0].mxu0 %v9397
      %v9910 = vpop.f32.mrb[0].mxu0
      %v9911 = vadd.f32 0.0, %v9910
      %v9912 = vpop.f32.mrb[0].mxu0
      %v9913 = vpop.f32.mrb[0].mxu0
      %v9914 = vadd.f32 0.0, %v9913
      %v9915 = vpop.f32.mrb[0].mxu0
      %9916 = vmatprep.mubr.bf16.mxu0 0
      %9917 = vmatmul.mubr.bf16.gmra.mrb[0].mxu0 %v9400
      %v9918 = vpop.f32.mrb[0].mxu0
      %v9919 = vadd.f32 0.0, %v9918
      %v9920 = vpop.f32.mrb[0].mxu0
      %v9921 = vpop.f32.mrb[0].mxu0
      %v9922 = vadd.f32 0.0, %v9921
      %v9923 = vpop.f32.mrb[0].mxu0
      %9924 = vmatprep.mubr.bf16.mxu0 0
      %9925 = vmatmul.mubr.bf16.gmra.mrb[0].mxu0 %v9403
      %v9926 = vpop.f32.mrb[0].mxu0
      %v9927 = vadd.f32 0.0, %v9926
      %v9928 = vpop.f32.mrb[0].mxu0
      %v9929 = vpop.f32.mrb[0].mxu0
      %v9930 = vadd.f32 0.0, %v9929
      %v9931 = vpop.f32.mrb[0].mxu0
      %9932 = vmatprep.mubr.bf16.mxu0 0
      %9933 = vmatmul.mubr.bf16.gmra.mrb[0].mxu0 %v9406
      %v9934 = vpop.f32.mrb[0].mxu0
      %v9935 = vadd.f32 0.0, %v9934
      %v9936 = vpop.f32.mrb[0].mxu0
      %v9937 = vpop.f32.mrb[0].mxu0
      %v9938 = vadd.f32 0.0, %v9937
      %v9939 = vpop.f32.mrb[0].mxu0
      %9940 = vmatprep.mubr.bf16.mxu0 0
      %9941 = vmatmul.mubr.bf16.gmra.mrb[0].mxu0 %v9409
      %v9942 = vpop.f32.mrb[0].mxu0
      %v9943 = vadd.f32 0.0, %v9942
      %v9944 = vpop.f32.mrb[0].mxu0
      %v9945 = vpop.f32.mrb[0].mxu0
      %v9946 = vadd.f32 0.0, %v9945
      %v9947 = vpop.f32.mrb[0].mxu0
      %9948 = vmatprep.mubr.bf16.mxu0 0
      %9949 = vmatmul.mubr.bf16.gmra.mrb[0].mxu0 %v9412
      %v9950 = vpop.f32.mrb[0].mxu0
      %v9951 = vadd.f32 0.0, %v9950
      %v9952 = vpop.f32.mrb[0].mxu0
      %v9953 = vpop.f32.mrb[0].mxu0
      %v9954 = vadd.f32 0.0, %v9953
      %v9955 = vpop.f32.mrb[0].mxu0
      %9956 = vmatprep.mubr.bf16.mxu0 0
      %9957 = vmatmul.mubr.bf16.gmra.mrb[0].mxu0 %v9415
      %v9958 = vpop.f32.mrb[0].mxu0
      %v9959 = vadd.f32 0.0, %v9958
      %v9960 = vpop.f32.mrb[0].mxu0
      %v9961 = vpop.f32.mrb[0].mxu0
      %v9962 = vadd.f32 0.0, %v9961
      %v9963 = vpop.f32.mrb[0].mxu0
      %9964 = vdwg.mxu0
      %v9965 = vadd.f32 %v8965, %v9455
      %v9966 = vadd.f32 %v8966, %v9458
      %v9967 = vadd.f32 %v8967, %v9463
      %v9968 = vadd.f32 %v8968, %v9466
      %v9969 = vadd.f32 %v8969, %v9471
      %v9970 = vadd.f32 %v8970, %v9474
      %v9971 = vadd.f32 %v8971, %v9479
      %v9972 = vadd.f32 %v8972, %v9482
      %v9973 = vadd.f32 %v8973, %v9487
      %v9974 = vadd.f32 %v8974, %v9490
      %v9975 = vadd.f32 %v8975, %v9495
      %v9976 = vadd.f32 %v8976, %v9498
      %v9977 = vadd.f32 %v8977, %v9503
      %v9978 = vadd.f32 %v8978, %v9506
      %v9979 = vadd.f32 %v8979, %v9511
      %v9980 = vadd.f32 %v8980, %v9514
      %v9981 = vadd.f32 %v8981, %v9519
      %v9982 = vadd.f32 %v8982, %v9522
      %v9983 = vadd.f32 %v8983, %v9527
      %v9984 = vadd.f32 %v8984, %v9530
      %v9985 = vadd.f32 %v8985, %v9535
      %v9986 = vadd.f32 %v8986, %v9538
      %v9987 = vadd.f32 %v8987, %v9543
      %v9988 = vadd.f32 %v8988, %v9546
      %v9989 = vadd.f32 %v8989, %v9551
      %v9990 = vadd.f32 %v8990, %v9554
      %v9991 = vadd.f32 %v8991, %v9559
      %v9992 = vadd.f32 %v8992, %v9562
      %v9993 = vadd.f32 %v8993, %v9567
      %v9994 = vadd.f32 %v8994, %v9570
      %v9995 = vadd.f32 %v8995, %v9575
      %v9996 = vadd.f32 %v8996, %v9578
      %v9997 = vadd.f32 %v8997, %v9583
      %v9998 = vadd.f32 %v8998, %v9586
      %v9999 = vadd.f32 %v8999, %v9591
      %v10000 = vadd.f32 %v9000, %v9594
      %v10001 = vadd.f32 %v9001, %v9599
      %v10002 = vadd.f32 %v9002, %v9602
      %v10003 = vadd.f32 %v9003, %v9607
      %v10004 = vadd.f32 %v9004, %v9610
      %v10005 = vadd.f32 %v9005, %v9615
      %v10006 = vadd.f32 %v9006, %v9618
      %v10007 = vadd.f32 %v9007, %v9623
      %v10008 = vadd.f32 %v9008, %v9626
      %v10009 = vadd.f32 %v9009, %v9631
      %v10010 = vadd.f32 %v9010, %v9634
      %v10011 = vadd.f32 %v9011, %v9639
      %v10012 = vadd.f32 %v9012, %v9642
      %v10013 = vadd.f32 %v9013, %v9647
      %v10014 = vadd.f32 %v9014, %v9650
      %v10015 = vadd.f32 %v9015, %v9655
      %v10016 = vadd.f32 %v9016, %v9658
      %v10017 = vadd.f32 %v9017, %v9663
      %v10018 = vadd.f32 %v9018, %v9666
      %v10019 = vadd.f32 %v9019, %v9671
      %v10020 = vadd.f32 %v9020, %v9674
      %v10021 = vadd.f32 %v9021, %v9679
      %v10022 = vadd.f32 %v9022, %v9682
      %v10023 = vadd.f32 %v9023, %v9687
      %v10024 = vadd.f32 %v9024, %v9690
      %v10025 = vadd.f32 %v9025, %v9695
      %v10026 = vadd.f32 %v9026, %v9698
      %v10027 = vadd.f32 %v9027, %v9703
      %v10028 = vadd.f32 %v9028, %v9706
      %v10029 = vadd.f32 %v9029, %v9711
      %v10030 = vadd.f32 %v9030, %v9714
      %v10031 = vadd.f32 %v9031, %v9719
      %v10032 = vadd.f32 %v9032, %v9722
      %v10033 = vadd.f32 %v9033, %v9727
      %v10034 = vadd.f32 %v9034, %v9730
      %v10035 = vadd.f32 %v9035, %v9735
      %v10036 = vadd.f32 %v9036, %v9738
      %v10037 = vadd.f32 %v9037, %v9743
      %v10038 = vadd.f32 %v9038, %v9746
      %v10039 = vadd.f32 %v9039, %v9751
      %v10040 = vadd.f32 %v9040, %v9754
      %v10041 = vadd.f32 %v9041, %v9759
      %v10042 = vadd.f32 %v9042, %v9762
      %v10043 = vadd.f32 %v9043, %v9767
      %v10044 = vadd.f32 %v9044, %v9770
      %v10045 = vadd.f32 %v9045, %v9775
      %v10046 = vadd.f32 %v9046, %v9778
      %v10047 = vadd.f32 %v9047, %v9783
      %v10048 = vadd.f32 %v9048, %v9786
      %v10049 = vadd.f32 %v9049, %v9791
      %v10050 = vadd.f32 %v9050, %v9794
      %v10051 = vadd.f32 %v9051, %v9799
      %v10052 = vadd.f32 %v9052, %v9802
      %v10053 = vadd.f32 %v9053, %v9807
      %v10054 = vadd.f32 %v9054, %v9810
      %v10055 = vadd.f32 %v9055, %v9815
      %v10056 = vadd.f32 %v9056, %v9818
      %v10057 = vadd.f32 %v9057, %v9823
      %v10058 = vadd.f32 %v9058, %v9826
      %v10059 = vadd.f32 %v9059, %v9831
      %v10060 = vadd.f32 %v9060, %v9834
      %v10061 = vadd.f32 %v9061, %v9839
      %v10062 = vadd.f32 %v9062, %v9842
      %v10063 = vadd.f32 %v9063, %v9847
      %v10064 = vadd.f32 %v9064, %v9850
      %v10065 = vadd.f32 %v9065, %v9855
      %v10066 = vadd.f32 %v9066, %v9858
      %v10067 = vadd.f32 %v9067, %v9863
      %v10068 = vadd.f32 %v9068, %v9866
      %v10069 = vadd.f32 %v9069, %v9871
      %v10070 = vadd.f32 %v9070, %v9874
      %v10071 = vadd.f32 %v9071, %v9879
      %v10072 = vadd.f32 %v9072, %v9882
      %v10073 = vadd.f32 %v9073, %v9887
      %v10074 = vadd.f32 %v9074, %v9890
      %v10075 = vadd.f32 %v9075, %v9895
      %v10076 = vadd.f32 %v9076, %v9898
      %v10077 = vadd.f32 %v9077, %v9903
      %v10078 = vadd.f32 %v9078, %v9906
      %v10079 = vadd.f32 %v9079, %v9911
      %v10080 = vadd.f32 %v9080, %v9914
      %v10081 = vadd.f32 %v9081, %v9919
      %v10082 = vadd.f32 %v9082, %v9922
      %v10083 = vadd.f32 %v9083, %v9927
      %v10084 = vadd.f32 %v9084, %v9930
      %v10085 = vadd.f32 %v9085, %v9935
      %v10086 = vadd.f32 %v9086, %v9938
      %v10087 = vadd.f32 %v9087, %v9943
      %v10088 = vadd.f32 %v9088, %v9946
      %v10089 = vadd.f32 %v9089, %v9951
      %v10090 = vadd.f32 %v9090, %v9954
      %v10091 = vadd.f32 %v9091, %v9959
      %v10092 = vadd.f32 %v9092, %v9962
      %v10093 = vld [vmem:[%s3] sm:$0x1]
      %v10095 = vlaneseq
      %v10096 = vshrl.u32 %v10095, 7
      %v10097 = vsub.s32 0, %v10096
      %v10098 = vrot.slane %v10093, %v10097
      %v10100 = vmul.f32 %v9965, %v10098
      %v10101 = vmul.f32 %v9966, %v10098
      %v10102 = vmul.f32 %v9967, %v10098
      %v10103 = vmul.f32 %v9968, %v10098
      %v10104 = vmul.f32 %v9969, %v10098
      %v10105 = vmul.f32 %v9970, %v10098
      %v10106 = vmul.f32 %v9971, %v10098
      %v10107 = vmul.f32 %v9972, %v10098
      %v10108 = vmul.f32 %v9973, %v10098
      %v10109 = vmul.f32 %v9974, %v10098
      %v10110 = vmul.f32 %v9975, %v10098
      %v10111 = vmul.f32 %v9976, %v10098
      %v10112 = vmul.f32 %v9977, %v10098
      %v10113 = vmul.f32 %v9978, %v10098
      %v10114 = vmul.f32 %v9979, %v10098
      %v10115 = vmul.f32 %v9980, %v10098
      %v10116 = vmul.f32 %v9981, %v10098
      %v10117 = vmul.f32 %v9982, %v10098
      %v10118 = vmul.f32 %v9983, %v10098
      %v10119 = vmul.f32 %v9984, %v10098
      %v10120 = vmul.f32 %v9985, %v10098
      %v10121 = vmul.f32 %v9986, %v10098
      %v10122 = vmul.f32 %v9987, %v10098
      %v10123 = vmul.f32 %v9988, %v10098
      %v10124 = vmul.f32 %v9989, %v10098
      %v10125 = vmul.f32 %v9990, %v10098
      %v10126 = vmul.f32 %v9991, %v10098
      %v10127 = vmul.f32 %v9992, %v10098
      %v10128 = vmul.f32 %v9993, %v10098
      %v10129 = vmul.f32 %v9994, %v10098
      %v10130 = vmul.f32 %v9995, %v10098
      %v10131 = vmul.f32 %v9996, %v10098
      %v10132 = vmul.f32 %v9997, %v10098
      %v10133 = vmul.f32 %v9998, %v10098
      %v10134 = vmul.f32 %v9999, %v10098
      %v10135 = vmul.f32 %v10000, %v10098
      %v10136 = vmul.f32 %v10001, %v10098
      %v10137 = vmul.f32 %v10002, %v10098
      %v10138 = vmul.f32 %v10003, %v10098
      %v10139 = vmul.f32 %v10004, %v10098
      %v10140 = vmul.f32 %v10005, %v10098
      %v10141 = vmul.f32 %v10006, %v10098
      %v10142 = vmul.f32 %v10007, %v10098
      %v10143 = vmul.f32 %v10008, %v10098
      %v10144 = vmul.f32 %v10009, %v10098
      %v10145 = vmul.f32 %v10010, %v10098
      %v10146 = vmul.f32 %v10011, %v10098
      %v10147 = vmul.f32 %v10012, %v10098
      %v10148 = vmul.f32 %v10013, %v10098
      %v10149 = vmul.f32 %v10014, %v10098
      %v10150 = vmul.f32 %v10015, %v10098
      %v10151 = vmul.f32 %v10016, %v10098
      %v10152 = vmul.f32 %v10017, %v10098
      %v10153 = vmul.f32 %v10018, %v10098
      %v10154 = vmul.f32 %v10019, %v10098
      %v10155 = vmul.f32 %v10020, %v10098
      %v10156 = vmul.f32 %v10021, %v10098
      %v10157 = vmul.f32 %v10022, %v10098
      %v10158 = vmul.f32 %v10023, %v10098
      %v10159 = vmul.f32 %v10024, %v10098
      %v10160 = vmul.f32 %v10025, %v10098
      %v10161 = vmul.f32 %v10026, %v10098
      %v10162 = vmul.f32 %v10027, %v10098
      %v10163 = vmul.f32 %v10028, %v10098
      %v10164 = vmul.f32 %v10029, %v10098
      %v10165 = vmul.f32 %v10030, %v10098
      %v10166 = vmul.f32 %v10031, %v10098
      %v10167 = vmul.f32 %v10032, %v10098
      %v10168 = vmul.f32 %v10033, %v10098
      %v10169 = vmul.f32 %v10034, %v10098
      %v10170 = vmul.f32 %v10035, %v10098
      %v10171 = vmul.f32 %v10036, %v10098
      %v10172 = vmul.f32 %v10037, %v10098
      %v10173 = vmul.f32 %v10038, %v10098
      %v10174 = vmul.f32 %v10039, %v10098
      %v10175 = vmul.f32 %v10040, %v10098
      %v10176 = vmul.f32 %v10041, %v10098
      %v10177 = vmul.f32 %v10042, %v10098
      %v10178 = vmul.f32 %v10043, %v10098
      %v10179 = vmul.f32 %v10044, %v10098
      %v10180 = vmul.f32 %v10045, %v10098
      %v10181 = vmul.f32 %v10046, %v10098
      %v10182 = vmul.f32 %v10047, %v10098
      %v10183 = vmul.f32 %v10048, %v10098
      %v10184 = vmul.f32 %v10049, %v10098
      %v10185 = vmul.f32 %v10050, %v10098
      %v10186 = vmul.f32 %v10051, %v10098
      %v10187 = vmul.f32 %v10052, %v10098
      %v10188 = vmul.f32 %v10053, %v10098
      %v10189 = vmul.f32 %v10054, %v10098
      %v10190 = vmul.f32 %v10055, %v10098
      %v10191 = vmul.f32 %v10056, %v10098
      %v10192 = vmul.f32 %v10057, %v10098
      %v10193 = vmul.f32 %v10058, %v10098
      %v10194 = vmul.f32 %v10059, %v10098
      %v10195 = vmul.f32 %v10060, %v10098
      %v10196 = vmul.f32 %v10061, %v10098
      %v10197 = vmul.f32 %v10062, %v10098
      %v10198 = vmul.f32 %v10063, %v10098
      %v10199 = vmul.f32 %v10064, %v10098
      %v10200 = vmul.f32 %v10065, %v10098
      %v10201 = vmul.f32 %v10066, %v10098
      %v10202 = vmul.f32 %v10067, %v10098
      %v10203 = vmul.f32 %v10068, %v10098
      %v10204 = vmul.f32 %v10069, %v10098
      %v10205 = vmul.f32 %v10070, %v10098
      %v10206 = vmul.f32 %v10071, %v10098
      %v10207 = vmul.f32 %v10072, %v10098
      %v10208 = vmul.f32 %v10073, %v10098
      %v10209 = vmul.f32 %v10074, %v10098
      %v10210 = vmul.f32 %v10075, %v10098
      %v10211 = vmul.f32 %v10076, %v10098
      %v10212 = vmul.f32 %v10077, %v10098
      %v10213 = vmul.f32 %v10078, %v10098
      %v10214 = vmul.f32 %v10079, %v10098
      %v10215 = vmul.f32 %v10080, %v10098
      %v10216 = vmul.f32 %v10081, %v10098
      %v10217 = vmul.f32 %v10082, %v10098
      %v10218 = vmul.f32 %v10083, %v10098
      %v10219 = vmul.f32 %v10084, %v10098
      %v10220 = vmul.f32 %v10085, %v10098
      %v10221 = vmul.f32 %v10086, %v10098
      %v10222 = vmul.f32 %v10087, %v10098
      %v10223 = vmul.f32 %v10088, %v10098
      %v10224 = vmul.f32 %v10089, %v10098
      %v10225 = vmul.f32 %v10090, %v10098
      %v10226 = vmul.f32 %v10091, %v10098
      %v10227 = vmul.f32 %v10092, %v10098
      %v10228 = vld [vmem:[%s4] sm:$0x1]
      %v10230 = vlaneseq
      %v10231 = vshrl.u32 %v10230, 7
      %v10232 = vsub.s32 0, %v10231
      %v10233 = vrot.slane %v10228, %v10232
      %v10235 = vadd.f32 %v10100, %v10233
      %v10236 = vadd.f32 %v10101, %v10233
      %v10237 = vadd.f32 %v10102, %v10233
      %v10238 = vadd.f32 %v10103, %v10233
      %v10239 = vadd.f32 %v10104, %v10233
      %v10240 = vadd.f32 %v10105, %v10233
      %v10241 = vadd.f32 %v10106, %v10233
      %v10242 = vadd.f32 %v10107, %v10233
      %v10243 = vadd.f32 %v10108, %v10233
      %v10244 = vadd.f32 %v10109, %v10233
      %v10245 = vadd.f32 %v10110, %v10233
      %v10246 = vadd.f32 %v10111, %v10233
      %v10247 = vadd.f32 %v10112, %v10233
      %v10248 = vadd.f32 %v10113, %v10233
      %v10249 = vadd.f32 %v10114, %v10233
      %v10250 = vadd.f32 %v10115, %v10233
      %v10251 = vadd.f32 %v10116, %v10233
      %v10252 = vadd.f32 %v10117, %v10233
      %v10253 = vadd.f32 %v10118, %v10233
      %v10254 = vadd.f32 %v10119, %v10233
      %v10255 = vadd.f32 %v10120, %v10233
      %v10256 = vadd.f32 %v10121, %v10233
      %v10257 = vadd.f32 %v10122, %v10233
      %v10258 = vadd.f32 %v10123, %v10233
      %v10259 = vadd.f32 %v10124, %v10233
      %v10260 = vadd.f32 %v10125, %v10233
      %v10261 = vadd.f32 %v10126, %v10233
      %v10262 = vadd.f32 %v10127, %v10233
      %v10263 = vadd.f32 %v10128, %v10233
      %v10264 = vadd.f32 %v10129, %v10233
      %v10265 = vadd.f32 %v10130, %v10233
      %v10266 = vadd.f32 %v10131, %v10233
      %v10267 = vadd.f32 %v10132, %v10233
      %v10268 = vadd.f32 %v10133, %v10233
      %v10269 = vadd.f32 %v10134, %v10233
      %v10270 = vadd.f32 %v10135, %v10233
      %v10271 = vadd.f32 %v10136, %v10233
      %v10272 = vadd.f32 %v10137, %v10233
      %v10273 = vadd.f32 %v10138, %v10233
      %v10274 = vadd.f32 %v10139, %v10233
      %v10275 = vadd.f32 %v10140, %v10233
      %v10276 = vadd.f32 %v10141, %v10233
      %v10277 = vadd.f32 %v10142, %v10233
      %v10278 = vadd.f32 %v10143, %v10233
      %v10279 = vadd.f32 %v10144, %v10233
      %v10280 = vadd.f32 %v10145, %v10233
      %v10281 = vadd.f32 %v10146, %v10233
      %v10282 = vadd.f32 %v10147, %v10233
      %v10283 = vadd.f32 %v10148, %v10233
      %v10284 = vadd.f32 %v10149, %v10233
      %v10285 = vadd.f32 %v10150, %v10233
      %v10286 = vadd.f32 %v10151, %v10233
      %v10287 = vadd.f32 %v10152, %v10233
      %v10288 = vadd.f32 %v10153, %v10233
      %v10289 = vadd.f32 %v10154, %v10233
      %v10290 = vadd.f32 %v10155, %v10233
      %v10291 = vadd.f32 %v10156, %v10233
      %v10292 = vadd.f32 %v10157, %v10233
      %v10293 = vadd.f32 %v10158, %v10233
      %v10294 = vadd.f32 %v10159, %v10233
      %v10295 = vadd.f32 %v10160, %v10233
      %v10296 = vadd.f32 %v10161, %v10233
      %v10297 = vadd.f32 %v10162, %v10233
      %v10298 = vadd.f32 %v10163, %v10233
      %v10299 = vadd.f32 %v10164, %v10233
      %v10300 = vadd.f32 %v10165, %v10233
      %v10301 = vadd.f32 %v10166, %v10233
      %v10302 = vadd.f32 %v10167, %v10233
      %v10303 = vadd.f32 %v10168, %v10233
      %v10304 = vadd.f32 %v10169, %v10233
      %v10305 = vadd.f32 %v10170, %v10233
      %v10306 = vadd.f32 %v10171, %v10233
      %v10307 = vadd.f32 %v10172, %v10233
      %v10308 = vadd.f32 %v10173, %v10233
      %v10309 = vadd.f32 %v10174, %v10233
      %v10310 = vadd.f32 %v10175, %v10233
      %v10311 = vadd.f32 %v10176, %v10233
      %v10312 = vadd.f32 %v10177, %v10233
      %v10313 = vadd.f32 %v10178, %v10233
      %v10314 = vadd.f32 %v10179, %v10233
      %v10315 = vadd.f32 %v10180, %v10233
      %v10316 = vadd.f32 %v10181, %v10233
      %v10317 = vadd.f32 %v10182, %v10233
      %v10318 = vadd.f32 %v10183, %v10233
      %v10319 = vadd.f32 %v10184, %v10233
      %v10320 = vadd.f32 %v10185, %v10233
      %v10321 = vadd.f32 %v10186, %v10233
      %v10322 = vadd.f32 %v10187, %v10233
      %v10323 = vadd.f32 %v10188, %v10233
      %v10324 = vadd.f32 %v10189, %v10233
      %v10325 = vadd.f32 %v10190, %v10233
      %v10326 = vadd.f32 %v10191, %v10233
      %v10327 = vadd.f32 %v10192, %v10233
      %v10328 = vadd.f32 %v10193, %v10233
      %v10329 = vadd.f32 %v10194, %v10233
      %v10330 = vadd.f32 %v10195, %v10233
      %v10331 = vadd.f32 %v10196, %v10233
      %v10332 = vadd.f32 %v10197, %v10233
      %v10333 = vadd.f32 %v10198, %v10233
      %v10334 = vadd.f32 %v10199, %v10233
      %v10335 = vadd.f32 %v10200, %v10233
      %v10336 = vadd.f32 %v10201, %v10233
      %v10337 = vadd.f32 %v10202, %v10233
      %v10338 = vadd.f32 %v10203, %v10233
      %v10339 = vadd.f32 %v10204, %v10233
      %v10340 = vadd.f32 %v10205, %v10233
      %v10341 = vadd.f32 %v10206, %v10233
      %v10342 = vadd.f32 %v10207, %v10233
      %v10343 = vadd.f32 %v10208, %v10233
      %v10344 = vadd.f32 %v10209, %v10233
      %v10345 = vadd.f32 %v10210, %v10233
      %v10346 = vadd.f32 %v10211, %v10233
      %v10347 = vadd.f32 %v10212, %v10233
      %v10348 = vadd.f32 %v10213, %v10233
      %v10349 = vadd.f32 %v10214, %v10233
      %v10350 = vadd.f32 %v10215, %v10233
      %v10351 = vadd.f32 %v10216, %v10233
      %v10352 = vadd.f32 %v10217, %v10233
      %v10353 = vadd.f32 %v10218, %v10233
      %v10354 = vadd.f32 %v10219, %v10233
      %v10355 = vadd.f32 %v10220, %v10233
      %v10356 = vadd.f32 %v10221, %v10233
      %v10357 = vadd.f32 %v10222, %v10233
      %v10358 = vadd.f32 %v10223, %v10233
      %v10359 = vadd.f32 %v10224, %v10233
      %v10360 = vadd.f32 %v10225, %v10233
      %v10361 = vadd.f32 %v10226, %v10233
      %v10362 = vadd.f32 %v10227, %v10233
      %v10363 = vpack.c.bf16 %v10236, %v10235
      %v10364 = vpack.c.bf16 %v10238, %v10237
      %v10365 = vpack.c.bf16 %v10240, %v10239
      %v10366 = vpack.c.bf16 %v10242, %v10241
      %v10367 = vpack.c.bf16 %v10244, %v10243
      %v10368 = vpack.c.bf16 %v10246, %v10245
      %v10369 = vpack.c.bf16 %v10248, %v10247
      %v10370 = vpack.c.bf16 %v10250, %v10249
      %v10371 = vpack.c.bf16 %v10252, %v10251
      %v10372 = vpack.c.bf16 %v10254, %v10253
      %v10373 = vpack.c.bf16 %v10256, %v10255
      %v10374 = vpack.c.bf16 %v10258, %v10257
      %v10375 = vpack.c.bf16 %v10260, %v10259
      %v10376 = vpack.c.bf16 %v10262, %v10261
      %v10377 = vpack.c.bf16 %v10264, %v10263
      %v10378 = vpack.c.bf16 %v10266, %v10265
      %v10379 = vpack.c.bf16 %v10268, %v10267
      %v10380 = vpack.c.bf16 %v10270, %v10269
      %v10381 = vpack.c.bf16 %v10272, %v10271
      %v10382 = vpack.c.bf16 %v10274, %v10273
      %v10383 = vpack.c.bf16 %v10276, %v10275
      %v10384 = vpack.c.bf16 %v10278, %v10277
      %v10385 = vpack.c.bf16 %v10280, %v10279
      %v10386 = vpack.c.bf16 %v10282, %v10281
      %v10387 = vpack.c.bf16 %v10284, %v10283
      %v10388 = vpack.c.bf16 %v10286, %v10285
      %v10389 = vpack.c.bf16 %v10288, %v10287
      %v10390 = vpack.c.bf16 %v10290, %v10289
      %v10391 = vpack.c.bf16 %v10292, %v10291
      %v10392 = vpack.c.bf16 %v10294, %v10293
      %v10393 = vpack.c.bf16 %v10296, %v10295
      %v10394 = vpack.c.bf16 %v10298, %v10297
      %v10395 = vpack.c.bf16 %v10300, %v10299
      %v10396 = vpack.c.bf16 %v10302, %v10301
      %v10397 = vpack.c.bf16 %v10304, %v10303
      %v10398 = vpack.c.bf16 %v10306, %v10305
      %v10399 = vpack.c.bf16 %v10308, %v10307
      %v10400 = vpack.c.bf16 %v10310, %v10309
      %v10401 = vpack.c.bf16 %v10312, %v10311
      %v10402 = vpack.c.bf16 %v10314, %v10313
      %v10403 = vpack.c.bf16 %v10316, %v10315
      %v10404 = vpack.c.bf16 %v10318, %v10317
      %v10405 = vpack.c.bf16 %v10320, %v10319
      %v10406 = vpack.c.bf16 %v10322, %v10321
      %v10407 = vpack.c.bf16 %v10324, %v10323
      %v10408 = vpack.c.bf16 %v10326, %v10325
      %v10409 = vpack.c.bf16 %v10328, %v10327
      %v10410 = vpack.c.bf16 %v10330, %v10329
      %v10411 = vpack.c.bf16 %v10332, %v10331
      %v10412 = vpack.c.bf16 %v10334, %v10333
      %v10413 = vpack.c.bf16 %v10336, %v10335
      %v10414 = vpack.c.bf16 %v10338, %v10337
      %v10415 = vpack.c.bf16 %v10340, %v10339
      %v10416 = vpack.c.bf16 %v10342, %v10341
      %v10417 = vpack.c.bf16 %v10344, %v10343
      %v10418 = vpack.c.bf16 %v10346, %v10345
      %v10419 = vpack.c.bf16 %v10348, %v10347
      %v10420 = vpack.c.bf16 %v10350, %v10349
      %v10421 = vpack.c.bf16 %v10352, %v10351
      %v10422 = vpack.c.bf16 %v10354, %v10353
      %v10423 = vpack.c.bf16 %v10356, %v10355
      %v10424 = vpack.c.bf16 %v10358, %v10357
      %v10425 = vpack.c.bf16 %v10360, %v10359
      %v10426 = vpack.c.bf16 %v10362, %v10361
      %v10491 = vunpack.c.l.b16 %v10363
      %v10492 = vunpack.c.h.b16 %v10363
      %v10493 = vunpack.c.l.b16 %v10364
      %v10494 = vunpack.c.h.b16 %v10364
      %v10495 = vunpack.c.l.b16 %v10365
      %v10496 = vunpack.c.h.b16 %v10365
      %v10497 = vunpack.c.l.b16 %v10366
      %v10498 = vunpack.c.h.b16 %v10366
      %v10499 = vunpack.c.l.b16 %v10367
      %v10500 = vunpack.c.h.b16 %v10367
      %v10501 = vunpack.c.l.b16 %v10368
      %v10502 = vunpack.c.h.b16 %v10368
      %v10503 = vunpack.c.l.b16 %v10369
      %v10504 = vunpack.c.h.b16 %v10369
      %v10505 = vunpack.c.l.b16 %v10370
      %v10506 = vunpack.c.h.b16 %v10370
      %v10507 = vunpack.c.l.b16 %v10371
      %v10508 = vunpack.c.h.b16 %v10371
      %v10509 = vunpack.c.l.b16 %v10372
      %v10510 = vunpack.c.h.b16 %v10372
      %v10511 = vunpack.c.l.b16 %v10373
      %v10512 = vunpack.c.h.b16 %v10373
      %v10513 = vunpack.c.l.b16 %v10374
      %v10514 = vunpack.c.h.b16 %v10374
      %v10515 = vunpack.c.l.b16 %v10375
      %v10516 = vunpack.c.h.b16 %v10375
      %v10517 = vunpack.c.l.b16 %v10376
      %v10518 = vunpack.c.h.b16 %v10376
      %v10519 = vunpack.c.l.b16 %v10377
      %v10520 = vunpack.c.h.b16 %v10377
      %v10521 = vunpack.c.l.b16 %v10378
      %v10522 = vunpack.c.h.b16 %v10378
      %v10523 = vunpack.c.l.b16 %v10379
      %v10524 = vunpack.c.h.b16 %v10379
      %v10525 = vunpack.c.l.b16 %v10380
      %v10526 = vunpack.c.h.b16 %v10380
      %v10527 = vunpack.c.l.b16 %v10381
      %v10528 = vunpack.c.h.b16 %v10381
      %v10529 = vunpack.c.l.b16 %v10382
      %v10530 = vunpack.c.h.b16 %v10382
      %v10531 = vunpack.c.l.b16 %v10383
      %v10532 = vunpack.c.h.b16 %v10383
      %v10533 = vunpack.c.l.b16 %v10384
      %v10534 = vunpack.c.h.b16 %v10384
      %v10535 = vunpack.c.l.b16 %v10385
      %v10536 = vunpack.c.h.b16 %v10385
      %v10537 = vunpack.c.l.b16 %v10386
      %v10538 = vunpack.c.h.b16 %v10386
      %v10539 = vunpack.c.l.b16 %v10387
      %v10540 = vunpack.c.h.b16 %v10387
      %v10541 = vunpack.c.l.b16 %v10388
      %v10542 = vunpack.c.h.b16 %v10388
      %v10543 = vunpack.c.l.b16 %v10389
      %v10544 = vunpack.c.h.b16 %v10389
      %v10545 = vunpack.c.l.b16 %v10390
      %v10546 = vunpack.c.h.b16 %v10390
      %v10547 = vunpack.c.l.b16 %v10391
      %v10548 = vunpack.c.h.b16 %v10391
      %v10549 = vunpack.c.l.b16 %v10392
      %v10550 = vunpack.c.h.b16 %v10392
      %v10551 = vunpack.c.l.b16 %v10393
      %v10552 = vunpack.c.h.b16 %v10393
      %v10553 = vunpack.c.l.b16 %v10394
      %v10554 = vunpack.c.h.b16 %v10394
      %v10555 = vunpack.c.l.b16 %v10395
      %v10556 = vunpack.c.h.b16 %v10395
      %v10557 = vunpack.c.l.b16 %v10396
      %v10558 = vunpack.c.h.b16 %v10396
      %v10559 = vunpack.c.l.b16 %v10397
      %v10560 = vunpack.c.h.b16 %v10397
      %v10561 = vunpack.c.l.b16 %v10398
      %v10562 = vunpack.c.h.b16 %v10398
      %v10563 = vunpack.c.l.b16 %v10399
      %v10564 = vunpack.c.h.b16 %v10399
      %v10565 = vunpack.c.l.b16 %v10400
      %v10566 = vunpack.c.h.b16 %v10400
      %v10567 = vunpack.c.l.b16 %v10401
      %v10568 = vunpack.c.h.b16 %v10401
      %v10569 = vunpack.c.l.b16 %v10402
      %v10570 = vunpack.c.h.b16 %v10402
      %v10571 = vunpack.c.l.b16 %v10403
      %v10572 = vunpack.c.h.b16 %v10403
      %v10573 = vunpack.c.l.b16 %v10404
      %v10574 = vunpack.c.h.b16 %v10404
      %v10575 = vunpack.c.l.b16 %v10405
      %v10576 = vunpack.c.h.b16 %v10405
      %v10577 = vunpack.c.l.b16 %v10406
      %v10578 = vunpack.c.h.b16 %v10406
      %v10579 = vunpack.c.l.b16 %v10407
      %v10580 = vunpack.c.h.b16 %v10407
      %v10581 = vunpack.c.l.b16 %v10408
      %v10582 = vunpack.c.h.b16 %v10408
      %v10583 = vunpack.c.l.b16 %v10409
      %v10584 = vunpack.c.h.b16 %v10409
      %v10585 = vunpack.c.l.b16 %v10410
      %v10586 = vunpack.c.h.b16 %v10410
      %v10587 = vunpack.c.l.b16 %v10411
      %v10588 = vunpack.c.h.b16 %v10411
      %v10589 = vunpack.c.l.b16 %v10412
      %v10590 = vunpack.c.h.b16 %v10412
      %v10591 = vunpack.c.l.b16 %v10413
      %v10592 = vunpack.c.h.b16 %v10413
      %v10593 = vunpack.c.l.b16 %v10414
      %v10594 = vunpack.c.h.b16 %v10414
      %v10595 = vunpack.c.l.b16 %v10415
      %v10596 = vunpack.c.h.b16 %v10415
      %v10597 = vunpack.c.l.b16 %v10416
      %v10598 = vunpack.c.h.b16 %v10416
      %v10599 = vunpack.c.l.b16 %v10417
      %v10600 = vunpack.c.h.b16 %v10417
      %v10601 = vunpack.c.l.b16 %v10418
      %v10602 = vunpack.c.h.b16 %v10418
      %v10603 = vunpack.c.l.b16 %v10419
      %v10604 = vunpack.c.h.b16 %v10419
      %v10605 = vunpack.c.l.b16 %v10420
      %v10606 = vunpack.c.h.b16 %v10420
      %v10607 = vunpack.c.l.b16 %v10421
      %v10608 = vunpack.c.h.b16 %v10421
      %v10609 = vunpack.c.l.b16 %v10422
      %v10610 = vunpack.c.h.b16 %v10422
      %v10611 = vunpack.c.l.b16 %v10423
      %v10612 = vunpack.c.h.b16 %v10423
      %v10613 = vunpack.c.l.b16 %v10424
      %v10614 = vunpack.c.h.b16 %v10424
      %v10615 = vunpack.c.l.b16 %v10425
      %v10616 = vunpack.c.h.b16 %v10425
      %v10617 = vunpack.c.l.b16 %v10426
      %v10618 = vunpack.c.h.b16 %v10426
      %v10619 = vpack.c.b16 %v10491, %v10491
      %v10620 = vpack.c.b16 %v10492, %v10492
      %v10621 = vpack.c.b16 %v10493, %v10493
      %v10622 = vpack.c.b16 %v10494, %v10494
      %v10623 = vpack.c.b16 %v10495, %v10495
      %v10624 = vpack.c.b16 %v10496, %v10496
      %v10625 = vpack.c.b16 %v10497, %v10497
      %v10626 = vpack.c.b16 %v10498, %v10498
      %v10627 = vpack.c.b16 %v10499, %v10499
      %v10628 = vpack.c.b16 %v10500, %v10500
      %v10629 = vpack.c.b16 %v10501, %v10501
      %v10630 = vpack.c.b16 %v10502, %v10502
      %v10631 = vpack.c.b16 %v10503, %v10503
      %v10632 = vpack.c.b16 %v10504, %v10504
      %v10633 = vpack.c.b16 %v10505, %v10505
      %v10634 = vpack.c.b16 %v10506, %v10506
      %v10635 = vpack.c.b16 %v10507, %v10507
      %v10636 = vpack.c.b16 %v10508, %v10508
      %v10637 = vpack.c.b16 %v10509, %v10509
      %v10638 = vpack.c.b16 %v10510, %v10510
      %v10639 = vpack.c.b16 %v10511, %v10511
      %v10640 = vpack.c.b16 %v10512, %v10512
      %v10641 = vpack.c.b16 %v10513, %v10513
      %v10642 = vpack.c.b16 %v10514, %v10514
      %v10643 = vpack.c.b16 %v10515, %v10515
      %v10644 = vpack.c.b16 %v10516, %v10516
      %v10645 = vpack.c.b16 %v10517, %v10517
      %v10646 = vpack.c.b16 %v10518, %v10518
      %v10647 = vpack.c.b16 %v10519, %v10519
      %v10648 = vpack.c.b16 %v10520, %v10520
      %v10649 = vpack.c.b16 %v10521, %v10521
      %v10650 = vpack.c.b16 %v10522, %v10522
      %v10651 = vpack.c.b16 %v10523, %v10523
      %v10652 = vpack.c.b16 %v10524, %v10524
      %v10653 = vpack.c.b16 %v10525, %v10525
      %v10654 = vpack.c.b16 %v10526, %v10526
      %v10655 = vpack.c.b16 %v10527, %v10527
      %v10656 = vpack.c.b16 %v10528, %v10528
      %v10657 = vpack.c.b16 %v10529, %v10529
      %v10658 = vpack.c.b16 %v10530, %v10530
      %v10659 = vpack.c.b16 %v10531, %v10531
      %v10660 = vpack.c.b16 %v10532, %v10532
      %v10661 = vpack.c.b16 %v10533, %v10533
      %v10662 = vpack.c.b16 %v10534, %v10534
      %v10663 = vpack.c.b16 %v10535, %v10535
      %v10664 = vpack.c.b16 %v10536, %v10536
      %v10665 = vpack.c.b16 %v10537, %v10537
      %v10666 = vpack.c.b16 %v10538, %v10538
      %v10667 = vpack.c.b16 %v10539, %v10539
      %v10668 = vpack.c.b16 %v10540, %v10540
      %v10669 = vpack.c.b16 %v10541, %v10541
      %v10670 = vpack.c.b16 %v10542, %v10542
      %v10671 = vpack.c.b16 %v10543, %v10543
      %v10672 = vpack.c.b16 %v10544, %v10544
      %v10673 = vpack.c.b16 %v10545, %v10545
      %v10674 = vpack.c.b16 %v10546, %v10546
      %v10675 = vpack.c.b16 %v10547, %v10547
      %v10676 = vpack.c.b16 %v10548, %v10548
      %v10677 = vpack.c.b16 %v10549, %v10549
      %v10678 = vpack.c.b16 %v10550, %v10550
      %v10679 = vpack.c.b16 %v10551, %v10551
      %v10680 = vpack.c.b16 %v10552, %v10552
      %v10681 = vpack.c.b16 %v10553, %v10553
      %v10682 = vpack.c.b16 %v10554, %v10554
      %v10683 = vpack.c.b16 %v10555, %v10555
      %v10684 = vpack.c.b16 %v10556, %v10556
      %v10685 = vpack.c.b16 %v10557, %v10557
      %v10686 = vpack.c.b16 %v10558, %v10558
      %v10687 = vpack.c.b16 %v10559, %v10559
      %v10688 = vpack.c.b16 %v10560, %v10560
      %v10689 = vpack.c.b16 %v10561, %v10561
      %v10690 = vpack.c.b16 %v10562, %v10562
      %v10691 = vpack.c.b16 %v10563, %v10563
      %v10692 = vpack.c.b16 %v10564, %v10564
      %v10693 = vpack.c.b16 %v10565, %v10565
      %v10694 = vpack.c.b16 %v10566, %v10566
      %v10695 = vpack.c.b16 %v10567, %v10567
      %v10696 = vpack.c.b16 %v10568, %v10568
      %v10697 = vpack.c.b16 %v10569, %v10569
      %v10698 = vpack.c.b16 %v10570, %v10570
      %v10699 = vpack.c.b16 %v10571, %v10571
      %v10700 = vpack.c.b16 %v10572, %v10572
      %v10701 = vpack.c.b16 %v10573, %v10573
      %v10702 = vpack.c.b16 %v10574, %v10574
      %v10703 = vpack.c.b16 %v10575, %v10575
      %v10704 = vpack.c.b16 %v10576, %v10576
      %v10705 = vpack.c.b16 %v10577, %v10577
      %v10706 = vpack.c.b16 %v10578, %v10578
      %v10707 = vpack.c.b16 %v10579, %v10579
      %v10708 = vpack.c.b16 %v10580, %v10580
      %v10709 = vpack.c.b16 %v10581, %v10581
      %v10710 = vpack.c.b16 %v10582, %v10582
      %v10711 = vpack.c.b16 %v10583, %v10583
      %v10712 = vpack.c.b16 %v10584, %v10584
      %v10713 = vpack.c.b16 %v10585, %v10585
      %v10714 = vpack.c.b16 %v10586, %v10586
      %v10715 = vpack.c.b16 %v10587, %v10587
      %v10716 = vpack.c.b16 %v10588, %v10588
      %v10717 = vpack.c.b16 %v10589, %v10589
      %v10718 = vpack.c.b16 %v10590, %v10590
      %v10719 = vpack.c.b16 %v10591, %v10591
      %v10720 = vpack.c.b16 %v10592, %v10592
      %v10721 = vpack.c.b16 %v10593, %v10593
      %v10722 = vpack.c.b16 %v10594, %v10594
      %v10723 = vpack.c.b16 %v10595, %v10595
      %v10724 = vpack.c.b16 %v10596, %v10596
      %v10725 = vpack.c.b16 %v10597, %v10597
      %v10726 = vpack.c.b16 %v10598, %v10598
      %v10727 = vpack.c.b16 %v10599, %v10599
      %v10728 = vpack.c.b16 %v10600, %v10600
      %v10729 = vpack.c.b16 %v10601, %v10601
      %v10730 = vpack.c.b16 %v10602, %v10602
      %v10731 = vpack.c.b16 %v10603, %v10603
      %v10732 = vpack.c.b16 %v10604, %v10604
      %v10733 = vpack.c.b16 %v10605, %v10605
      %v10734 = vpack.c.b16 %v10606, %v10606
      %v10735 = vpack.c.b16 %v10607, %v10607
      %v10736 = vpack.c.b16 %v10608, %v10608
      %v10737 = vpack.c.b16 %v10609, %v10609
      %v10738 = vpack.c.b16 %v10610, %v10610
      %v10739 = vpack.c.b16 %v10611, %v10611
      %v10740 = vpack.c.b16 %v10612, %v10612
      %v10741 = vpack.c.b16 %v10613, %v10613
      %v10742 = vpack.c.b16 %v10614, %v10614
      %v10743 = vpack.c.b16 %v10615, %v10615
      %v10744 = vpack.c.b16 %v10616, %v10616
      %v10745 = vpack.c.b16 %v10617, %v10617
      %v10746 = vpack.c.b16 %v10618, %v10618
      %vm10875 = vcmask 519168
      %10876 = vst.msk [vmem:[%s305] sm:$0xf] %vm10875, %v10619
      %10877 = vst.msk [vmem:[%s305 + $0x4] sm:$0xf] %vm10875, %v10620
      %10878 = vst.msk [vmem:[%s305 + $0x8] sm:$0xf] %vm10875, %v10621
      %10879 = vst.msk [vmem:[%s305 + $0xc] sm:$0xf] %vm10875, %v10622
      %10880 = vst.msk [vmem:[%s305 + $0x10] sm:$0xf] %vm10875, %v10623
      %10881 = vst.msk [vmem:[%s305 + $0x14] sm:$0xf] %vm10875, %v10624
      %10882 = vst.msk [vmem:[%s305 + $0x18] sm:$0xf] %vm10875, %v10625
      %10883 = vst.msk [vmem:[%s305 + $0x1c] sm:$0xf] %vm10875, %v10626
      %10884 = vst.msk [vmem:[%s305 + $0x20] sm:$0xf] %vm10875, %v10627
      %10885 = vst.msk [vmem:[%s305 + $0x24] sm:$0xf] %vm10875, %v10628
      %10886 = vst.msk [vmem:[%s305 + $0x28] sm:$0xf] %vm10875, %v10629
      %10887 = vst.msk [vmem:[%s305 + $0x2c] sm:$0xf] %vm10875, %v10630
      %10888 = vst.msk [vmem:[%s305 + $0x30] sm:$0xf] %vm10875, %v10631
      %10889 = vst.msk [vmem:[%s305 + $0x34] sm:$0xf] %vm10875, %v10632
      %10890 = vst.msk [vmem:[%s305 + $0x38] sm:$0xf] %vm10875, %v10633
      %10891 = vst.msk [vmem:[%s305 + $0x3c] sm:$0xf] %vm10875, %v10634
      %10892 = vst.msk [vmem:[%s305 + $0x40] sm:$0xf] %vm10875, %v10635
      %10893 = vst.msk [vmem:[%s305 + $0x44] sm:$0xf] %vm10875, %v10636
      %10894 = vst.msk [vmem:[%s305 + $0x48] sm:$0xf] %vm10875, %v10637
      %10895 = vst.msk [vmem:[%s305 + $0x4c] sm:$0xf] %vm10875, %v10638
      %10896 = vst.msk [vmem:[%s305 + $0x50] sm:$0xf] %vm10875, %v10639
      %10897 = vst.msk [vmem:[%s305 + $0x54] sm:$0xf] %vm10875, %v10640
      %10898 = vst.msk [vmem:[%s305 + $0x58] sm:$0xf] %vm10875, %v10641
      %10899 = vst.msk [vmem:[%s305 + $0x5c] sm:$0xf] %vm10875, %v10642
      %10900 = vst.msk [vmem:[%s305 + $0x60] sm:$0xf] %vm10875, %v10643
      %10901 = vst.msk [vmem:[%s305 + $0x64] sm:$0xf] %vm10875, %v10644
      %10902 = vst.msk [vmem:[%s305 + $0x68] sm:$0xf] %vm10875, %v10645
      %10903 = vst.msk [vmem:[%s305 + $0x6c] sm:$0xf] %vm10875, %v10646
      %10904 = vst.msk [vmem:[%s305 + $0x70] sm:$0xf] %vm10875, %v10647
      %10905 = vst.msk [vmem:[%s305 + $0x74] sm:$0xf] %vm10875, %v10648
      %10906 = vst.msk [vmem:[%s305 + $0x78] sm:$0xf] %vm10875, %v10649
      %10907 = vst.msk [vmem:[%s305 + $0x7c] sm:$0xf] %vm10875, %v10650
      %10908 = vst.msk [vmem:[%s305 + $0x80] sm:$0xf] %vm10875, %v10651
      %10909 = vst.msk [vmem:[%s305 + $0x84] sm:$0xf] %vm10875, %v10652
      %10910 = vst.msk [vmem:[%s305 + $0x88] sm:$0xf] %vm10875, %v10653
      %10911 = vst.msk [vmem:[%s305 + $0x8c] sm:$0xf] %vm10875, %v10654
      %10912 = vst.msk [vmem:[%s305 + $0x90] sm:$0xf] %vm10875, %v10655
      %10913 = vst.msk [vmem:[%s305 + $0x94] sm:$0xf] %vm10875, %v10656
      %10914 = vst.msk [vmem:[%s305 + $0x98] sm:$0xf] %vm10875, %v10657
      %10915 = vst.msk [vmem:[%s305 + $0x9c] sm:$0xf] %vm10875, %v10658
      %10916 = vst.msk [vmem:[%s305 + $0xa0] sm:$0xf] %vm10875, %v10659
      %10917 = vst.msk [vmem:[%s305 + $0xa4] sm:$0xf] %vm10875, %v10660
      %10918 = vst.msk [vmem:[%s305 + $0xa8] sm:$0xf] %vm10875, %v10661
      %10919 = vst.msk [vmem:[%s305 + $0xac] sm:$0xf] %vm10875, %v10662
      %10920 = vst.msk [vmem:[%s305 + $0xb0] sm:$0xf] %vm10875, %v10663
      %10921 = vst.msk [vmem:[%s305 + $0xb4] sm:$0xf] %vm10875, %v10664
      %10922 = vst.msk [vmem:[%s305 + $0xb8] sm:$0xf] %vm10875, %v10665
      %10923 = vst.msk [vmem:[%s305 + $0xbc] sm:$0xf] %vm10875, %v10666
      %10924 = vst.msk [vmem:[%s305 + $0xc0] sm:$0xf] %vm10875, %v10667
      %10925 = vst.msk [vmem:[%s305 + $0xc4] sm:$0xf] %vm10875, %v10668
      %10926 = vst.msk [vmem:[%s305 + $0xc8] sm:$0xf] %vm10875, %v10669
      %10927 = vst.msk [vmem:[%s305 + $0xcc] sm:$0xf] %vm10875, %v10670
      %10928 = vst.msk [vmem:[%s305 + $0xd0] sm:$0xf] %vm10875, %v10671
      %10929 = vst.msk [vmem:[%s305 + $0xd4] sm:$0xf] %vm10875, %v10672
      %10930 = vst.msk [vmem:[%s305 + $0xd8] sm:$0xf] %vm10875, %v10673
      %10931 = vst.msk [vmem:[%s305 + $0xdc] sm:$0xf] %vm10875, %v10674
      %10932 = vst.msk [vmem:[%s305 + $0xe0] sm:$0xf] %vm10875, %v10675
      %10933 = vst.msk [vmem:[%s305 + $0xe4] sm:$0xf] %vm10875, %v10676
      %10934 = vst.msk [vmem:[%s305 + $0xe8] sm:$0xf] %vm10875, %v10677
      %10935 = vst.msk [vmem:[%s305 + $0xec] sm:$0xf] %vm10875, %v10678
      %10936 = vst.msk [vmem:[%s305 + $0xf0] sm:$0xf] %vm10875, %v10679
      %10937 = vst.msk [vmem:[%s305 + $0xf4] sm:$0xf] %vm10875, %v10680
      %10938 = vst.msk [vmem:[%s305 + $0xf8] sm:$0xf] %vm10875, %v10681
      %10939 = vst.msk [vmem:[%s305 + $0xfc] sm:$0xf] %vm10875, %v10682
      %10940 = vst.msk [vmem:[%s305 + $0x100] sm:$0xf] %vm10875, %v10683
      %10941 = vst.msk [vmem:[%s305 + $0x104] sm:$0xf] %vm10875, %v10684
      %10942 = vst.msk [vmem:[%s305 + $0x108] sm:$0xf] %vm10875, %v10685
      %10943 = vst.msk [vmem:[%s305 + $0x10c] sm:$0xf] %vm10875, %v10686
      %10944 = vst.msk [vmem:[%s305 + $0x110] sm:$0xf] %vm10875, %v10687
      %10945 = vst.msk [vmem:[%s305 + $0x114] sm:$0xf] %vm10875, %v10688
      %10946 = vst.msk [vmem:[%s305 + $0x118] sm:$0xf] %vm10875, %v10689
      %10947 = vst.msk [vmem:[%s305 + $0x11c] sm:$0xf] %vm10875, %v10690
      %10948 = vst.msk [vmem:[%s305 + $0x120] sm:$0xf] %vm10875, %v10691
      %10949 = vst.msk [vmem:[%s305 + $0x124] sm:$0xf] %vm10875, %v10692
      %10950 = vst.msk [vmem:[%s305 + $0x128] sm:$0xf] %vm10875, %v10693
      %10951 = vst.msk [vmem:[%s305 + $0x12c] sm:$0xf] %vm10875, %v10694
      %10952 = vst.msk [vmem:[%s305 + $0x130] sm:$0xf] %vm10875, %v10695
      %10953 = vst.msk [vmem:[%s305 + $0x134] sm:$0xf] %vm10875, %v10696
      %10954 = vst.msk [vmem:[%s305 + $0x138] sm:$0xf] %vm10875, %v10697
      %10955 = vst.msk [vmem:[%s305 + $0x13c] sm:$0xf] %vm10875, %v10698
      %10956 = vst.msk [vmem:[%s305 + $0x140] sm:$0xf] %vm10875, %v10699
      %10957 = vst.msk [vmem:[%s305 + $0x144] sm:$0xf] %vm10875, %v10700
      %10958 = vst.msk [vmem:[%s305 + $0x148] sm:$0xf] %vm10875, %v10701
      %10959 = vst.msk [vmem:[%s305 + $0x14c] sm:$0xf] %vm10875, %v10702
      %10960 = vst.msk [vmem:[%s305 + $0x150] sm:$0xf] %vm10875, %v10703
      %10961 = vst.msk [vmem:[%s305 + $0x154] sm:$0xf] %vm10875, %v10704
      %10962 = vst.msk [vmem:[%s305 + $0x158] sm:$0xf] %vm10875, %v10705
      %10963 = vst.msk [vmem:[%s305 + $0x15c] sm:$0xf] %vm10875, %v10706
      %10964 = vst.msk [vmem:[%s305 + $0x160] sm:$0xf] %vm10875, %v10707
      %10965 = vst.msk [vmem:[%s305 + $0x164] sm:$0xf] %vm10875, %v10708
      %10966 = vst.msk [vmem:[%s305 + $0x168] sm:$0xf] %vm10875, %v10709
      %10967 = vst.msk [vmem:[%s305 + $0x16c] sm:$0xf] %vm10875, %v10710
      %10968 = vst.msk [vmem:[%s305 + $0x170] sm:$0xf] %vm10875, %v10711
      %10969 = vst.msk [vmem:[%s305 + $0x174] sm:$0xf] %vm10875, %v10712
      %10970 = vst.msk [vmem:[%s305 + $0x178] sm:$0xf] %vm10875, %v10713
      %10971 = vst.msk [vmem:[%s305 + $0x17c] sm:$0xf] %vm10875, %v10714
      %10972 = vst.msk [vmem:[%s305 + $0x180] sm:$0xf] %vm10875, %v10715
      %10973 = vst.msk [vmem:[%s305 + $0x184] sm:$0xf] %vm10875, %v10716
      %10974 = vst.msk [vmem:[%s305 + $0x188] sm:$0xf] %vm10875, %v10717
      %10975 = vst.msk [vmem:[%s305 + $0x18c] sm:$0xf] %vm10875, %v10718
      %10976 = vst.msk [vmem:[%s305 + $0x190] sm:$0xf] %vm10875, %v10719
      %10977 = vst.msk [vmem:[%s305 + $0x194] sm:$0xf] %vm10875, %v10720
      %10978 = vst.msk [vmem:[%s305 + $0x198] sm:$0xf] %vm10875, %v10721
      %10979 = vst.msk [vmem:[%s305 + $0x19c] sm:$0xf] %vm10875, %v10722
      %10980 = vst.msk [vmem:[%s305 + $0x1a0] sm:$0xf] %vm10875, %v10723
      %10981 = vst.msk [vmem:[%s305 + $0x1a4] sm:$0xf] %vm10875, %v10724
      %10982 = vst.msk [vmem:[%s305 + $0x1a8] sm:$0xf] %vm10875, %v10725
      %10983 = vst.msk [vmem:[%s305 + $0x1ac] sm:$0xf] %vm10875, %v10726
      %10984 = vst.msk [vmem:[%s305 + $0x1b0] sm:$0xf] %vm10875, %v10727
      %10985 = vst.msk [vmem:[%s305 + $0x1b4] sm:$0xf] %vm10875, %v10728
      %10986 = vst.msk [vmem:[%s305 + $0x1b8] sm:$0xf] %vm10875, %v10729
      %10987 = vst.msk [vmem:[%s305 + $0x1bc] sm:$0xf] %vm10875, %v10730
      %10988 = vst.msk [vmem:[%s305 + $0x1c0] sm:$0xf] %vm10875, %v10731
      %10989 = vst.msk [vmem:[%s305 + $0x1c4] sm:$0xf] %vm10875, %v10732
      %10990 = vst.msk [vmem:[%s305 + $0x1c8] sm:$0xf] %vm10875, %v10733
      %10991 = vst.msk [vmem:[%s305 + $0x1cc] sm:$0xf] %vm10875, %v10734
      %10992 = vst.msk [vmem:[%s305 + $0x1d0] sm:$0xf] %vm10875, %v10735
      %10993 = vst.msk [vmem:[%s305 + $0x1d4] sm:$0xf] %vm10875, %v10736
      %10994 = vst.msk [vmem:[%s305 + $0x1d8] sm:$0xf] %vm10875, %v10737
      %10995 = vst.msk [vmem:[%s305 + $0x1dc] sm:$0xf] %vm10875, %v10738
      %10996 = vst.msk [vmem:[%s305 + $0x1e0] sm:$0xf] %vm10875, %v10739
      %10997 = vst.msk [vmem:[%s305 + $0x1e4] sm:$0xf] %vm10875, %v10740
      %10998 = vst.msk [vmem:[%s305 + $0x1e8] sm:$0xf] %vm10875, %v10741
      %10999 = vst.msk [vmem:[%s305 + $0x1ec] sm:$0xf] %vm10875, %v10742
      %11000 = vst.msk [vmem:[%s305 + $0x1f0] sm:$0xf] %vm10875, %v10743
      %11001 = vst.msk [vmem:[%s305 + $0x1f4] sm:$0xf] %vm10875, %v10744
      %11002 = vst.msk [vmem:[%s305 + $0x1f8] sm:$0xf] %vm10875, %v10745
      %11003 = vst.msk [vmem:[%s305 + $0x1fc] sm:$0xf] %vm10875, %v10746
      %s11004 = smul.u32 128, %s21
      %p11005 = scmp.lt.s32.totalorder %s20, 0
      %s11006 = scalar_select %p11005, %s20, 0
      %p11007 = scmp.lt.s32.totalorder %s11004, 1023
      %s11008 = scalar_select %p11007, %s11004, 1023
      %s11009 = smul.addr %s11006, 1024
      %s11010 = sadd.s32 %s11008, %s11009
      %s11011 = smul.addr %s11010, 4
      %s11012 = scalar_lea.vmem %s5, %s11011
      // Predicated region
      $region41: #{tpu_custom_call.1} parent=39 // pred_check
        %p11013 = pneg %p169
      $region42: #{tpu_custom_call.1} parent=39 // pred_check_branch
        %11015 = sbr.rel (%p11013) target = $region44
      $region43: #{tpu_custom_call.1} parent=39 // pred_region
        %s11016 = smul.u32 128, %s21
      $region44: #{tpu_custom_call.1} parent=39 // pred_fallthru
        _
    $region40: #{tpu_custom_call.1} parent=5 // pred_fallthru
      _
    %p11017 = scmp.le.s32.totalorder 2, %s11
    // Predicated region
    $region45: #{tpu_custom_call.1} parent=5 // pred_check
      %p11018 = pneg %p11017
    $region46: #{tpu_custom_call.1} parent=5 // pred_check_branch
      %11020 = sbr.rel (%p11018) target = $region48
    $region47: #{tpu_custom_call.1} parent=5 // pred_region
      %s11021 = ssub.s32 %s11, 2
      // Predicated region
      $region49: #{tpu_custom_call.1} parent=47 // pred_check
        %p11022 = pneg %p175
      $region50: #{tpu_custom_call.1} parent=47 // pred_check_branch
        %11024 = sbr.rel (%p11022) target = $region52
      $region51: #{tpu_custom_call.1} parent=47 // pred_region
        %s11025 = smul.u32 128, %s23
        %p11026 = scmp.lt.s32.totalorder %s22, 0
        %s11027 = scalar_select %p11026, %s22, 0
        %p11028 = scmp.lt.s32.totalorder %s11025, 1023
        %s11029 = scalar_select %p11028, %s11025, 1023
        %s11030 = smul.addr %s11027, 1024
        %s11031 = sadd.s32 %s11029, %s11030
        %s11032 = smul.addr %s11031, 4
        %s11033 = scalar_lea.vmem %s5, %s11032
      $region52: #{tpu_custom_call.1} parent=47 // pred_fallthru
        _
    $region48: #{tpu_custom_call.1} parent=5 // pred_fallthru
      _
  $region6: #{tpu_custom_call.1} parent=0 // loop_footer
    %s15 = sadd.s32 1, %s11
  $region7: #{tpu_custom_call.1} parent=0 // loop_footer_branch
    %10 = sbr.rel target = $region3
  $region8: #{tpu_custom_call.1} parent=0 // loop_exit
    _

</llo_original>
